<compile_context>
chip_gen: v7x
topology: tpu7x:2x2x1
jax: 0.10.0
libtpu: 0.0.40
codegen_flags: <defaults>
</compile_context>

<pallas_src>
import functools

import jax
import jax.numpy as jnp
import numpy as np
from jax.experimental import pallas as pl
from jax.experimental.pallas import tpu as pltpu


KH = KW = 5           # conv kernel size (both convs)
C1 = 20               # conv1 out channels
C2 = 50               # conv2 out channels
N_HIDDEN = 500        # fc1 out features
N_HIDDEN_PAD = 512    # fc1 width padded to a multiple of 128 (lane-dense)
N_OUT = 10            # fc2 out features
N_OUT_PAD = 128       # fc2 width padded to one full lane group
BN_EPS = 2e-5


# ----------------------------------------------------------------------------
# Kernel A: conv1 -> pool1 -> conv2 -> pool2 -> fc1 (+ bias) + BN partial sums.
# Only matmuls, unit-stride slices, maximum and small reshapes; no scratch.
# ----------------------------------------------------------------------------
def _fused_conv_fc1_kernel(x_ref, w1b_ref, b1t_ref, w2b_ref, b2t_ref,
                           wf1_ref, bf1_ref, h_ref, stats_ref, *, dims):
    (BT, H, OH1, R2, PH2, L1, L1P, L2, L2P) = dims

    x = x_ref[...]                                        # (BT*H, W) bf16

    # ---- conv1: KH banded matmuls over the width axis (lane-dense) ---------
    c1 = None
    for i in range(KH):
        y = jnp.dot(x, w1b_ref[i], preferred_element_type=jnp.float32)
        y = y.reshape(BT, H, L1)[:, i:i + OH1, :]
        c1 = y if c1 is None else c1 + y
    c1 = c1 + b1t_ref[...].reshape(1, 1, L1)              # (BT, OH1, L1) f32

    # ---- maxpool1 2x2 in registers ------------------------------------------
    # W-pairs are C1 lanes apart in the packed layout, H-pairs are adjacent
    # rows.  Valid pooled values land at rows 2*hp and lane groups 2*wp*C1;
    # the dead rows/lanes are discarded by zero rows in w2b / w_fc1 later.
    m1 = jnp.maximum(c1[:, :, :L1P], c1[:, :, C1:])       # (BT, OH1,   L1P)
    m2 = jnp.maximum(m1[:, :OH1 - 1, :], m1[:, 1:, :])    # (BT, OH1-1, L1P)

    # ---- conv2: KH banded matmuls over the packed pool1 layout --------------
    p1 = m2.astype(jnp.bfloat16).reshape(BT * (OH1 - 1), L1P)
    c2 = None
    for i in range(KH):
        z = jnp.dot(p1, w2b_ref[i], preferred_element_type=jnp.float32)
        z = z.reshape(BT, OH1 - 1, L2)[:, 2 * i:2 * i + R2, :]
        c2 = z if c2 is None else c2 + z
    c2 = c2 + b2t_ref[...].reshape(1, 1, L2)              # (BT, R2, L2) f32

    # ---- maxpool2 2x2 in registers (valid pooled rows are 4*hp) -------------
    m3 = jnp.maximum(c2[:, :, :L2P], c2[:, :, C2:])       # (BT, R2,   L2P)
    m4 = jnp.maximum(m3[:, :R2 - 2, :], m3[:, 2:, :])     # (BT, R2-2, L2P)

    # ---- fc1: one K=L2P matmul per valid pooled row --------------------------
    # Weight rows were permuted from PyTorch's NCHW flatten order and the dead
    # lanes zero-filled, so no activation flatten / transpose is needed.
    hpre = None
    for q in range(PH2):
        row = m4[:, 4 * q, :].astype(jnp.bfloat16)        # (BT, L2P)
        t = jnp.dot(row, wf1_ref[q], preferred_element_type=jnp.float32)
        hpre = t if hpre is None else hpre + t
    hpre = hpre + bf1_ref[...]                            # (BT, 512) f32
    h_ref[...] = hpre                                     # lane-dense store

    # ---- per-tile BatchNorm partial stats (row 0 = sum, row 1 = sum(x^2)) ---
    ps = jnp.sum(hpre, axis=0, keepdims=True)             # (1, 512)
    pq = jnp.sum(hpre * hpre, axis=0, keepdims=True)      # (1, 512)
    stats_ref[...] = jnp.zeros(stats_ref.shape, stats_ref.dtype)
    stats_ref[0:1, 0:1, :] = ps.reshape(1, 1, -1)
    stats_ref[0:1, 1:2, :] = pq.reshape(1, 1, -1)


# ----------------------------------------------------------------------------
# Kernel B: BatchNorm (pre-folded scale/shift) -> ReLU -> fc2, batch-tiled.
# ----------------------------------------------------------------------------
def _bn_relu_fc2_kernel(h_ref, scale_ref, shift_ref, w2_ref, b2_ref, o_ref):
    hn = jnp.maximum(h_ref[...] * scale_ref[...] + shift_ref[...], 0.0)
    o_ref[...] = (jnp.dot(hn.astype(jnp.bfloat16), w2_ref[...],
                          preferred_element_type=jnp.float32) + b2_ref[...])


# ----------------------------------------------------------------------------
# Wrapper
# ----------------------------------------------------------------------------
def _batch_tile(batch, cap=32):
    """Largest tile <= cap that divides the batch and keeps non-full blocks
    sublane aligned (multiple of 8); otherwise fall back to the whole batch."""
    if batch <= cap:
        return batch
    bt = cap - cap % 8
    while bt >= 8:
        if batch % bt == 0:
            return bt
        bt -= 8
    return batch  # TODO(synk): batches with no multiple-of-8 divisor run as one tile.


def cnn2_forward(x_nchw, kp):
    B, Cin, H, W = x_nchw.shape
    assert Cin == 1  # TODO(synk): banded conv1 path assumes the module default Cin=1.

    OH1, OW1 = H - KH + 1, W - KW + 1
    PH1, PW1 = OH1 // 2, OW1 // 2
    OH2, OW2 = PH1 - KH + 1, PW1 - KW + 1
    PH2 = OH2 // 2
    L1, L2 = OW1 * C1, OW2 * C2
    L1P, L2P = L1 - C1, L2 - C2
    R2 = OH1 - 2 * KH + 1                      # rows carried between conv2 and pool2

    BT = _batch_tile(B)
    G = B // BT
    dims = (BT, H, OH1, R2, PH2, L1, L1P, L2, L2P)

    # Cin=1 squeezed out, image rows merged into the sublane axis, bf16 input
    # (conv matmuls run in bf16 anyway) -> small, dense input DMA.
    x2d = x_nchw.astype(jnp.bfloat16).reshape(B * H, W)

    flops_a = 2 * B * (KH * H * W * L1 + KH * (OH1 - 1) * L1P * L2
                       + PH2 * L2P * N_HIDDEN_PAD)
    bytes_a = int(x2d.size * 2 + kp["w1b"].size * 2 + kp["w2b"].size * 2
                  + kp["w_fc1"].size * 2 + B * N_HIDDEN_PAD * 4)

    h, stats = pl.pallas_call(
        functools.partial(_fused_conv_fc1_kernel, dims=dims),
        out_shape=(jax.ShapeDtypeStruct((B, N_HIDDEN_PAD), jnp.float32),
                   jax.ShapeDtypeStruct((G, 8, N_HIDDEN_PAD), jnp.float32)),
        grid=(G,),
        in_specs=[
            pl.BlockSpec((BT * H, W), lambda b: (b, 0)),
            pl.BlockSpec((KH, W, L1), lambda b: (0, 0, 0)),
            pl.BlockSpec((1, L1), lambda b: (0, 0)),
            pl.BlockSpec((KH, L1P, L2), lambda b: (0, 0, 0)),
            pl.BlockSpec((1, L2), lambda b: (0, 0)),
            pl.BlockSpec((PH2, L2P, N_HIDDEN_PAD), lambda b: (0, 0, 0)),
            pl.BlockSpec((1, N_HIDDEN_PAD), lambda b: (0, 0)),
        ],
        out_specs=(pl.BlockSpec((BT, N_HIDDEN_PAD), lambda b: (b, 0)),
                   pl.BlockSpec((1, 8, N_HIDDEN_PAD), lambda b: (b, 0, 0))),
        compiler_params=pltpu.CompilerParams(
            dimension_semantics=("parallel",),
            vmem_limit_bytes=48 * 1024 * 1024),
        cost_estimate=pl.CostEstimate(flops=int(flops_a), transcendentals=0,
                                      bytes_accessed=bytes_a),
    )(x2d, kp["w1b"], kp["b1t"], kp["w2b"], kp["b2t"], kp["w_fc1"], kp["b_fc1"])

    # BatchNorm1d training statistics: finalize mean / inv-std from the
    # per-tile partial sums (O(hidden) glue) and fold gamma/beta into a single
    # per-feature scale/shift so Kernel B stays batch-tiled and parallel.
    sums = jnp.sum(stats[:, 0, :], axis=0)
    sqs = jnp.sum(stats[:, 1, :], axis=0)
    mean = sums / B
    var = jnp.maximum(sqs / B - mean * mean, 0.0)          # biased variance
    inv = jax.lax.rsqrt(var + BN_EPS)
    scale = (kp["bn_g"] * inv).reshape(1, N_HIDDEN_PAD)
    shift = (kp["bn_b"] - mean * kp["bn_g"] * inv).reshape(1, N_HIDDEN_PAD)

    flops_b = 2 * B * N_HIDDEN_PAD * N_OUT_PAD + 3 * B * N_HIDDEN_PAD
    bytes_b = int(B * N_HIDDEN_PAD * 4 + kp["w_fc2"].size * 2 + B * N_OUT_PAD * 4)

    out_pad = pl.pallas_call(
        _bn_relu_fc2_kernel,
        out_shape=jax.ShapeDtypeStruct((B, N_OUT_PAD), jnp.float32),
        grid=(G,),
        in_specs=[
            pl.BlockSpec((BT, N_HIDDEN_PAD), lambda b: (b, 0)),
            pl.BlockSpec((1, N_HIDDEN_PAD), lambda b: (0, 0)),
            pl.BlockSpec((1, N_HIDDEN_PAD), lambda b: (0, 0)),
            pl.BlockSpec((N_HIDDEN_PAD, N_OUT_PAD), lambda b: (0, 0)),
            pl.BlockSpec((1, N_OUT_PAD), lambda b: (0, 0)),
        ],
        out_specs=pl.BlockSpec((BT, N_OUT_PAD), lambda b: (b, 0)),
        compiler_params=pltpu.CompilerParams(
            dimension_semantics=("parallel",),
            vmem_limit_bytes=32 * 1024 * 1024),
        cost_estimate=pl.CostEstimate(flops=int(flops_b), transcendentals=0,
                                      bytes_accessed=bytes_b),
    )(h, scale, shift, kp["w_fc2"], kp["b_fc2"])

    return out_pad[:, :N_OUT]


# ----------------------------------------------------------------------------
# Parameters: canonical layout -> kernel-ready (banded / permuted / padded /
# bf16-cast) layout.  Done once, outside the forward pass.
# ----------------------------------------------------------------------------
def init_params(key, input_shape=(1, 28, 28)):
    cin, H, W = input_shape
    ph2 = ((H - KH + 1) // 2 - KH + 1) // 2
    pw2 = ((W - KW + 1) // 2 - KW + 1) // 2
    flat_dim = C2 * ph2 * pw2                       # 800 for (1, 28, 28)
    ks = jax.random.split(key, 6)
    s = 0.05
    return {
        # conv weights in HWIO; fc1 rows in PyTorch NCHW-flatten order.
        "conv1_w": s * jax.random.normal(ks[0], (KH, KW, cin, C1), jnp.float32),
        "conv1_b": s * jax.random.normal(ks[1], (C1,), jnp.float32),
        "conv2_w": s * jax.random.normal(ks[2], (KH, KW, C1, C2), jnp.float32),
        "conv2_b": s * jax.random.normal(ks[3], (C2,), jnp.float32),
        "fc1_w": s * jax.random.normal(ks[4], (flat_dim, N_HIDDEN), jnp.float32),
        "fc1_b": jnp.zeros((N_HIDDEN,), jnp.float32),
        "bn_g": jnp.ones((N_HIDDEN,), jnp.float32),
        "bn_b": jnp.zeros((N_HIDDEN,), jnp.float32),
        "fc2_w": s * jax.random.normal(ks[5], (N_HIDDEN, N_OUT), jnp.float32),
        "fc2_b": jnp.zeros((N_OUT,), jnp.float32),
    }


def prepare_params(params, input_shape=(1, 28, 28)):
    cin, H, W = input_shape
    assert cin == 1
    OH1, OW1 = H - KH + 1, W - KW + 1
    PH1, PW1 = OH1 // 2, OW1 // 2
    OH2, OW2 = PH1 - KH + 1, PW1 - KW + 1
    PH2, PW2 = OH2 // 2, OW2 // 2
    L1, L2 = OW1 * C1, OW2 * C2
    L1P, L2P = L1 - C1, L2 - C2

    w1 = np.asarray(params["conv1_w"], np.float32)        # (KH, KW, 1, C1)
    w2 = np.asarray(params["conv2_w"], np.float32)        # (KH, KW, C1, C2)
    fc1_w = np.asarray(params["fc1_w"], np.float32)       # (C2*PH2*PW2, 500)

    # conv1 as KH banded (W -> OW1*C1) matrices: the width tap j is folded
    # into the band so each kernel row is one lane-dense MXU matmul.
    w1b = np.zeros((KH, W, L1), np.float32)
    for i in range(KH):
        for wo in range(OW1):
            for j in range(KW):
                w1b[i, wo + j, wo * C1:(wo + 1) * C1] = w1[i, j, 0, :]

    # conv2 banded matrices over the packed pool1 layout.  Rows are indexed by
    # the *unpooled* lane position 2*wp*C1 + cin; odd-w rows stay zero, which
    # is what discards the pool1 "don't care" lanes.
    w2b = np.zeros((KH, L1P, L2), np.float32)
    for i in range(KH):
        for wo in range(OW2):
            for j in range(KW):
                r0 = 2 * (wo + j) * C1
                w2b[i, r0:r0 + C1, wo * C2:(wo + 1) * C2] = w2[i, j, :, :]

    # fc1: one (L2P, 512) block per pooled row; rows permuted from PyTorch's
    # NCHW flatten order into the kernel's packed pool2 layout, dead lanes = 0.
    wf1 = np.zeros((PH2, L2P, N_HIDDEN_PAD), np.float32)
    for hp in range(PH2):
        for wp in range(PW2):
            for c in range(C2):
                r = 2 * wp * C2 + c
                f = c * (PH2 * PW2) + hp * PW2 + wp
                wf1[hp, r, :N_HIDDEN] = fc1_w[f, :]

    b1t = np.tile(np.asarray(params["conv1_b"], np.float32), OW1).reshape(1, L1)
    b2t = np.tile(np.asarray(params["conv2_b"], np.float32), OW2).reshape(1, L2)

    pad_h = N_HIDDEN_PAD - N_HIDDEN
    pad_o = N_OUT_PAD - N_OUT
    return {
        "w1b": jnp.asarray(w1b, jnp.bfloat16),
        "b1t": jnp.asarray(b1t, jnp.float32),
        "w2b": jnp.asarray(w2b, jnp.bfloat16),
        "b2t": jnp.asarray(b2t, jnp.float32),
        "w_fc1": jnp.asarray(wf1, jnp.bfloat16),
        "b_fc1": jnp.asarray(
            np.pad(np.asarray(params["fc1_b"], np.float32), (0, pad_h))
        ).reshape(1, N_HIDDEN_PAD),
        "bn_g": jnp.asarray(np.pad(np.asarray(params["bn_g"], np.float32), (0, pad_h))),
        "bn_b": jnp.asarray(np.pad(np.asarray(params["bn_b"], np.float32), (0, pad_h))),
        "w_fc2": jnp.asarray(
            np.pad(np.asarray(params["fc2_w"], np.float32),
                   ((0, pad_h), (0, pad_o))), jnp.bfloat16),
        "b_fc2": jnp.asarray(
            np.pad(np.asarray(params["fc2_b"], np.float32), (0, pad_o))
        ).reshape(1, N_OUT_PAD),
    }


if __name__ == "__main__":
    key = jax.random.PRNGKey(0)
    k_x, k_p = jax.random.split(key)

    batch, input_shape = 2, (1, 28, 28)
    x = jax.random.normal(k_x, (batch, *input_shape), jnp.float32)   # NCHW
    params = init_params(k_p, input_shape)
    kparams = prepare_params(params, input_shape)

    out = jax.jit(cnn2_forward)(x, kparams)
    out = jax.block_until_ready(out)

    assert out.shape == (batch, N_OUT), out.shape
    assert out.dtype == jnp.float32
    assert bool(jnp.all(jnp.isfinite(out)))
    print("KERNEL_OK")
</pallas_src>

<mosaic_0001>
module attributes {stable_mosaic.version = 11 : i64} {
  func.func @_fused_conv_fc1_kernel(%arg0: i32, %arg1: memref<56x28xbf16, #tpu.memory_space<vmem>>, %arg2: memref<5x28x480xbf16, #tpu.memory_space<vmem>>, %arg3: memref<1x480xf32, #tpu.memory_space<vmem>>, %arg4: memref<5x460x400xbf16, #tpu.memory_space<vmem>>, %arg5: memref<1x400xf32, #tpu.memory_space<vmem>>, %arg6: memref<4x350x512xbf16, #tpu.memory_space<vmem>>, %arg7: memref<1x512xf32, #tpu.memory_space<vmem>>, %arg8: memref<2x512xf32, #tpu.memory_space<vmem>>, %arg9: memref<1x8x512xf32, #tpu.memory_space<vmem>>) attributes {dimension_semantics = [#tpu.dimension_semantics<parallel>], iteration_bounds = array<i64: 1>, scalar_prefetch = 0 : i64, scratch_operands = 0 : i64, tpu.core_type = #tpu.core_type<tc>, window_params = [{transform_indices = @transform_0, window_bounds = array<i64: 56, 28>}, {pipeline_mode = #tpu.pipeline_mode<synchronous>, transform_indices = @transform_1, window_bounds = array<i64: 5, 28, 480>}, {pipeline_mode = #tpu.pipeline_mode<synchronous>, transform_indices = @transform_2, window_bounds = array<i64: 1, 480>}, {pipeline_mode = #tpu.pipeline_mode<synchronous>, transform_indices = @transform_3, window_bounds = array<i64: 5, 460, 400>}, {pipeline_mode = #tpu.pipeline_mode<synchronous>, transform_indices = @transform_4, window_bounds = array<i64: 1, 400>}, {pipeline_mode = #tpu.pipeline_mode<synchronous>, transform_indices = @transform_5, window_bounds = array<i64: 4, 350, 512>}, {pipeline_mode = #tpu.pipeline_mode<synchronous>, transform_indices = @transform_6, window_bounds = array<i64: 1, 512>}, {transform_indices = @transform_7, window_bounds = array<i64: 2, 512>}, {transform_indices = @transform_8, window_bounds = array<i64: 1, 8, 512>}]} {
    %c0 = arith.constant 0 : index
    %c0_0 = arith.constant 0 : index
    %0 = vector.load %arg1[%c0, %c0_0] : memref<56x28xbf16, #tpu.memory_space<vmem>>, vector<56x28xbf16>
    %c0_1 = arith.constant 0 : index
    %c0_2 = arith.constant 0 : index
    %c0_3 = arith.constant 0 : index
    %1 = vector.load %arg2[%c0_1, %c0_2, %c0_3] : memref<5x28x480xbf16, #tpu.memory_space<vmem>>, vector<1x28x480xbf16>
    %2 = vector.shape_cast %1 : vector<1x28x480xbf16> to vector<28x480xbf16>
    %cst = arith.constant dense<0.000000e+00> : vector<56x480xf32>
    %3 = tpu.matmul %0, %2, %cst {dimension_numbers = #tpu.dot_dimension_numbers<[1], [0], [0], [1], [0, 0, 1, 1], [], []>} : vector<56x28xbf16>, vector<28x480xbf16>, vector<56x480xf32> -> vector<56x480xf32>
    %4 = vector.shape_cast %3 : vector<56x480xf32> to vector<2x28x480xf32>
    %5 = vector.extract_strided_slice %4 {offsets = [0, 0, 0], sizes = [2, 24, 480], strides = [1, 1, 1]} : vector<2x28x480xf32> to vector<2x24x480xf32>
    %c1 = arith.constant 1 : index
    %c0_4 = arith.constant 0 : index
    %c0_5 = arith.constant 0 : index
    %6 = vector.load %arg2[%c1, %c0_4, %c0_5] : memref<5x28x480xbf16, #tpu.memory_space<vmem>>, vector<1x28x480xbf16>
    %7 = vector.shape_cast %6 : vector<1x28x480xbf16> to vector<28x480xbf16>
    %cst_6 = arith.constant dense<0.000000e+00> : vector<56x480xf32>
    %8 = tpu.matmul %0, %7, %cst_6 {dimension_numbers = #tpu.dot_dimension_numbers<[1], [0], [0], [1], [0, 0, 1, 1], [], []>} : vector<56x28xbf16>, vector<28x480xbf16>, vector<56x480xf32> -> vector<56x480xf32>
    %9 = vector.shape_cast %8 : vector<56x480xf32> to vector<2x28x480xf32>
    %10 = vector.extract_strided_slice %9 {offsets = [0, 1, 0], sizes = [2, 24, 480], strides = [1, 1, 1]} : vector<2x28x480xf32> to vector<2x24x480xf32>
    %11 = arith.addf %5, %10 : vector<2x24x480xf32>
    %c2 = arith.constant 2 : index
    %c0_7 = arith.constant 0 : index
    %c0_8 = arith.constant 0 : index
    %12 = vector.load %arg2[%c2, %c0_7, %c0_8] : memref<5x28x480xbf16, #tpu.memory_space<vmem>>, vector<1x28x480xbf16>
    %13 = vector.shape_cast %12 : vector<1x28x480xbf16> to vector<28x480xbf16>
    %cst_9 = arith.constant dense<0.000000e+00> : vector<56x480xf32>
    %14 = tpu.matmul %0, %13, %cst_9 {dimension_numbers = #tpu.dot_dimension_numbers<[1], [0], [0], [1], [0, 0, 1, 1], [], []>} : vector<56x28xbf16>, vector<28x480xbf16>, vector<56x480xf32> -> vector<56x480xf32>
    %15 = vector.shape_cast %14 : vector<56x480xf32> to vector<2x28x480xf32>
    %16 = vector.extract_strided_slice %15 {offsets = [0, 2, 0], sizes = [2, 24, 480], strides = [1, 1, 1]} : vector<2x28x480xf32> to vector<2x24x480xf32>
    %17 = arith.addf %11, %16 : vector<2x24x480xf32>
    %c3 = arith.constant 3 : index
    %c0_10 = arith.constant 0 : index
    %c0_11 = arith.constant 0 : index
    %18 = vector.load %arg2[%c3, %c0_10, %c0_11] : memref<5x28x480xbf16, #tpu.memory_space<vmem>>, vector<1x28x480xbf16>
    %19 = vector.shape_cast %18 : vector<1x28x480xbf16> to vector<28x480xbf16>
    %cst_12 = arith.constant dense<0.000000e+00> : vector<56x480xf32>
    %20 = tpu.matmul %0, %19, %cst_12 {dimension_numbers = #tpu.dot_dimension_numbers<[1], [0], [0], [1], [0, 0, 1, 1], [], []>} : vector<56x28xbf16>, vector<28x480xbf16>, vector<56x480xf32> -> vector<56x480xf32>
    %21 = vector.shape_cast %20 : vector<56x480xf32> to vector<2x28x480xf32>
    %22 = vector.extract_strided_slice %21 {offsets = [0, 3, 0], sizes = [2, 24, 480], strides = [1, 1, 1]} : vector<2x28x480xf32> to vector<2x24x480xf32>
    %23 = arith.addf %17, %22 : vector<2x24x480xf32>
    %c4 = arith.constant 4 : index
    %c0_13 = arith.constant 0 : index
    %c0_14 = arith.constant 0 : index
    %24 = vector.load %arg2[%c4, %c0_13, %c0_14] : memref<5x28x480xbf16, #tpu.memory_space<vmem>>, vector<1x28x480xbf16>
    %25 = vector.shape_cast %24 : vector<1x28x480xbf16> to vector<28x480xbf16>
    %cst_15 = arith.constant dense<0.000000e+00> : vector<56x480xf32>
    %26 = tpu.matmul %0, %25, %cst_15 {dimension_numbers = #tpu.dot_dimension_numbers<[1], [0], [0], [1], [0, 0, 1, 1], [], []>} : vector<56x28xbf16>, vector<28x480xbf16>, vector<56x480xf32> -> vector<56x480xf32>
    %27 = vector.shape_cast %26 : vector<56x480xf32> to vector<2x28x480xf32>
    %28 = vector.extract_strided_slice %27 {offsets = [0, 4, 0], sizes = [2, 24, 480], strides = [1, 1, 1]} : vector<2x28x480xf32> to vector<2x24x480xf32>
    %29 = arith.addf %23, %28 : vector<2x24x480xf32>
    %c0_16 = arith.constant 0 : index
    %c0_17 = arith.constant 0 : index
    %30 = vector.load %arg3[%c0_16, %c0_17] : memref<1x480xf32, #tpu.memory_space<vmem>>, vector<1x480xf32>
    %31 = vector.shape_cast %30 : vector<1x480xf32> to vector<1x1x480xf32>
    %32 = vector.broadcast %31 : vector<1x1x480xf32> to vector<2x24x480xf32>
    %33 = arith.addf %29, %32 : vector<2x24x480xf32>
    %34 = vector.extract_strided_slice %33 {offsets = [0, 0, 0], sizes = [2, 24, 460], strides = [1, 1, 1]} : vector<2x24x480xf32> to vector<2x24x460xf32>
    %35 = vector.extract_strided_slice %33 {offsets = [0, 0, 20], sizes = [2, 24, 460], strides = [1, 1, 1]} : vector<2x24x480xf32> to vector<2x24x460xf32>
    %36 = arith.maximumf %34, %35 : vector<2x24x460xf32>
    %37 = vector.extract_strided_slice %36 {offsets = [0, 0, 0], sizes = [2, 23, 460], strides = [1, 1, 1]} : vector<2x24x460xf32> to vector<2x23x460xf32>
    %38 = vector.extract_strided_slice %36 {offsets = [0, 1, 0], sizes = [2, 23, 460], strides = [1, 1, 1]} : vector<2x24x460xf32> to vector<2x23x460xf32>
    %39 = arith.maximumf %37, %38 : vector<2x23x460xf32>
    %40 = arith.truncf %39 : vector<2x23x460xf32> to vector<2x23x460xbf16>
    %41 = vector.shape_cast %40 : vector<2x23x460xbf16> to vector<46x460xbf16>
    %c0_18 = arith.constant 0 : index
    %c0_19 = arith.constant 0 : index
    %c0_20 = arith.constant 0 : index
    %42 = vector.load %arg4[%c0_18, %c0_19, %c0_20] : memref<5x460x400xbf16, #tpu.memory_space<vmem>>, vector<1x460x400xbf16>
    %43 = vector.shape_cast %42 : vector<1x460x400xbf16> to vector<460x400xbf16>
    %cst_21 = arith.constant dense<0.000000e+00> : vector<46x400xf32>
    %44 = tpu.matmul %41, %43, %cst_21 {dimension_numbers = #tpu.dot_dimension_numbers<[1], [0], [0], [1], [0, 0, 1, 1], [], []>} : vector<46x460xbf16>, vector<460x400xbf16>, vector<46x400xf32> -> vector<46x400xf32>
    %45 = vector.shape_cast %44 : vector<46x400xf32> to vector<2x23x400xf32>
    %46 = vector.extract_strided_slice %45 {offsets = [0, 0, 0], sizes = [2, 15, 400], strides = [1, 1, 1]} : vector<2x23x400xf32> to vector<2x15x400xf32>
    %c1_22 = arith.constant 1 : index
    %c0_23 = arith.constant 0 : index
    %c0_24 = arith.constant 0 : index
    %47 = vector.load %arg4[%c1_22, %c0_23, %c0_24] : memref<5x460x400xbf16, #tpu.memory_space<vmem>>, vector<1x460x400xbf16>
    %48 = vector.shape_cast %47 : vector<1x460x400xbf16> to vector<460x400xbf16>
    %cst_25 = arith.constant dense<0.000000e+00> : vector<46x400xf32>
    %49 = tpu.matmul %41, %48, %cst_25 {dimension_numbers = #tpu.dot_dimension_numbers<[1], [0], [0], [1], [0, 0, 1, 1], [], []>} : vector<46x460xbf16>, vector<460x400xbf16>, vector<46x400xf32> -> vector<46x400xf32>
    %50 = vector.shape_cast %49 : vector<46x400xf32> to vector<2x23x400xf32>
    %51 = vector.extract_strided_slice %50 {offsets = [0, 2, 0], sizes = [2, 15, 400], strides = [1, 1, 1]} : vector<2x23x400xf32> to vector<2x15x400xf32>
    %52 = arith.addf %46, %51 : vector<2x15x400xf32>
    %c2_26 = arith.constant 2 : index
    %c0_27 = arith.constant 0 : index
    %c0_28 = arith.constant 0 : index
    %53 = vector.load %arg4[%c2_26, %c0_27, %c0_28] : memref<5x460x400xbf16, #tpu.memory_space<vmem>>, vector<1x460x400xbf16>
    %54 = vector.shape_cast %53 : vector<1x460x400xbf16> to vector<460x400xbf16>
    %cst_29 = arith.constant dense<0.000000e+00> : vector<46x400xf32>
    %55 = tpu.matmul %41, %54, %cst_29 {dimension_numbers = #tpu.dot_dimension_numbers<[1], [0], [0], [1], [0, 0, 1, 1], [], []>} : vector<46x460xbf16>, vector<460x400xbf16>, vector<46x400xf32> -> vector<46x400xf32>
    %56 = vector.shape_cast %55 : vector<46x400xf32> to vector<2x23x400xf32>
    %57 = vector.extract_strided_slice %56 {offsets = [0, 4, 0], sizes = [2, 15, 400], strides = [1, 1, 1]} : vector<2x23x400xf32> to vector<2x15x400xf32>
    %58 = arith.addf %52, %57 : vector<2x15x400xf32>
    %c3_30 = arith.constant 3 : index
    %c0_31 = arith.constant 0 : index
    %c0_32 = arith.constant 0 : index
    %59 = vector.load %arg4[%c3_30, %c0_31, %c0_32] : memref<5x460x400xbf16, #tpu.memory_space<vmem>>, vector<1x460x400xbf16>
    %60 = vector.shape_cast %59 : vector<1x460x400xbf16> to vector<460x400xbf16>
    %cst_33 = arith.constant dense<0.000000e+00> : vector<46x400xf32>
    %61 = tpu.matmul %41, %60, %cst_33 {dimension_numbers = #tpu.dot_dimension_numbers<[1], [0], [0], [1], [0, 0, 1, 1], [], []>} : vector<46x460xbf16>, vector<460x400xbf16>, vector<46x400xf32> -> vector<46x400xf32>
    %62 = vector.shape_cast %61 : vector<46x400xf32> to vector<2x23x400xf32>
    %63 = vector.extract_strided_slice %62 {offsets = [0, 6, 0], sizes = [2, 15, 400], strides = [1, 1, 1]} : vector<2x23x400xf32> to vector<2x15x400xf32>
    %64 = arith.addf %58, %63 : vector<2x15x400xf32>
    %c4_34 = arith.constant 4 : index
    %c0_35 = arith.constant 0 : index
    %c0_36 = arith.constant 0 : index
    %65 = vector.load %arg4[%c4_34, %c0_35, %c0_36] : memref<5x460x400xbf16, #tpu.memory_space<vmem>>, vector<1x460x400xbf16>
    %66 = vector.shape_cast %65 : vector<1x460x400xbf16> to vector<460x400xbf16>
    %cst_37 = arith.constant dense<0.000000e+00> : vector<46x400xf32>
    %67 = tpu.matmul %41, %66, %cst_37 {dimension_numbers = #tpu.dot_dimension_numbers<[1], [0], [0], [1], [0, 0, 1, 1], [], []>} : vector<46x460xbf16>, vector<460x400xbf16>, vector<46x400xf32> -> vector<46x400xf32>
    %68 = vector.shape_cast %67 : vector<46x400xf32> to vector<2x23x400xf32>
    %69 = vector.extract_strided_slice %68 {offsets = [0, 8, 0], sizes = [2, 15, 400], strides = [1, 1, 1]} : vector<2x23x400xf32> to vector<2x15x400xf32>
    %70 = arith.addf %64, %69 : vector<2x15x400xf32>
    %c0_38 = arith.constant 0 : index
    %c0_39 = arith.constant 0 : index
    %71 = vector.load %arg5[%c0_38, %c0_39] : memref<1x400xf32, #tpu.memory_space<vmem>>, vector<1x400xf32>
    %72 = vector.shape_cast %71 : vector<1x400xf32> to vector<1x1x400xf32>
    %73 = vector.broadcast %72 : vector<1x1x400xf32> to vector<2x15x400xf32>
    %74 = arith.addf %70, %73 : vector<2x15x400xf32>
    %75 = vector.extract_strided_slice %74 {offsets = [0, 0, 0], sizes = [2, 15, 350], strides = [1, 1, 1]} : vector<2x15x400xf32> to vector<2x15x350xf32>
    %76 = vector.extract_strided_slice %74 {offsets = [0, 0, 50], sizes = [2, 15, 350], strides = [1, 1, 1]} : vector<2x15x400xf32> to vector<2x15x350xf32>
    %77 = arith.maximumf %75, %76 : vector<2x15x350xf32>
    %78 = vector.extract_strided_slice %77 {offsets = [0, 0, 0], sizes = [2, 13, 350], strides = [1, 1, 1]} : vector<2x15x350xf32> to vector<2x13x350xf32>
    %79 = vector.extract_strided_slice %77 {offsets = [0, 2, 0], sizes = [2, 13, 350], strides = [1, 1, 1]} : vector<2x15x350xf32> to vector<2x13x350xf32>
    %80 = arith.maximumf %78, %79 : vector<2x13x350xf32>
    %81 = vector.extract_strided_slice %80 {offsets = [0, 0, 0], sizes = [2, 1, 350], strides = [1, 1, 1]} : vector<2x13x350xf32> to vector<2x1x350xf32>
    %82 = vector.shape_cast %81 : vector<2x1x350xf32> to vector<2x350xf32>
    %83 = arith.truncf %82 : vector<2x350xf32> to vector<2x350xbf16>
    %c0_40 = arith.constant 0 : index
    %c0_41 = arith.constant 0 : index
    %c0_42 = arith.constant 0 : index
    %84 = vector.load %arg6[%c0_40, %c0_41, %c0_42] : memref<4x350x512xbf16, #tpu.memory_space<vmem>>, vector<1x350x512xbf16>
    %85 = vector.shape_cast %84 : vector<1x350x512xbf16> to vector<350x512xbf16>
    %cst_43 = arith.constant dense<0.000000e+00> : vector<2x512xf32>
    %86 = tpu.matmul %83, %85, %cst_43 {dimension_numbers = #tpu.dot_dimension_numbers<[1], [0], [0], [1], [0, 0, 1, 1], [], []>} : vector<2x350xbf16>, vector<350x512xbf16>, vector<2x512xf32> -> vector<2x512xf32>
    %87 = vector.extract_strided_slice %80 {offsets = [0, 4, 0], sizes = [2, 1, 350], strides = [1, 1, 1]} : vector<2x13x350xf32> to vector<2x1x350xf32>
    %88 = vector.shape_cast %87 : vector<2x1x350xf32> to vector<2x350xf32>
    %89 = arith.truncf %88 : vector<2x350xf32> to vector<2x350xbf16>
    %c1_44 = arith.constant 1 : index
    %c0_45 = arith.constant 0 : index
    %c0_46 = arith.constant 0 : index
    %90 = vector.load %arg6[%c1_44, %c0_45, %c0_46] : memref<4x350x512xbf16, #tpu.memory_space<vmem>>, vector<1x350x512xbf16>
    %91 = vector.shape_cast %90 : vector<1x350x512xbf16> to vector<350x512xbf16>
    %cst_47 = arith.constant dense<0.000000e+00> : vector<2x512xf32>
    %92 = tpu.matmul %89, %91, %cst_47 {dimension_numbers = #tpu.dot_dimension_numbers<[1], [0], [0], [1], [0, 0, 1, 1], [], []>} : vector<2x350xbf16>, vector<350x512xbf16>, vector<2x512xf32> -> vector<2x512xf32>
    %93 = arith.addf %86, %92 : vector<2x512xf32>
    %94 = vector.extract_strided_slice %80 {offsets = [0, 8, 0], sizes = [2, 1, 350], strides = [1, 1, 1]} : vector<2x13x350xf32> to vector<2x1x350xf32>
    %95 = vector.shape_cast %94 : vector<2x1x350xf32> to vector<2x350xf32>
    %96 = arith.truncf %95 : vector<2x350xf32> to vector<2x350xbf16>
    %c2_48 = arith.constant 2 : index
    %c0_49 = arith.constant 0 : index
    %c0_50 = arith.constant 0 : index
    %97 = vector.load %arg6[%c2_48, %c0_49, %c0_50] : memref<4x350x512xbf16, #tpu.memory_space<vmem>>, vector<1x350x512xbf16>
    %98 = vector.shape_cast %97 : vector<1x350x512xbf16> to vector<350x512xbf16>
    %cst_51 = arith.constant dense<0.000000e+00> : vector<2x512xf32>
    %99 = tpu.matmul %96, %98, %cst_51 {dimension_numbers = #tpu.dot_dimension_numbers<[1], [0], [0], [1], [0, 0, 1, 1], [], []>} : vector<2x350xbf16>, vector<350x512xbf16>, vector<2x512xf32> -> vector<2x512xf32>
    %100 = arith.addf %93, %99 : vector<2x512xf32>
    %101 = vector.extract_strided_slice %80 {offsets = [0, 12, 0], sizes = [2, 1, 350], strides = [1, 1, 1]} : vector<2x13x350xf32> to vector<2x1x350xf32>
    %102 = vector.shape_cast %101 : vector<2x1x350xf32> to vector<2x350xf32>
    %103 = arith.truncf %102 : vector<2x350xf32> to vector<2x350xbf16>
    %c3_52 = arith.constant 3 : index
    %c0_53 = arith.constant 0 : index
    %c0_54 = arith.constant 0 : index
    %104 = vector.load %arg6[%c3_52, %c0_53, %c0_54] : memref<4x350x512xbf16, #tpu.memory_space<vmem>>, vector<1x350x512xbf16>
    %105 = vector.shape_cast %104 : vector<1x350x512xbf16> to vector<350x512xbf16>
    %cst_55 = arith.constant dense<0.000000e+00> : vector<2x512xf32>
    %106 = tpu.matmul %103, %105, %cst_55 {dimension_numbers = #tpu.dot_dimension_numbers<[1], [0], [0], [1], [0, 0, 1, 1], [], []>} : vector<2x350xbf16>, vector<350x512xbf16>, vector<2x512xf32> -> vector<2x512xf32>
    %107 = arith.addf %100, %106 : vector<2x512xf32>
    %c0_56 = arith.constant 0 : index
    %c0_57 = arith.constant 0 : index
    %108 = vector.load %arg7[%c0_56, %c0_57] : memref<1x512xf32, #tpu.memory_space<vmem>>, vector<1x512xf32>
    %109 = vector.broadcast %108 : vector<1x512xf32> to vector<2x512xf32>
    %110 = arith.addf %107, %109 : vector<2x512xf32>
    %c0_58 = arith.constant 0 : index
    %c0_59 = arith.constant 0 : index
    %111 = vector.load %arg8[%c0_58, %c0_59] : memref<2x512xf32, #tpu.memory_space<vmem>>, vector<2x512xf32>
    tpu.vector_store %arg8[%c0_58, %c0_59], %110 {strides = array<i32>} : memref<2x512xf32, #tpu.memory_space<vmem>>, vector<2x512xf32>,
    %cst_60 = arith.constant dense<0.000000e+00> : vector<512xf32>
    %112 = vector.multi_reduction <add>, %110, %cst_60 [0] : vector<2x512xf32> to vector<512xf32>
    %113 = vector.shape_cast %112 : vector<512xf32> to vector<1x512xf32>
    %114 = arith.mulf %110, %110 : vector<2x512xf32>
    %cst_61 = arith.constant dense<0.000000e+00> : vector<512xf32>
    %115 = vector.multi_reduction <add>, %114, %cst_61 [0] : vector<2x512xf32> to vector<512xf32>
    %116 = vector.shape_cast %115 : vector<512xf32> to vector<1x512xf32>
    %cst_62 = arith.constant 0.000000e+00 : f32
    %117 = vector.broadcast %cst_62 : f32 to vector<1x8x512xf32>
    %c0_63 = arith.constant 0 : index
    %c0_64 = arith.constant 0 : index
    %c0_65 = arith.constant 0 : index
    %118 = vector.load %arg9[%c0_63, %c0_64, %c0_65] : memref<1x8x512xf32, #tpu.memory_space<vmem>>, vector<1x8x512xf32>
    tpu.vector_store %arg9[%c0_63, %c0_64, %c0_65], %117 {strides = array<i32>} : memref<1x8x512xf32, #tpu.memory_space<vmem>>, vector<1x8x512xf32>,
    %119 = vector.shape_cast %113 : vector<1x512xf32> to vector<1x1x512xf32>
    %c0_66 = arith.constant 0 : index
    %c0_67 = arith.constant 0 : index
    %c0_68 = arith.constant 0 : index
    %120 = vector.load %arg9[%c0_66, %c0_67, %c0_68] : memref<1x8x512xf32, #tpu.memory_space<vmem>>, vector<1x1x512xf32>
    tpu.vector_store %arg9[%c0_66, %c0_67, %c0_68], %119 {strides = array<i32>} : memref<1x8x512xf32, #tpu.memory_space<vmem>>, vector<1x1x512xf32>,
    %121 = vector.shape_cast %116 : vector<1x512xf32> to vector<1x1x512xf32>
    %c0_69 = arith.constant 0 : index
    %c1_70 = arith.constant 1 : index
    %c0_71 = arith.constant 0 : index
    %122 = vector.load %arg9[%c0_69, %c1_70, %c0_71] : memref<1x8x512xf32, #tpu.memory_space<vmem>>, vector<1x1x512xf32>
    tpu.vector_store %arg9[%c0_69, %c1_70, %c0_71], %121 {strides = array<i32>} : memref<1x8x512xf32, #tpu.memory_space<vmem>>, vector<1x1x512xf32>,
    return
  }
  func.func @transform_0(%arg0: i32) -> (i32, i32) {
    %c0_i32 = arith.constant 0 : i32
    %c0_i32_0 = arith.constant 0 : i32
    return %arg0, %c0_i32 : i32, i32
  }
  func.func @transform_1(%arg0: i32) -> (i32, i32, i32) {
    %c0_i32 = arith.constant 0 : i32
    %c0_i32_0 = arith.constant 0 : i32
    %c0_i32_1 = arith.constant 0 : i32
    %c0_i32_2 = arith.constant 0 : i32
    return %c0_i32, %c0_i32_0, %c0_i32_1 : i32, i32, i32
  }
  func.func @transform_2(%arg0: i32) -> (i32, i32) {
    %c0_i32 = arith.constant 0 : i32
    %c0_i32_0 = arith.constant 0 : i32
    %c0_i32_1 = arith.constant 0 : i32
    return %c0_i32, %c0_i32_0 : i32, i32
  }
  func.func @transform_3(%arg0: i32) -> (i32, i32, i32) {
    %c0_i32 = arith.constant 0 : i32
    %c0_i32_0 = arith.constant 0 : i32
    %c0_i32_1 = arith.constant 0 : i32
    %c0_i32_2 = arith.constant 0 : i32
    return %c0_i32, %c0_i32_0, %c0_i32_1 : i32, i32, i32
  }
  func.func @transform_4(%arg0: i32) -> (i32, i32) {
    %c0_i32 = arith.constant 0 : i32
    %c0_i32_0 = arith.constant 0 : i32
    %c0_i32_1 = arith.constant 0 : i32
    return %c0_i32, %c0_i32_0 : i32, i32
  }
  func.func @transform_5(%arg0: i32) -> (i32, i32, i32) {
    %c0_i32 = arith.constant 0 : i32
    %c0_i32_0 = arith.constant 0 : i32
    %c0_i32_1 = arith.constant 0 : i32
    %c0_i32_2 = arith.constant 0 : i32
    return %c0_i32, %c0_i32_0, %c0_i32_1 : i32, i32, i32
  }
  func.func @transform_6(%arg0: i32) -> (i32, i32) {
    %c0_i32 = arith.constant 0 : i32
    %c0_i32_0 = arith.constant 0 : i32
    %c0_i32_1 = arith.constant 0 : i32
    return %c0_i32, %c0_i32_0 : i32, i32
  }
  func.func @transform_7(%arg0: i32) -> (i32, i32) {
    %c0_i32 = arith.constant 0 : i32
    %c0_i32_0 = arith.constant 0 : i32
    return %arg0, %c0_i32 : i32, i32
  }
  func.func @transform_8(%arg0: i32) -> (i32, i32, i32) {
    %c0_i32 = arith.constant 0 : i32
    %c0_i32_0 = arith.constant 0 : i32
    %c0_i32_1 = arith.constant 0 : i32
    return %arg0, %c0_i32, %c0_i32_0 : i32, i32, i32
  }
}

module attributes {stable_mosaic.version = 11 : i64} {
  func.func @_bn_relu_fc2_kernel(%arg0: i32, %arg1: memref<2x512xf32, #tpu.memory_space<vmem>>, %arg2: memref<1x512xf32, #tpu.memory_space<vmem>>, %arg3: memref<1x512xf32, #tpu.memory_space<vmem>>, %arg4: memref<512x128xbf16, #tpu.memory_space<vmem>>, %arg5: memref<1x128xf32, #tpu.memory_space<vmem>>, %arg6: memref<2x128xf32, #tpu.memory_space<vmem>>) attributes {dimension_semantics = [#tpu.dimension_semantics<parallel>], iteration_bounds = array<i64: 1>, scalar_prefetch = 0 : i64, scratch_operands = 0 : i64, tpu.core_type = #tpu.core_type<tc>, window_params = [{transform_indices = @transform_0, window_bounds = array<i64: 2, 512>}, {pipeline_mode = #tpu.pipeline_mode<synchronous>, transform_indices = @transform_1, window_bounds = array<i64: 1, 512>}, {pipeline_mode = #tpu.pipeline_mode<synchronous>, transform_indices = @transform_2, window_bounds = array<i64: 1, 512>}, {pipeline_mode = #tpu.pipeline_mode<synchronous>, transform_indices = @transform_3, window_bounds = array<i64: 512, 128>}, {pipeline_mode = #tpu.pipeline_mode<synchronous>, transform_indices = @transform_4, window_bounds = array<i64: 1, 128>}, {transform_indices = @transform_5, window_bounds = array<i64: 2, 128>}]} {
    %c0 = arith.constant 0 : index
    %c0_0 = arith.constant 0 : index
    %0 = vector.load %arg1[%c0, %c0_0] : memref<2x512xf32, #tpu.memory_space<vmem>>, vector<2x512xf32>
    %c0_1 = arith.constant 0 : index
    %c0_2 = arith.constant 0 : index
    %1 = vector.load %arg2[%c0_1, %c0_2] : memref<1x512xf32, #tpu.memory_space<vmem>>, vector<1x512xf32>
    %2 = vector.broadcast %1 : vector<1x512xf32> to vector<2x512xf32>
    %3 = arith.mulf %0, %2 : vector<2x512xf32>
    %c0_3 = arith.constant 0 : index
    %c0_4 = arith.constant 0 : index
    %4 = vector.load %arg3[%c0_3, %c0_4] : memref<1x512xf32, #tpu.memory_space<vmem>>, vector<1x512xf32>
    %5 = vector.broadcast %4 : vector<1x512xf32> to vector<2x512xf32>
    %6 = arith.addf %3, %5 : vector<2x512xf32>
    %cst = arith.constant 0.000000e+00 : f32
    %7 = vector.broadcast %cst : f32 to vector<2x512xf32>
    %8 = arith.maximumf %6, %7 : vector<2x512xf32>
    %9 = arith.truncf %8 : vector<2x512xf32> to vector<2x512xbf16>
    %c0_5 = arith.constant 0 : index
    %c0_6 = arith.constant 0 : index
    %10 = vector.load %arg4[%c0_5, %c0_6] : memref<512x128xbf16, #tpu.memory_space<vmem>>, vector<512x128xbf16>
    %cst_7 = arith.constant dense<0.000000e+00> : vector<2x128xf32>
    %11 = tpu.matmul %9, %10, %cst_7 {dimension_numbers = #tpu.dot_dimension_numbers<[1], [0], [0], [1], [0, 0, 1, 1], [], []>} : vector<2x512xbf16>, vector<512x128xbf16>, vector<2x128xf32> -> vector<2x128xf32>
    %c0_8 = arith.constant 0 : index
    %c0_9 = arith.constant 0 : index
    %12 = vector.load %arg5[%c0_8, %c0_9] : memref<1x128xf32, #tpu.memory_space<vmem>>, vector<1x128xf32>
    %13 = vector.broadcast %12 : vector<1x128xf32> to vector<2x128xf32>
    %14 = arith.addf %11, %13 : vector<2x128xf32>
    %c0_10 = arith.constant 0 : index
    %c0_11 = arith.constant 0 : index
    %15 = vector.load %arg6[%c0_10, %c0_11] : memref<2x128xf32, #tpu.memory_space<vmem>>, vector<2x128xf32>
    tpu.vector_store %arg6[%c0_10, %c0_11], %14 {strides = array<i32>} : memref<2x128xf32, #tpu.memory_space<vmem>>, vector<2x128xf32>,
    return
  }
  func.func @transform_0(%arg0: i32) -> (i32, i32) {
    %c0_i32 = arith.constant 0 : i32
    %c0_i32_0 = arith.constant 0 : i32
    return %arg0, %c0_i32 : i32, i32
  }
  func.func @transform_1(%arg0: i32) -> (i32, i32) {
    %c0_i32 = arith.constant 0 : i32
    %c0_i32_0 = arith.constant 0 : i32
    %c0_i32_1 = arith.constant 0 : i32
    return %c0_i32, %c0_i32_0 : i32, i32
  }
  func.func @transform_2(%arg0: i32) -> (i32, i32) {
    %c0_i32 = arith.constant 0 : i32
    %c0_i32_0 = arith.constant 0 : i32
    %c0_i32_1 = arith.constant 0 : i32
    return %c0_i32, %c0_i32_0 : i32, i32
  }
  func.func @transform_3(%arg0: i32) -> (i32, i32) {
    %c0_i32 = arith.constant 0 : i32
    %c0_i32_0 = arith.constant 0 : i32
    %c0_i32_1 = arith.constant 0 : i32
    return %c0_i32, %c0_i32_0 : i32, i32
  }
  func.func @transform_4(%arg0: i32) -> (i32, i32) {
    %c0_i32 = arith.constant 0 : i32
    %c0_i32_0 = arith.constant 0 : i32
    %c0_i32_1 = arith.constant 0 : i32
    return %c0_i32, %c0_i32_0 : i32, i32
  }
  func.func @transform_5(%arg0: i32) -> (i32, i32) {
    %c0_i32 = arith.constant 0 : i32
    %c0_i32_0 = arith.constant 0 : i32
    return %arg0, %c0_i32 : i32, i32
  }
}

</mosaic_0001>

<llo_original>
// kernel: cnn2_forward.3
$region0: #{cnn2_forward.3}
  #allocation0 [shape = 'u32[]', space=smem, size = 0x4, offset = 0x4, fixed_abs, tag = 'smem constant byte address 0x4 - core index']
  #allocation1 [shape = 'u32[144,128]{1,0:T(1,128)}', space=vmem, size = 0x12000, scoped, tag = 'internal scratch']
  %s0 = inlined_call_operand.vmem [shape: f32[2,512], index: 0, kind: input, shape index: {}]
  %s1 = inlined_call_operand.vmem [shape: f32[1,512], index: 1, kind: input, shape index: {}]
  %s2 = inlined_call_operand.vmem [shape: f32[1,512], index: 2, kind: input, shape index: {}]
  %s3 = inlined_call_operand.vmem [shape: bf16[512,128], index: 3, kind: input, shape index: {}]
  %s4 = inlined_call_operand.vmem [shape: f32[1,128], index: 4, kind: input, shape index: {}]
  %s5 = inlined_call_operand.hbm [shape: f32[2,128], index: 5, kind: output, shape index: {}]
  %s6 = sld [smem:[#allocation0]]
  $region30: #{cnn2_forward.3} parent=0
    _
  %s8 = ssub.s32 1, %s6
  %s9 = scalar_select 0, %s8, %s6
  $region1: #{cnn2_forward.3} parent=0
    #allocation2 [shape = 'u8[1024]{0}', space=vmem, size = 0x400, scoped, tag = 'output window, operand 0, single buffered']
    #allocation3 [shape = 's32[1]{0}', space=sflag, size = 0x4, scoped, tag = 'scoped memory for cnn2_forward.3']
    %10 = vsyncpa [#allocation3], 0
    // Predicated region
    $region2: #{cnn2_forward.3} parent=1 // pred_check
      _
    $region3: #{cnn2_forward.3} parent=1 // pred_check_branch
      %12 = sbr.rel (0) target = $region5
    $region4: #{cnn2_forward.3} parent=1 // pred_region
      _
    $region5: #{cnn2_forward.3} parent=1 // pred_fallthru
      _
    // Predicated region
    $region6: #{cnn2_forward.3} parent=1 // pred_check
      _
    $region7: #{cnn2_forward.3} parent=1 // pred_check_branch
      %14 = sbr.rel (0) target = $region9
    $region8: #{cnn2_forward.3} parent=1 // pred_region
      _
    $region9: #{cnn2_forward.3} parent=1 // pred_fallthru
      _
    // Predicated region
    $region10: #{cnn2_forward.3} parent=1 // pred_check
      _
    $region11: #{cnn2_forward.3} parent=1 // pred_check_branch
      %16 = sbr.rel (0) target = $region13
    $region12: #{cnn2_forward.3} parent=1 // pred_region
      _
    $region13: #{cnn2_forward.3} parent=1 // pred_fallthru
      _
    // Predicated region
    $region14: #{cnn2_forward.3} parent=1 // pred_check
      _
    $region15: #{cnn2_forward.3} parent=1 // pred_check_branch
      %18 = sbr.rel (0) target = $region17
    $region16: #{cnn2_forward.3} parent=1 // pred_region
      _
    $region17: #{cnn2_forward.3} parent=1 // pred_fallthru
      _
    // Predicated region
    $region18: #{cnn2_forward.3} parent=1 // pred_check
      _
    $region19: #{cnn2_forward.3} parent=1 // pred_check_branch
      %20 = sbr.rel (0) target = $region21
    $region20: #{cnn2_forward.3} parent=1 // pred_region
      _
    $region21: #{cnn2_forward.3} parent=1 // pred_fallthru
      _
    %v22 = vld [vmem:[%s0] sm:$0xff]
    %v23 = vld [vmem:[%s1] sm:$0xf]
    %v25 = vlaneseq
    %v26 = vshrl.u32 %v25, 7
    %v27 = vsub.s32 0, %v26
    %v28 = vrot.slane %v23, %v27
    %v29 = vlaneseq
    %v30 = vshrl.u32 %v29, 7
    %v31 = vsub.s32 1, %v30
    %v32 = vrot.slane %v23, %v31
    %v33 = vlaneseq
    %v34 = vshrl.u32 %v33, 7
    %v35 = vsub.s32 2, %v34
    %v36 = vrot.slane %v23, %v35
    %v37 = vlaneseq
    %v38 = vshrl.u32 %v37, 7
    %v39 = vsub.s32 3, %v38
    %v40 = vrot.slane %v23, %v39
    %v41 = vcombine.low %v28, %v32
    %v42 = vcombine.low %v36, %v40
    %v44 = vunpack.c.l.s4 1983009808
    %v45 = vunpack.c.0.s8 %v44
    %v46 = vlaneseq
    %v47 = vshrl.u32 %v46, 7
    %v48 = vsub.s32 %v45, %v47
    %v49 = vrot.slane %v41, %v48
    %v51 = vunpack.c.l.s4 1983009808
    %v52 = vunpack.c.0.s8 %v51
    %v53 = vlaneseq
    %v54 = vshrl.u32 %v53, 7
    %v55 = vsub.s32 %v52, %v54
    %v56 = vrot.slane %v42, %v55
    %v57 = vcombine.low %v49, %v56
    %v59 = vmul.f32 %v22, %v57
    %v60 = vld [vmem:[%s2] sm:$0xf]
    %v62 = vlaneseq
    %v63 = vshrl.u32 %v62, 7
    %v64 = vsub.s32 0, %v63
    %v65 = vrot.slane %v60, %v64
    %v66 = vlaneseq
    %v67 = vshrl.u32 %v66, 7
    %v68 = vsub.s32 1, %v67
    %v69 = vrot.slane %v60, %v68
    %v70 = vlaneseq
    %v71 = vshrl.u32 %v70, 7
    %v72 = vsub.s32 2, %v71
    %v73 = vrot.slane %v60, %v72
    %v74 = vlaneseq
    %v75 = vshrl.u32 %v74, 7
    %v76 = vsub.s32 3, %v75
    %v77 = vrot.slane %v60, %v76
    %v78 = vcombine.low %v65, %v69
    %v79 = vcombine.low %v73, %v77
    %v81 = vunpack.c.l.s4 1983009808
    %v82 = vunpack.c.0.s8 %v81
    %v83 = vlaneseq
    %v84 = vshrl.u32 %v83, 7
    %v85 = vsub.s32 %v82, %v84
    %v86 = vrot.slane %v78, %v85
    %v88 = vunpack.c.l.s4 1983009808
    %v89 = vunpack.c.0.s8 %v88
    %v90 = vlaneseq
    %v91 = vshrl.u32 %v90, 7
    %v92 = vsub.s32 %v89, %v91
    %v93 = vrot.slane %v79, %v92
    %v94 = vcombine.low %v86, %v93
    %v96 = vadd.f32 %v59, %v94
    %v97 = vmax.f32 %v96, 0.0
    %v99 = vcombine.high %v97, %v97
    %v101 = vunpack.c.l.s4 1983009808
    %v102 = vunpack.c.0.s8 %v101
    %v103 = vlaneseq
    %v104 = vshrl.u32 %v103, 7
    %v105 = vsub.s32 %v102, %v104
    %v106 = vrot.slane %v97, %v105
    %v108 = vunpack.c.l.s4 1983009808
    %v109 = vunpack.c.0.s8 %v108
    %v110 = vlaneseq
    %v111 = vshrl.u32 %v110, 7
    %v112 = vsub.s32 %v109, %v111
    %v113 = vrot.slane %v99, %v112
    %v114 = vcombine.high %v106, %v106
    %v115 = vcombine.high %v113, %v113
    %v120 = vpack.c.bf16 %v106, %v106
    %v121 = vpack.c.bf16 %v114, %v114
    %v122 = vpack.c.bf16 %v113, %v113
    %v123 = vpack.c.bf16 %v115, %v115
    %v124 = vld [vmem:[%s3] sm:$0xf]
    %v125 = vld [vmem:[%s3 + $0x4] sm:$0xf]
    %v126 = vld [vmem:[%s3 + $0x8] sm:$0xf]
    %v127 = vld [vmem:[%s3 + $0xc] sm:$0xf]
    %v128 = vld [vmem:[%s3 + $0x10] sm:$0xf]
    %v129 = vld [vmem:[%s3 + $0x14] sm:$0xf]
    %v130 = vld [vmem:[%s3 + $0x18] sm:$0xf]
    %v131 = vld [vmem:[%s3 + $0x1c] sm:$0xf]
    %v132 = vld [vmem:[%s3 + $0x20] sm:$0xf]
    %v133 = vld [vmem:[%s3 + $0x24] sm:$0xf]
    %v134 = vld [vmem:[%s3 + $0x28] sm:$0xf]
    %v135 = vld [vmem:[%s3 + $0x2c] sm:$0xf]
    %v136 = vld [vmem:[%s3 + $0x30] sm:$0xf]
    %v137 = vld [vmem:[%s3 + $0x34] sm:$0xf]
    %v138 = vld [vmem:[%s3 + $0x38] sm:$0xf]
    %v139 = vld [vmem:[%s3 + $0x3c] sm:$0xf]
    %v140 = vld [vmem:[%s3 + $0x40] sm:$0xf]
    %v141 = vld [vmem:[%s3 + $0x44] sm:$0xf]
    %v142 = vld [vmem:[%s3 + $0x48] sm:$0xf]
    %v143 = vld [vmem:[%s3 + $0x4c] sm:$0xf]
    %v144 = vld [vmem:[%s3 + $0x50] sm:$0xf]
    %v145 = vld [vmem:[%s3 + $0x54] sm:$0xf]
    %v146 = vld [vmem:[%s3 + $0x58] sm:$0xf]
    %v147 = vld [vmem:[%s3 + $0x5c] sm:$0xf]
    %v148 = vld [vmem:[%s3 + $0x60] sm:$0xf]
    %v149 = vld [vmem:[%s3 + $0x64] sm:$0xf]
    %v150 = vld [vmem:[%s3 + $0x68] sm:$0xf]
    %v151 = vld [vmem:[%s3 + $0x6c] sm:$0xf]
    %v152 = vld [vmem:[%s3 + $0x70] sm:$0xf]
    %v153 = vld [vmem:[%s3 + $0x74] sm:$0xf]
    %v154 = vld [vmem:[%s3 + $0x78] sm:$0xf]
    %v155 = vld [vmem:[%s3 + $0x7c] sm:$0xf]
    %v156 = vld [vmem:[%s3 + $0x80] sm:$0xf]
    %v157 = vld [vmem:[%s3 + $0x84] sm:$0xf]
    %v158 = vld [vmem:[%s3 + $0x88] sm:$0xf]
    %v159 = vld [vmem:[%s3 + $0x8c] sm:$0xf]
    %v160 = vld [vmem:[%s3 + $0x90] sm:$0xf]
    %v161 = vld [vmem:[%s3 + $0x94] sm:$0xf]
    %v162 = vld [vmem:[%s3 + $0x98] sm:$0xf]
    %v163 = vld [vmem:[%s3 + $0x9c] sm:$0xf]
    %v164 = vld [vmem:[%s3 + $0xa0] sm:$0xf]
    %v165 = vld [vmem:[%s3 + $0xa4] sm:$0xf]
    %v166 = vld [vmem:[%s3 + $0xa8] sm:$0xf]
    %v167 = vld [vmem:[%s3 + $0xac] sm:$0xf]
    %v168 = vld [vmem:[%s3 + $0xb0] sm:$0xf]
    %v169 = vld [vmem:[%s3 + $0xb4] sm:$0xf]
    %v170 = vld [vmem:[%s3 + $0xb8] sm:$0xf]
    %v171 = vld [vmem:[%s3 + $0xbc] sm:$0xf]
    %v172 = vld [vmem:[%s3 + $0xc0] sm:$0xf]
    %v173 = vld [vmem:[%s3 + $0xc4] sm:$0xf]
    %v174 = vld [vmem:[%s3 + $0xc8] sm:$0xf]
    %v175 = vld [vmem:[%s3 + $0xcc] sm:$0xf]
    %v176 = vld [vmem:[%s3 + $0xd0] sm:$0xf]
    %v177 = vld [vmem:[%s3 + $0xd4] sm:$0xf]
    %v178 = vld [vmem:[%s3 + $0xd8] sm:$0xf]
    %v179 = vld [vmem:[%s3 + $0xdc] sm:$0xf]
    %v180 = vld [vmem:[%s3 + $0xe0] sm:$0xf]
    %v181 = vld [vmem:[%s3 + $0xe4] sm:$0xf]
    %v182 = vld [vmem:[%s3 + $0xe8] sm:$0xf]
    %v183 = vld [vmem:[%s3 + $0xec] sm:$0xf]
    %v184 = vld [vmem:[%s3 + $0xf0] sm:$0xf]
    %v185 = vld [vmem:[%s3 + $0xf4] sm:$0xf]
    %v186 = vld [vmem:[%s3 + $0xf8] sm:$0xf]
    %v187 = vld [vmem:[%s3 + $0xfc] sm:$0xf]
    %v188 = vld [vmem:[%s4] sm:$0x1]
    %v190 = vlaneseq
    %v191 = vshrl.u32 %v190, 7
    %v192 = vsub.s32 0, %v191
    %v193 = vrot.slane %v188, %v192
    %v259 = vunpack.c.l.b16 %v124
    %v260 = vunpack.c.l.b16 %v125
    %v261 = vunpack.c.l.b16 %v126
    %v262 = vunpack.c.l.b16 %v127
    %v263 = vunpack.c.l.b16 %v128
    %v264 = vunpack.c.l.b16 %v129
    %v265 = vunpack.c.l.b16 %v130
    %v266 = vunpack.c.l.b16 %v131
    %v267 = vunpack.c.l.b16 %v132
    %v268 = vunpack.c.l.b16 %v133
    %v269 = vunpack.c.l.b16 %v134
    %v270 = vunpack.c.l.b16 %v135
    %v271 = vunpack.c.l.b16 %v136
    %v272 = vunpack.c.l.b16 %v137
    %v273 = vunpack.c.l.b16 %v138
    %v274 = vunpack.c.l.b16 %v139
    %v275 = vunpack.c.l.b16 %v140
    %v276 = vunpack.c.l.b16 %v141
    %v277 = vunpack.c.l.b16 %v142
    %v278 = vunpack.c.l.b16 %v143
    %v279 = vunpack.c.l.b16 %v144
    %v280 = vunpack.c.l.b16 %v145
    %v281 = vunpack.c.l.b16 %v146
    %v282 = vunpack.c.l.b16 %v147
    %v283 = vunpack.c.l.b16 %v148
    %v284 = vunpack.c.l.b16 %v149
    %v285 = vunpack.c.l.b16 %v150
    %v286 = vunpack.c.l.b16 %v151
    %v287 = vunpack.c.l.b16 %v152
    %v288 = vunpack.c.l.b16 %v153
    %v289 = vunpack.c.l.b16 %v154
    %v290 = vunpack.c.l.b16 %v155
    %v291 = vunpack.c.l.b16 %v156
    %v292 = vunpack.c.l.b16 %v157
    %v293 = vunpack.c.l.b16 %v158
    %v294 = vunpack.c.l.b16 %v159
    %v295 = vunpack.c.l.b16 %v160
    %v296 = vunpack.c.l.b16 %v161
    %v297 = vunpack.c.l.b16 %v162
    %v298 = vunpack.c.l.b16 %v163
    %v299 = vunpack.c.l.b16 %v164
    %v300 = vunpack.c.l.b16 %v165
    %v301 = vunpack.c.l.b16 %v166
    %v302 = vunpack.c.l.b16 %v167
    %v303 = vunpack.c.l.b16 %v168
    %v304 = vunpack.c.l.b16 %v169
    %v305 = vunpack.c.l.b16 %v170
    %v306 = vunpack.c.l.b16 %v171
    %v307 = vunpack.c.l.b16 %v172
    %v308 = vunpack.c.l.b16 %v173
    %v309 = vunpack.c.l.b16 %v174
    %v310 = vunpack.c.l.b16 %v175
    %v311 = vunpack.c.l.b16 %v176
    %v312 = vunpack.c.l.b16 %v177
    %v313 = vunpack.c.l.b16 %v178
    %v314 = vunpack.c.l.b16 %v179
    %v315 = vunpack.c.l.b16 %v180
    %v316 = vunpack.c.l.b16 %v181
    %v317 = vunpack.c.l.b16 %v182
    %v318 = vunpack.c.l.b16 %v183
    %v319 = vunpack.c.l.b16 %v184
    %v320 = vunpack.c.l.b16 %v185
    %v321 = vunpack.c.l.b16 %v186
    %v322 = vunpack.c.l.b16 %v187
    %v323 = vpack.c.b16 %v260, %v259
    %v324 = vpack.c.b16 %v262, %v261
    %v325 = vpack.c.b16 %v264, %v263
    %v326 = vpack.c.b16 %v266, %v265
    %v327 = vpack.c.b16 %v268, %v267
    %v328 = vpack.c.b16 %v270, %v269
    %v329 = vpack.c.b16 %v272, %v271
    %v330 = vpack.c.b16 %v274, %v273
    %v331 = vpack.c.b16 %v276, %v275
    %v332 = vpack.c.b16 %v278, %v277
    %v333 = vpack.c.b16 %v280, %v279
    %v334 = vpack.c.b16 %v282, %v281
    %v335 = vpack.c.b16 %v284, %v283
    %v336 = vpack.c.b16 %v286, %v285
    %v337 = vpack.c.b16 %v288, %v287
    %v338 = vpack.c.b16 %v290, %v289
    %v339 = vpack.c.b16 %v292, %v291
    %v340 = vpack.c.b16 %v294, %v293
    %v341 = vpack.c.b16 %v296, %v295
    %v342 = vpack.c.b16 %v298, %v297
    %v343 = vpack.c.b16 %v300, %v299
    %v344 = vpack.c.b16 %v302, %v301
    %v345 = vpack.c.b16 %v304, %v303
    %v346 = vpack.c.b16 %v306, %v305
    %v347 = vpack.c.b16 %v308, %v307
    %v348 = vpack.c.b16 %v310, %v309
    %v349 = vpack.c.b16 %v312, %v311
    %v350 = vpack.c.b16 %v314, %v313
    %v351 = vpack.c.b16 %v316, %v315
    %v352 = vpack.c.b16 %v318, %v317
    %v353 = vpack.c.b16 %v320, %v319
    %v354 = vpack.c.b16 %v322, %v321
    %387 = vmatprep.subr.bf16.mxu0 0
    %388 = vmatpush1.bf16.msra.mxu0 %v323
    %389 = vmatprep.subr.bf16.mxu0 0
    %390 = vmatpush1.bf16.msra.mxu0 %v324
    %391 = vmatprep.subr.bf16.mxu0 0
    %392 = vmatpush1.bf16.msra.mxu0 %v325
    %393 = vmatprep.subr.bf16.mxu0 0
    %394 = vmatpush1.bf16.msra.mxu0 %v326
    %395 = vmatprep.subr.bf16.mxu0 0
    %396 = vmatpush1.bf16.msra.mxu0 %v327
    %397 = vmatprep.subr.bf16.mxu0 0
    %398 = vmatpush1.bf16.msra.mxu0 %v328
    %399 = vmatprep.subr.bf16.mxu0 0
    %400 = vmatpush1.bf16.msra.mxu0 %v329
    %401 = vmatprep.subr.bf16.mxu0 0
    %402 = vmatpush1.bf16.msra.mxu0 %v330
    %403 = vmatprep.subr.bf16.mxu0 0
    %404 = vmatpush1.bf16.msra.mxu0 %v331
    %405 = vmatprep.subr.bf16.mxu0 0
    %406 = vmatpush1.bf16.msra.mxu0 %v332
    %407 = vmatprep.subr.bf16.mxu0 0
    %408 = vmatpush1.bf16.msra.mxu0 %v333
    %409 = vmatprep.subr.bf16.mxu0 0
    %410 = vmatpush1.bf16.msra.mxu0 %v334
    %411 = vmatprep.subr.bf16.mxu0 0
    %412 = vmatpush1.bf16.msra.mxu0 %v335
    %413 = vmatprep.subr.bf16.mxu0 0
    %414 = vmatpush1.bf16.msra.mxu0 %v336
    %415 = vmatprep.subr.bf16.mxu0 0
    %416 = vmatpush1.bf16.msra.mxu0 %v337
    %417 = vmatprep.subr.bf16.mxu0 0
    %418 = vmatpush1.bf16.msra.mxu0 %v338
    %419 = vmatprep.mubr.bf16.mxu0 %v121
    %420 = vmatmul.mubr.bf16.gmra.mrb[0].mxu0 %v120
    %v421 = vpop.f32.mrb[0].mxu0
    %v422 = vadd.f32 %v193, %v421
    %v423 = vpop.f32.mrb[0].mxu0
    %v424 = vpop.f32.mrb[0].mxu0
    %v425 = vpop.f32.mrb[0].mxu0
    %426 = vdwg.mxu0
    %427 = vmatprep.subr.bf16.mxu0 0
    %428 = vmatpush1.bf16.msra.mxu0 %v339
    %429 = vmatprep.subr.bf16.mxu0 0
    %430 = vmatpush1.bf16.msra.mxu0 %v340
    %431 = vmatprep.subr.bf16.mxu0 0
    %432 = vmatpush1.bf16.msra.mxu0 %v341
    %433 = vmatprep.subr.bf16.mxu0 0
    %434 = vmatpush1.bf16.msra.mxu0 %v342
    %435 = vmatprep.subr.bf16.mxu0 0
    %436 = vmatpush1.bf16.msra.mxu0 %v343
    %437 = vmatprep.subr.bf16.mxu0 0
    %438 = vmatpush1.bf16.msra.mxu0 %v344
    %439 = vmatprep.subr.bf16.mxu0 0
    %440 = vmatpush1.bf16.msra.mxu0 %v345
    %441 = vmatprep.subr.bf16.mxu0 0
    %442 = vmatpush1.bf16.msra.mxu0 %v346
    %443 = vmatprep.subr.bf16.mxu0 0
    %444 = vmatpush1.bf16.msra.mxu0 %v347
    %445 = vmatprep.subr.bf16.mxu0 0
    %446 = vmatpush1.bf16.msra.mxu0 %v348
    %447 = vmatprep.subr.bf16.mxu0 0
    %448 = vmatpush1.bf16.msra.mxu0 %v349
    %449 = vmatprep.subr.bf16.mxu0 0
    %450 = vmatpush1.bf16.msra.mxu0 %v350
    %451 = vmatprep.subr.bf16.mxu0 0
    %452 = vmatpush1.bf16.msra.mxu0 %v351
    %453 = vmatprep.subr.bf16.mxu0 0
    %454 = vmatpush1.bf16.msra.mxu0 %v352
    %455 = vmatprep.subr.bf16.mxu0 0
    %456 = vmatpush1.bf16.msra.mxu0 %v353
    %457 = vmatprep.subr.bf16.mxu0 0
    %458 = vmatpush1.bf16.msra.mxu0 %v354
    %459 = vmatprep.mubr.bf16.mxu0 %v123
    %460 = vmatmul.mubr.bf16.gmra.mrb[0].mxu0 %v122
    %v461 = vpop.f32.mrb[0].mxu0
    %v462 = vadd.f32 %v422, %v461
    %v463 = vpop.f32.mrb[0].mxu0
    %v464 = vpop.f32.mrb[0].mxu0
    %v465 = vpop.f32.mrb[0].mxu0
    %466 = vdwg.mxu0
    %467 = vst [vmem:[#allocation2] sm:$0x3] %v462
    // Predicated region
    $region22: #{cnn2_forward.3} parent=1 // pred_check
      _
    $region23: #{cnn2_forward.3} parent=1 // pred_check_branch
      %469 = sbr.rel (0) target = $region25
    $region24: #{cnn2_forward.3} parent=1 // pred_region
      %s471 = ssub.s32 32, 32
      %472 = vsyncadd [#allocation3], %s471
      %s474 = sshll.u32 [#allocation2], 4
      %s475 = int_to_ptr.vmem [resolvable:$true] %s474
      %477 = dma.vmem_to_hbm [thread:$0]  %s475, 32, %s5, [#allocation3]
    $region25: #{cnn2_forward.3} parent=1 // pred_fallthru
      _
    // Predicated region
    $region26: #{cnn2_forward.3} parent=1 // pred_check
      _
    $region27: #{cnn2_forward.3} parent=1 // pred_check_branch
      %479 = sbr.rel (0) target = $region29
    $region28: #{cnn2_forward.3} parent=1 // pred_region
      %480 = dma.done [#allocation3], 32
    $region29: #{cnn2_forward.3} parent=1 // pred_fallthru
      _
    %481 = vsyncpa [#allocation3], 1

// kernel: cnn2_forward.2
$region0: #{cnn2_forward.2}
  #allocation0 [shape = 'u32[]', space=smem, size = 0x4, offset = 0x4, fixed_abs, tag = 'smem constant byte address 0x4 - core index']
  #allocation1 [shape = 'u32[144,128]{1,0:T(1,128)}', space=vmem, size = 0x12000, scoped, tag = 'internal scratch']
  %s0 = inlined_call_operand.vmem [shape: bf16[56,28], index: 0, kind: input, shape index: {}]
  %s1 = inlined_call_operand.vmem [shape: bf16[5,28,480], index: 1, kind: input, shape index: {}]
  %s2 = inlined_call_operand.vmem [shape: f32[1,480], index: 2, kind: input, shape index: {}]
  %s3 = inlined_call_operand.vmem [shape: bf16[5,460,400], index: 3, kind: input, shape index: {}]
  %s4 = inlined_call_operand.vmem [shape: f32[1,400], index: 4, kind: input, shape index: {}]
  %s5 = inlined_call_operand.vmem [shape: bf16[4,350,512], index: 5, kind: input, shape index: {}]
  %s6 = inlined_call_operand.vmem [shape: f32[1,512], index: 6, kind: input, shape index: {}]
  %s7 = inlined_call_operand.vmem [shape: f32[2,512], index: 7, kind: output, shape index: {0}]
  %s8 = inlined_call_operand.vmem [shape: f32[1,8,512], index: 8, kind: output, shape index: {1}]
  %9 = xla_tuple %s7, %s8
  %s10 = sld [smem:[#allocation0]]
  $region46: #{cnn2_forward.2} parent=0
    _
  %s12 = ssub.s32 1, %s10
  %s13 = scalar_select 0, %s12, %s10
  // Predicated region
  $region2: #{cnn2_forward.2} parent=0 // pred_check
    _
  $region3: #{cnn2_forward.2} parent=0 // pred_check_branch
    %15 = sbr.rel (0) target = $region5
  $region4: #{cnn2_forward.2} parent=0 // pred_region
    _
  $region5: #{cnn2_forward.2} parent=0 // pred_fallthru
    _
  // Predicated region
  $region6: #{cnn2_forward.2} parent=0 // pred_check
    _
  $region7: #{cnn2_forward.2} parent=0 // pred_check_branch
    %17 = sbr.rel (0) target = $region9
  $region8: #{cnn2_forward.2} parent=0 // pred_region
    _
  $region9: #{cnn2_forward.2} parent=0 // pred_fallthru
    _
  // Predicated region
  $region10: #{cnn2_forward.2} parent=0 // pred_check
    _
  $region11: #{cnn2_forward.2} parent=0 // pred_check_branch
    %19 = sbr.rel (0) target = $region13
  $region12: #{cnn2_forward.2} parent=0 // pred_region
    _
  $region13: #{cnn2_forward.2} parent=0 // pred_fallthru
    _
  // Predicated region
  $region14: #{cnn2_forward.2} parent=0 // pred_check
    _
  $region15: #{cnn2_forward.2} parent=0 // pred_check_branch
    %21 = sbr.rel (0) target = $region17
  $region16: #{cnn2_forward.2} parent=0 // pred_region
    _
  $region17: #{cnn2_forward.2} parent=0 // pred_fallthru
    _
  // Predicated region
  $region18: #{cnn2_forward.2} parent=0 // pred_check
    _
  $region19: #{cnn2_forward.2} parent=0 // pred_check_branch
    %23 = sbr.rel (0) target = $region21
  $region20: #{cnn2_forward.2} parent=0 // pred_region
    _
  $region21: #{cnn2_forward.2} parent=0 // pred_fallthru
    _
  // Predicated region
  $region22: #{cnn2_forward.2} parent=0 // pred_check
    _
  $region23: #{cnn2_forward.2} parent=0 // pred_check_branch
    %25 = sbr.rel (0) target = $region25
  $region24: #{cnn2_forward.2} parent=0 // pred_region
    _
  $region25: #{cnn2_forward.2} parent=0 // pred_fallthru
    _
  // Predicated region
  $region26: #{cnn2_forward.2} parent=0 // pred_check
    _
  $region27: #{cnn2_forward.2} parent=0 // pred_check_branch
    %27 = sbr.rel (0) target = $region29
  $region28: #{cnn2_forward.2} parent=0 // pred_region
    _
  $region29: #{cnn2_forward.2} parent=0 // pred_fallthru
    _
  %v29 = vld [vmem:[%s0] sm:$0xf]
  %v30 = vld [vmem:[%s0 + $0x4] sm:$0xf]
  %v31 = vld [vmem:[%s0 + $0x8] sm:$0xf]
  %v32 = vld [vmem:[%s0 + $0xc] sm:$0xf]
  %v33 = vld [vmem:[%s0 + $0x10] sm:$0xf]
  %v34 = vld [vmem:[%s0 + $0x14] sm:$0xf]
  %v35 = vld [vmem:[%s0 + $0x18] sm:$0xf]
  %v36 = vld [vmem:[%s1] sm:$0xff]
  %v37 = vld [vmem:[%s1 + $0x8] sm:$0xff]
  %v38 = vld [vmem:[%s1 + $0x10] sm:$0xff]
  %v39 = vld [vmem:[%s1 + $0x18] sm:$0xff]
  %v40 = vld [vmem:[%s1 + $0x20] sm:$0xff]
  %v41 = vld [vmem:[%s1 + $0x28] sm:$0xff]
  %v42 = vld [vmem:[%s1 + $0x30] sm:$0x33]
  %v43 = vld [vmem:[%s1 + $0x38] sm:$0x33]
  %v51 = vunpack.c.l.b16 %v29
  %v52 = vunpack.c.l.b16 %v30
  %v53 = vunpack.c.l.b16 %v31
  %v54 = vunpack.c.l.b16 %v32
  %v55 = vunpack.c.l.b16 %v33
  %v56 = vunpack.c.l.b16 %v34
  %v57 = vunpack.c.l.b16 %v35
  %v58 = vpack.c.b16 %v52, %v51
  %v59 = vpack.c.b16 %v54, %v53
  %v60 = vpack.c.b16 %v56, %v55
  %v61 = vpack.c.b16 %v57, %v57
  %v70 = vunpack.c.l.b16 %v36
  %v71 = vunpack.c.h.b16 %v36
  %v72 = vunpack.c.l.b16 %v37
  %v73 = vunpack.c.h.b16 %v37
  %v74 = vunpack.c.l.b16 %v38
  %v75 = vunpack.c.h.b16 %v38
  %v76 = vunpack.c.l.b16 %v39
  %v77 = vunpack.c.h.b16 %v39
  %v78 = vunpack.c.l.b16 %v40
  %v79 = vunpack.c.h.b16 %v40
  %v80 = vunpack.c.l.b16 %v41
  %v81 = vunpack.c.h.b16 %v41
  %v82 = vunpack.c.l.b16 %v42
  %v83 = vunpack.c.h.b16 %v42
  %v84 = vunpack.c.l.b16 %v43
  %v85 = vunpack.c.h.b16 %v43
  %v86 = vpack.c.b16 %v74, %v70
  %v87 = vpack.c.b16 %v75, %v71
  %v88 = vpack.c.b16 %v76, %v72
  %v89 = vpack.c.b16 %v77, %v73
  %v90 = vpack.c.b16 %v82, %v78
  %v91 = vpack.c.b16 %v83, %v79
  %v92 = vpack.c.b16 %v84, %v80
  %v93 = vpack.c.b16 %v85, %v81
  %vm98 = vcmask 228352
  %v100 = vsel %vm98, %v58, 0
  %v103 = vsel %vm98, %v59, 0
  %v106 = vsel %vm98, %v60, 0
  %v109 = vsel %vm98, %v61, 0
  %vm111 = vcmask 1045504
  %v113 = vsel %vm111, %v90, 0
  %v116 = vsel %vm111, %v91, 0
  %v119 = vsel %vm111, %v92, 0
  %v122 = vsel %vm111, %v93, 0
  %124 = vmatprep.subr.bf16.mxu0 %v87
  %125 = vmatpush1.bf16.msra.mxu0 %v86
  %126 = vmatprep.subr.bf16.mxu0 %v116
  %127 = vmatpush1.bf16.msra.mxu0 %v113
  %128 = vmatprep.subr.bf16.mxu0 0
  %129 = vmatpush1.bf16.msra.mxu0 0
  %130 = vmatprep.subr.bf16.mxu0 0
  %131 = vmatpush1.bf16.msra.mxu0 0
  %132 = vmatprep.subr.bf16.mxu0 0
  %133 = vmatpush1.bf16.msra.mxu0 0
  %134 = vmatprep.subr.bf16.mxu0 0
  %135 = vmatpush1.bf16.msra.mxu0 0
  %136 = vmatprep.subr.bf16.mxu0 0
  %137 = vmatpush1.bf16.msra.mxu0 0
  %138 = vmatprep.subr.bf16.mxu0 0
  %139 = vmatpush1.bf16.msra.mxu0 0
  %140 = vmatprep.subr.bf16.mxu0 0
  %141 = vmatpush1.bf16.msra.mxu0 0
  %142 = vmatprep.subr.bf16.mxu0 0
  %143 = vmatpush1.bf16.msra.mxu0 0
  %144 = vmatprep.subr.bf16.mxu0 0
  %145 = vmatpush1.bf16.msra.mxu0 0
  %146 = vmatprep.subr.bf16.mxu0 0
  %147 = vmatpush1.bf16.msra.mxu0 0
  %148 = vmatprep.subr.bf16.mxu0 0
  %149 = vmatpush1.bf16.msra.mxu0 0
  %150 = vmatprep.subr.bf16.mxu0 0
  %151 = vmatpush1.bf16.msra.mxu0 0
  %152 = vmatprep.subr.bf16.mxu0 0
  %153 = vmatpush1.bf16.msra.mxu0 0
  %154 = vmatprep.subr.bf16.mxu0 0
  %155 = vmatpush1.bf16.msra.mxu0 0
  %156 = vmatprep.mubr.bf16.mxu0 0
  %157 = vmatmul.mubr.bf16.gmra.mrb[0].mxu0 %v100
  %v158 = vpop.f32.mrb[0].mxu0
  %v159 = vadd.f32 0.0, %v158
  %v160 = vpop.f32.mrb[0].mxu0
  %v161 = vadd.f32 0.0, %v160
  %v162 = vpop.f32.mrb[0].mxu0
  %v163 = vadd.f32 0.0, %v162
  %v164 = vpop.f32.mrb[0].mxu0
  %v165 = vadd.f32 0.0, %v164
  %166 = vmatprep.mubr.bf16.mxu0 0
  %167 = vmatmul.mubr.bf16.gmra.mrb[0].mxu0 %v103
  %v168 = vpop.f32.mrb[0].mxu0
  %v169 = vadd.f32 0.0, %v168
  %v170 = vpop.f32.mrb[0].mxu0
  %v171 = vadd.f32 0.0, %v170
  %v172 = vpop.f32.mrb[0].mxu0
  %v173 = vadd.f32 0.0, %v172
  %v174 = vpop.f32.mrb[0].mxu0
  %v175 = vadd.f32 0.0, %v174
  %176 = vmatprep.mubr.bf16.mxu0 0
  %177 = vmatmul.mubr.bf16.gmra.mrb[0].mxu0 %v106
  %v178 = vpop.f32.mrb[0].mxu0
  %v179 = vadd.f32 0.0, %v178
  %v180 = vpop.f32.mrb[0].mxu0
  %v181 = vadd.f32 0.0, %v180
  %v182 = vpop.f32.mrb[0].mxu0
  %v183 = vadd.f32 0.0, %v182
  %v184 = vpop.f32.mrb[0].mxu0
  %v185 = vadd.f32 0.0, %v184
  %186 = vmatprep.mubr.bf16.mxu0 0
  %187 = vmatmul.mubr.bf16.gmra.mrb[0].mxu0 %v109
  %v188 = vpop.f32.mrb[0].mxu0
  %v189 = vadd.f32 0.0, %v188
  %v190 = vpop.f32.mrb[0].mxu0
  %v191 = vadd.f32 0.0, %v190
  %v192 = vpop.f32.mrb[0].mxu0
  %v193 = vpop.f32.mrb[0].mxu0
  %194 = vdwg.mxu0
  %195 = vmatprep.subr.bf16.mxu0 %v89
  %196 = vmatpush1.bf16.msra.mxu0 %v88
  %197 = vmatprep.subr.bf16.mxu0 %v122
  %198 = vmatpush1.bf16.msra.mxu0 %v119
  %199 = vmatprep.subr.bf16.mxu0 0
  %200 = vmatpush1.bf16.msra.mxu0 0
  %201 = vmatprep.subr.bf16.mxu0 0
  %202 = vmatpush1.bf16.msra.mxu0 0
  %203 = vmatprep.subr.bf16.mxu0 0
  %204 = vmatpush1.bf16.msra.mxu0 0
  %205 = vmatprep.subr.bf16.mxu0 0
  %206 = vmatpush1.bf16.msra.mxu0 0
  %207 = vmatprep.subr.bf16.mxu0 0
  %208 = vmatpush1.bf16.msra.mxu0 0
  %209 = vmatprep.subr.bf16.mxu0 0
  %210 = vmatpush1.bf16.msra.mxu0 0
  %211 = vmatprep.subr.bf16.mxu0 0
  %212 = vmatpush1.bf16.msra.mxu0 0
  %213 = vmatprep.subr.bf16.mxu0 0
  %214 = vmatpush1.bf16.msra.mxu0 0
  %215 = vmatprep.subr.bf16.mxu0 0
  %216 = vmatpush1.bf16.msra.mxu0 0
  %217 = vmatprep.subr.bf16.mxu0 0
  %218 = vmatpush1.bf16.msra.mxu0 0
  %219 = vmatprep.subr.bf16.mxu0 0
  %220 = vmatpush1.bf16.msra.mxu0 0
  %221 = vmatprep.subr.bf16.mxu0 0
  %222 = vmatpush1.bf16.msra.mxu0 0
  %223 = vmatprep.subr.bf16.mxu0 0
  %224 = vmatpush1.bf16.msra.mxu0 0
  %225 = vmatprep.subr.bf16.mxu0 0
  %226 = vmatpush1.bf16.msra.mxu0 0
  %227 = vmatprep.mubr.bf16.mxu0 0
  %228 = vmatmul.mubr.bf16.gmra.mrb[0].mxu0 %v100
  %v229 = vpop.f32.mrb[0].mxu0
  %v230 = vadd.f32 0.0, %v229
  %v231 = vpop.f32.mrb[0].mxu0
  %v232 = vadd.f32 0.0, %v231
  %v233 = vpop.f32.mrb[0].mxu0
  %v234 = vadd.f32 0.0, %v233
  %v235 = vpop.f32.mrb[0].mxu0
  %v236 = vadd.f32 0.0, %v235
  %237 = vmatprep.mubr.bf16.mxu0 0
  %238 = vmatmul.mubr.bf16.gmra.mrb[0].mxu0 %v103
  %v239 = vpop.f32.mrb[0].mxu0
  %v240 = vadd.f32 0.0, %v239
  %v241 = vpop.f32.mrb[0].mxu0
  %v242 = vadd.f32 0.0, %v241
  %v243 = vpop.f32.mrb[0].mxu0
  %v244 = vadd.f32 0.0, %v243
  %v245 = vpop.f32.mrb[0].mxu0
  %v246 = vadd.f32 0.0, %v245
  %247 = vmatprep.mubr.bf16.mxu0 0
  %248 = vmatmul.mubr.bf16.gmra.mrb[0].mxu0 %v106
  %v249 = vpop.f32.mrb[0].mxu0
  %v250 = vadd.f32 0.0, %v249
  %v251 = vpop.f32.mrb[0].mxu0
  %v252 = vadd.f32 0.0, %v251
  %v253 = vpop.f32.mrb[0].mxu0
  %v254 = vadd.f32 0.0, %v253
  %v255 = vpop.f32.mrb[0].mxu0
  %v256 = vadd.f32 0.0, %v255
  %257 = vmatprep.mubr.bf16.mxu0 0
  %258 = vmatmul.mubr.bf16.gmra.mrb[0].mxu0 %v109
  %v259 = vpop.f32.mrb[0].mxu0
  %v260 = vadd.f32 0.0, %v259
  %v261 = vpop.f32.mrb[0].mxu0
  %v262 = vadd.f32 0.0, %v261
  %v263 = vpop.f32.mrb[0].mxu0
  %v264 = vpop.f32.mrb[0].mxu0
  %265 = vdwg.mxu0
  %v294 = vcombine.low %v159, %v161
  %v295 = vcombine.high %v159, %v161
  %v296 = vcombine.low %v230, %v232
  %v297 = vcombine.high %v230, %v232
  %v298 = vcombine.low %v163, %v165
  %v299 = vcombine.high %v163, %v165
  %v300 = vcombine.low %v234, %v236
  %v301 = vcombine.high %v234, %v236
  %v302 = vcombine.low %v169, %v171
  %v303 = vcombine.high %v169, %v171
  %v304 = vcombine.low %v240, %v242
  %v305 = vcombine.high %v240, %v242
  %v306 = vcombine.high %v173, %v175
  %v307 = vcombine.high %v244, %v246
  %v308 = vcombine.low %v179, %v181
  %v309 = vcombine.high %v179, %v181
  %v310 = vcombine.low %v250, %v252
  %v311 = vcombine.high %v250, %v252
  %v312 = vcombine.low %v183, %v185
  %v313 = vcombine.high %v183, %v185
  %v314 = vcombine.low %v254, %v256
  %v315 = vcombine.high %v254, %v256
  %v316 = vcombine.low %v189, %v191
  %v317 = vcombine.low %v260, %v262
  %s342 = scalar_lea.vmem %s1, 64
  %v343 = vld [vmem:[%s342] sm:$0xff]
  %v344 = vld [vmem:[%s342 + $0x8] sm:$0xff]
  %v345 = vld [vmem:[%s342 + $0x10] sm:$0xff]
  %v346 = vld [vmem:[%s342 + $0x18] sm:$0xff]
  %v347 = vld [vmem:[%s342 + $0x20] sm:$0xff]
  %v348 = vld [vmem:[%s342 + $0x28] sm:$0xff]
  %v349 = vld [vmem:[%s342 + $0x30] sm:$0x33]
  %v350 = vld [vmem:[%s342 + $0x38] sm:$0x33]
  %v359 = vunpack.c.l.b16 %v343
  %v360 = vunpack.c.h.b16 %v343
  %v361 = vunpack.c.l.b16 %v344
  %v362 = vunpack.c.h.b16 %v344
  %v363 = vunpack.c.l.b16 %v345
  %v364 = vunpack.c.h.b16 %v345
  %v365 = vunpack.c.l.b16 %v346
  %v366 = vunpack.c.h.b16 %v346
  %v367 = vunpack.c.l.b16 %v347
  %v368 = vunpack.c.h.b16 %v347
  %v369 = vunpack.c.l.b16 %v348
  %v370 = vunpack.c.h.b16 %v348
  %v371 = vunpack.c.l.b16 %v349
  %v372 = vunpack.c.h.b16 %v349
  %v373 = vunpack.c.l.b16 %v350
  %v374 = vunpack.c.h.b16 %v350
  %v375 = vpack.c.b16 %v363, %v359
  %v376 = vpack.c.b16 %v364, %v360
  %v377 = vpack.c.b16 %v365, %v361
  %v378 = vpack.c.b16 %v366, %v362
  %v379 = vpack.c.b16 %v371, %v367
  %v380 = vpack.c.b16 %v372, %v368
  %v381 = vpack.c.b16 %v373, %v369
  %v382 = vpack.c.b16 %v374, %v370
  %v388 = vsel %vm111, %v379, 0
  %v391 = vsel %vm111, %v380, 0
  %v394 = vsel %vm111, %v381, 0
  %v397 = vsel %vm111, %v382, 0
  %399 = vmatprep.subr.bf16.mxu0 %v376
  %400 = vmatpush1.bf16.msra.mxu0 %v375
  %401 = vmatprep.subr.bf16.mxu0 %v391
  %402 = vmatpush1.bf16.msra.mxu0 %v388
  %403 = vmatprep.subr.bf16.mxu0 0
  %404 = vmatpush1.bf16.msra.mxu0 0
  %405 = vmatprep.subr.bf16.mxu0 0
  %406 = vmatpush1.bf16.msra.mxu0 0
  %407 = vmatprep.subr.bf16.mxu0 0
  %408 = vmatpush1.bf16.msra.mxu0 0
  %409 = vmatprep.subr.bf16.mxu0 0
  %410 = vmatpush1.bf16.msra.mxu0 0
  %411 = vmatprep.subr.bf16.mxu0 0
  %412 = vmatpush1.bf16.msra.mxu0 0
  %413 = vmatprep.subr.bf16.mxu0 0
  %414 = vmatpush1.bf16.msra.mxu0 0
  %415 = vmatprep.subr.bf16.mxu0 0
  %416 = vmatpush1.bf16.msra.mxu0 0
  %417 = vmatprep.subr.bf16.mxu0 0
  %418 = vmatpush1.bf16.msra.mxu0 0
  %419 = vmatprep.subr.bf16.mxu0 0
  %420 = vmatpush1.bf16.msra.mxu0 0
  %421 = vmatprep.subr.bf16.mxu0 0
  %422 = vmatpush1.bf16.msra.mxu0 0
  %423 = vmatprep.subr.bf16.mxu0 0
  %424 = vmatpush1.bf16.msra.mxu0 0
  %425 = vmatprep.subr.bf16.mxu0 0
  %426 = vmatpush1.bf16.msra.mxu0 0
  %427 = vmatprep.subr.bf16.mxu0 0
  %428 = vmatpush1.bf16.msra.mxu0 0
  %429 = vmatprep.subr.bf16.mxu0 0
  %430 = vmatpush1.bf16.msra.mxu0 0
  %431 = vmatprep.mubr.bf16.mxu0 0
  %432 = vmatmul.mubr.bf16.gmra.mrb[0].mxu0 %v100
  %v433 = vpop.f32.mrb[0].mxu0
  %v434 = vadd.f32 0.0, %v433
  %v435 = vpop.f32.mrb[0].mxu0
  %v436 = vadd.f32 0.0, %v435
  %v437 = vpop.f32.mrb[0].mxu0
  %v438 = vadd.f32 0.0, %v437
  %v439 = vpop.f32.mrb[0].mxu0
  %v440 = vadd.f32 0.0, %v439
  %441 = vmatprep.mubr.bf16.mxu0 0
  %442 = vmatmul.mubr.bf16.gmra.mrb[0].mxu0 %v103
  %v443 = vpop.f32.mrb[0].mxu0
  %v444 = vadd.f32 0.0, %v443
  %v445 = vpop.f32.mrb[0].mxu0
  %v446 = vadd.f32 0.0, %v445
  %v447 = vpop.f32.mrb[0].mxu0
  %v448 = vadd.f32 0.0, %v447
  %v449 = vpop.f32.mrb[0].mxu0
  %v450 = vadd.f32 0.0, %v449
  %451 = vmatprep.mubr.bf16.mxu0 0
  %452 = vmatmul.mubr.bf16.gmra.mrb[0].mxu0 %v106
  %v453 = vpop.f32.mrb[0].mxu0
  %v454 = vadd.f32 0.0, %v453
  %v455 = vpop.f32.mrb[0].mxu0
  %v456 = vadd.f32 0.0, %v455
  %v457 = vpop.f32.mrb[0].mxu0
  %v458 = vadd.f32 0.0, %v457
  %v459 = vpop.f32.mrb[0].mxu0
  %v460 = vadd.f32 0.0, %v459
  %461 = vmatprep.mubr.bf16.mxu0 0
  %462 = vmatmul.mubr.bf16.gmra.mrb[0].mxu0 %v109
  %v463 = vpop.f32.mrb[0].mxu0
  %v464 = vadd.f32 0.0, %v463
  %v465 = vpop.f32.mrb[0].mxu0
  %v466 = vadd.f32 0.0, %v465
  %v467 = vpop.f32.mrb[0].mxu0
  %v468 = vpop.f32.mrb[0].mxu0
  %469 = vdwg.mxu0
  %470 = vmatprep.subr.bf16.mxu0 %v378
  %471 = vmatpush1.bf16.msra.mxu0 %v377
  %472 = vmatprep.subr.bf16.mxu0 %v397
  %473 = vmatpush1.bf16.msra.mxu0 %v394
  %474 = vmatprep.subr.bf16.mxu0 0
  %475 = vmatpush1.bf16.msra.mxu0 0
  %476 = vmatprep.subr.bf16.mxu0 0
  %477 = vmatpush1.bf16.msra.mxu0 0
  %478 = vmatprep.subr.bf16.mxu0 0
  %479 = vmatpush1.bf16.msra.mxu0 0
  %480 = vmatprep.subr.bf16.mxu0 0
  %481 = vmatpush1.bf16.msra.mxu0 0
  %482 = vmatprep.subr.bf16.mxu0 0
  %483 = vmatpush1.bf16.msra.mxu0 0
  %484 = vmatprep.subr.bf16.mxu0 0
  %485 = vmatpush1.bf16.msra.mxu0 0
  %486 = vmatprep.subr.bf16.mxu0 0
  %487 = vmatpush1.bf16.msra.mxu0 0
  %488 = vmatprep.subr.bf16.mxu0 0
  %489 = vmatpush1.bf16.msra.mxu0 0
  %490 = vmatprep.subr.bf16.mxu0 0
  %491 = vmatpush1.bf16.msra.mxu0 0
  %492 = vmatprep.subr.bf16.mxu0 0
  %493 = vmatpush1.bf16.msra.mxu0 0
  %494 = vmatprep.subr.bf16.mxu0 0
  %495 = vmatpush1.bf16.msra.mxu0 0
  %496 = vmatprep.subr.bf16.mxu0 0
  %497 = vmatpush1.bf16.msra.mxu0 0
  %498 = vmatprep.subr.bf16.mxu0 0
  %499 = vmatpush1.bf16.msra.mxu0 0
  %500 = vmatprep.subr.bf16.mxu0 0
  %501 = vmatpush1.bf16.msra.mxu0 0
  %502 = vmatprep.mubr.bf16.mxu0 0
  %503 = vmatmul.mubr.bf16.gmra.mrb[0].mxu0 %v100
  %v504 = vpop.f32.mrb[0].mxu0
  %v505 = vadd.f32 0.0, %v504
  %v506 = vpop.f32.mrb[0].mxu0
  %v507 = vadd.f32 0.0, %v506
  %v508 = vpop.f32.mrb[0].mxu0
  %v509 = vadd.f32 0.0, %v508
  %v510 = vpop.f32.mrb[0].mxu0
  %v511 = vadd.f32 0.0, %v510
  %512 = vmatprep.mubr.bf16.mxu0 0
  %513 = vmatmul.mubr.bf16.gmra.mrb[0].mxu0 %v103
  %v514 = vpop.f32.mrb[0].mxu0
  %v515 = vadd.f32 0.0, %v514
  %v516 = vpop.f32.mrb[0].mxu0
  %v517 = vadd.f32 0.0, %v516
  %v518 = vpop.f32.mrb[0].mxu0
  %v519 = vadd.f32 0.0, %v518
  %v520 = vpop.f32.mrb[0].mxu0
  %v521 = vadd.f32 0.0, %v520
  %522 = vmatprep.mubr.bf16.mxu0 0
  %523 = vmatmul.mubr.bf16.gmra.mrb[0].mxu0 %v106
  %v524 = vpop.f32.mrb[0].mxu0
  %v525 = vadd.f32 0.0, %v524
  %v526 = vpop.f32.mrb[0].mxu0
  %v527 = vadd.f32 0.0, %v526
  %v528 = vpop.f32.mrb[0].mxu0
  %v529 = vadd.f32 0.0, %v528
  %v530 = vpop.f32.mrb[0].mxu0
  %v531 = vadd.f32 0.0, %v530
  %532 = vmatprep.mubr.bf16.mxu0 0
  %533 = vmatmul.mubr.bf16.gmra.mrb[0].mxu0 %v109
  %v534 = vpop.f32.mrb[0].mxu0
  %v535 = vadd.f32 0.0, %v534
  %v536 = vpop.f32.mrb[0].mxu0
  %v537 = vadd.f32 0.0, %v536
  %v538 = vpop.f32.mrb[0].mxu0
  %v539 = vpop.f32.mrb[0].mxu0
  %540 = vdwg.mxu0
  %v569 = vcombine.low %v434, %v436
  %v570 = vcombine.high %v434, %v436
  %v571 = vcombine.low %v505, %v507
  %v572 = vcombine.high %v505, %v507
  %v573 = vcombine.low %v438, %v440
  %v574 = vcombine.high %v438, %v440
  %v575 = vcombine.low %v509, %v511
  %v576 = vcombine.high %v509, %v511
  %v577 = vcombine.low %v444, %v446
  %v578 = vcombine.high %v444, %v446
  %v579 = vcombine.low %v515, %v517
  %v580 = vcombine.high %v515, %v517
  %v581 = vcombine.low %v448, %v450
  %v582 = vcombine.high %v448, %v450
  %v583 = vcombine.low %v519, %v521
  %v584 = vcombine.high %v519, %v521
  %v585 = vcombine.low %v454, %v456
  %v586 = vcombine.high %v454, %v456
  %v587 = vcombine.low %v525, %v527
  %v588 = vcombine.high %v525, %v527
  %v589 = vcombine.low %v458, %v460
  %v590 = vcombine.high %v458, %v460
  %v591 = vcombine.low %v529, %v531
  %v592 = vcombine.high %v529, %v531
  %v593 = vcombine.low %v464, %v466
  %v594 = vcombine.high %v464, %v466
  %v595 = vcombine.low %v535, %v537
  %v596 = vcombine.high %v535, %v537
  %vm597 = vcmask 1042432
  %vm598 = vcmask 1046532
  %vm599 = vmor %vm597, %vm598
  %v600 = vrot.slane %v569, 5
  %v601 = vrot.slane %v600, 4
  %v602 = vrot.slane %v570, 5
  %v603 = vsel %vm599, %v601, %v602
  %v604 = vrot.slane %v571, 5
  %v605 = vrot.slane %v604, 4
  %v606 = vrot.slane %v572, 5
  %v607 = vsel %vm599, %v605, %v606
  %v608 = vrot.slane %v602, 4
  %v609 = vrot.slane %v573, 5
  %v610 = vsel %vm599, %v608, %v609
  %v611 = vrot.slane %v606, 4
  %v612 = vrot.slane %v575, 5
  %v613 = vsel %vm599, %v611, %v612
  %v614 = vrot.slane %v609, 4
  %v615 = vrot.slane %v574, 5
  %v616 = vsel %vm599, %v614, %v615
  %v617 = vrot.slane %v612, 4
  %v618 = vrot.slane %v576, 5
  %v619 = vsel %vm599, %v617, %v618
  %v620 = vrot.slane %v615, 4
  %v621 = vrot.slane %v577, 5
  %v622 = vsel %vm599, %v620, %v621
  %v623 = vrot.slane %v618, 4
  %v624 = vrot.slane %v579, 5
  %v625 = vsel %vm599, %v623, %v624
  %v626 = vrot.slane %v621, 4
  %v627 = vrot.slane %v578, 5
  %v628 = vsel %vm599, %v626, %v627
  %v629 = vrot.slane %v624, 4
  %v630 = vrot.slane %v580, 5
  %v631 = vsel %vm599, %v629, %v630
  %v632 = vrot.slane %v627, 4
  %v633 = vrot.slane %v581, 5
  %v634 = vsel %vm599, %v632, %v633
  %v635 = vrot.slane %v630, 4
  %v636 = vrot.slane %v583, 5
  %v637 = vsel %vm599, %v635, %v636
  %v638 = vrot.slane %v582, 5
  %v639 = vrot.slane %v638, 4
  %v640 = vrot.slane %v585, 5
  %v641 = vsel %vm599, %v639, %v640
  %v642 = vrot.slane %v584, 5
  %v643 = vrot.slane %v642, 4
  %v644 = vrot.slane %v587, 5
  %v645 = vsel %vm599, %v643, %v644
  %v646 = vrot.slane %v640, 4
  %v647 = vrot.slane %v586, 5
  %v648 = vsel %vm599, %v646, %v647
  %v649 = vrot.slane %v644, 4
  %v650 = vrot.slane %v588, 5
  %v651 = vsel %vm599, %v649, %v650
  %v652 = vrot.slane %v647, 4
  %v653 = vrot.slane %v589, 5
  %v654 = vsel %vm599, %v652, %v653
  %v655 = vrot.slane %v650, 4
  %v656 = vrot.slane %v591, 5
  %v657 = vsel %vm599, %v655, %v656
  %v658 = vrot.slane %v653, 4
  %v659 = vrot.slane %v590, 5
  %v660 = vsel %vm599, %v658, %v659
  %v661 = vrot.slane %v656, 4
  %v662 = vrot.slane %v592, 5
  %v663 = vsel %vm599, %v661, %v662
  %v664 = vrot.slane %v659, 4
  %v665 = vrot.slane %v593, 5
  %v666 = vsel %vm599, %v664, %v665
  %v667 = vrot.slane %v662, 4
  %v668 = vrot.slane %v595, 5
  %v669 = vsel %vm599, %v667, %v668
  %v670 = vrot.slane %v665, 4
  %v671 = vrot.slane %v594, 5
  %v672 = vsel %vm599, %v670, %v671
  %v673 = vrot.slane %v668, 4
  %v674 = vrot.slane %v596, 5
  %v675 = vsel %vm599, %v673, %v674
  %v700 = vadd.f32 %v294, %v603
  %v701 = vadd.f32 %v296, %v607
  %v702 = vadd.f32 %v295, %v610
  %v703 = vadd.f32 %v297, %v613
  %v704 = vadd.f32 %v298, %v616
  %v705 = vadd.f32 %v300, %v619
  %v706 = vadd.f32 %v299, %v622
  %v707 = vadd.f32 %v301, %v625
  %v708 = vadd.f32 %v302, %v628
  %v709 = vadd.f32 %v304, %v631
  %v710 = vadd.f32 %v303, %v634
  %v711 = vadd.f32 %v305, %v637
  %v712 = vadd.f32 %v306, %v641
  %v713 = vadd.f32 %v307, %v645
  %v714 = vadd.f32 %v308, %v648
  %v715 = vadd.f32 %v310, %v651
  %v716 = vadd.f32 %v309, %v654
  %v717 = vadd.f32 %v311, %v657
  %v718 = vadd.f32 %v312, %v660
  %v719 = vadd.f32 %v314, %v663
  %v720 = vadd.f32 %v313, %v666
  %v721 = vadd.f32 %v315, %v669
  %v722 = vadd.f32 %v316, %v672
  %v723 = vadd.f32 %v317, %v675
  %s724 = scalar_lea.vmem %s1, 128
  %v725 = vld [vmem:[%s724] sm:$0xff]
  %v726 = vld [vmem:[%s724 + $0x8] sm:$0xff]
  %v727 = vld [vmem:[%s724 + $0x10] sm:$0xff]
  %v728 = vld [vmem:[%s724 + $0x18] sm:$0xff]
  %v729 = vld [vmem:[%s724 + $0x20] sm:$0xff]
  %v730 = vld [vmem:[%s724 + $0x28] sm:$0xff]
  %v731 = vld [vmem:[%s724 + $0x30] sm:$0x33]
  %v732 = vld [vmem:[%s724 + $0x38] sm:$0x33]
  %v741 = vunpack.c.l.b16 %v725
  %v742 = vunpack.c.h.b16 %v725
  %v743 = vunpack.c.l.b16 %v726
  %v744 = vunpack.c.h.b16 %v726
  %v745 = vunpack.c.l.b16 %v727
  %v746 = vunpack.c.h.b16 %v727
  %v747 = vunpack.c.l.b16 %v728
  %v748 = vunpack.c.h.b16 %v728
  %v749 = vunpack.c.l.b16 %v729
  %v750 = vunpack.c.h.b16 %v729
  %v751 = vunpack.c.l.b16 %v730
  %v752 = vunpack.c.h.b16 %v730
  %v753 = vunpack.c.l.b16 %v731
  %v754 = vunpack.c.h.b16 %v731
  %v755 = vunpack.c.l.b16 %v732
  %v756 = vunpack.c.h.b16 %v732
  %v757 = vpack.c.b16 %v745, %v741
  %v758 = vpack.c.b16 %v746, %v742
  %v759 = vpack.c.b16 %v747, %v743
  %v760 = vpack.c.b16 %v748, %v744
  %v761 = vpack.c.b16 %v753, %v749
  %v762 = vpack.c.b16 %v754, %v750
  %v763 = vpack.c.b16 %v755, %v751
  %v764 = vpack.c.b16 %v756, %v752
  %v770 = vsel %vm111, %v761, 0
  %v773 = vsel %vm111, %v762, 0
  %v776 = vsel %vm111, %v763, 0
  %v779 = vsel %vm111, %v764, 0
  %781 = vmatprep.subr.bf16.mxu0 %v758
  %782 = vmatpush1.bf16.msra.mxu0 %v757
  %783 = vmatprep.subr.bf16.mxu0 %v773
  %784 = vmatpush1.bf16.msra.mxu0 %v770
  %785 = vmatprep.subr.bf16.mxu0 0
  %786 = vmatpush1.bf16.msra.mxu0 0
  %787 = vmatprep.subr.bf16.mxu0 0
  %788 = vmatpush1.bf16.msra.mxu0 0
  %789 = vmatprep.subr.bf16.mxu0 0
  %790 = vmatpush1.bf16.msra.mxu0 0
  %791 = vmatprep.subr.bf16.mxu0 0
  %792 = vmatpush1.bf16.msra.mxu0 0
  %793 = vmatprep.subr.bf16.mxu0 0
  %794 = vmatpush1.bf16.msra.mxu0 0
  %795 = vmatprep.subr.bf16.mxu0 0
  %796 = vmatpush1.bf16.msra.mxu0 0
  %797 = vmatprep.subr.bf16.mxu0 0
  %798 = vmatpush1.bf16.msra.mxu0 0
  %799 = vmatprep.subr.bf16.mxu0 0
  %800 = vmatpush1.bf16.msra.mxu0 0
  %801 = vmatprep.subr.bf16.mxu0 0
  %802 = vmatpush1.bf16.msra.mxu0 0
  %803 = vmatprep.subr.bf16.mxu0 0
  %804 = vmatpush1.bf16.msra.mxu0 0
  %805 = vmatprep.subr.bf16.mxu0 0
  %806 = vmatpush1.bf16.msra.mxu0 0
  %807 = vmatprep.subr.bf16.mxu0 0
  %808 = vmatpush1.bf16.msra.mxu0 0
  %809 = vmatprep.subr.bf16.mxu0 0
  %810 = vmatpush1.bf16.msra.mxu0 0
  %811 = vmatprep.subr.bf16.mxu0 0
  %812 = vmatpush1.bf16.msra.mxu0 0
  %813 = vmatprep.mubr.bf16.mxu0 0
  %814 = vmatmul.mubr.bf16.gmra.mrb[0].mxu0 %v100
  %v815 = vpop.f32.mrb[0].mxu0
  %v816 = vadd.f32 0.0, %v815
  %v817 = vpop.f32.mrb[0].mxu0
  %v818 = vadd.f32 0.0, %v817
  %v819 = vpop.f32.mrb[0].mxu0
  %v820 = vadd.f32 0.0, %v819
  %v821 = vpop.f32.mrb[0].mxu0
  %v822 = vadd.f32 0.0, %v821
  %823 = vmatprep.mubr.bf16.mxu0 0
  %824 = vmatmul.mubr.bf16.gmra.mrb[0].mxu0 %v103
  %v825 = vpop.f32.mrb[0].mxu0
  %v826 = vadd.f32 0.0, %v825
  %v827 = vpop.f32.mrb[0].mxu0
  %v828 = vadd.f32 0.0, %v827
  %v829 = vpop.f32.mrb[0].mxu0
  %v830 = vadd.f32 0.0, %v829
  %v831 = vpop.f32.mrb[0].mxu0
  %v832 = vadd.f32 0.0, %v831
  %833 = vmatprep.mubr.bf16.mxu0 0
  %834 = vmatmul.mubr.bf16.gmra.mrb[0].mxu0 %v106
  %v835 = vpop.f32.mrb[0].mxu0
  %v836 = vadd.f32 0.0, %v835
  %v837 = vpop.f32.mrb[0].mxu0
  %v838 = vadd.f32 0.0, %v837
  %v839 = vpop.f32.mrb[0].mxu0
  %v840 = vadd.f32 0.0, %v839
  %v841 = vpop.f32.mrb[0].mxu0
  %v842 = vadd.f32 0.0, %v841
  %843 = vmatprep.mubr.bf16.mxu0 0
  %844 = vmatmul.mubr.bf16.gmra.mrb[0].mxu0 %v109
  %v845 = vpop.f32.mrb[0].mxu0
  %v846 = vadd.f32 0.0, %v845
  %v847 = vpop.f32.mrb[0].mxu0
  %v848 = vadd.f32 0.0, %v847
  %v849 = vpop.f32.mrb[0].mxu0
  %v850 = vpop.f32.mrb[0].mxu0
  %851 = vdwg.mxu0
  %852 = vmatprep.subr.bf16.mxu0 %v760
  %853 = vmatpush1.bf16.msra.mxu0 %v759
  %854 = vmatprep.subr.bf16.mxu0 %v779
  %855 = vmatpush1.bf16.msra.mxu0 %v776
  %856 = vmatprep.subr.bf16.mxu0 0
  %857 = vmatpush1.bf16.msra.mxu0 0
  %858 = vmatprep.subr.bf16.mxu0 0
  %859 = vmatpush1.bf16.msra.mxu0 0
  %860 = vmatprep.subr.bf16.mxu0 0
  %861 = vmatpush1.bf16.msra.mxu0 0
  %862 = vmatprep.subr.bf16.mxu0 0
  %863 = vmatpush1.bf16.msra.mxu0 0
  %864 = vmatprep.subr.bf16.mxu0 0
  %865 = vmatpush1.bf16.msra.mxu0 0
  %866 = vmatprep.subr.bf16.mxu0 0
  %867 = vmatpush1.bf16.msra.mxu0 0
  %868 = vmatprep.subr.bf16.mxu0 0
  %869 = vmatpush1.bf16.msra.mxu0 0
  %870 = vmatprep.subr.bf16.mxu0 0
  %871 = vmatpush1.bf16.msra.mxu0 0
  %872 = vmatprep.subr.bf16.mxu0 0
  %873 = vmatpush1.bf16.msra.mxu0 0
  %874 = vmatprep.subr.bf16.mxu0 0
  %875 = vmatpush1.bf16.msra.mxu0 0
  %876 = vmatprep.subr.bf16.mxu0 0
  %877 = vmatpush1.bf16.msra.mxu0 0
  %878 = vmatprep.subr.bf16.mxu0 0
  %879 = vmatpush1.bf16.msra.mxu0 0
  %880 = vmatprep.subr.bf16.mxu0 0
  %881 = vmatpush1.bf16.msra.mxu0 0
  %882 = vmatprep.subr.bf16.mxu0 0
  %883 = vmatpush1.bf16.msra.mxu0 0
  %884 = vmatprep.mubr.bf16.mxu0 0
  %885 = vmatmul.mubr.bf16.gmra.mrb[0].mxu0 %v100
  %v886 = vpop.f32.mrb[0].mxu0
  %v887 = vadd.f32 0.0, %v886
  %v888 = vpop.f32.mrb[0].mxu0
  %v889 = vadd.f32 0.0, %v888
  %v890 = vpop.f32.mrb[0].mxu0
  %v891 = vadd.f32 0.0, %v890
  %v892 = vpop.f32.mrb[0].mxu0
  %v893 = vadd.f32 0.0, %v892
  %894 = vmatprep.mubr.bf16.mxu0 0
  %895 = vmatmul.mubr.bf16.gmra.mrb[0].mxu0 %v103
  %v896 = vpop.f32.mrb[0].mxu0
  %v897 = vadd.f32 0.0, %v896
  %v898 = vpop.f32.mrb[0].mxu0
  %v899 = vadd.f32 0.0, %v898
  %v900 = vpop.f32.mrb[0].mxu0
  %v901 = vadd.f32 0.0, %v900
  %v902 = vpop.f32.mrb[0].mxu0
  %v903 = vadd.f32 0.0, %v902
  %904 = vmatprep.mubr.bf16.mxu0 0
  %905 = vmatmul.mubr.bf16.gmra.mrb[0].mxu0 %v106
  %v906 = vpop.f32.mrb[0].mxu0
  %v907 = vadd.f32 0.0, %v906
  %v908 = vpop.f32.mrb[0].mxu0
  %v909 = vadd.f32 0.0, %v908
  %v910 = vpop.f32.mrb[0].mxu0
  %v911 = vadd.f32 0.0, %v910
  %v912 = vpop.f32.mrb[0].mxu0
  %v913 = vadd.f32 0.0, %v912
  %914 = vmatprep.mubr.bf16.mxu0 0
  %915 = vmatmul.mubr.bf16.gmra.mrb[0].mxu0 %v109
  %v916 = vpop.f32.mrb[0].mxu0
  %v917 = vadd.f32 0.0, %v916
  %v918 = vpop.f32.mrb[0].mxu0
  %v919 = vadd.f32 0.0, %v918
  %v920 = vpop.f32.mrb[0].mxu0
  %v921 = vpop.f32.mrb[0].mxu0
  %922 = vdwg.mxu0
  %v951 = vcombine.low %v816, %v818
  %v952 = vcombine.high %v816, %v818
  %v953 = vcombine.low %v887, %v889
  %v954 = vcombine.high %v887, %v889
  %v955 = vcombine.low %v820, %v822
  %v956 = vcombine.high %v820, %v822
  %v957 = vcombine.low %v891, %v893
  %v958 = vcombine.high %v891, %v893
  %v959 = vcombine.low %v826, %v828
  %v960 = vcombine.high %v826, %v828
  %v961 = vcombine.low %v897, %v899
  %v962 = vcombine.high %v897, %v899
  %v963 = vcombine.low %v830, %v832
  %v964 = vcombine.high %v830, %v832
  %v965 = vcombine.low %v901, %v903
  %v966 = vcombine.high %v901, %v903
  %v967 = vcombine.low %v836, %v838
  %v968 = vcombine.high %v836, %v838
  %v969 = vcombine.low %v907, %v909
  %v970 = vcombine.high %v907, %v909
  %v971 = vcombine.low %v840, %v842
  %v972 = vcombine.high %v840, %v842
  %v973 = vcombine.low %v911, %v913
  %v974 = vcombine.high %v911, %v913
  %v975 = vcombine.low %v846, %v848
  %v976 = vcombine.high %v846, %v848
  %v977 = vcombine.low %v917, %v919
  %v978 = vcombine.high %v917, %v919
  %vm979 = vcmask 1041408
  %vm980 = vcmask 1045508
  %vm981 = vmor %vm979, %vm980
  %v982 = vrot.slane %v951, 6
  %v983 = vrot.slane %v982, 4
  %v984 = vrot.slane %v952, 6
  %v985 = vsel %vm981, %v983, %v984
  %v986 = vrot.slane %v953, 6
  %v987 = vrot.slane %v986, 4
  %v988 = vrot.slane %v954, 6
  %v989 = vsel %vm981, %v987, %v988
  %v990 = vrot.slane %v984, 4
  %v991 = vrot.slane %v955, 6
  %v992 = vsel %vm981, %v990, %v991
  %v993 = vrot.slane %v988, 4
  %v994 = vrot.slane %v957, 6
  %v995 = vsel %vm981, %v993, %v994
  %v996 = vrot.slane %v991, 4
  %v997 = vrot.slane %v956, 6
  %v998 = vsel %vm981, %v996, %v997
  %v999 = vrot.slane %v994, 4
  %v1000 = vrot.slane %v958, 6
  %v1001 = vsel %vm981, %v999, %v1000
  %v1002 = vrot.slane %v997, 4
  %v1003 = vrot.slane %v959, 6
  %v1004 = vsel %vm981, %v1002, %v1003
  %v1005 = vrot.slane %v1000, 4
  %v1006 = vrot.slane %v961, 6
  %v1007 = vsel %vm981, %v1005, %v1006
  %v1008 = vrot.slane %v1003, 4
  %v1009 = vrot.slane %v960, 6
  %v1010 = vsel %vm981, %v1008, %v1009
  %v1011 = vrot.slane %v1006, 4
  %v1012 = vrot.slane %v962, 6
  %v1013 = vsel %vm981, %v1011, %v1012
  %v1014 = vrot.slane %v1009, 4
  %v1015 = vrot.slane %v963, 6
  %v1016 = vsel %vm981, %v1014, %v1015
  %v1017 = vrot.slane %v1012, 4
  %v1018 = vrot.slane %v965, 6
  %v1019 = vsel %vm981, %v1017, %v1018
  %v1020 = vrot.slane %v964, 6
  %v1021 = vrot.slane %v1020, 4
  %v1022 = vrot.slane %v967, 6
  %v1023 = vsel %vm981, %v1021, %v1022
  %v1024 = vrot.slane %v966, 6
  %v1025 = vrot.slane %v1024, 4
  %v1026 = vrot.slane %v969, 6
  %v1027 = vsel %vm981, %v1025, %v1026
  %v1028 = vrot.slane %v1022, 4
  %v1029 = vrot.slane %v968, 6
  %v1030 = vsel %vm981, %v1028, %v1029
  %v1031 = vrot.slane %v1026, 4
  %v1032 = vrot.slane %v970, 6
  %v1033 = vsel %vm981, %v1031, %v1032
  %v1034 = vrot.slane %v1029, 4
  %v1035 = vrot.slane %v971, 6
  %v1036 = vsel %vm981, %v1034, %v1035
  %v1037 = vrot.slane %v1032, 4
  %v1038 = vrot.slane %v973, 6
  %v1039 = vsel %vm981, %v1037, %v1038
  %v1040 = vrot.slane %v1035, 4
  %v1041 = vrot.slane %v972, 6
  %v1042 = vsel %vm981, %v1040, %v1041
  %v1043 = vrot.slane %v1038, 4
  %v1044 = vrot.slane %v974, 6
  %v1045 = vsel %vm981, %v1043, %v1044
  %v1046 = vrot.slane %v1041, 4
  %v1047 = vrot.slane %v975, 6
  %v1048 = vsel %vm981, %v1046, %v1047
  %v1049 = vrot.slane %v1044, 4
  %v1050 = vrot.slane %v977, 6
  %v1051 = vsel %vm981, %v1049, %v1050
  %v1052 = vrot.slane %v1047, 4
  %v1053 = vrot.slane %v976, 6
  %v1054 = vsel %vm981, %v1052, %v1053
  %v1055 = vrot.slane %v1050, 4
  %v1056 = vrot.slane %v978, 6
  %v1057 = vsel %vm981, %v1055, %v1056
  %v1082 = vadd.f32 %v700, %v985
  %v1083 = vadd.f32 %v701, %v989
  %v1084 = vadd.f32 %v702, %v992
  %v1085 = vadd.f32 %v703, %v995
  %v1086 = vadd.f32 %v704, %v998
  %v1087 = vadd.f32 %v705, %v1001
  %v1088 = vadd.f32 %v706, %v1004
  %v1089 = vadd.f32 %v707, %v1007
  %v1090 = vadd.f32 %v708, %v1010
  %v1091 = vadd.f32 %v709, %v1013
  %v1092 = vadd.f32 %v710, %v1016
  %v1093 = vadd.f32 %v711, %v1019
  %v1094 = vadd.f32 %v712, %v1023
  %v1095 = vadd.f32 %v713, %v1027
  %v1096 = vadd.f32 %v714, %v1030
  %v1097 = vadd.f32 %v715, %v1033
  %v1098 = vadd.f32 %v716, %v1036
  %v1099 = vadd.f32 %v717, %v1039
  %v1100 = vadd.f32 %v718, %v1042
  %v1101 = vadd.f32 %v719, %v1045
  %v1102 = vadd.f32 %v720, %v1048
  %v1103 = vadd.f32 %v721, %v1051
  %v1104 = vadd.f32 %v722, %v1054
  %v1105 = vadd.f32 %v723, %v1057
  %s1106 = scalar_lea.vmem %s1, 192
  %v1107 = vld [vmem:[%s1106] sm:$0xff]
  %v1108 = vld [vmem:[%s1106 + $0x8] sm:$0xff]
  %v1109 = vld [vmem:[%s1106 + $0x10] sm:$0xff]
  %v1110 = vld [vmem:[%s1106 + $0x18] sm:$0xff]
  %v1111 = vld [vmem:[%s1106 + $0x20] sm:$0xff]
  %v1112 = vld [vmem:[%s1106 + $0x28] sm:$0xff]
  %v1113 = vld [vmem:[%s1106 + $0x30] sm:$0x33]
  %v1114 = vld [vmem:[%s1106 + $0x38] sm:$0x33]
  %v1123 = vunpack.c.l.b16 %v1107
  %v1124 = vunpack.c.h.b16 %v1107
  %v1125 = vunpack.c.l.b16 %v1108
  %v1126 = vunpack.c.h.b16 %v1108
  %v1127 = vunpack.c.l.b16 %v1109
  %v1128 = vunpack.c.h.b16 %v1109
  %v1129 = vunpack.c.l.b16 %v1110
  %v1130 = vunpack.c.h.b16 %v1110
  %v1131 = vunpack.c.l.b16 %v1111
  %v1132 = vunpack.c.h.b16 %v1111
  %v1133 = vunpack.c.l.b16 %v1112
  %v1134 = vunpack.c.h.b16 %v1112
  %v1135 = vunpack.c.l.b16 %v1113
  %v1136 = vunpack.c.h.b16 %v1113
  %v1137 = vunpack.c.l.b16 %v1114
  %v1138 = vunpack.c.h.b16 %v1114
  %v1139 = vpack.c.b16 %v1127, %v1123
  %v1140 = vpack.c.b16 %v1128, %v1124
  %v1141 = vpack.c.b16 %v1129, %v1125
  %v1142 = vpack.c.b16 %v1130, %v1126
  %v1143 = vpack.c.b16 %v1135, %v1131
  %v1144 = vpack.c.b16 %v1136, %v1132
  %v1145 = vpack.c.b16 %v1137, %v1133
  %v1146 = vpack.c.b16 %v1138, %v1134
  %v1152 = vsel %vm111, %v1143, 0
  %v1155 = vsel %vm111, %v1144, 0
  %v1158 = vsel %vm111, %v1145, 0
  %v1161 = vsel %vm111, %v1146, 0
  %1163 = vmatprep.subr.bf16.mxu0 %v1140
  %1164 = vmatpush1.bf16.msra.mxu0 %v1139
  %1165 = vmatprep.subr.bf16.mxu0 %v1155
  %1166 = vmatpush1.bf16.msra.mxu0 %v1152
  %1167 = vmatprep.subr.bf16.mxu0 0
  %1168 = vmatpush1.bf16.msra.mxu0 0
  %1169 = vmatprep.subr.bf16.mxu0 0
  %1170 = vmatpush1.bf16.msra.mxu0 0
  %1171 = vmatprep.subr.bf16.mxu0 0
  %1172 = vmatpush1.bf16.msra.mxu0 0
  %1173 = vmatprep.subr.bf16.mxu0 0
  %1174 = vmatpush1.bf16.msra.mxu0 0
  %1175 = vmatprep.subr.bf16.mxu0 0
  %1176 = vmatpush1.bf16.msra.mxu0 0
  %1177 = vmatprep.subr.bf16.mxu0 0
  %1178 = vmatpush1.bf16.msra.mxu0 0
  %1179 = vmatprep.subr.bf16.mxu0 0
  %1180 = vmatpush1.bf16.msra.mxu0 0
  %1181 = vmatprep.subr.bf16.mxu0 0
  %1182 = vmatpush1.bf16.msra.mxu0 0
  %1183 = vmatprep.subr.bf16.mxu0 0
  %1184 = vmatpush1.bf16.msra.mxu0 0
  %1185 = vmatprep.subr.bf16.mxu0 0
  %1186 = vmatpush1.bf16.msra.mxu0 0
  %1187 = vmatprep.subr.bf16.mxu0 0
  %1188 = vmatpush1.bf16.msra.mxu0 0
  %1189 = vmatprep.subr.bf16.mxu0 0
  %1190 = vmatpush1.bf16.msra.mxu0 0
  %1191 = vmatprep.subr.bf16.mxu0 0
  %1192 = vmatpush1.bf16.msra.mxu0 0
  %1193 = vmatprep.subr.bf16.mxu0 0
  %1194 = vmatpush1.bf16.msra.mxu0 0
  %1195 = vmatprep.mubr.bf16.mxu0 0
  %1196 = vmatmul.mubr.bf16.gmra.mrb[0].mxu0 %v100
  %v1197 = vpop.f32.mrb[0].mxu0
  %v1198 = vadd.f32 0.0, %v1197
  %v1199 = vpop.f32.mrb[0].mxu0
  %v1200 = vadd.f32 0.0, %v1199
  %v1201 = vpop.f32.mrb[0].mxu0
  %v1202 = vadd.f32 0.0, %v1201
  %v1203 = vpop.f32.mrb[0].mxu0
  %v1204 = vadd.f32 0.0, %v1203
  %1205 = vmatprep.mubr.bf16.mxu0 0
  %1206 = vmatmul.mubr.bf16.gmra.mrb[0].mxu0 %v103
  %v1207 = vpop.f32.mrb[0].mxu0
  %v1208 = vadd.f32 0.0, %v1207
  %v1209 = vpop.f32.mrb[0].mxu0
  %v1210 = vadd.f32 0.0, %v1209
  %v1211 = vpop.f32.mrb[0].mxu0
  %v1212 = vadd.f32 0.0, %v1211
  %v1213 = vpop.f32.mrb[0].mxu0
  %v1214 = vadd.f32 0.0, %v1213
  %1215 = vmatprep.mubr.bf16.mxu0 0
  %1216 = vmatmul.mubr.bf16.gmra.mrb[0].mxu0 %v106
  %v1217 = vpop.f32.mrb[0].mxu0
  %v1218 = vadd.f32 0.0, %v1217
  %v1219 = vpop.f32.mrb[0].mxu0
  %v1220 = vadd.f32 0.0, %v1219
  %v1221 = vpop.f32.mrb[0].mxu0
  %v1222 = vadd.f32 0.0, %v1221
  %v1223 = vpop.f32.mrb[0].mxu0
  %v1224 = vadd.f32 0.0, %v1223
  %1225 = vmatprep.mubr.bf16.mxu0 0
  %1226 = vmatmul.mubr.bf16.gmra.mrb[0].mxu0 %v109
  %v1227 = vpop.f32.mrb[0].mxu0
  %v1228 = vadd.f32 0.0, %v1227
  %v1229 = vpop.f32.mrb[0].mxu0
  %v1230 = vadd.f32 0.0, %v1229
  %v1231 = vpop.f32.mrb[0].mxu0
  %v1232 = vpop.f32.mrb[0].mxu0
  %1233 = vdwg.mxu0
  %1234 = vmatprep.subr.bf16.mxu0 %v1142
  %1235 = vmatpush1.bf16.msra.mxu0 %v1141
  %1236 = vmatprep.subr.bf16.mxu0 %v1161
  %1237 = vmatpush1.bf16.msra.mxu0 %v1158
  %1238 = vmatprep.subr.bf16.mxu0 0
  %1239 = vmatpush1.bf16.msra.mxu0 0
  %1240 = vmatprep.subr.bf16.mxu0 0
  %1241 = vmatpush1.bf16.msra.mxu0 0
  %1242 = vmatprep.subr.bf16.mxu0 0
  %1243 = vmatpush1.bf16.msra.mxu0 0
  %1244 = vmatprep.subr.bf16.mxu0 0
  %1245 = vmatpush1.bf16.msra.mxu0 0
  %1246 = vmatprep.subr.bf16.mxu0 0
  %1247 = vmatpush1.bf16.msra.mxu0 0
  %1248 = vmatprep.subr.bf16.mxu0 0
  %1249 = vmatpush1.bf16.msra.mxu0 0
  %1250 = vmatprep.subr.bf16.mxu0 0
  %1251 = vmatpush1.bf16.msra.mxu0 0
  %1252 = vmatprep.subr.bf16.mxu0 0
  %1253 = vmatpush1.bf16.msra.mxu0 0
  %1254 = vmatprep.subr.bf16.mxu0 0
  %1255 = vmatpush1.bf16.msra.mxu0 0
  %1256 = vmatprep.subr.bf16.mxu0 0
  %1257 = vmatpush1.bf16.msra.mxu0 0
  %1258 = vmatprep.subr.bf16.mxu0 0
  %1259 = vmatpush1.bf16.msra.mxu0 0
  %1260 = vmatprep.subr.bf16.mxu0 0
  %1261 = vmatpush1.bf16.msra.mxu0 0
  %1262 = vmatprep.subr.bf16.mxu0 0
  %1263 = vmatpush1.bf16.msra.mxu0 0
  %1264 = vmatprep.subr.bf16.mxu0 0
  %1265 = vmatpush1.bf16.msra.mxu0 0
  %1266 = vmatprep.mubr.bf16.mxu0 0
  %1267 = vmatmul.mubr.bf16.gmra.mrb[0].mxu0 %v100
  %v1268 = vpop.f32.mrb[0].mxu0
  %v1269 = vadd.f32 0.0, %v1268
  %v1270 = vpop.f32.mrb[0].mxu0
  %v1271 = vadd.f32 0.0, %v1270
  %v1272 = vpop.f32.mrb[0].mxu0
  %v1273 = vadd.f32 0.0, %v1272
  %v1274 = vpop.f32.mrb[0].mxu0
  %v1275 = vadd.f32 0.0, %v1274
  %1276 = vmatprep.mubr.bf16.mxu0 0
  %1277 = vmatmul.mubr.bf16.gmra.mrb[0].mxu0 %v103
  %v1278 = vpop.f32.mrb[0].mxu0
  %v1279 = vadd.f32 0.0, %v1278
  %v1280 = vpop.f32.mrb[0].mxu0
  %v1281 = vadd.f32 0.0, %v1280
  %v1282 = vpop.f32.mrb[0].mxu0
  %v1283 = vadd.f32 0.0, %v1282
  %v1284 = vpop.f32.mrb[0].mxu0
  %v1285 = vadd.f32 0.0, %v1284
  %1286 = vmatprep.mubr.bf16.mxu0 0
  %1287 = vmatmul.mubr.bf16.gmra.mrb[0].mxu0 %v106
  %v1288 = vpop.f32.mrb[0].mxu0
  %v1289 = vadd.f32 0.0, %v1288
  %v1290 = vpop.f32.mrb[0].mxu0
  %v1291 = vadd.f32 0.0, %v1290
  %v1292 = vpop.f32.mrb[0].mxu0
  %v1293 = vadd.f32 0.0, %v1292
  %v1294 = vpop.f32.mrb[0].mxu0
  %v1295 = vadd.f32 0.0, %v1294
  %1296 = vmatprep.mubr.bf16.mxu0 0
  %1297 = vmatmul.mubr.bf16.gmra.mrb[0].mxu0 %v109
  %v1298 = vpop.f32.mrb[0].mxu0
  %v1299 = vadd.f32 0.0, %v1298
  %v1300 = vpop.f32.mrb[0].mxu0
  %v1301 = vadd.f32 0.0, %v1300
  %v1302 = vpop.f32.mrb[0].mxu0
  %v1303 = vpop.f32.mrb[0].mxu0
  %1304 = vdwg.mxu0
  %v1333 = vcombine.low %v1198, %v1200
  %v1334 = vcombine.high %v1198, %v1200
  %v1335 = vcombine.low %v1269, %v1271
  %v1336 = vcombine.high %v1269, %v1271
  %v1337 = vcombine.low %v1202, %v1204
  %v1338 = vcombine.high %v1202, %v1204
  %v1339 = vcombine.low %v1273, %v1275
  %v1340 = vcombine.high %v1273, %v1275
  %v1341 = vcombine.low %v1208, %v1210
  %v1342 = vcombine.high %v1208, %v1210
  %v1343 = vcombine.low %v1279, %v1281
  %v1344 = vcombine.high %v1279, %v1281
  %v1345 = vcombine.low %v1212, %v1214
  %v1346 = vcombine.high %v1212, %v1214
  %v1347 = vcombine.low %v1283, %v1285
  %v1348 = vcombine.high %v1283, %v1285
  %v1349 = vcombine.low %v1218, %v1220
  %v1350 = vcombine.high %v1218, %v1220
  %v1351 = vcombine.low %v1289, %v1291
  %v1352 = vcombine.high %v1289, %v1291
  %v1353 = vcombine.low %v1222, %v1224
  %v1354 = vcombine.high %v1222, %v1224
  %v1355 = vcombine.low %v1293, %v1295
  %v1356 = vcombine.high %v1293, %v1295
  %v1357 = vcombine.low %v1228, %v1230
  %v1358 = vcombine.high %v1228, %v1230
  %v1359 = vcombine.low %v1299, %v1301
  %v1360 = vcombine.high %v1299, %v1301
  %vm1361 = vcmask 1040384
  %vm1362 = vcmask 1044484
  %vm1363 = vmor %vm1361, %vm1362
  %v1364 = vrot.slane %v1333, 7
  %v1365 = vrot.slane %v1364, 4
  %v1366 = vrot.slane %v1334, 7
  %v1367 = vsel %vm1363, %v1365, %v1366
  %v1368 = vrot.slane %v1335, 7
  %v1369 = vrot.slane %v1368, 4
  %v1370 = vrot.slane %v1336, 7
  %v1371 = vsel %vm1363, %v1369, %v1370
  %v1372 = vrot.slane %v1366, 4
  %v1373 = vrot.slane %v1337, 7
  %v1374 = vsel %vm1363, %v1372, %v1373
  %v1375 = vrot.slane %v1370, 4
  %v1376 = vrot.slane %v1339, 7
  %v1377 = vsel %vm1363, %v1375, %v1376
  %v1378 = vrot.slane %v1373, 4
  %v1379 = vrot.slane %v1338, 7
  %v1380 = vsel %vm1363, %v1378, %v1379
  %v1381 = vrot.slane %v1376, 4
  %v1382 = vrot.slane %v1340, 7
  %v1383 = vsel %vm1363, %v1381, %v1382
  %v1384 = vrot.slane %v1379, 4
  %v1385 = vrot.slane %v1341, 7
  %v1386 = vsel %vm1363, %v1384, %v1385
  %v1387 = vrot.slane %v1382, 4
  %v1388 = vrot.slane %v1343, 7
  %v1389 = vsel %vm1363, %v1387, %v1388
  %v1390 = vrot.slane %v1385, 4
  %v1391 = vrot.slane %v1342, 7
  %v1392 = vsel %vm1363, %v1390, %v1391
  %v1393 = vrot.slane %v1388, 4
  %v1394 = vrot.slane %v1344, 7
  %v1395 = vsel %vm1363, %v1393, %v1394
  %v1396 = vrot.slane %v1391, 4
  %v1397 = vrot.slane %v1345, 7
  %v1398 = vsel %vm1363, %v1396, %v1397
  %v1399 = vrot.slane %v1394, 4
  %v1400 = vrot.slane %v1347, 7
  %v1401 = vsel %vm1363, %v1399, %v1400
  %v1402 = vrot.slane %v1346, 7
  %v1403 = vrot.slane %v1402, 4
  %v1404 = vrot.slane %v1349, 7
  %v1405 = vsel %vm1363, %v1403, %v1404
  %v1406 = vrot.slane %v1348, 7
  %v1407 = vrot.slane %v1406, 4
  %v1408 = vrot.slane %v1351, 7
  %v1409 = vsel %vm1363, %v1407, %v1408
  %v1410 = vrot.slane %v1404, 4
  %v1411 = vrot.slane %v1350, 7
  %v1412 = vsel %vm1363, %v1410, %v1411
  %v1413 = vrot.slane %v1408, 4
  %v1414 = vrot.slane %v1352, 7
  %v1415 = vsel %vm1363, %v1413, %v1414
  %v1416 = vrot.slane %v1411, 4
  %v1417 = vrot.slane %v1353, 7
  %v1418 = vsel %vm1363, %v1416, %v1417
  %v1419 = vrot.slane %v1414, 4
  %v1420 = vrot.slane %v1355, 7
  %v1421 = vsel %vm1363, %v1419, %v1420
  %v1422 = vrot.slane %v1417, 4
  %v1423 = vrot.slane %v1354, 7
  %v1424 = vsel %vm1363, %v1422, %v1423
  %v1425 = vrot.slane %v1420, 4
  %v1426 = vrot.slane %v1356, 7
  %v1427 = vsel %vm1363, %v1425, %v1426
  %v1428 = vrot.slane %v1423, 4
  %v1429 = vrot.slane %v1357, 7
  %v1430 = vsel %vm1363, %v1428, %v1429
  %v1431 = vrot.slane %v1426, 4
  %v1432 = vrot.slane %v1359, 7
  %v1433 = vsel %vm1363, %v1431, %v1432
  %v1434 = vrot.slane %v1429, 4
  %v1435 = vrot.slane %v1358, 7
  %v1436 = vsel %vm1363, %v1434, %v1435
  %v1437 = vrot.slane %v1432, 4
  %v1438 = vrot.slane %v1360, 7
  %v1439 = vsel %vm1363, %v1437, %v1438
  %v1464 = vadd.f32 %v1082, %v1367
  %v1465 = vadd.f32 %v1083, %v1371
  %v1466 = vadd.f32 %v1084, %v1374
  %v1467 = vadd.f32 %v1085, %v1377
  %v1468 = vadd.f32 %v1086, %v1380
  %v1469 = vadd.f32 %v1087, %v1383
  %v1470 = vadd.f32 %v1088, %v1386
  %v1471 = vadd.f32 %v1089, %v1389
  %v1472 = vadd.f32 %v1090, %v1392
  %v1473 = vadd.f32 %v1091, %v1395
  %v1474 = vadd.f32 %v1092, %v1398
  %v1475 = vadd.f32 %v1093, %v1401
  %v1476 = vadd.f32 %v1094, %v1405
  %v1477 = vadd.f32 %v1095, %v1409
  %v1478 = vadd.f32 %v1096, %v1412
  %v1479 = vadd.f32 %v1097, %v1415
  %v1480 = vadd.f32 %v1098, %v1418
  %v1481 = vadd.f32 %v1099, %v1421
  %v1482 = vadd.f32 %v1100, %v1424
  %v1483 = vadd.f32 %v1101, %v1427
  %v1484 = vadd.f32 %v1102, %v1430
  %v1485 = vadd.f32 %v1103, %v1433
  %v1486 = vadd.f32 %v1104, %v1436
  %v1487 = vadd.f32 %v1105, %v1439
  %s1488 = scalar_lea.vmem %s1, 256
  %v1489 = vld [vmem:[%s1488] sm:$0xff]
  %v1490 = vld [vmem:[%s1488 + $0x8] sm:$0xff]
  %v1491 = vld [vmem:[%s1488 + $0x10] sm:$0xff]
  %v1492 = vld [vmem:[%s1488 + $0x18] sm:$0xff]
  %v1493 = vld [vmem:[%s1488 + $0x20] sm:$0xff]
  %v1494 = vld [vmem:[%s1488 + $0x28] sm:$0xff]
  %v1495 = vld [vmem:[%s1488 + $0x30] sm:$0x33]
  %v1496 = vld [vmem:[%s1488 + $0x38] sm:$0x33]
  %v1505 = vunpack.c.l.b16 %v1489
  %v1506 = vunpack.c.h.b16 %v1489
  %v1507 = vunpack.c.l.b16 %v1490
  %v1508 = vunpack.c.h.b16 %v1490
  %v1509 = vunpack.c.l.b16 %v1491
  %v1510 = vunpack.c.h.b16 %v1491
  %v1511 = vunpack.c.l.b16 %v1492
  %v1512 = vunpack.c.h.b16 %v1492
  %v1513 = vunpack.c.l.b16 %v1493
  %v1514 = vunpack.c.h.b16 %v1493
  %v1515 = vunpack.c.l.b16 %v1494
  %v1516 = vunpack.c.h.b16 %v1494
  %v1517 = vunpack.c.l.b16 %v1495
  %v1518 = vunpack.c.h.b16 %v1495
  %v1519 = vunpack.c.l.b16 %v1496
  %v1520 = vunpack.c.h.b16 %v1496
  %v1521 = vpack.c.b16 %v1509, %v1505
  %v1522 = vpack.c.b16 %v1510, %v1506
  %v1523 = vpack.c.b16 %v1511, %v1507
  %v1524 = vpack.c.b16 %v1512, %v1508
  %v1525 = vpack.c.b16 %v1517, %v1513
  %v1526 = vpack.c.b16 %v1518, %v1514
  %v1527 = vpack.c.b16 %v1519, %v1515
  %v1528 = vpack.c.b16 %v1520, %v1516
  %v1534 = vsel %vm111, %v1525, 0
  %v1537 = vsel %vm111, %v1526, 0
  %v1540 = vsel %vm111, %v1527, 0
  %v1543 = vsel %vm111, %v1528, 0
  %1545 = vmatprep.subr.bf16.mxu0 %v1522
  %1546 = vmatpush1.bf16.msra.mxu0 %v1521
  %1547 = vmatprep.subr.bf16.mxu0 %v1537
  %1548 = vmatpush1.bf16.msra.mxu0 %v1534
  %1549 = vmatprep.subr.bf16.mxu0 0
  %1550 = vmatpush1.bf16.msra.mxu0 0
  %1551 = vmatprep.subr.bf16.mxu0 0
  %1552 = vmatpush1.bf16.msra.mxu0 0
  %1553 = vmatprep.subr.bf16.mxu0 0
  %1554 = vmatpush1.bf16.msra.mxu0 0
  %1555 = vmatprep.subr.bf16.mxu0 0
  %1556 = vmatpush1.bf16.msra.mxu0 0
  %1557 = vmatprep.subr.bf16.mxu0 0
  %1558 = vmatpush1.bf16.msra.mxu0 0
  %1559 = vmatprep.subr.bf16.mxu0 0
  %1560 = vmatpush1.bf16.msra.mxu0 0
  %1561 = vmatprep.subr.bf16.mxu0 0
  %1562 = vmatpush1.bf16.msra.mxu0 0
  %1563 = vmatprep.subr.bf16.mxu0 0
  %1564 = vmatpush1.bf16.msra.mxu0 0
  %1565 = vmatprep.subr.bf16.mxu0 0
  %1566 = vmatpush1.bf16.msra.mxu0 0
  %1567 = vmatprep.subr.bf16.mxu0 0
  %1568 = vmatpush1.bf16.msra.mxu0 0
  %1569 = vmatprep.subr.bf16.mxu0 0
  %1570 = vmatpush1.bf16.msra.mxu0 0
  %1571 = vmatprep.subr.bf16.mxu0 0
  %1572 = vmatpush1.bf16.msra.mxu0 0
  %1573 = vmatprep.subr.bf16.mxu0 0
  %1574 = vmatpush1.bf16.msra.mxu0 0
  %1575 = vmatprep.subr.bf16.mxu0 0
  %1576 = vmatpush1.bf16.msra.mxu0 0
  %1577 = vmatprep.mubr.bf16.mxu0 0
  %1578 = vmatmul.mubr.bf16.gmra.mrb[0].mxu0 %v100
  %v1579 = vpop.f32.mrb[0].mxu0
  %v1580 = vadd.f32 0.0, %v1579
  %v1581 = vpop.f32.mrb[0].mxu0
  %v1582 = vadd.f32 0.0, %v1581
  %v1583 = vpop.f32.mrb[0].mxu0
  %v1584 = vadd.f32 0.0, %v1583
  %v1585 = vpop.f32.mrb[0].mxu0
  %v1586 = vadd.f32 0.0, %v1585
  %1587 = vmatprep.mubr.bf16.mxu0 0
  %1588 = vmatmul.mubr.bf16.gmra.mrb[0].mxu0 %v103
  %v1589 = vpop.f32.mrb[0].mxu0
  %v1590 = vadd.f32 0.0, %v1589
  %v1591 = vpop.f32.mrb[0].mxu0
  %v1592 = vadd.f32 0.0, %v1591
  %v1593 = vpop.f32.mrb[0].mxu0
  %v1594 = vadd.f32 0.0, %v1593
  %v1595 = vpop.f32.mrb[0].mxu0
  %v1596 = vadd.f32 0.0, %v1595
  %1597 = vmatprep.mubr.bf16.mxu0 0
  %1598 = vmatmul.mubr.bf16.gmra.mrb[0].mxu0 %v106
  %v1599 = vpop.f32.mrb[0].mxu0
  %v1600 = vadd.f32 0.0, %v1599
  %v1601 = vpop.f32.mrb[0].mxu0
  %v1602 = vadd.f32 0.0, %v1601
  %v1603 = vpop.f32.mrb[0].mxu0
  %v1604 = vadd.f32 0.0, %v1603
  %v1605 = vpop.f32.mrb[0].mxu0
  %v1606 = vadd.f32 0.0, %v1605
  %1607 = vmatprep.mubr.bf16.mxu0 0
  %1608 = vmatmul.mubr.bf16.gmra.mrb[0].mxu0 %v109
  %v1609 = vpop.f32.mrb[0].mxu0
  %v1610 = vadd.f32 0.0, %v1609
  %v1611 = vpop.f32.mrb[0].mxu0
  %v1612 = vadd.f32 0.0, %v1611
  %v1613 = vpop.f32.mrb[0].mxu0
  %v1614 = vpop.f32.mrb[0].mxu0
  %1615 = vdwg.mxu0
  %1616 = vmatprep.subr.bf16.mxu0 %v1524
  %1617 = vmatpush1.bf16.msra.mxu0 %v1523
  %1618 = vmatprep.subr.bf16.mxu0 %v1543
  %1619 = vmatpush1.bf16.msra.mxu0 %v1540
  %1620 = vmatprep.subr.bf16.mxu0 0
  %1621 = vmatpush1.bf16.msra.mxu0 0
  %1622 = vmatprep.subr.bf16.mxu0 0
  %1623 = vmatpush1.bf16.msra.mxu0 0
  %1624 = vmatprep.subr.bf16.mxu0 0
  %1625 = vmatpush1.bf16.msra.mxu0 0
  %1626 = vmatprep.subr.bf16.mxu0 0
  %1627 = vmatpush1.bf16.msra.mxu0 0
  %1628 = vmatprep.subr.bf16.mxu0 0
  %1629 = vmatpush1.bf16.msra.mxu0 0
  %1630 = vmatprep.subr.bf16.mxu0 0
  %1631 = vmatpush1.bf16.msra.mxu0 0
  %1632 = vmatprep.subr.bf16.mxu0 0
  %1633 = vmatpush1.bf16.msra.mxu0 0
  %1634 = vmatprep.subr.bf16.mxu0 0
  %1635 = vmatpush1.bf16.msra.mxu0 0
  %1636 = vmatprep.subr.bf16.mxu0 0
  %1637 = vmatpush1.bf16.msra.mxu0 0
  %1638 = vmatprep.subr.bf16.mxu0 0
  %1639 = vmatpush1.bf16.msra.mxu0 0
  %1640 = vmatprep.subr.bf16.mxu0 0
  %1641 = vmatpush1.bf16.msra.mxu0 0
  %1642 = vmatprep.subr.bf16.mxu0 0
  %1643 = vmatpush1.bf16.msra.mxu0 0
  %1644 = vmatprep.subr.bf16.mxu0 0
  %1645 = vmatpush1.bf16.msra.mxu0 0
  %1646 = vmatprep.subr.bf16.mxu0 0
  %1647 = vmatpush1.bf16.msra.mxu0 0
  %1648 = vmatprep.mubr.bf16.mxu0 0
  %1649 = vmatmul.mubr.bf16.gmra.mrb[0].mxu0 %v100
  %v1650 = vpop.f32.mrb[0].mxu0
  %v1651 = vadd.f32 0.0, %v1650
  %v1652 = vpop.f32.mrb[0].mxu0
  %v1653 = vadd.f32 0.0, %v1652
  %v1654 = vpop.f32.mrb[0].mxu0
  %v1655 = vadd.f32 0.0, %v1654
  %v1656 = vpop.f32.mrb[0].mxu0
  %v1657 = vadd.f32 0.0, %v1656
  %1658 = vmatprep.mubr.bf16.mxu0 0
  %1659 = vmatmul.mubr.bf16.gmra.mrb[0].mxu0 %v103
  %v1660 = vpop.f32.mrb[0].mxu0
  %v1661 = vadd.f32 0.0, %v1660
  %v1662 = vpop.f32.mrb[0].mxu0
  %v1663 = vadd.f32 0.0, %v1662
  %v1664 = vpop.f32.mrb[0].mxu0
  %v1665 = vadd.f32 0.0, %v1664
  %v1666 = vpop.f32.mrb[0].mxu0
  %v1667 = vadd.f32 0.0, %v1666
  %1668 = vmatprep.mubr.bf16.mxu0 0
  %1669 = vmatmul.mubr.bf16.gmra.mrb[0].mxu0 %v106
  %v1670 = vpop.f32.mrb[0].mxu0
  %v1671 = vadd.f32 0.0, %v1670
  %v1672 = vpop.f32.mrb[0].mxu0
  %v1673 = vadd.f32 0.0, %v1672
  %v1674 = vpop.f32.mrb[0].mxu0
  %v1675 = vadd.f32 0.0, %v1674
  %v1676 = vpop.f32.mrb[0].mxu0
  %v1677 = vadd.f32 0.0, %v1676
  %1678 = vmatprep.mubr.bf16.mxu0 0
  %1679 = vmatmul.mubr.bf16.gmra.mrb[0].mxu0 %v109
  %v1680 = vpop.f32.mrb[0].mxu0
  %v1681 = vadd.f32 0.0, %v1680
  %v1682 = vpop.f32.mrb[0].mxu0
  %v1683 = vadd.f32 0.0, %v1682
  %v1684 = vpop.f32.mrb[0].mxu0
  %v1685 = vpop.f32.mrb[0].mxu0
  %1686 = vdwg.mxu0
  %v1715 = vcombine.high %v1580, %v1582
  %v1716 = vcombine.high %v1651, %v1653
  %v1717 = vcombine.low %v1584, %v1586
  %v1718 = vcombine.high %v1584, %v1586
  %v1719 = vcombine.low %v1655, %v1657
  %v1720 = vcombine.high %v1655, %v1657
  %v1721 = vcombine.low %v1590, %v1592
  %v1722 = vcombine.high %v1590, %v1592
  %v1723 = vcombine.low %v1661, %v1663
  %v1724 = vcombine.high %v1661, %v1663
  %v1725 = vcombine.low %v1594, %v1596
  %v1726 = vcombine.low %v1665, %v1667
  %v1727 = vcombine.low %v1600, %v1602
  %v1728 = vcombine.high %v1600, %v1602
  %v1729 = vcombine.low %v1671, %v1673
  %v1730 = vcombine.high %v1671, %v1673
  %v1731 = vcombine.low %v1604, %v1606
  %v1732 = vcombine.high %v1604, %v1606
  %v1733 = vcombine.low %v1675, %v1677
  %v1734 = vcombine.high %v1675, %v1677
  %v1735 = vcombine.low %v1610, %v1612
  %v1736 = vcombine.high %v1610, %v1612
  %v1737 = vcombine.low %v1681, %v1683
  %v1738 = vcombine.high %v1681, %v1683
  %v1763 = vadd.f32 %v1464, %v1715
  %v1764 = vadd.f32 %v1465, %v1716
  %v1765 = vadd.f32 %v1466, %v1717
  %v1766 = vadd.f32 %v1467, %v1719
  %v1767 = vadd.f32 %v1468, %v1718
  %v1768 = vadd.f32 %v1469, %v1720
  %v1769 = vadd.f32 %v1470, %v1721
  %v1770 = vadd.f32 %v1471, %v1723
  %v1771 = vadd.f32 %v1472, %v1722
  %v1772 = vadd.f32 %v1473, %v1724
  %v1773 = vadd.f32 %v1474, %v1725
  %v1774 = vadd.f32 %v1475, %v1726
  %v1775 = vadd.f32 %v1476, %v1727
  %v1776 = vadd.f32 %v1477, %v1729
  %v1777 = vadd.f32 %v1478, %v1728
  %v1778 = vadd.f32 %v1479, %v1730
  %v1779 = vadd.f32 %v1480, %v1731
  %v1780 = vadd.f32 %v1481, %v1733
  %v1781 = vadd.f32 %v1482, %v1732
  %v1782 = vadd.f32 %v1483, %v1734
  %v1783 = vadd.f32 %v1484, %v1735
  %v1784 = vadd.f32 %v1485, %v1737
  %v1785 = vadd.f32 %v1486, %v1736
  %v1786 = vadd.f32 %v1487, %v1738
  %v1787 = vld [vmem:[%s2] sm:$0xf]
  %v1789 = vlaneseq
  %v1790 = vshrl.u32 %v1789, 7
  %v1791 = vsub.s32 0, %v1790
  %v1792 = vrot.slane %v1787, %v1791
  %v1793 = vlaneseq
  %v1794 = vshrl.u32 %v1793, 7
  %v1795 = vsub.s32 1, %v1794
  %v1796 = vrot.slane %v1787, %v1795
  %v1797 = vlaneseq
  %v1798 = vshrl.u32 %v1797, 7
  %v1799 = vsub.s32 2, %v1798
  %v1800 = vrot.slane %v1787, %v1799
  %v1801 = vlaneseq
  %v1802 = vshrl.u32 %v1801, 7
  %v1803 = vsub.s32 3, %v1802
  %v1804 = vrot.slane %v1787, %v1803
  %v1805 = vcombine.low %v1792, %v1796
  %v1806 = vcombine.high %v1792, %v1796
  %v1807 = vcombine.low %v1800, %v1804
  %v1808 = vcombine.high %v1800, %v1804
  %v1813 = vadd.f32 %v1763, %v1805
  %v1814 = vadd.f32 %v1764, %v1807
  %v1815 = vadd.f32 %v1765, %v1806
  %v1816 = vadd.f32 %v1766, %v1808
  %v1817 = vadd.f32 %v1767, %v1805
  %v1818 = vadd.f32 %v1768, %v1807
  %v1819 = vadd.f32 %v1769, %v1806
  %v1820 = vadd.f32 %v1770, %v1808
  %v1821 = vadd.f32 %v1771, %v1805
  %v1822 = vadd.f32 %v1772, %v1807
  %v1823 = vadd.f32 %v1773, %v1806
  %v1824 = vadd.f32 %v1774, %v1808
  %v1825 = vadd.f32 %v1775, %v1805
  %v1826 = vadd.f32 %v1776, %v1807
  %v1827 = vadd.f32 %v1777, %v1806
  %v1828 = vadd.f32 %v1778, %v1808
  %v1829 = vadd.f32 %v1779, %v1805
  %v1830 = vadd.f32 %v1780, %v1807
  %v1831 = vadd.f32 %v1781, %v1806
  %v1832 = vadd.f32 %v1782, %v1808
  %v1833 = vadd.f32 %v1783, %v1805
  %v1834 = vadd.f32 %v1784, %v1807
  %v1835 = vadd.f32 %v1785, %v1806
  %v1836 = vadd.f32 %v1786, %v1808
  %1861 = vrot.lane.b32.xlu0 %v1813, 108
  %v1862 = vpop.permute.xlu0 %1861
  %1863 = vrot.lane.b32.xlu0 %v1814, 108
  %v1864 = vpop.permute.xlu0 %1863
  %1865 = vrot.lane.b32.xlu0 %v1815, 108
  %v1866 = vpop.permute.xlu0 %1865
  %1867 = vrot.lane.b32.xlu0 %v1816, 108
  %v1868 = vpop.permute.xlu0 %1867
  %1869 = vrot.lane.b32.xlu0 %v1817, 108
  %v1870 = vpop.permute.xlu0 %1869
  %1871 = vrot.lane.b32.xlu0 %v1818, 108
  %v1872 = vpop.permute.xlu0 %1871
  %1873 = vrot.lane.b32.xlu0 %v1819, 108
  %v1874 = vpop.permute.xlu0 %1873
  %1875 = vrot.lane.b32.xlu0 %v1820, 108
  %v1876 = vpop.permute.xlu0 %1875
  %1877 = vrot.lane.b32.xlu0 %v1821, 108
  %v1878 = vpop.permute.xlu0 %1877
  %1879 = vrot.lane.b32.xlu0 %v1822, 108
  %v1880 = vpop.permute.xlu0 %1879
  %1881 = vrot.lane.b32.xlu0 %v1823, 108
  %v1882 = vpop.permute.xlu0 %1881
  %1883 = vrot.lane.b32.xlu0 %v1824, 108
  %v1884 = vpop.permute.xlu0 %1883
  %1885 = vrot.lane.b32.xlu0 %v1825, 108
  %v1886 = vpop.permute.xlu0 %1885
  %1887 = vrot.lane.b32.xlu0 %v1826, 108
  %v1888 = vpop.permute.xlu0 %1887
  %1889 = vrot.lane.b32.xlu0 %v1827, 108
  %v1890 = vpop.permute.xlu0 %1889
  %1891 = vrot.lane.b32.xlu0 %v1828, 108
  %v1892 = vpop.permute.xlu0 %1891
  %1893 = vrot.lane.b32.xlu0 %v1829, 108
  %v1894 = vpop.permute.xlu0 %1893
  %1895 = vrot.lane.b32.xlu0 %v1830, 108
  %v1896 = vpop.permute.xlu0 %1895
  %1897 = vrot.lane.b32.xlu0 %v1831, 108
  %v1898 = vpop.permute.xlu0 %1897
  %1899 = vrot.lane.b32.xlu0 %v1832, 108
  %v1900 = vpop.permute.xlu0 %1899
  %1901 = vrot.lane.b32.xlu0 %v1833, 108
  %v1902 = vpop.permute.xlu0 %1901
  %1903 = vrot.lane.b32.xlu0 %v1834, 108
  %v1904 = vpop.permute.xlu0 %1903
  %1905 = vrot.lane.b32.xlu0 %v1835, 108
  %v1906 = vpop.permute.xlu0 %1905
  %1907 = vrot.lane.b32.xlu0 %v1836, 108
  %v1908 = vpop.permute.xlu0 %1907
  %v1909 = vrot.slane %v1862, 4
  %v1910 = vrot.slane %v1864, 4
  %v1911 = vrot.slane %v1866, 4
  %v1912 = vrot.slane %v1868, 4
  %v1913 = vrot.slane %v1870, 4
  %v1914 = vrot.slane %v1872, 4
  %v1915 = vrot.slane %v1874, 4
  %v1916 = vrot.slane %v1876, 4
  %v1917 = vrot.slane %v1878, 4
  %v1918 = vrot.slane %v1880, 4
  %v1919 = vrot.slane %v1882, 4
  %v1920 = vrot.slane %v1884, 4
  %v1921 = vrot.slane %v1886, 4
  %v1922 = vrot.slane %v1888, 4
  %v1923 = vrot.slane %v1890, 4
  %v1924 = vrot.slane %v1892, 4
  %v1925 = vrot.slane %v1894, 4
  %v1926 = vrot.slane %v1896, 4
  %v1927 = vrot.slane %v1898, 4
  %v1928 = vrot.slane %v1900, 4
  %v1929 = vrot.slane %v1902, 4
  %v1930 = vrot.slane %v1904, 4
  %v1931 = vrot.slane %v1906, 4
  %v1932 = vrot.slane %v1908, 4
  %vm1933 = vcmask 1043456
  %v1934 = vsel %vm1933, %v1909, %v1910
  %vm1935 = vcmask 883712
  %v1936 = vsel %vm1935, %v1862, %v1934
  %v1937 = vsel %vm1935, %v1864, %v1910
  %v1938 = vsel %vm1933, %v1911, %v1912
  %v1939 = vsel %vm1935, %v1866, %v1938
  %v1940 = vsel %vm1935, %v1868, %v1912
  %v1941 = vsel %vm1933, %v1913, %v1914
  %v1942 = vsel %vm1935, %v1870, %v1941
  %v1943 = vsel %vm1935, %v1872, %v1914
  %v1944 = vsel %vm1933, %v1915, %v1916
  %v1945 = vsel %vm1935, %v1874, %v1944
  %v1946 = vsel %vm1935, %v1876, %v1916
  %v1947 = vsel %vm1933, %v1917, %v1918
  %v1948 = vsel %vm1935, %v1878, %v1947
  %v1949 = vsel %vm1935, %v1880, %v1918
  %v1950 = vsel %vm1933, %v1919, %v1920
  %v1951 = vsel %vm1935, %v1882, %v1950
  %v1952 = vsel %vm1935, %v1884, %v1920
  %v1953 = vsel %vm1933, %v1921, %v1922
  %v1954 = vsel %vm1935, %v1886, %v1953
  %v1955 = vsel %vm1935, %v1888, %v1922
  %v1956 = vsel %vm1933, %v1923, %v1924
  %v1957 = vsel %vm1935, %v1890, %v1956
  %v1958 = vsel %vm1935, %v1892, %v1924
  %v1959 = vsel %vm1933, %v1925, %v1926
  %v1960 = vsel %vm1935, %v1894, %v1959
  %v1961 = vsel %vm1935, %v1896, %v1926
  %v1962 = vsel %vm1933, %v1927, %v1928
  %v1963 = vsel %vm1935, %v1898, %v1962
  %v1964 = vsel %vm1935, %v1900, %v1928
  %v1965 = vsel %vm1933, %v1929, %v1930
  %v1966 = vsel %vm1935, %v1902, %v1965
  %v1967 = vsel %vm1935, %v1904, %v1930
  %v1968 = vsel %vm1933, %v1931, %v1932
  %v1969 = vsel %vm1935, %v1906, %v1968
  %v1970 = vsel %vm1935, %v1908, %v1932
  %v1995 = vmax.f32 %v1813, %v1936
  %v1996 = vmax.f32 %v1814, %v1937
  %v1997 = vmax.f32 %v1815, %v1939
  %v1998 = vmax.f32 %v1816, %v1940
  %v1999 = vmax.f32 %v1817, %v1942
  %v2000 = vmax.f32 %v1818, %v1943
  %v2001 = vmax.f32 %v1819, %v1945
  %v2002 = vmax.f32 %v1820, %v1946
  %v2003 = vmax.f32 %v1821, %v1948
  %v2004 = vmax.f32 %v1822, %v1949
  %v2005 = vmax.f32 %v1823, %v1951
  %v2006 = vmax.f32 %v1824, %v1952
  %v2007 = vmax.f32 %v1825, %v1954
  %v2008 = vmax.f32 %v1826, %v1955
  %v2009 = vmax.f32 %v1827, %v1957
  %v2010 = vmax.f32 %v1828, %v1958
  %v2011 = vmax.f32 %v1829, %v1960
  %v2012 = vmax.f32 %v1830, %v1961
  %v2013 = vmax.f32 %v1831, %v1963
  %v2014 = vmax.f32 %v1832, %v1964
  %v2015 = vmax.f32 %v1833, %v1966
  %v2016 = vmax.f32 %v1834, %v1967
  %v2017 = vmax.f32 %v1835, %v1969
  %v2018 = vmax.f32 %v1836, %v1970
  %v2043 = vrot.slane %v1995, 5
  %v2044 = vrot.slane %v2043, 4
  %v2045 = vrot.slane %v1997, 5
  %v2046 = vsel %vm599, %v2044, %v2045
  %v2047 = vrot.slane %v1996, 5
  %v2048 = vrot.slane %v2047, 4
  %v2049 = vrot.slane %v1998, 5
  %v2050 = vsel %vm599, %v2048, %v2049
  %v2051 = vrot.slane %v2045, 4
  %v2052 = vrot.slane %v1999, 5
  %v2053 = vsel %vm599, %v2051, %v2052
  %v2054 = vrot.slane %v2049, 4
  %v2055 = vrot.slane %v2000, 5
  %v2056 = vsel %vm599, %v2054, %v2055
  %v2057 = vrot.slane %v2052, 4
  %v2058 = vrot.slane %v2001, 5
  %v2059 = vsel %vm599, %v2057, %v2058
  %v2060 = vrot.slane %v2055, 4
  %v2061 = vrot.slane %v2002, 5
  %v2062 = vsel %vm599, %v2060, %v2061
  %v2063 = vrot.slane %v2058, 4
  %v2064 = vrot.slane %v2003, 5
  %v2065 = vsel %vm599, %v2063, %v2064
  %v2066 = vrot.slane %v2061, 4
  %v2067 = vrot.slane %v2004, 5
  %v2068 = vsel %vm599, %v2066, %v2067
  %v2069 = vrot.slane %v2064, 4
  %v2070 = vrot.slane %v2005, 5
  %v2071 = vsel %vm599, %v2069, %v2070
  %v2072 = vrot.slane %v2067, 4
  %v2073 = vrot.slane %v2006, 5
  %v2074 = vsel %vm599, %v2072, %v2073
  %v2075 = vrot.slane %v2070, 4
  %v2076 = vrot.slane %v2073, 4
  %v2077 = vrot.slane %v2007, 5
  %v2078 = vrot.slane %v2077, 4
  %v2079 = vrot.slane %v2009, 5
  %v2080 = vsel %vm599, %v2078, %v2079
  %v2081 = vrot.slane %v2008, 5
  %v2082 = vrot.slane %v2081, 4
  %v2083 = vrot.slane %v2010, 5
  %v2084 = vsel %vm599, %v2082, %v2083
  %v2085 = vrot.slane %v2079, 4
  %v2086 = vrot.slane %v2011, 5
  %v2087 = vsel %vm599, %v2085, %v2086
  %v2088 = vrot.slane %v2083, 4
  %v2089 = vrot.slane %v2012, 5
  %v2090 = vsel %vm599, %v2088, %v2089
  %v2091 = vrot.slane %v2086, 4
  %v2092 = vrot.slane %v2013, 5
  %v2093 = vsel %vm599, %v2091, %v2092
  %v2094 = vrot.slane %v2089, 4
  %v2095 = vrot.slane %v2014, 5
  %v2096 = vsel %vm599, %v2094, %v2095
  %v2097 = vrot.slane %v2092, 4
  %v2098 = vrot.slane %v2015, 5
  %v2099 = vsel %vm599, %v2097, %v2098
  %v2100 = vrot.slane %v2095, 4
  %v2101 = vrot.slane %v2016, 5
  %v2102 = vsel %vm599, %v2100, %v2101
  %v2103 = vrot.slane %v2098, 4
  %v2104 = vrot.slane %v2017, 5
  %v2105 = vsel %vm599, %v2103, %v2104
  %v2106 = vrot.slane %v2101, 4
  %v2107 = vrot.slane %v2018, 5
  %v2108 = vsel %vm599, %v2106, %v2107
  %v2109 = vrot.slane %v2104, 4
  %v2110 = vrot.slane %v2107, 4
  %v2135 = vmax.f32 %v1995, %v2046
  %v2136 = vmax.f32 %v1996, %v2050
  %v2137 = vmax.f32 %v1997, %v2053
  %v2138 = vmax.f32 %v1998, %v2056
  %v2139 = vmax.f32 %v1999, %v2059
  %v2140 = vmax.f32 %v2000, %v2062
  %v2141 = vmax.f32 %v2001, %v2065
  %v2142 = vmax.f32 %v2002, %v2068
  %v2143 = vmax.f32 %v2003, %v2071
  %v2144 = vmax.f32 %v2004, %v2074
  %v2145 = vmax.f32 %v2005, %v2075
  %v2146 = vmax.f32 %v2006, %v2076
  %v2147 = vmax.f32 %v2007, %v2080
  %v2148 = vmax.f32 %v2008, %v2084
  %v2149 = vmax.f32 %v2009, %v2087
  %v2150 = vmax.f32 %v2010, %v2090
  %v2151 = vmax.f32 %v2011, %v2093
  %v2152 = vmax.f32 %v2012, %v2096
  %v2153 = vmax.f32 %v2013, %v2099
  %v2154 = vmax.f32 %v2014, %v2102
  %v2155 = vmax.f32 %v2015, %v2105
  %v2156 = vmax.f32 %v2016, %v2108
  %v2157 = vmax.f32 %v2017, %v2109
  %v2158 = vmax.f32 %v2018, %v2110
  %v2183 = vcombine.low %v2135, %v2137
  %v2184 = vcombine.high %v2135, %v2137
  %v2185 = vcombine.low %v2136, %v2138
  %v2186 = vcombine.high %v2136, %v2138
  %v2187 = vcombine.low %v2139, %v2141
  %v2188 = vcombine.high %v2139, %v2141
  %v2189 = vcombine.low %v2140, %v2142
  %v2190 = vcombine.high %v2140, %v2142
  %v2191 = vcombine.low %v2143, %v2145
  %v2192 = vcombine.high %v2143, %v2145
  %v2193 = vcombine.low %v2144, %v2146
  %v2194 = vcombine.high %v2144, %v2146
  %v2195 = vcombine.low %v2147, %v2149
  %v2196 = vcombine.high %v2147, %v2149
  %v2197 = vcombine.low %v2148, %v2150
  %v2198 = vcombine.high %v2148, %v2150
  %v2199 = vcombine.low %v2151, %v2153
  %v2200 = vcombine.high %v2151, %v2153
  %v2201 = vcombine.low %v2152, %v2154
  %v2202 = vcombine.high %v2152, %v2154
  %v2203 = vcombine.low %v2155, %v2157
  %v2204 = vcombine.high %v2155, %v2157
  %v2205 = vcombine.low %v2156, %v2158
  %v2206 = vcombine.high %v2156, %v2158
  %v2231 = vpack.c.bf16 %v2187, %v2183
  %v2232 = vpack.c.bf16 %v2188, %v2184
  %v2233 = vpack.c.bf16 %v2189, %v2185
  %v2234 = vpack.c.bf16 %v2190, %v2186
  %v2235 = vpack.c.bf16 %v2191, %v2191
  %v2236 = vpack.c.bf16 %v2192, %v2192
  %v2237 = vpack.c.bf16 %v2193, %v2193
  %v2238 = vpack.c.bf16 %v2194, %v2194
  %v2239 = vpack.c.bf16 %v2199, %v2195
  %v2240 = vpack.c.bf16 %v2200, %v2196
  %v2241 = vpack.c.bf16 %v2201, %v2197
  %v2242 = vpack.c.bf16 %v2202, %v2198
  %v2243 = vpack.c.bf16 %v2203, %v2203
  %v2244 = vpack.c.bf16 %v2204, %v2204
  %v2245 = vpack.c.bf16 %v2205, %v2205
  %v2246 = vpack.c.bf16 %v2206, %v2206
  %v2263 = vcombine.low %v2231, %v2232
  %v2264 = vcombine.high %v2231, %v2232
  %v2265 = vcombine.low %v2233, %v2234
  %v2266 = vcombine.high %v2233, %v2234
  %v2268 = vunpack.c.l.s4 1966171168
  %v2269 = vunpack.c.0.s8 %v2268
  %v2270 = vlaneseq
  %v2271 = vshrl.u32 %v2270, 7
  %v2272 = vsub.s32 %v2269, %v2271
  %v2273 = vrot.slane %v2263, %v2272
  %v2275 = vunpack.c.l.s4 1966171168
  %v2276 = vunpack.c.0.s8 %v2275
  %v2277 = vlaneseq
  %v2278 = vshrl.u32 %v2277, 7
  %v2279 = vsub.s32 %v2276, %v2278
  %v2280 = vrot.slane %v2264, %v2279
  %v2282 = vunpack.c.l.s4 1966171168
  %v2283 = vunpack.c.0.s8 %v2282
  %v2284 = vlaneseq
  %v2285 = vshrl.u32 %v2284, 7
  %v2286 = vsub.s32 %v2283, %v2285
  %v2287 = vrot.slane %v2265, %v2286
  %v2289 = vunpack.c.l.s4 1966171168
  %v2290 = vunpack.c.0.s8 %v2289
  %v2291 = vlaneseq
  %v2292 = vshrl.u32 %v2291, 7
  %v2293 = vsub.s32 %v2290, %v2292
  %v2294 = vrot.slane %v2266, %v2293
  %v2295 = vcombine.low %v2273, %v2287
  %v2296 = vcombine.high %v2273, %v2287
  %v2297 = vcombine.low %v2280, %v2294
  %v2298 = vcombine.high %v2280, %v2294
  %v2300 = vunpack.c.l.s4 1966171168
  %v2301 = vunpack.c.0.s8 %v2300
  %v2302 = vlaneseq
  %v2303 = vshrl.u32 %v2302, 7
  %v2304 = vsub.s32 %v2301, %v2303
  %v2305 = vrot.slane %v2295, %v2304
  %v2307 = vunpack.c.l.s4 1966171168
  %v2308 = vunpack.c.0.s8 %v2307
  %v2309 = vlaneseq
  %v2310 = vshrl.u32 %v2309, 7
  %v2311 = vsub.s32 %v2308, %v2310
  %v2312 = vrot.slane %v2297, %v2311
  %v2314 = vunpack.c.l.s4 1966171168
  %v2315 = vunpack.c.0.s8 %v2314
  %v2316 = vlaneseq
  %v2317 = vshrl.u32 %v2316, 7
  %v2318 = vsub.s32 %v2315, %v2317
  %v2319 = vrot.slane %v2296, %v2318
  %v2321 = vunpack.c.l.s4 1966171168
  %v2322 = vunpack.c.0.s8 %v2321
  %v2323 = vlaneseq
  %v2324 = vshrl.u32 %v2323, 7
  %v2325 = vsub.s32 %v2322, %v2324
  %v2326 = vrot.slane %v2298, %v2325
  %v2327 = vcombine.high %v2305, %v2305
  %v2328 = vcombine.high %v2312, %v2312
  %v2329 = vcombine.high %v2319, %v2319
  %v2330 = vcombine.high %v2326, %v2326
  %v2331 = vcombine.low %v2235, %v2236
  %v2332 = vcombine.low %v2237, %v2238
  %v2334 = vunpack.c.l.s4 1966171168
  %v2335 = vunpack.c.0.s8 %v2334
  %v2336 = vlaneseq
  %v2337 = vshrl.u32 %v2336, 7
  %v2338 = vsub.s32 %v2335, %v2337
  %v2339 = vrot.slane %v2331, %v2338
  %v2341 = vunpack.c.l.s4 1966171168
  %v2342 = vunpack.c.0.s8 %v2341
  %v2343 = vlaneseq
  %v2344 = vshrl.u32 %v2343, 7
  %v2345 = vsub.s32 %v2342, %v2344
  %v2346 = vrot.slane %v2332, %v2345
  %v2347 = vcombine.low %v2339, %v2346
  %v2348 = vcombine.high %v2339, %v2346
  %v2350 = vunpack.c.l.s4 1966171168
  %v2351 = vunpack.c.0.s8 %v2350
  %v2352 = vlaneseq
  %v2353 = vshrl.u32 %v2352, 7
  %v2354 = vsub.s32 %v2351, %v2353
  %v2355 = vrot.slane %v2347, %v2354
  %v2357 = vunpack.c.l.s4 1966171168
  %v2358 = vunpack.c.0.s8 %v2357
  %v2359 = vlaneseq
  %v2360 = vshrl.u32 %v2359, 7
  %v2361 = vsub.s32 %v2358, %v2360
  %v2362 = vrot.slane %v2348, %v2361
  %v2363 = vcombine.high %v2355, %v2355
  %v2364 = vcombine.high %v2362, %v2362
  %v2365 = vcombine.low %v2239, %v2240
  %v2366 = vcombine.high %v2239, %v2240
  %v2367 = vcombine.low %v2241, %v2242
  %v2368 = vcombine.high %v2241, %v2242
  %v2370 = vunpack.c.l.s4 1966171168
  %v2371 = vunpack.c.0.s8 %v2370
  %v2372 = vlaneseq
  %v2373 = vshrl.u32 %v2372, 7
  %v2374 = vsub.s32 %v2371, %v2373
  %v2375 = vrot.slane %v2365, %v2374
  %v2377 = vunpack.c.l.s4 1966171168
  %v2378 = vunpack.c.0.s8 %v2377
  %v2379 = vlaneseq
  %v2380 = vshrl.u32 %v2379, 7
  %v2381 = vsub.s32 %v2378, %v2380
  %v2382 = vrot.slane %v2366, %v2381
  %v2384 = vunpack.c.l.s4 1966171168
  %v2385 = vunpack.c.0.s8 %v2384
  %v2386 = vlaneseq
  %v2387 = vshrl.u32 %v2386, 7
  %v2388 = vsub.s32 %v2385, %v2387
  %v2389 = vrot.slane %v2367, %v2388
  %v2391 = vunpack.c.l.s4 1966171168
  %v2392 = vunpack.c.0.s8 %v2391
  %v2393 = vlaneseq
  %v2394 = vshrl.u32 %v2393, 7
  %v2395 = vsub.s32 %v2392, %v2394
  %v2396 = vrot.slane %v2368, %v2395
  %v2397 = vcombine.low %v2375, %v2389
  %v2398 = vcombine.high %v2375, %v2389
  %v2399 = vcombine.low %v2382, %v2396
  %v2400 = vcombine.high %v2382, %v2396
  %v2402 = vunpack.c.l.s4 1966171168
  %v2403 = vunpack.c.0.s8 %v2402
  %v2404 = vlaneseq
  %v2405 = vshrl.u32 %v2404, 7
  %v2406 = vsub.s32 %v2403, %v2405
  %v2407 = vrot.slane %v2397, %v2406
  %v2409 = vunpack.c.l.s4 1966171168
  %v2410 = vunpack.c.0.s8 %v2409
  %v2411 = vlaneseq
  %v2412 = vshrl.u32 %v2411, 7
  %v2413 = vsub.s32 %v2410, %v2412
  %v2414 = vrot.slane %v2399, %v2413
  %v2416 = vunpack.c.l.s4 1966171168
  %v2417 = vunpack.c.0.s8 %v2416
  %v2418 = vlaneseq
  %v2419 = vshrl.u32 %v2418, 7
  %v2420 = vsub.s32 %v2417, %v2419
  %v2421 = vrot.slane %v2398, %v2420
  %v2423 = vunpack.c.l.s4 1966171168
  %v2424 = vunpack.c.0.s8 %v2423
  %v2425 = vlaneseq
  %v2426 = vshrl.u32 %v2425, 7
  %v2427 = vsub.s32 %v2424, %v2426
  %v2428 = vrot.slane %v2400, %v2427
  %v2429 = vcombine.high %v2407, %v2407
  %v2430 = vcombine.high %v2414, %v2414
  %v2431 = vcombine.high %v2421, %v2421
  %v2432 = vcombine.high %v2428, %v2428
  %v2433 = vcombine.low %v2243, %v2244
  %v2434 = vcombine.low %v2245, %v2246
  %v2436 = vunpack.c.l.s4 1966171168
  %v2437 = vunpack.c.0.s8 %v2436
  %v2438 = vlaneseq
  %v2439 = vshrl.u32 %v2438, 7
  %v2440 = vsub.s32 %v2437, %v2439
  %v2441 = vrot.slane %v2433, %v2440
  %v2443 = vunpack.c.l.s4 1966171168
  %v2444 = vunpack.c.0.s8 %v2443
  %v2445 = vlaneseq
  %v2446 = vshrl.u32 %v2445, 7
  %v2447 = vsub.s32 %v2444, %v2446
  %v2448 = vrot.slane %v2434, %v2447
  %v2449 = vcombine.low %v2441, %v2448
  %v2450 = vcombine.high %v2441, %v2448
  %v2452 = vunpack.c.l.s4 1966171168
  %v2453 = vunpack.c.0.s8 %v2452
  %v2454 = vlaneseq
  %v2455 = vshrl.u32 %v2454, 7
  %v2456 = vsub.s32 %v2453, %v2455
  %v2457 = vrot.slane %v2449, %v2456
  %v2459 = vunpack.c.l.s4 1966171168
  %v2460 = vunpack.c.0.s8 %v2459
  %v2461 = vlaneseq
  %v2462 = vshrl.u32 %v2461, 7
  %v2463 = vsub.s32 %v2460, %v2462
  %v2464 = vrot.slane %v2450, %v2463
  %v2465 = vcombine.high %v2457, %v2457
  %v2466 = vcombine.high %v2464, %v2464
  %v2467 = vunpack.i.l.s16 %v2305
  %v2468 = vunpack.i.h.s16 %v2305
  %v2469 = vunpack.i.l.s16 %v2319
  %v2470 = vunpack.i.h.s16 %v2319
  %v2471 = vunpack.i.l.s16 %v2327
  %v2472 = vunpack.i.h.s16 %v2327
  %v2473 = vunpack.i.l.s16 %v2329
  %v2474 = vunpack.i.h.s16 %v2329
  %v2475 = vunpack.i.l.s16 %v2312
  %v2476 = vunpack.i.h.s16 %v2312
  %v2477 = vunpack.i.l.s16 %v2326
  %v2478 = vunpack.i.h.s16 %v2326
  %v2479 = vunpack.i.l.s16 %v2328
  %v2480 = vunpack.i.h.s16 %v2328
  %v2481 = vunpack.i.l.s16 %v2330
  %v2482 = vunpack.i.h.s16 %v2330
  %v2483 = vunpack.i.l.s16 %v2355
  %v2484 = vunpack.i.h.s16 %v2355
  %v2485 = vunpack.i.l.s16 %v2362
  %v2486 = vunpack.i.h.s16 %v2362
  %v2487 = vunpack.i.l.s16 %v2363
  %v2488 = vunpack.i.h.s16 %v2363
  %v2489 = vunpack.i.l.s16 %v2364
  %v2490 = vunpack.i.l.s16 %v2407
  %v2491 = vunpack.i.h.s16 %v2407
  %v2492 = vunpack.i.l.s16 %v2421
  %v2493 = vunpack.i.h.s16 %v2421
  %v2494 = vunpack.i.l.s16 %v2429
  %v2495 = vunpack.i.h.s16 %v2429
  %v2496 = vunpack.i.l.s16 %v2431
  %v2497 = vunpack.i.h.s16 %v2431
  %v2498 = vunpack.i.l.s16 %v2414
  %v2499 = vunpack.i.h.s16 %v2414
  %v2500 = vunpack.i.l.s16 %v2428
  %v2501 = vunpack.i.h.s16 %v2428
  %v2502 = vunpack.i.l.s16 %v2430
  %v2503 = vunpack.i.h.s16 %v2430
  %v2504 = vunpack.i.l.s16 %v2432
  %v2505 = vunpack.i.h.s16 %v2432
  %v2506 = vunpack.i.l.s16 %v2457
  %v2507 = vunpack.i.h.s16 %v2457
  %v2508 = vunpack.i.l.s16 %v2464
  %v2509 = vunpack.i.h.s16 %v2464
  %v2510 = vunpack.i.l.s16 %v2465
  %v2511 = vunpack.i.h.s16 %v2465
  %v2512 = vunpack.i.l.s16 %v2466
  %v2513 = vld [vmem:[%s3] sm:$0xff]
  %v2514 = vld [vmem:[%s3 + $0x8] sm:$0xff]
  %v2515 = vld [vmem:[%s3 + $0x10] sm:$0xff]
  %v2516 = vld [vmem:[%s3 + $0x18] sm:$0xff]
  %v2517 = vld [vmem:[%s3 + $0x20] sm:$0xff]
  %v2518 = vld [vmem:[%s3 + $0x28] sm:$0xff]
  %v2519 = vld [vmem:[%s3 + $0x30] sm:$0xff]
  %v2520 = vld [vmem:[%s3 + $0x38] sm:$0xff]
  %v2521 = vld [vmem:[%s3 + $0x40] sm:$0xff]
  %v2522 = vld [vmem:[%s3 + $0x48] sm:$0xff]
  %v2523 = vld [vmem:[%s3 + $0x50] sm:$0xff]
  %v2524 = vld [vmem:[%s3 + $0x58] sm:$0xff]
  %v2525 = vld [vmem:[%s3 + $0x60] sm:$0xff]
  %v2526 = vld [vmem:[%s3 + $0x68] sm:$0xff]
  %v2527 = vld [vmem:[%s3 + $0x70] sm:$0xff]
  %v2528 = vld [vmem:[%s3 + $0x78] sm:$0xff]
  %v2529 = vld [vmem:[%s3 + $0x80] sm:$0xff]
  %v2530 = vld [vmem:[%s3 + $0x88] sm:$0xff]
  %v2531 = vld [vmem:[%s3 + $0x90] sm:$0xff]
  %v2532 = vld [vmem:[%s3 + $0x98] sm:$0xff]
  %v2533 = vld [vmem:[%s3 + $0xa0] sm:$0xff]
  %v2534 = vld [vmem:[%s3 + $0xa8] sm:$0xff]
  %v2535 = vld [vmem:[%s3 + $0xb0] sm:$0xff]
  %v2536 = vld [vmem:[%s3 + $0xb8] sm:$0xff]
  %v2537 = vld [vmem:[%s3 + $0xc0] sm:$0xff]
  %v2538 = vld [vmem:[%s3 + $0xc8] sm:$0xff]
  %v2539 = vld [vmem:[%s3 + $0xd0] sm:$0xff]
  %v2540 = vld [vmem:[%s3 + $0xd8] sm:$0xff]
  %v2541 = vld [vmem:[%s3 + $0xe0] sm:$0xff]
  %v2542 = vld [vmem:[%s3 + $0xe8] sm:$0xff]
  %v2543 = vld [vmem:[%s3 + $0xf0] sm:$0xff]
  %v2544 = vld [vmem:[%s3 + $0xf8] sm:$0xff]
  %v2545 = vld [vmem:[%s3 + $0x100] sm:$0xff]
  %v2546 = vld [vmem:[%s3 + $0x108] sm:$0xff]
  %v2547 = vld [vmem:[%s3 + $0x110] sm:$0xff]
  %v2548 = vld [vmem:[%s3 + $0x118] sm:$0xff]
  %v2549 = vld [vmem:[%s3 + $0x120] sm:$0xff]
  %v2550 = vld [vmem:[%s3 + $0x128] sm:$0xff]
  %v2551 = vld [vmem:[%s3 + $0x130] sm:$0xff]
  %v2552 = vld [vmem:[%s3 + $0x138] sm:$0xff]
  %v2553 = vld [vmem:[%s3 + $0x140] sm:$0xff]
  %v2554 = vld [vmem:[%s3 + $0x148] sm:$0xff]
  %v2555 = vld [vmem:[%s3 + $0x150] sm:$0xff]
  %v2556 = vld [vmem:[%s3 + $0x158] sm:$0xff]
  %v2557 = vld [vmem:[%s3 + $0x160] sm:$0xff]
  %v2558 = vld [vmem:[%s3 + $0x168] sm:$0xff]
  %v2559 = vld [vmem:[%s3 + $0x170] sm:$0xff]
  %v2560 = vld [vmem:[%s3 + $0x178] sm:$0xff]
  %v2561 = vld [vmem:[%s3 + $0x180] sm:$0xff]
  %v2562 = vld [vmem:[%s3 + $0x188] sm:$0xff]
  %v2563 = vld [vmem:[%s3 + $0x190] sm:$0xff]
  %v2564 = vld [vmem:[%s3 + $0x198] sm:$0xff]
  %v2565 = vld [vmem:[%s3 + $0x1a0] sm:$0xff]
  %v2566 = vld [vmem:[%s3 + $0x1a8] sm:$0xff]
  %v2567 = vld [vmem:[%s3 + $0x1b0] sm:$0xff]
  %v2568 = vld [vmem:[%s3 + $0x1b8] sm:$0xff]
  %v2569 = vld [vmem:[%s3 + $0x1c0] sm:$0xff]
  %v2570 = vld [vmem:[%s3 + $0x1c8] sm:$0xff]
  %v2571 = vld [vmem:[%s3 + $0x1d0] sm:$0xff]
  %v2572 = vld [vmem:[%s3 + $0x1d8] sm:$0xff]
  %v2573 = vld [vmem:[%s3 + $0x1e0] sm:$0xff]
  %v2574 = vld [vmem:[%s3 + $0x1e8] sm:$0xff]
  %v2575 = vld [vmem:[%s3 + $0x1f0] sm:$0xff]
  %v2576 = vld [vmem:[%s3 + $0x1f8] sm:$0xff]
  %v2577 = vld [vmem:[%s3 + $0x200] sm:$0xff]
  %v2578 = vld [vmem:[%s3 + $0x208] sm:$0xff]
  %v2579 = vld [vmem:[%s3 + $0x210] sm:$0xff]
  %v2580 = vld [vmem:[%s3 + $0x218] sm:$0xff]
  %v2581 = vld [vmem:[%s3 + $0x220] sm:$0xff]
  %v2582 = vld [vmem:[%s3 + $0x228] sm:$0xff]
  %v2583 = vld [vmem:[%s3 + $0x230] sm:$0xff]
  %v2584 = vld [vmem:[%s3 + $0x238] sm:$0xff]
  %v2585 = vld [vmem:[%s3 + $0x240] sm:$0xff]
  %v2586 = vld [vmem:[%s3 + $0x248] sm:$0xff]
  %v2587 = vld [vmem:[%s3 + $0x250] sm:$0xff]
  %v2588 = vld [vmem:[%s3 + $0x258] sm:$0xff]
  %v2589 = vld [vmem:[%s3 + $0x260] sm:$0xff]
  %v2590 = vld [vmem:[%s3 + $0x268] sm:$0xff]
  %v2591 = vld [vmem:[%s3 + $0x270] sm:$0xff]
  %v2592 = vld [vmem:[%s3 + $0x278] sm:$0xff]
  %v2593 = vld [vmem:[%s3 + $0x280] sm:$0xff]
  %v2594 = vld [vmem:[%s3 + $0x288] sm:$0xff]
  %v2595 = vld [vmem:[%s3 + $0x290] sm:$0xff]
  %v2596 = vld [vmem:[%s3 + $0x298] sm:$0xff]
  %v2597 = vld [vmem:[%s3 + $0x2a0] sm:$0xff]
  %v2598 = vld [vmem:[%s3 + $0x2a8] sm:$0xff]
  %v2599 = vld [vmem:[%s3 + $0x2b0] sm:$0xff]
  %v2600 = vld [vmem:[%s3 + $0x2b8] sm:$0xff]
  %v2601 = vld [vmem:[%s3 + $0x2c0] sm:$0xff]
  %v2602 = vld [vmem:[%s3 + $0x2c8] sm:$0xff]
  %v2603 = vld [vmem:[%s3 + $0x2d0] sm:$0xff]
  %v2604 = vld [vmem:[%s3 + $0x2d8] sm:$0xff]
  %v2605 = vld [vmem:[%s3 + $0x2e0] sm:$0xff]
  %v2606 = vld [vmem:[%s3 + $0x2e8] sm:$0xff]
  %v2607 = vld [vmem:[%s3 + $0x2f0] sm:$0xff]
  %v2608 = vld [vmem:[%s3 + $0x2f8] sm:$0xff]
  %v2609 = vld [vmem:[%s3 + $0x300] sm:$0xff]
  %v2610 = vld [vmem:[%s3 + $0x308] sm:$0xff]
  %v2611 = vld [vmem:[%s3 + $0x310] sm:$0xff]
  %v2612 = vld [vmem:[%s3 + $0x318] sm:$0xff]
  %v2613 = vld [vmem:[%s3 + $0x320] sm:$0xff]
  %v2614 = vld [vmem:[%s3 + $0x328] sm:$0xff]
  %v2615 = vld [vmem:[%s3 + $0x330] sm:$0xff]
  %v2616 = vld [vmem:[%s3 + $0x338] sm:$0xff]
  %v2617 = vld [vmem:[%s3 + $0x340] sm:$0xff]
  %v2618 = vld [vmem:[%s3 + $0x348] sm:$0xff]
  %v2619 = vld [vmem:[%s3 + $0x350] sm:$0xff]
  %v2620 = vld [vmem:[%s3 + $0x358] sm:$0xff]
  %v2621 = vld [vmem:[%s3 + $0x360] sm:$0xff]
  %v2622 = vld [vmem:[%s3 + $0x368] sm:$0xff]
  %v2623 = vld [vmem:[%s3 + $0x370] sm:$0xff]
  %v2624 = vld [vmem:[%s3 + $0x378] sm:$0xff]
  %v2625 = vld [vmem:[%s3 + $0x380] sm:$0xff]
  %v2626 = vld [vmem:[%s3 + $0x388] sm:$0xff]
  %v2627 = vld [vmem:[%s3 + $0x390] sm:$0x33]
  %v2628 = vld [vmem:[%s3 + $0x398] sm:$0x33]
  %v2629 = vpack.i.b16 %v2468, %v2467
  %v2630 = vpack.i.b16 %v2470, %v2469
  %v2631 = vpack.i.b16 %v2472, %v2471
  %v2632 = vpack.i.b16 %v2474, %v2473
  %v2633 = vpack.i.b16 %v2476, %v2475
  %v2634 = vpack.i.b16 %v2478, %v2477
  %v2635 = vpack.i.b16 %v2480, %v2479
  %v2636 = vpack.i.b16 %v2482, %v2481
  %v2637 = vpack.i.b16 %v2484, %v2483
  %v2638 = vpack.i.b16 %v2486, %v2485
  %v2639 = vpack.i.b16 %v2488, %v2487
  %v2640 = vpack.i.b16 %v2490, %v2489
  %v2641 = vpack.i.b16 %v2492, %v2491
  %v2642 = vpack.i.b16 %v2494, %v2493
  %v2643 = vpack.i.b16 %v2496, %v2495
  %v2644 = vpack.i.b16 %v2498, %v2497
  %v2645 = vpack.i.b16 %v2500, %v2499
  %v2646 = vpack.i.b16 %v2502, %v2501
  %v2647 = vpack.i.b16 %v2504, %v2503
  %v2648 = vpack.i.b16 %v2506, %v2505
  %v2649 = vpack.i.b16 %v2508, %v2507
  %v2650 = vpack.i.b16 %v2510, %v2509
  %v2651 = vpack.i.b16 %v2512, %v2511
  %v2652 = vcombine.low %v2629, %v2630
  %v2653 = vcombine.low %v2631, %v2632
  %v2654 = vcombine.low %v2633, %v2634
  %v2655 = vcombine.low %v2635, %v2636
  %v2657 = vunpack.c.l.s4 1966171168
  %v2658 = vunpack.c.0.s8 %v2657
  %v2659 = vlaneseq
  %v2660 = vshrl.u32 %v2659, 7
  %v2661 = vsub.s32 %v2658, %v2660
  %v2662 = vrot.slane %v2652, %v2661
  %v2664 = vunpack.c.l.s4 1966171168
  %v2665 = vunpack.c.0.s8 %v2664
  %v2666 = vlaneseq
  %v2667 = vshrl.u32 %v2666, 7
  %v2668 = vsub.s32 %v2665, %v2667
  %v2669 = vrot.slane %v2653, %v2668
  %v2671 = vunpack.c.l.s4 1966171168
  %v2672 = vunpack.c.0.s8 %v2671
  %v2673 = vlaneseq
  %v2674 = vshrl.u32 %v2673, 7
  %v2675 = vsub.s32 %v2672, %v2674
  %v2676 = vrot.slane %v2654, %v2675
  %v2678 = vunpack.c.l.s4 1966171168
  %v2679 = vunpack.c.0.s8 %v2678
  %v2680 = vlaneseq
  %v2681 = vshrl.u32 %v2680, 7
  %v2682 = vsub.s32 %v2679, %v2681
  %v2683 = vrot.slane %v2655, %v2682
  %v2684 = vcombine.low %v2662, %v2669
  %v2685 = vcombine.high %v2662, %v2669
  %v2686 = vcombine.low %v2676, %v2683
  %v2687 = vcombine.high %v2676, %v2683
  %v2689 = vunpack.c.l.s4 1966171168
  %v2690 = vunpack.c.0.s8 %v2689
  %v2691 = vlaneseq
  %v2692 = vshrl.u32 %v2691, 7
  %v2693 = vsub.s32 %v2690, %v2692
  %v2694 = vrot.slane %v2684, %v2693
  %v2696 = vunpack.c.l.s4 1966171168
  %v2697 = vunpack.c.0.s8 %v2696
  %v2698 = vlaneseq
  %v2699 = vshrl.u32 %v2698, 7
  %v2700 = vsub.s32 %v2697, %v2699
  %v2701 = vrot.slane %v2685, %v2700
  %v2703 = vunpack.c.l.s4 1966171168
  %v2704 = vunpack.c.0.s8 %v2703
  %v2705 = vlaneseq
  %v2706 = vshrl.u32 %v2705, 7
  %v2707 = vsub.s32 %v2704, %v2706
  %v2708 = vrot.slane %v2686, %v2707
  %v2710 = vunpack.c.l.s4 1966171168
  %v2711 = vunpack.c.0.s8 %v2710
  %v2712 = vlaneseq
  %v2713 = vshrl.u32 %v2712, 7
  %v2714 = vsub.s32 %v2711, %v2713
  %v2715 = vrot.slane %v2687, %v2714
  %v2716 = vcombine.low %v2694, %v2708
  %v2717 = vcombine.high %v2694, %v2708
  %v2718 = vcombine.low %v2701, %v2715
  %v2719 = vcombine.high %v2701, %v2715
  %v2720 = vcombine.low %v2637, %v2638
  %v2721 = vcombine.low %v2639, %v2640
  %v2722 = vcombine.low %v2641, %v2642
  %v2723 = vcombine.low %v2643, %v2644
  %v2725 = vunpack.c.l.s4 1966171168
  %v2726 = vunpack.c.0.s8 %v2725
  %v2727 = vlaneseq
  %v2728 = vshrl.u32 %v2727, 7
  %v2729 = vsub.s32 %v2726, %v2728
  %v2730 = vrot.slane %v2720, %v2729
  %v2732 = vunpack.c.l.s4 1966171168
  %v2733 = vunpack.c.0.s8 %v2732
  %v2734 = vlaneseq
  %v2735 = vshrl.u32 %v2734, 7
  %v2736 = vsub.s32 %v2733, %v2735
  %v2737 = vrot.slane %v2721, %v2736
  %v2739 = vunpack.c.l.s4 1966171168
  %v2740 = vunpack.c.0.s8 %v2739
  %v2741 = vlaneseq
  %v2742 = vshrl.u32 %v2741, 7
  %v2743 = vsub.s32 %v2740, %v2742
  %v2744 = vrot.slane %v2722, %v2743
  %v2746 = vunpack.c.l.s4 1966171168
  %v2747 = vunpack.c.0.s8 %v2746
  %v2748 = vlaneseq
  %v2749 = vshrl.u32 %v2748, 7
  %v2750 = vsub.s32 %v2747, %v2749
  %v2751 = vrot.slane %v2723, %v2750
  %v2752 = vcombine.low %v2730, %v2737
  %v2753 = vcombine.high %v2730, %v2737
  %v2754 = vcombine.low %v2744, %v2751
  %v2755 = vcombine.high %v2744, %v2751
  %v2757 = vunpack.c.l.s4 1966171168
  %v2758 = vunpack.c.0.s8 %v2757
  %v2759 = vlaneseq
  %v2760 = vshrl.u32 %v2759, 7
  %v2761 = vsub.s32 %v2758, %v2760
  %v2762 = vrot.slane %v2752, %v2761
  %v2764 = vunpack.c.l.s4 1966171168
  %v2765 = vunpack.c.0.s8 %v2764
  %v2766 = vlaneseq
  %v2767 = vshrl.u32 %v2766, 7
  %v2768 = vsub.s32 %v2765, %v2767
  %v2769 = vrot.slane %v2753, %v2768
  %v2771 = vunpack.c.l.s4 1966171168
  %v2772 = vunpack.c.0.s8 %v2771
  %v2773 = vlaneseq
  %v2774 = vshrl.u32 %v2773, 7
  %v2775 = vsub.s32 %v2772, %v2774
  %v2776 = vrot.slane %v2754, %v2775
  %v2778 = vunpack.c.l.s4 1966171168
  %v2779 = vunpack.c.0.s8 %v2778
  %v2780 = vlaneseq
  %v2781 = vshrl.u32 %v2780, 7
  %v2782 = vsub.s32 %v2779, %v2781
  %v2783 = vrot.slane %v2755, %v2782
  %v2784 = vcombine.low %v2762, %v2776
  %v2785 = vcombine.high %v2762, %v2776
  %v2786 = vcombine.low %v2769, %v2783
  %v2787 = vcombine.high %v2769, %v2783
  %v2788 = vcombine.low %v2645, %v2646
  %v2789 = vcombine.low %v2647, %v2648
  %v2790 = vcombine.low %v2649, %v2650
  %v2792 = vunpack.c.l.s4 1966171168
  %v2793 = vunpack.c.0.s8 %v2792
  %v2794 = vlaneseq
  %v2795 = vshrl.u32 %v2794, 7
  %v2796 = vsub.s32 %v2793, %v2795
  %v2797 = vrot.slane %v2788, %v2796
  %v2799 = vunpack.c.l.s4 1966171168
  %v2800 = vunpack.c.0.s8 %v2799
  %v2801 = vlaneseq
  %v2802 = vshrl.u32 %v2801, 7
  %v2803 = vsub.s32 %v2800, %v2802
  %v2804 = vrot.slane %v2789, %v2803
  %v2806 = vunpack.c.l.s4 1966171168
  %v2807 = vunpack.c.0.s8 %v2806
  %v2808 = vlaneseq
  %v2809 = vshrl.u32 %v2808, 7
  %v2810 = vsub.s32 %v2807, %v2809
  %v2811 = vrot.slane %v2790, %v2810
  %v2813 = vunpack.c.l.s4 1966171168
  %v2814 = vunpack.c.0.s8 %v2813
  %v2815 = vlaneseq
  %v2816 = vshrl.u32 %v2815, 7
  %v2817 = vsub.s32 %v2814, %v2816
  %v2818 = vrot.slane %v2651, %v2817
  %v2819 = vcombine.low %v2797, %v2804
  %v2820 = vcombine.high %v2797, %v2804
  %v2821 = vcombine.low %v2811, %v2818
  %v2822 = vcombine.high %v2811, %v2818
  %v2824 = vunpack.c.l.s4 1966171168
  %v2825 = vunpack.c.0.s8 %v2824
  %v2826 = vlaneseq
  %v2827 = vshrl.u32 %v2826, 7
  %v2828 = vsub.s32 %v2825, %v2827
  %v2829 = vrot.slane %v2819, %v2828
  %v2831 = vunpack.c.l.s4 1966171168
  %v2832 = vunpack.c.0.s8 %v2831
  %v2833 = vlaneseq
  %v2834 = vshrl.u32 %v2833, 7
  %v2835 = vsub.s32 %v2832, %v2834
  %v2836 = vrot.slane %v2820, %v2835
  %v2838 = vunpack.c.l.s4 1966171168
  %v2839 = vunpack.c.0.s8 %v2838
  %v2840 = vlaneseq
  %v2841 = vshrl.u32 %v2840, 7
  %v2842 = vsub.s32 %v2839, %v2841
  %v2843 = vrot.slane %v2821, %v2842
  %v2845 = vunpack.c.l.s4 1966171168
  %v2846 = vunpack.c.0.s8 %v2845
  %v2847 = vlaneseq
  %v2848 = vshrl.u32 %v2847, 7
  %v2849 = vsub.s32 %v2846, %v2848
  %v2850 = vrot.slane %v2822, %v2849
  %v2851 = vcombine.low %v2829, %v2843
  %v2852 = vcombine.high %v2829, %v2843
  %v2853 = vcombine.low %v2836, %v2850
  %v2854 = vcombine.high %v2836, %v2850
  %v2980 = vunpack.c.l.b16 %v2513
  %v2981 = vunpack.c.h.b16 %v2513
  %v2982 = vunpack.c.l.b16 %v2514
  %v2983 = vunpack.c.h.b16 %v2514
  %v2984 = vunpack.c.l.b16 %v2515
  %v2985 = vunpack.c.h.b16 %v2515
  %v2986 = vunpack.c.l.b16 %v2516
  %v2987 = vunpack.c.h.b16 %v2516
  %v2988 = vunpack.c.l.b16 %v2517
  %v2989 = vunpack.c.h.b16 %v2517
  %v2990 = vunpack.c.l.b16 %v2518
  %v2991 = vunpack.c.h.b16 %v2518
  %v2992 = vunpack.c.l.b16 %v2519
  %v2993 = vunpack.c.h.b16 %v2519
  %v2994 = vunpack.c.l.b16 %v2520
  %v2995 = vunpack.c.h.b16 %v2520
  %v2996 = vunpack.c.l.b16 %v2521
  %v2997 = vunpack.c.h.b16 %v2521
  %v2998 = vunpack.c.l.b16 %v2522
  %v2999 = vunpack.c.h.b16 %v2522
  %v3000 = vunpack.c.l.b16 %v2523
  %v3001 = vunpack.c.h.b16 %v2523
  %v3002 = vunpack.c.l.b16 %v2524
  %v3003 = vunpack.c.h.b16 %v2524
  %v3004 = vunpack.c.l.b16 %v2525
  %v3005 = vunpack.c.h.b16 %v2525
  %v3006 = vunpack.c.l.b16 %v2526
  %v3007 = vunpack.c.h.b16 %v2526
  %v3008 = vunpack.c.l.b16 %v2527
  %v3009 = vunpack.c.h.b16 %v2527
  %v3010 = vunpack.c.l.b16 %v2528
  %v3011 = vunpack.c.h.b16 %v2528
  %v3012 = vunpack.c.l.b16 %v2529
  %v3013 = vunpack.c.h.b16 %v2529
  %v3014 = vunpack.c.l.b16 %v2530
  %v3015 = vunpack.c.h.b16 %v2530
  %v3016 = vunpack.c.l.b16 %v2531
  %v3017 = vunpack.c.h.b16 %v2531
  %v3018 = vunpack.c.l.b16 %v2532
  %v3019 = vunpack.c.h.b16 %v2532
  %v3020 = vunpack.c.l.b16 %v2533
  %v3021 = vunpack.c.h.b16 %v2533
  %v3022 = vunpack.c.l.b16 %v2534
  %v3023 = vunpack.c.h.b16 %v2534
  %v3024 = vunpack.c.l.b16 %v2535
  %v3025 = vunpack.c.h.b16 %v2535
  %v3026 = vunpack.c.l.b16 %v2536
  %v3027 = vunpack.c.h.b16 %v2536
  %v3028 = vunpack.c.l.b16 %v2537
  %v3029 = vunpack.c.h.b16 %v2537
  %v3030 = vunpack.c.l.b16 %v2538
  %v3031 = vunpack.c.h.b16 %v2538
  %v3032 = vunpack.c.l.b16 %v2539
  %v3033 = vunpack.c.h.b16 %v2539
  %v3034 = vunpack.c.l.b16 %v2540
  %v3035 = vunpack.c.h.b16 %v2540
  %v3036 = vunpack.c.l.b16 %v2541
  %v3037 = vunpack.c.h.b16 %v2541
  %v3038 = vunpack.c.l.b16 %v2542
  %v3039 = vunpack.c.h.b16 %v2542
  %v3040 = vunpack.c.l.b16 %v2543
  %v3041 = vunpack.c.h.b16 %v2543
  %v3042 = vunpack.c.l.b16 %v2544
  %v3043 = vunpack.c.h.b16 %v2544
  %v3044 = vunpack.c.l.b16 %v2545
  %v3045 = vunpack.c.h.b16 %v2545
  %v3046 = vunpack.c.l.b16 %v2546
  %v3047 = vunpack.c.h.b16 %v2546
  %v3048 = vunpack.c.l.b16 %v2547
  %v3049 = vunpack.c.h.b16 %v2547
  %v3050 = vunpack.c.l.b16 %v2548
  %v3051 = vunpack.c.h.b16 %v2548
  %v3052 = vunpack.c.l.b16 %v2549
  %v3053 = vunpack.c.h.b16 %v2549
  %v3054 = vunpack.c.l.b16 %v2550
  %v3055 = vunpack.c.h.b16 %v2550
  %v3056 = vunpack.c.l.b16 %v2551
  %v3057 = vunpack.c.h.b16 %v2551
  %v3058 = vunpack.c.l.b16 %v2552
  %v3059 = vunpack.c.h.b16 %v2552
  %v3060 = vunpack.c.l.b16 %v2553
  %v3061 = vunpack.c.h.b16 %v2553
  %v3062 = vunpack.c.l.b16 %v2554
  %v3063 = vunpack.c.h.b16 %v2554
  %v3064 = vunpack.c.l.b16 %v2555
  %v3065 = vunpack.c.h.b16 %v2555
  %v3066 = vunpack.c.l.b16 %v2556
  %v3067 = vunpack.c.h.b16 %v2556
  %v3068 = vunpack.c.l.b16 %v2557
  %v3069 = vunpack.c.h.b16 %v2557
  %v3070 = vunpack.c.l.b16 %v2558
  %v3071 = vunpack.c.h.b16 %v2558
  %v3072 = vunpack.c.l.b16 %v2559
  %v3073 = vunpack.c.h.b16 %v2559
  %v3074 = vunpack.c.l.b16 %v2560
  %v3075 = vunpack.c.h.b16 %v2560
  %v3076 = vunpack.c.l.b16 %v2561
  %v3077 = vunpack.c.h.b16 %v2561
  %v3078 = vunpack.c.l.b16 %v2562
  %v3079 = vunpack.c.h.b16 %v2562
  %v3080 = vunpack.c.l.b16 %v2563
  %v3081 = vunpack.c.h.b16 %v2563
  %v3082 = vunpack.c.l.b16 %v2564
  %v3083 = vunpack.c.h.b16 %v2564
  %v3084 = vunpack.c.l.b16 %v2565
  %v3085 = vunpack.c.h.b16 %v2565
  %v3086 = vunpack.c.l.b16 %v2566
  %v3087 = vunpack.c.h.b16 %v2566
  %v3088 = vunpack.c.l.b16 %v2567
  %v3089 = vunpack.c.h.b16 %v2567
  %v3090 = vunpack.c.l.b16 %v2568
  %v3091 = vunpack.c.h.b16 %v2568
  %v3092 = vunpack.c.l.b16 %v2569
  %v3093 = vunpack.c.h.b16 %v2569
  %v3094 = vunpack.c.l.b16 %v2570
  %v3095 = vunpack.c.h.b16 %v2570
  %v3096 = vunpack.c.l.b16 %v2571
  %v3097 = vunpack.c.h.b16 %v2571
  %v3098 = vunpack.c.l.b16 %v2572
  %v3099 = vunpack.c.h.b16 %v2572
  %v3100 = vunpack.c.l.b16 %v2573
  %v3101 = vunpack.c.h.b16 %v2573
  %v3102 = vunpack.c.l.b16 %v2574
  %v3103 = vunpack.c.h.b16 %v2574
  %v3104 = vunpack.c.l.b16 %v2575
  %v3105 = vunpack.c.h.b16 %v2575
  %v3106 = vunpack.c.l.b16 %v2576
  %v3107 = vunpack.c.h.b16 %v2576
  %v3108 = vunpack.c.l.b16 %v2577
  %v3109 = vunpack.c.h.b16 %v2577
  %v3110 = vunpack.c.l.b16 %v2578
  %v3111 = vunpack.c.h.b16 %v2578
  %v3112 = vunpack.c.l.b16 %v2579
  %v3113 = vunpack.c.h.b16 %v2579
  %v3114 = vunpack.c.l.b16 %v2580
  %v3115 = vunpack.c.h.b16 %v2580
  %v3116 = vunpack.c.l.b16 %v2581
  %v3117 = vunpack.c.h.b16 %v2581
  %v3118 = vunpack.c.l.b16 %v2582
  %v3119 = vunpack.c.h.b16 %v2582
  %v3120 = vunpack.c.l.b16 %v2583
  %v3121 = vunpack.c.h.b16 %v2583
  %v3122 = vunpack.c.l.b16 %v2584
  %v3123 = vunpack.c.h.b16 %v2584
  %v3124 = vunpack.c.l.b16 %v2585
  %v3125 = vunpack.c.h.b16 %v2585
  %v3126 = vunpack.c.l.b16 %v2586
  %v3127 = vunpack.c.h.b16 %v2586
  %v3128 = vunpack.c.l.b16 %v2587
  %v3129 = vunpack.c.h.b16 %v2587
  %v3130 = vunpack.c.l.b16 %v2588
  %v3131 = vunpack.c.h.b16 %v2588
  %v3132 = vunpack.c.l.b16 %v2589
  %v3133 = vunpack.c.h.b16 %v2589
  %v3134 = vunpack.c.l.b16 %v2590
  %v3135 = vunpack.c.h.b16 %v2590
  %v3136 = vunpack.c.l.b16 %v2591
  %v3137 = vunpack.c.h.b16 %v2591
  %v3138 = vunpack.c.l.b16 %v2592
  %v3139 = vunpack.c.h.b16 %v2592
  %v3140 = vunpack.c.l.b16 %v2593
  %v3141 = vunpack.c.h.b16 %v2593
  %v3142 = vunpack.c.l.b16 %v2594
  %v3143 = vunpack.c.h.b16 %v2594
  %v3144 = vunpack.c.l.b16 %v2595
  %v3145 = vunpack.c.h.b16 %v2595
  %v3146 = vunpack.c.l.b16 %v2596
  %v3147 = vunpack.c.h.b16 %v2596
  %v3148 = vunpack.c.l.b16 %v2597
  %v3149 = vunpack.c.h.b16 %v2597
  %v3150 = vunpack.c.l.b16 %v2598
  %v3151 = vunpack.c.h.b16 %v2598
  %v3152 = vunpack.c.l.b16 %v2599
  %v3153 = vunpack.c.h.b16 %v2599
  %v3154 = vunpack.c.l.b16 %v2600
  %v3155 = vunpack.c.h.b16 %v2600
  %v3156 = vunpack.c.l.b16 %v2601
  %v3157 = vunpack.c.h.b16 %v2601
  %v3158 = vunpack.c.l.b16 %v2602
  %v3159 = vunpack.c.h.b16 %v2602
  %v3160 = vunpack.c.l.b16 %v2603
  %v3161 = vunpack.c.h.b16 %v2603
  %v3162 = vunpack.c.l.b16 %v2604
  %v3163 = vunpack.c.h.b16 %v2604
  %v3164 = vunpack.c.l.b16 %v2605
  %v3165 = vunpack.c.h.b16 %v2605
  %v3166 = vunpack.c.l.b16 %v2606
  %v3167 = vunpack.c.h.b16 %v2606
  %v3168 = vunpack.c.l.b16 %v2607
  %v3169 = vunpack.c.h.b16 %v2607
  %v3170 = vunpack.c.l.b16 %v2608
  %v3171 = vunpack.c.h.b16 %v2608
  %v3172 = vunpack.c.l.b16 %v2609
  %v3173 = vunpack.c.h.b16 %v2609
  %v3174 = vunpack.c.l.b16 %v2610
  %v3175 = vunpack.c.h.b16 %v2610
  %v3176 = vunpack.c.l.b16 %v2611
  %v3177 = vunpack.c.h.b16 %v2611
  %v3178 = vunpack.c.l.b16 %v2612
  %v3179 = vunpack.c.h.b16 %v2612
  %v3180 = vunpack.c.l.b16 %v2613
  %v3181 = vunpack.c.h.b16 %v2613
  %v3182 = vunpack.c.l.b16 %v2614
  %v3183 = vunpack.c.h.b16 %v2614
  %v3184 = vunpack.c.l.b16 %v2615
  %v3185 = vunpack.c.h.b16 %v2615
  %v3186 = vunpack.c.l.b16 %v2616
  %v3187 = vunpack.c.h.b16 %v2616
  %v3188 = vunpack.c.l.b16 %v2617
  %v3189 = vunpack.c.h.b16 %v2617
  %v3190 = vunpack.c.l.b16 %v2618
  %v3191 = vunpack.c.h.b16 %v2618
  %v3192 = vunpack.c.l.b16 %v2619
  %v3193 = vunpack.c.h.b16 %v2619
  %v3194 = vunpack.c.l.b16 %v2620
  %v3195 = vunpack.c.h.b16 %v2620
  %v3196 = vunpack.c.l.b16 %v2621
  %v3197 = vunpack.c.h.b16 %v2621
  %v3198 = vunpack.c.l.b16 %v2622
  %v3199 = vunpack.c.h.b16 %v2622
  %v3200 = vunpack.c.l.b16 %v2623
  %v3201 = vunpack.c.h.b16 %v2623
  %v3202 = vunpack.c.l.b16 %v2624
  %v3203 = vunpack.c.h.b16 %v2624
  %v3204 = vunpack.c.l.b16 %v2625
  %v3205 = vunpack.c.h.b16 %v2625
  %v3206 = vunpack.c.l.b16 %v2626
  %v3207 = vunpack.c.h.b16 %v2626
  %v3208 = vunpack.c.l.b16 %v2627
  %v3209 = vunpack.c.h.b16 %v2627
  %v3210 = vunpack.c.l.b16 %v2628
  %v3211 = vunpack.c.h.b16 %v2628
  %v3212 = vpack.c.b16 %v2984, %v2980
  %v3213 = vpack.c.b16 %v2985, %v2981
  %v3214 = vpack.c.b16 %v2986, %v2982
  %v3215 = vpack.c.b16 %v2987, %v2983
  %v3216 = vpack.c.b16 %v2992, %v2988
  %v3217 = vpack.c.b16 %v2993, %v2989
  %v3218 = vpack.c.b16 %v2994, %v2990
  %v3219 = vpack.c.b16 %v2995, %v2991
  %v3220 = vpack.c.b16 %v3000, %v2996
  %v3221 = vpack.c.b16 %v3001, %v2997
  %v3222 = vpack.c.b16 %v3002, %v2998
  %v3223 = vpack.c.b16 %v3003, %v2999
  %v3224 = vpack.c.b16 %v3008, %v3004
  %v3225 = vpack.c.b16 %v3009, %v3005
  %v3226 = vpack.c.b16 %v3010, %v3006
  %v3227 = vpack.c.b16 %v3011, %v3007
  %v3228 = vpack.c.b16 %v3016, %v3012
  %v3229 = vpack.c.b16 %v3017, %v3013
  %v3230 = vpack.c.b16 %v3018, %v3014
  %v3231 = vpack.c.b16 %v3019, %v3015
  %v3232 = vpack.c.b16 %v3024, %v3020
  %v3233 = vpack.c.b16 %v3025, %v3021
  %v3234 = vpack.c.b16 %v3026, %v3022
  %v3235 = vpack.c.b16 %v3027, %v3023
  %v3236 = vpack.c.b16 %v3032, %v3028
  %v3237 = vpack.c.b16 %v3033, %v3029
  %v3238 = vpack.c.b16 %v3034, %v3030
  %v3239 = vpack.c.b16 %v3035, %v3031
  %v3240 = vpack.c.b16 %v3040, %v3036
  %v3241 = vpack.c.b16 %v3041, %v3037
  %v3242 = vpack.c.b16 %v3042, %v3038
  %v3243 = vpack.c.b16 %v3043, %v3039
  %v3244 = vpack.c.b16 %v3048, %v3044
  %v3245 = vpack.c.b16 %v3049, %v3045
  %v3246 = vpack.c.b16 %v3050, %v3046
  %v3247 = vpack.c.b16 %v3051, %v3047
  %v3248 = vpack.c.b16 %v3056, %v3052
  %v3249 = vpack.c.b16 %v3057, %v3053
  %v3250 = vpack.c.b16 %v3058, %v3054
  %v3251 = vpack.c.b16 %v3059, %v3055
  %v3252 = vpack.c.b16 %v3064, %v3060
  %v3253 = vpack.c.b16 %v3065, %v3061
  %v3254 = vpack.c.b16 %v3066, %v3062
  %v3255 = vpack.c.b16 %v3067, %v3063
  %v3256 = vpack.c.b16 %v3072, %v3068
  %v3257 = vpack.c.b16 %v3073, %v3069
  %v3258 = vpack.c.b16 %v3074, %v3070
  %v3259 = vpack.c.b16 %v3075, %v3071
  %v3260 = vpack.c.b16 %v3080, %v3076
  %v3261 = vpack.c.b16 %v3081, %v3077
  %v3262 = vpack.c.b16 %v3082, %v3078
  %v3263 = vpack.c.b16 %v3083, %v3079
  %v3264 = vpack.c.b16 %v3088, %v3084
  %v3265 = vpack.c.b16 %v3089, %v3085
  %v3266 = vpack.c.b16 %v3090, %v3086
  %v3267 = vpack.c.b16 %v3091, %v3087
  %v3268 = vpack.c.b16 %v3096, %v3092
  %v3269 = vpack.c.b16 %v3097, %v3093
  %v3270 = vpack.c.b16 %v3098, %v3094
  %v3271 = vpack.c.b16 %v3099, %v3095
  %v3272 = vpack.c.b16 %v3104, %v3100
  %v3273 = vpack.c.b16 %v3105, %v3101
  %v3274 = vpack.c.b16 %v3106, %v3102
  %v3275 = vpack.c.b16 %v3107, %v3103
  %v3276 = vpack.c.b16 %v3112, %v3108
  %v3277 = vpack.c.b16 %v3113, %v3109
  %v3278 = vpack.c.b16 %v3114, %v3110
  %v3279 = vpack.c.b16 %v3115, %v3111
  %v3280 = vpack.c.b16 %v3120, %v3116
  %v3281 = vpack.c.b16 %v3121, %v3117
  %v3282 = vpack.c.b16 %v3122, %v3118
  %v3283 = vpack.c.b16 %v3123, %v3119
  %v3284 = vpack.c.b16 %v3128, %v3124
  %v3285 = vpack.c.b16 %v3129, %v3125
  %v3286 = vpack.c.b16 %v3130, %v3126
  %v3287 = vpack.c.b16 %v3131, %v3127
  %v3288 = vpack.c.b16 %v3136, %v3132
  %v3289 = vpack.c.b16 %v3137, %v3133
  %v3290 = vpack.c.b16 %v3138, %v3134
  %v3291 = vpack.c.b16 %v3139, %v3135
  %v3292 = vpack.c.b16 %v3144, %v3140
  %v3293 = vpack.c.b16 %v3145, %v3141
  %v3294 = vpack.c.b16 %v3146, %v3142
  %v3295 = vpack.c.b16 %v3147, %v3143
  %v3296 = vpack.c.b16 %v3152, %v3148
  %v3297 = vpack.c.b16 %v3153, %v3149
  %v3298 = vpack.c.b16 %v3154, %v3150
  %v3299 = vpack.c.b16 %v3155, %v3151
  %v3300 = vpack.c.b16 %v3160, %v3156
  %v3301 = vpack.c.b16 %v3161, %v3157
  %v3302 = vpack.c.b16 %v3162, %v3158
  %v3303 = vpack.c.b16 %v3163, %v3159
  %v3304 = vpack.c.b16 %v3168, %v3164
  %v3305 = vpack.c.b16 %v3169, %v3165
  %v3306 = vpack.c.b16 %v3170, %v3166
  %v3307 = vpack.c.b16 %v3171, %v3167
  %v3308 = vpack.c.b16 %v3176, %v3172
  %v3309 = vpack.c.b16 %v3177, %v3173
  %v3310 = vpack.c.b16 %v3178, %v3174
  %v3311 = vpack.c.b16 %v3179, %v3175
  %v3312 = vpack.c.b16 %v3184, %v3180
  %v3313 = vpack.c.b16 %v3185, %v3181
  %v3314 = vpack.c.b16 %v3186, %v3182
  %v3315 = vpack.c.b16 %v3187, %v3183
  %v3316 = vpack.c.b16 %v3192, %v3188
  %v3317 = vpack.c.b16 %v3193, %v3189
  %v3318 = vpack.c.b16 %v3194, %v3190
  %v3319 = vpack.c.b16 %v3195, %v3191
  %v3320 = vpack.c.b16 %v3200, %v3196
  %v3321 = vpack.c.b16 %v3201, %v3197
  %v3322 = vpack.c.b16 %v3202, %v3198
  %v3323 = vpack.c.b16 %v3203, %v3199
  %v3324 = vpack.c.b16 %v3208, %v3204
  %v3325 = vpack.c.b16 %v3209, %v3205
  %v3326 = vpack.c.b16 %v3210, %v3206
  %v3327 = vpack.c.b16 %v3211, %v3207
  %vm3440 = vcmask 621568
  %v3442 = vsel %vm3440, %v2719, 0
  %v3445 = vsel %vm3440, %v2787, 0
  %v3448 = vsel %vm3440, %v2854, 0
  %v3451 = vsel %vm111, %v3324, 0
  %v3454 = vsel %vm111, %v3325, 0
  %v3457 = vsel %vm111, %v3326, 0
  %v3460 = vsel %vm111, %v3327, 0
  %3462 = vmatprep.subr.bf16.mxu0 %v3213
  %3463 = vmatpush1.bf16.msra.mxu0 %v3212
  %3464 = vmatprep.subr.bf16.mxu0 %v3217
  %3465 = vmatpush1.bf16.msra.mxu0 %v3216
  %3466 = vmatprep.subr.bf16.mxu0 %v3221
  %3467 = vmatpush1.bf16.msra.mxu0 %v3220
  %3468 = vmatprep.subr.bf16.mxu0 %v3225
  %3469 = vmatpush1.bf16.msra.mxu0 %v3224
  %3470 = vmatprep.subr.bf16.mxu0 %v3229
  %3471 = vmatpush1.bf16.msra.mxu0 %v3228
  %3472 = vmatprep.subr.bf16.mxu0 %v3233
  %3473 = vmatpush1.bf16.msra.mxu0 %v3232
  %3474 = vmatprep.subr.bf16.mxu0 %v3237
  %3475 = vmatpush1.bf16.msra.mxu0 %v3236
  %3476 = vmatprep.subr.bf16.mxu0 %v3241
  %3477 = vmatpush1.bf16.msra.mxu0 %v3240
  %3478 = vmatprep.subr.bf16.mxu0 %v3245
  %3479 = vmatpush1.bf16.msra.mxu0 %v3244
  %3480 = vmatprep.subr.bf16.mxu0 %v3249
  %3481 = vmatpush1.bf16.msra.mxu0 %v3248
  %3482 = vmatprep.subr.bf16.mxu0 %v3253
  %3483 = vmatpush1.bf16.msra.mxu0 %v3252
  %3484 = vmatprep.subr.bf16.mxu0 %v3257
  %3485 = vmatpush1.bf16.msra.mxu0 %v3256
  %3486 = vmatprep.subr.bf16.mxu0 %v3261
  %3487 = vmatpush1.bf16.msra.mxu0 %v3260
  %3488 = vmatprep.subr.bf16.mxu0 %v3265
  %3489 = vmatpush1.bf16.msra.mxu0 %v3264
  %3490 = vmatprep.subr.bf16.mxu0 %v3269
  %3491 = vmatpush1.bf16.msra.mxu0 %v3268
  %3492 = vmatprep.subr.bf16.mxu0 %v3273
  %3493 = vmatpush1.bf16.msra.mxu0 %v3272
  %3494 = vmatprep.mubr.bf16.mxu0 %v2718
  %3495 = vmatmul.mubr.bf16.gmra.mrb[0].mxu0 %v2716
  %v3496 = vpop.f32.mrb[0].mxu0
  %v3497 = vadd.f32 0.0, %v3496
  %v3498 = vpop.f32.mrb[0].mxu0
  %v3499 = vadd.f32 0.0, %v3498
  %v3500 = vpop.f32.mrb[0].mxu0
  %v3501 = vadd.f32 0.0, %v3500
  %v3502 = vpop.f32.mrb[0].mxu0
  %v3503 = vadd.f32 0.0, %v3502
  %3504 = vmatprep.mubr.bf16.mxu0 %v2786
  %3505 = vmatmul.mubr.bf16.gmra.mrb[0].mxu0 %v2784
  %v3506 = vpop.f32.mrb[0].mxu0
  %v3507 = vadd.f32 0.0, %v3506
  %v3508 = vpop.f32.mrb[0].mxu0
  %v3509 = vadd.f32 0.0, %v3508
  %v3510 = vpop.f32.mrb[0].mxu0
  %v3511 = vadd.f32 0.0, %v3510
  %v3512 = vpop.f32.mrb[0].mxu0
  %v3513 = vadd.f32 0.0, %v3512
  %3514 = vmatprep.mubr.bf16.mxu0 %v2853
  %3515 = vmatmul.mubr.bf16.gmra.mrb[0].mxu0 %v2851
  %v3516 = vpop.f32.mrb[0].mxu0
  %v3517 = vadd.f32 0.0, %v3516
  %v3518 = vpop.f32.mrb[0].mxu0
  %v3519 = vadd.f32 0.0, %v3518
  %v3520 = vpop.f32.mrb[0].mxu0
  %v3521 = vpop.f32.mrb[0].mxu0
  %3522 = vdwg.mxu0
  %3523 = vmatprep.subr.bf16.mxu0 %v3277
  %3524 = vmatpush1.bf16.msra.mxu0 %v3276
  %3525 = vmatprep.subr.bf16.mxu0 %v3281
  %3526 = vmatpush1.bf16.msra.mxu0 %v3280
  %3527 = vmatprep.subr.bf16.mxu0 %v3285
  %3528 = vmatpush1.bf16.msra.mxu0 %v3284
  %3529 = vmatprep.subr.bf16.mxu0 %v3289
  %3530 = vmatpush1.bf16.msra.mxu0 %v3288
  %3531 = vmatprep.subr.bf16.mxu0 %v3293
  %3532 = vmatpush1.bf16.msra.mxu0 %v3292
  %3533 = vmatprep.subr.bf16.mxu0 %v3297
  %3534 = vmatpush1.bf16.msra.mxu0 %v3296
  %3535 = vmatprep.subr.bf16.mxu0 %v3301
  %3536 = vmatpush1.bf16.msra.mxu0 %v3300
  %3537 = vmatprep.subr.bf16.mxu0 %v3305
  %3538 = vmatpush1.bf16.msra.mxu0 %v3304
  %3539 = vmatprep.subr.bf16.mxu0 %v3309
  %3540 = vmatpush1.bf16.msra.mxu0 %v3308
  %3541 = vmatprep.subr.bf16.mxu0 %v3313
  %3542 = vmatpush1.bf16.msra.mxu0 %v3312
  %3543 = vmatprep.subr.bf16.mxu0 %v3317
  %3544 = vmatpush1.bf16.msra.mxu0 %v3316
  %3545 = vmatprep.subr.bf16.mxu0 %v3321
  %3546 = vmatpush1.bf16.msra.mxu0 %v3320
  %3547 = vmatprep.subr.bf16.mxu0 %v3454
  %3548 = vmatpush1.bf16.msra.mxu0 %v3451
  %3549 = vmatprep.subr.bf16.mxu0 0
  %3550 = vmatpush1.bf16.msra.mxu0 0
  %3551 = vmatprep.subr.bf16.mxu0 0
  %3552 = vmatpush1.bf16.msra.mxu0 0
  %3553 = vmatprep.subr.bf16.mxu0 0
  %3554 = vmatpush1.bf16.msra.mxu0 0
  %3555 = vmatprep.mubr.bf16.mxu0 %v3442
  %3556 = vmatmul.mubr.bf16.gmra.mrb[0].mxu0 %v2717
  %v3557 = vpop.f32.mrb[0].mxu0
  %v3558 = vadd.f32 %v3497, %v3557
  %v3559 = vpop.f32.mrb[0].mxu0
  %v3560 = vadd.f32 %v3499, %v3559
  %v3561 = vpop.f32.mrb[0].mxu0
  %v3562 = vadd.f32 %v3501, %v3561
  %v3563 = vpop.f32.mrb[0].mxu0
  %v3564 = vadd.f32 %v3503, %v3563
  %3565 = vmatprep.mubr.bf16.mxu0 %v3445
  %3566 = vmatmul.mubr.bf16.gmra.mrb[0].mxu0 %v2785
  %v3567 = vpop.f32.mrb[0].mxu0
  %v3568 = vadd.f32 %v3507, %v3567
  %v3569 = vpop.f32.mrb[0].mxu0
  %v3570 = vadd.f32 %v3509, %v3569
  %v3571 = vpop.f32.mrb[0].mxu0
  %v3572 = vadd.f32 %v3511, %v3571
  %v3573 = vpop.f32.mrb[0].mxu0
  %v3574 = vadd.f32 %v3513, %v3573
  %3575 = vmatprep.mubr.bf16.mxu0 %v3448
  %3576 = vmatmul.mubr.bf16.gmra.mrb[0].mxu0 %v2852
  %v3577 = vpop.f32.mrb[0].mxu0
  %v3578 = vadd.f32 %v3517, %v3577
  %v3579 = vpop.f32.mrb[0].mxu0
  %v3580 = vadd.f32 %v3519, %v3579
  %v3581 = vpop.f32.mrb[0].mxu0
  %v3582 = vpop.f32.mrb[0].mxu0
  %3583 = vdwg.mxu0
  %3584 = vmatprep.subr.bf16.mxu0 %v3215
  %3585 = vmatpush1.bf16.msra.mxu0 %v3214
  %3586 = vmatprep.subr.bf16.mxu0 %v3219
  %3587 = vmatpush1.bf16.msra.mxu0 %v3218
  %3588 = vmatprep.subr.bf16.mxu0 %v3223
  %3589 = vmatpush1.bf16.msra.mxu0 %v3222
  %3590 = vmatprep.subr.bf16.mxu0 %v3227
  %3591 = vmatpush1.bf16.msra.mxu0 %v3226
  %3592 = vmatprep.subr.bf16.mxu0 %v3231
  %3593 = vmatpush1.bf16.msra.mxu0 %v3230
  %3594 = vmatprep.subr.bf16.mxu0 %v3235
  %3595 = vmatpush1.bf16.msra.mxu0 %v3234
  %3596 = vmatprep.subr.bf16.mxu0 %v3239
  %3597 = vmatpush1.bf16.msra.mxu0 %v3238
  %3598 = vmatprep.subr.bf16.mxu0 %v3243
  %3599 = vmatpush1.bf16.msra.mxu0 %v3242
  %3600 = vmatprep.subr.bf16.mxu0 %v3247
  %3601 = vmatpush1.bf16.msra.mxu0 %v3246
  %3602 = vmatprep.subr.bf16.mxu0 %v3251
  %3603 = vmatpush1.bf16.msra.mxu0 %v3250
  %3604 = vmatprep.subr.bf16.mxu0 %v3255
  %3605 = vmatpush1.bf16.msra.mxu0 %v3254
  %3606 = vmatprep.subr.bf16.mxu0 %v3259
  %3607 = vmatpush1.bf16.msra.mxu0 %v3258
  %3608 = vmatprep.subr.bf16.mxu0 %v3263
  %3609 = vmatpush1.bf16.msra.mxu0 %v3262
  %3610 = vmatprep.subr.bf16.mxu0 %v3267
  %3611 = vmatpush1.bf16.msra.mxu0 %v3266
  %3612 = vmatprep.subr.bf16.mxu0 %v3271
  %3613 = vmatpush1.bf16.msra.mxu0 %v3270
  %3614 = vmatprep.subr.bf16.mxu0 %v3275
  %3615 = vmatpush1.bf16.msra.mxu0 %v3274
  %3616 = vmatprep.mubr.bf16.mxu0 %v2718
  %3617 = vmatmul.mubr.bf16.gmra.mrb[0].mxu0 %v2716
  %v3618 = vpop.f32.mrb[0].mxu0
  %v3619 = vadd.f32 0.0, %v3618
  %v3620 = vpop.f32.mrb[0].mxu0
  %v3621 = vadd.f32 0.0, %v3620
  %v3622 = vpop.f32.mrb[0].mxu0
  %v3623 = vadd.f32 0.0, %v3622
  %v3624 = vpop.f32.mrb[0].mxu0
  %v3625 = vadd.f32 0.0, %v3624
  %3626 = vmatprep.mubr.bf16.mxu0 %v2786
  %3627 = vmatmul.mubr.bf16.gmra.mrb[0].mxu0 %v2784
  %v3628 = vpop.f32.mrb[0].mxu0
  %v3629 = vadd.f32 0.0, %v3628
  %v3630 = vpop.f32.mrb[0].mxu0
  %v3631 = vadd.f32 0.0, %v3630
  %v3632 = vpop.f32.mrb[0].mxu0
  %v3633 = vadd.f32 0.0, %v3632
  %v3634 = vpop.f32.mrb[0].mxu0
  %v3635 = vadd.f32 0.0, %v3634
  %3636 = vmatprep.mubr.bf16.mxu0 %v2853
  %3637 = vmatmul.mubr.bf16.gmra.mrb[0].mxu0 %v2851
  %v3638 = vpop.f32.mrb[0].mxu0
  %v3639 = vadd.f32 0.0, %v3638
  %v3640 = vpop.f32.mrb[0].mxu0
  %v3641 = vadd.f32 0.0, %v3640
  %v3642 = vpop.f32.mrb[0].mxu0
  %v3643 = vpop.f32.mrb[0].mxu0
  %3644 = vdwg.mxu0
  %3645 = vmatprep.subr.bf16.mxu0 %v3279
  %3646 = vmatpush1.bf16.msra.mxu0 %v3278
  %3647 = vmatprep.subr.bf16.mxu0 %v3283
  %3648 = vmatpush1.bf16.msra.mxu0 %v3282
  %3649 = vmatprep.subr.bf16.mxu0 %v3287
  %3650 = vmatpush1.bf16.msra.mxu0 %v3286
  %3651 = vmatprep.subr.bf16.mxu0 %v3291
  %3652 = vmatpush1.bf16.msra.mxu0 %v3290
  %3653 = vmatprep.subr.bf16.mxu0 %v3295
  %3654 = vmatpush1.bf16.msra.mxu0 %v3294
  %3655 = vmatprep.subr.bf16.mxu0 %v3299
  %3656 = vmatpush1.bf16.msra.mxu0 %v3298
  %3657 = vmatprep.subr.bf16.mxu0 %v3303
  %3658 = vmatpush1.bf16.msra.mxu0 %v3302
  %3659 = vmatprep.subr.bf16.mxu0 %v3307
  %3660 = vmatpush1.bf16.msra.mxu0 %v3306
  %3661 = vmatprep.subr.bf16.mxu0 %v3311
  %3662 = vmatpush1.bf16.msra.mxu0 %v3310
  %3663 = vmatprep.subr.bf16.mxu0 %v3315
  %3664 = vmatpush1.bf16.msra.mxu0 %v3314
  %3665 = vmatprep.subr.bf16.mxu0 %v3319
  %3666 = vmatpush1.bf16.msra.mxu0 %v3318
  %3667 = vmatprep.subr.bf16.mxu0 %v3323
  %3668 = vmatpush1.bf16.msra.mxu0 %v3322
  %3669 = vmatprep.subr.bf16.mxu0 %v3460
  %3670 = vmatpush1.bf16.msra.mxu0 %v3457
  %3671 = vmatprep.subr.bf16.mxu0 0
  %3672 = vmatpush1.bf16.msra.mxu0 0
  %3673 = vmatprep.subr.bf16.mxu0 0
  %3674 = vmatpush1.bf16.msra.mxu0 0
  %3675 = vmatprep.subr.bf16.mxu0 0
  %3676 = vmatpush1.bf16.msra.mxu0 0
  %3677 = vmatprep.mubr.bf16.mxu0 %v3442
  %3678 = vmatmul.mubr.bf16.gmra.mrb[0].mxu0 %v2717
  %v3679 = vpop.f32.mrb[0].mxu0
  %v3680 = vadd.f32 %v3619, %v3679
  %v3681 = vpop.f32.mrb[0].mxu0
  %v3682 = vadd.f32 %v3621, %v3681
  %v3683 = vpop.f32.mrb[0].mxu0
  %v3684 = vadd.f32 %v3623, %v3683
  %v3685 = vpop.f32.mrb[0].mxu0
  %v3686 = vadd.f32 %v3625, %v3685
  %3687 = vmatprep.mubr.bf16.mxu0 %v3445
  %3688 = vmatmul.mubr.bf16.gmra.mrb[0].mxu0 %v2785
  %v3689 = vpop.f32.mrb[0].mxu0
  %v3690 = vadd.f32 %v3629, %v3689
  %v3691 = vpop.f32.mrb[0].mxu0
  %v3692 = vadd.f32 %v3631, %v3691
  %v3693 = vpop.f32.mrb[0].mxu0
  %v3694 = vadd.f32 %v3633, %v3693
  %v3695 = vpop.f32.mrb[0].mxu0
  %v3696 = vadd.f32 %v3635, %v3695
  %3697 = vmatprep.mubr.bf16.mxu0 %v3448
  %3698 = vmatmul.mubr.bf16.gmra.mrb[0].mxu0 %v2852
  %v3699 = vpop.f32.mrb[0].mxu0
  %v3700 = vadd.f32 %v3639, %v3699
  %v3701 = vpop.f32.mrb[0].mxu0
  %v3702 = vadd.f32 %v3641, %v3701
  %v3703 = vpop.f32.mrb[0].mxu0
  %v3704 = vpop.f32.mrb[0].mxu0
  %3705 = vdwg.mxu0
  %v3726 = vcombine.low %v3558, %v3560
  %v3727 = vcombine.high %v3558, %v3560
  %v3728 = vcombine.low %v3680, %v3682
  %v3729 = vcombine.high %v3680, %v3682
  %v3731 = vunpack.c.l.s4 1966171168
  %v3732 = vunpack.c.0.s8 %v3731
  %v3733 = vlaneseq
  %v3734 = vshrl.u32 %v3733, 7
  %v3735 = vsub.s32 %v3732, %v3734
  %v3736 = vrot.slane %v3726, %v3735
  %v3738 = vunpack.c.l.s4 1966171168
  %v3739 = vunpack.c.0.s8 %v3738
  %v3740 = vlaneseq
  %v3741 = vshrl.u32 %v3740, 7
  %v3742 = vsub.s32 %v3739, %v3741
  %v3743 = vrot.slane %v3727, %v3742
  %v3745 = vunpack.c.l.s4 1966171168
  %v3746 = vunpack.c.0.s8 %v3745
  %v3747 = vlaneseq
  %v3748 = vshrl.u32 %v3747, 7
  %v3749 = vsub.s32 %v3746, %v3748
  %v3750 = vrot.slane %v3728, %v3749
  %v3752 = vunpack.c.l.s4 1966171168
  %v3753 = vunpack.c.0.s8 %v3752
  %v3754 = vlaneseq
  %v3755 = vshrl.u32 %v3754, 7
  %v3756 = vsub.s32 %v3753, %v3755
  %v3757 = vrot.slane %v3729, %v3756
  %v3758 = vcombine.low %v3736, %v3750
  %v3759 = vcombine.low %v3743, %v3757
  %v3761 = vunpack.c.l.s4 1966171168
  %v3762 = vunpack.c.0.s8 %v3761
  %v3763 = vlaneseq
  %v3764 = vshrl.u32 %v3763, 7
  %v3765 = vsub.s32 %v3762, %v3764
  %v3766 = vrot.slane %v3758, %v3765
  %v3768 = vunpack.c.l.s4 1966171168
  %v3769 = vunpack.c.0.s8 %v3768
  %v3770 = vlaneseq
  %v3771 = vshrl.u32 %v3770, 7
  %v3772 = vsub.s32 %v3769, %v3771
  %v3773 = vrot.slane %v3759, %v3772
  %v3774 = vcombine.high %v3766, %v3766
  %v3775 = vcombine.high %v3773, %v3773
  %v3776 = vcombine.low %v3562, %v3564
  %v3777 = vcombine.high %v3562, %v3564
  %v3778 = vcombine.low %v3684, %v3686
  %v3779 = vcombine.high %v3684, %v3686
  %v3781 = vunpack.c.l.s4 1966171168
  %v3782 = vunpack.c.0.s8 %v3781
  %v3783 = vlaneseq
  %v3784 = vshrl.u32 %v3783, 7
  %v3785 = vsub.s32 %v3782, %v3784
  %v3786 = vrot.slane %v3776, %v3785
  %v3788 = vunpack.c.l.s4 1966171168
  %v3789 = vunpack.c.0.s8 %v3788
  %v3790 = vlaneseq
  %v3791 = vshrl.u32 %v3790, 7
  %v3792 = vsub.s32 %v3789, %v3791
  %v3793 = vrot.slane %v3777, %v3792
  %v3795 = vunpack.c.l.s4 1966171168
  %v3796 = vunpack.c.0.s8 %v3795
  %v3797 = vlaneseq
  %v3798 = vshrl.u32 %v3797, 7
  %v3799 = vsub.s32 %v3796, %v3798
  %v3800 = vrot.slane %v3778, %v3799
  %v3802 = vunpack.c.l.s4 1966171168
  %v3803 = vunpack.c.0.s8 %v3802
  %v3804 = vlaneseq
  %v3805 = vshrl.u32 %v3804, 7
  %v3806 = vsub.s32 %v3803, %v3805
  %v3807 = vrot.slane %v3779, %v3806
  %v3808 = vcombine.low %v3786, %v3800
  %v3809 = vcombine.low %v3793, %v3807
  %v3811 = vunpack.c.l.s4 1966171168
  %v3812 = vunpack.c.0.s8 %v3811
  %v3813 = vlaneseq
  %v3814 = vshrl.u32 %v3813, 7
  %v3815 = vsub.s32 %v3812, %v3814
  %v3816 = vrot.slane %v3808, %v3815
  %v3818 = vunpack.c.l.s4 1966171168
  %v3819 = vunpack.c.0.s8 %v3818
  %v3820 = vlaneseq
  %v3821 = vshrl.u32 %v3820, 7
  %v3822 = vsub.s32 %v3819, %v3821
  %v3823 = vrot.slane %v3809, %v3822
  %v3824 = vcombine.high %v3816, %v3816
  %v3825 = vcombine.high %v3823, %v3823
  %v3826 = vcombine.high %v3568, %v3570
  %v3827 = vcombine.high %v3690, %v3692
  %v3829 = vunpack.c.l.s4 1966171168
  %v3830 = vunpack.c.0.s8 %v3829
  %v3831 = vlaneseq
  %v3832 = vshrl.u32 %v3831, 7
  %v3833 = vsub.s32 %v3830, %v3832
  %v3834 = vrot.slane %v3826, %v3833
  %v3836 = vunpack.c.l.s4 1966171168
  %v3837 = vunpack.c.0.s8 %v3836
  %v3838 = vlaneseq
  %v3839 = vshrl.u32 %v3838, 7
  %v3840 = vsub.s32 %v3837, %v3839
  %v3841 = vrot.slane %v3827, %v3840
  %v3842 = vcombine.high %v3834, %v3841
  %v3844 = vunpack.c.l.s4 1966171168
  %v3845 = vunpack.c.0.s8 %v3844
  %v3846 = vlaneseq
  %v3847 = vshrl.u32 %v3846, 7
  %v3848 = vsub.s32 %v3845, %v3847
  %v3849 = vrot.slane %v3842, %v3848
  %v3850 = vcombine.high %v3849, %v3849
  %v3851 = vcombine.low %v3572, %v3574
  %v3852 = vcombine.high %v3572, %v3574
  %v3853 = vcombine.low %v3694, %v3696
  %v3854 = vcombine.high %v3694, %v3696
  %v3856 = vunpack.c.l.s4 1966171168
  %v3857 = vunpack.c.0.s8 %v3856
  %v3858 = vlaneseq
  %v3859 = vshrl.u32 %v3858, 7
  %v3860 = vsub.s32 %v3857, %v3859
  %v3861 = vrot.slane %v3851, %v3860
  %v3863 = vunpack.c.l.s4 1966171168
  %v3864 = vunpack.c.0.s8 %v3863
  %v3865 = vlaneseq
  %v3866 = vshrl.u32 %v3865, 7
  %v3867 = vsub.s32 %v3864, %v3866
  %v3868 = vrot.slane %v3852, %v3867
  %v3870 = vunpack.c.l.s4 1966171168
  %v3871 = vunpack.c.0.s8 %v3870
  %v3872 = vlaneseq
  %v3873 = vshrl.u32 %v3872, 7
  %v3874 = vsub.s32 %v3871, %v3873
  %v3875 = vrot.slane %v3853, %v3874
  %v3877 = vunpack.c.l.s4 1966171168
  %v3878 = vunpack.c.0.s8 %v3877
  %v3879 = vlaneseq
  %v3880 = vshrl.u32 %v3879, 7
  %v3881 = vsub.s32 %v3878, %v3880
  %v3882 = vrot.slane %v3854, %v3881
  %v3883 = vcombine.high %v3861, %v3875
  %v3884 = vcombine.high %v3868, %v3882
  %v3886 = vunpack.c.l.s4 1966171168
  %v3887 = vunpack.c.0.s8 %v3886
  %v3888 = vlaneseq
  %v3889 = vshrl.u32 %v3888, 7
  %v3890 = vsub.s32 %v3887, %v3889
  %v3891 = vrot.slane %v3883, %v3890
  %v3893 = vunpack.c.l.s4 1966171168
  %v3894 = vunpack.c.0.s8 %v3893
  %v3895 = vlaneseq
  %v3896 = vshrl.u32 %v3895, 7
  %v3897 = vsub.s32 %v3894, %v3896
  %v3898 = vrot.slane %v3884, %v3897
  %v3899 = vcombine.high %v3891, %v3891
  %v3900 = vcombine.high %v3898, %v3898
  %v3901 = vcombine.low %v3578, %v3580
  %v3902 = vcombine.high %v3578, %v3580
  %v3903 = vcombine.low %v3700, %v3702
  %v3904 = vcombine.high %v3700, %v3702
  %v3906 = vunpack.c.l.s4 1966171168
  %v3907 = vunpack.c.0.s8 %v3906
  %v3908 = vlaneseq
  %v3909 = vshrl.u32 %v3908, 7
  %v3910 = vsub.s32 %v3907, %v3909
  %v3911 = vrot.slane %v3901, %v3910
  %v3913 = vunpack.c.l.s4 1966171168
  %v3914 = vunpack.c.0.s8 %v3913
  %v3915 = vlaneseq
  %v3916 = vshrl.u32 %v3915, 7
  %v3917 = vsub.s32 %v3914, %v3916
  %v3918 = vrot.slane %v3902, %v3917
  %v3920 = vunpack.c.l.s4 1966171168
  %v3921 = vunpack.c.0.s8 %v3920
  %v3922 = vlaneseq
  %v3923 = vshrl.u32 %v3922, 7
  %v3924 = vsub.s32 %v3921, %v3923
  %v3925 = vrot.slane %v3903, %v3924
  %v3927 = vunpack.c.l.s4 1966171168
  %v3928 = vunpack.c.0.s8 %v3927
  %v3929 = vlaneseq
  %v3930 = vshrl.u32 %v3929, 7
  %v3931 = vsub.s32 %v3928, %v3930
  %v3932 = vrot.slane %v3904, %v3931
  %v3933 = vcombine.high %v3911, %v3925
  %v3934 = vcombine.high %v3918, %v3932
  %v3936 = vunpack.c.l.s4 1966171168
  %v3937 = vunpack.c.0.s8 %v3936
  %v3938 = vlaneseq
  %v3939 = vshrl.u32 %v3938, 7
  %v3940 = vsub.s32 %v3937, %v3939
  %v3941 = vrot.slane %v3933, %v3940
  %v3943 = vunpack.c.l.s4 1966171168
  %v3944 = vunpack.c.0.s8 %v3943
  %v3945 = vlaneseq
  %v3946 = vshrl.u32 %v3945, 7
  %v3947 = vsub.s32 %v3944, %v3946
  %v3948 = vrot.slane %v3934, %v3947
  %v3949 = vcombine.high %v3941, %v3941
  %s3966 = scalar_lea.vmem %s3, 928
  %v3967 = vld [vmem:[%s3966] sm:$0xff]
  %v3968 = vld [vmem:[%s3966 + $0x8] sm:$0xff]
  %v3969 = vld [vmem:[%s3966 + $0x10] sm:$0xff]
  %v3970 = vld [vmem:[%s3966 + $0x18] sm:$0xff]
  %v3971 = vld [vmem:[%s3966 + $0x20] sm:$0xff]
  %v3972 = vld [vmem:[%s3966 + $0x28] sm:$0xff]
  %v3973 = vld [vmem:[%s3966 + $0x30] sm:$0xff]
  %v3974 = vld [vmem:[%s3966 + $0x38] sm:$0xff]
  %v3975 = vld [vmem:[%s3966 + $0x40] sm:$0xff]
  %v3976 = vld [vmem:[%s3966 + $0x48] sm:$0xff]
  %v3977 = vld [vmem:[%s3966 + $0x50] sm:$0xff]
  %v3978 = vld [vmem:[%s3966 + $0x58] sm:$0xff]
  %v3979 = vld [vmem:[%s3966 + $0x60] sm:$0xff]
  %v3980 = vld [vmem:[%s3966 + $0x68] sm:$0xff]
  %v3981 = vld [vmem:[%s3966 + $0x70] sm:$0xff]
  %v3982 = vld [vmem:[%s3966 + $0x78] sm:$0xff]
  %v3983 = vld [vmem:[%s3966 + $0x80] sm:$0xff]
  %v3984 = vld [vmem:[%s3966 + $0x88] sm:$0xff]
  %v3985 = vld [vmem:[%s3966 + $0x90] sm:$0xff]
  %v3986 = vld [vmem:[%s3966 + $0x98] sm:$0xff]
  %v3987 = vld [vmem:[%s3966 + $0xa0] sm:$0xff]
  %v3988 = vld [vmem:[%s3966 + $0xa8] sm:$0xff]
  %v3989 = vld [vmem:[%s3966 + $0xb0] sm:$0xff]
  %v3990 = vld [vmem:[%s3966 + $0xb8] sm:$0xff]
  %v3991 = vld [vmem:[%s3966 + $0xc0] sm:$0xff]
  %v3992 = vld [vmem:[%s3966 + $0xc8] sm:$0xff]
  %v3993 = vld [vmem:[%s3966 + $0xd0] sm:$0xff]
  %v3994 = vld [vmem:[%s3966 + $0xd8] sm:$0xff]
  %v3995 = vld [vmem:[%s3966 + $0xe0] sm:$0xff]
  %v3996 = vld [vmem:[%s3966 + $0xe8] sm:$0xff]
  %v3997 = vld [vmem:[%s3966 + $0xf0] sm:$0xff]
  %v3998 = vld [vmem:[%s3966 + $0xf8] sm:$0xff]
  %v3999 = vld [vmem:[%s3966 + $0x100] sm:$0xff]
  %v4000 = vld [vmem:[%s3966 + $0x108] sm:$0xff]
  %v4001 = vld [vmem:[%s3966 + $0x110] sm:$0xff]
  %v4002 = vld [vmem:[%s3966 + $0x118] sm:$0xff]
  %v4003 = vld [vmem:[%s3966 + $0x120] sm:$0xff]
  %v4004 = vld [vmem:[%s3966 + $0x128] sm:$0xff]
  %v4005 = vld [vmem:[%s3966 + $0x130] sm:$0xff]
  %v4006 = vld [vmem:[%s3966 + $0x138] sm:$0xff]
  %v4007 = vld [vmem:[%s3966 + $0x140] sm:$0xff]
  %v4008 = vld [vmem:[%s3966 + $0x148] sm:$0xff]
  %v4009 = vld [vmem:[%s3966 + $0x150] sm:$0xff]
  %v4010 = vld [vmem:[%s3966 + $0x158] sm:$0xff]
  %v4011 = vld [vmem:[%s3966 + $0x160] sm:$0xff]
  %v4012 = vld [vmem:[%s3966 + $0x168] sm:$0xff]
  %v4013 = vld [vmem:[%s3966 + $0x170] sm:$0xff]
  %v4014 = vld [vmem:[%s3966 + $0x178] sm:$0xff]
  %v4015 = vld [vmem:[%s3966 + $0x180] sm:$0xff]
  %v4016 = vld [vmem:[%s3966 + $0x188] sm:$0xff]
  %v4017 = vld [vmem:[%s3966 + $0x190] sm:$0xff]
  %v4018 = vld [vmem:[%s3966 + $0x198] sm:$0xff]
  %v4019 = vld [vmem:[%s3966 + $0x1a0] sm:$0xff]
  %v4020 = vld [vmem:[%s3966 + $0x1a8] sm:$0xff]
  %v4021 = vld [vmem:[%s3966 + $0x1b0] sm:$0xff]
  %v4022 = vld [vmem:[%s3966 + $0x1b8] sm:$0xff]
  %v4023 = vld [vmem:[%s3966 + $0x1c0] sm:$0xff]
  %v4024 = vld [vmem:[%s3966 + $0x1c8] sm:$0xff]
  %v4025 = vld [vmem:[%s3966 + $0x1d0] sm:$0xff]
  %v4026 = vld [vmem:[%s3966 + $0x1d8] sm:$0xff]
  %v4027 = vld [vmem:[%s3966 + $0x1e0] sm:$0xff]
  %v4028 = vld [vmem:[%s3966 + $0x1e8] sm:$0xff]
  %v4029 = vld [vmem:[%s3966 + $0x1f0] sm:$0xff]
  %v4030 = vld [vmem:[%s3966 + $0x1f8] sm:$0xff]
  %v4031 = vld [vmem:[%s3966 + $0x200] sm:$0xff]
  %v4032 = vld [vmem:[%s3966 + $0x208] sm:$0xff]
  %v4033 = vld [vmem:[%s3966 + $0x210] sm:$0xff]
  %v4034 = vld [vmem:[%s3966 + $0x218] sm:$0xff]
  %v4035 = vld [vmem:[%s3966 + $0x220] sm:$0xff]
  %v4036 = vld [vmem:[%s3966 + $0x228] sm:$0xff]
  %v4037 = vld [vmem:[%s3966 + $0x230] sm:$0xff]
  %v4038 = vld [vmem:[%s3966 + $0x238] sm:$0xff]
  %v4039 = vld [vmem:[%s3966 + $0x240] sm:$0xff]
  %v4040 = vld [vmem:[%s3966 + $0x248] sm:$0xff]
  %v4041 = vld [vmem:[%s3966 + $0x250] sm:$0xff]
  %v4042 = vld [vmem:[%s3966 + $0x258] sm:$0xff]
  %v4043 = vld [vmem:[%s3966 + $0x260] sm:$0xff]
  %v4044 = vld [vmem:[%s3966 + $0x268] sm:$0xff]
  %v4045 = vld [vmem:[%s3966 + $0x270] sm:$0xff]
  %v4046 = vld [vmem:[%s3966 + $0x278] sm:$0xff]
  %v4047 = vld [vmem:[%s3966 + $0x280] sm:$0xff]
  %v4048 = vld [vmem:[%s3966 + $0x288] sm:$0xff]
  %v4049 = vld [vmem:[%s3966 + $0x290] sm:$0xff]
  %v4050 = vld [vmem:[%s3966 + $0x298] sm:$0xff]
  %v4051 = vld [vmem:[%s3966 + $0x2a0] sm:$0xff]
  %v4052 = vld [vmem:[%s3966 + $0x2a8] sm:$0xff]
  %v4053 = vld [vmem:[%s3966 + $0x2b0] sm:$0xff]
  %v4054 = vld [vmem:[%s3966 + $0x2b8] sm:$0xff]
  %v4055 = vld [vmem:[%s3966 + $0x2c0] sm:$0xff]
  %v4056 = vld [vmem:[%s3966 + $0x2c8] sm:$0xff]
  %v4057 = vld [vmem:[%s3966 + $0x2d0] sm:$0xff]
  %v4058 = vld [vmem:[%s3966 + $0x2d8] sm:$0xff]
  %v4059 = vld [vmem:[%s3966 + $0x2e0] sm:$0xff]
  %v4060 = vld [vmem:[%s3966 + $0x2e8] sm:$0xff]
  %v4061 = vld [vmem:[%s3966 + $0x2f0] sm:$0xff]
  %v4062 = vld [vmem:[%s3966 + $0x2f8] sm:$0xff]
  %v4063 = vld [vmem:[%s3966 + $0x300] sm:$0xff]
  %v4064 = vld [vmem:[%s3966 + $0x308] sm:$0xff]
  %v4065 = vld [vmem:[%s3966 + $0x310] sm:$0xff]
  %v4066 = vld [vmem:[%s3966 + $0x318] sm:$0xff]
  %v4067 = vld [vmem:[%s3966 + $0x320] sm:$0xff]
  %v4068 = vld [vmem:[%s3966 + $0x328] sm:$0xff]
  %v4069 = vld [vmem:[%s3966 + $0x330] sm:$0xff]
  %v4070 = vld [vmem:[%s3966 + $0x338] sm:$0xff]
  %v4071 = vld [vmem:[%s3966 + $0x340] sm:$0xff]
  %v4072 = vld [vmem:[%s3966 + $0x348] sm:$0xff]
  %v4073 = vld [vmem:[%s3966 + $0x350] sm:$0xff]
  %v4074 = vld [vmem:[%s3966 + $0x358] sm:$0xff]
  %v4075 = vld [vmem:[%s3966 + $0x360] sm:$0xff]
  %v4076 = vld [vmem:[%s3966 + $0x368] sm:$0xff]
  %v4077 = vld [vmem:[%s3966 + $0x370] sm:$0xff]
  %v4078 = vld [vmem:[%s3966 + $0x378] sm:$0xff]
  %v4079 = vld [vmem:[%s3966 + $0x380] sm:$0xff]
  %v4080 = vld [vmem:[%s3966 + $0x388] sm:$0xff]
  %v4081 = vld [vmem:[%s3966 + $0x390] sm:$0x33]
  %v4082 = vld [vmem:[%s3966 + $0x398] sm:$0x33]
  %v4199 = vunpack.c.l.b16 %v3967
  %v4200 = vunpack.c.h.b16 %v3967
  %v4201 = vunpack.c.l.b16 %v3968
  %v4202 = vunpack.c.h.b16 %v3968
  %v4203 = vunpack.c.l.b16 %v3969
  %v4204 = vunpack.c.h.b16 %v3969
  %v4205 = vunpack.c.l.b16 %v3970
  %v4206 = vunpack.c.h.b16 %v3970
  %v4207 = vunpack.c.l.b16 %v3971
  %v4208 = vunpack.c.h.b16 %v3971
  %v4209 = vunpack.c.l.b16 %v3972
  %v4210 = vunpack.c.h.b16 %v3972
  %v4211 = vunpack.c.l.b16 %v3973
  %v4212 = vunpack.c.h.b16 %v3973
  %v4213 = vunpack.c.l.b16 %v3974
  %v4214 = vunpack.c.h.b16 %v3974
  %v4215 = vunpack.c.l.b16 %v3975
  %v4216 = vunpack.c.h.b16 %v3975
  %v4217 = vunpack.c.l.b16 %v3976
  %v4218 = vunpack.c.h.b16 %v3976
  %v4219 = vunpack.c.l.b16 %v3977
  %v4220 = vunpack.c.h.b16 %v3977
  %v4221 = vunpack.c.l.b16 %v3978
  %v4222 = vunpack.c.h.b16 %v3978
  %v4223 = vunpack.c.l.b16 %v3979
  %v4224 = vunpack.c.h.b16 %v3979
  %v4225 = vunpack.c.l.b16 %v3980
  %v4226 = vunpack.c.h.b16 %v3980
  %v4227 = vunpack.c.l.b16 %v3981
  %v4228 = vunpack.c.h.b16 %v3981
  %v4229 = vunpack.c.l.b16 %v3982
  %v4230 = vunpack.c.h.b16 %v3982
  %v4231 = vunpack.c.l.b16 %v3983
  %v4232 = vunpack.c.h.b16 %v3983
  %v4233 = vunpack.c.l.b16 %v3984
  %v4234 = vunpack.c.h.b16 %v3984
  %v4235 = vunpack.c.l.b16 %v3985
  %v4236 = vunpack.c.h.b16 %v3985
  %v4237 = vunpack.c.l.b16 %v3986
  %v4238 = vunpack.c.h.b16 %v3986
  %v4239 = vunpack.c.l.b16 %v3987
  %v4240 = vunpack.c.h.b16 %v3987
  %v4241 = vunpack.c.l.b16 %v3988
  %v4242 = vunpack.c.h.b16 %v3988
  %v4243 = vunpack.c.l.b16 %v3989
  %v4244 = vunpack.c.h.b16 %v3989
  %v4245 = vunpack.c.l.b16 %v3990
  %v4246 = vunpack.c.h.b16 %v3990
  %v4247 = vunpack.c.l.b16 %v3991
  %v4248 = vunpack.c.h.b16 %v3991
  %v4249 = vunpack.c.l.b16 %v3992
  %v4250 = vunpack.c.h.b16 %v3992
  %v4251 = vunpack.c.l.b16 %v3993
  %v4252 = vunpack.c.h.b16 %v3993
  %v4253 = vunpack.c.l.b16 %v3994
  %v4254 = vunpack.c.h.b16 %v3994
  %v4255 = vunpack.c.l.b16 %v3995
  %v4256 = vunpack.c.h.b16 %v3995
  %v4257 = vunpack.c.l.b16 %v3996
  %v4258 = vunpack.c.h.b16 %v3996
  %v4259 = vunpack.c.l.b16 %v3997
  %v4260 = vunpack.c.h.b16 %v3997
  %v4261 = vunpack.c.l.b16 %v3998
  %v4262 = vunpack.c.h.b16 %v3998
  %v4263 = vunpack.c.l.b16 %v3999
  %v4264 = vunpack.c.h.b16 %v3999
  %v4265 = vunpack.c.l.b16 %v4000
  %v4266 = vunpack.c.h.b16 %v4000
  %v4267 = vunpack.c.l.b16 %v4001
  %v4268 = vunpack.c.h.b16 %v4001
  %v4269 = vunpack.c.l.b16 %v4002
  %v4270 = vunpack.c.h.b16 %v4002
  %v4271 = vunpack.c.l.b16 %v4003
  %v4272 = vunpack.c.h.b16 %v4003
  %v4273 = vunpack.c.l.b16 %v4004
  %v4274 = vunpack.c.h.b16 %v4004
  %v4275 = vunpack.c.l.b16 %v4005
  %v4276 = vunpack.c.h.b16 %v4005
  %v4277 = vunpack.c.l.b16 %v4006
  %v4278 = vunpack.c.h.b16 %v4006
  %v4279 = vunpack.c.l.b16 %v4007
  %v4280 = vunpack.c.h.b16 %v4007
  %v4281 = vunpack.c.l.b16 %v4008
  %v4282 = vunpack.c.h.b16 %v4008
  %v4283 = vunpack.c.l.b16 %v4009
  %v4284 = vunpack.c.h.b16 %v4009
  %v4285 = vunpack.c.l.b16 %v4010
  %v4286 = vunpack.c.h.b16 %v4010
  %v4287 = vunpack.c.l.b16 %v4011
  %v4288 = vunpack.c.h.b16 %v4011
  %v4289 = vunpack.c.l.b16 %v4012
  %v4290 = vunpack.c.h.b16 %v4012
  %v4291 = vunpack.c.l.b16 %v4013
  %v4292 = vunpack.c.h.b16 %v4013
  %v4293 = vunpack.c.l.b16 %v4014
  %v4294 = vunpack.c.h.b16 %v4014
  %v4295 = vunpack.c.l.b16 %v4015
  %v4296 = vunpack.c.h.b16 %v4015
  %v4297 = vunpack.c.l.b16 %v4016
  %v4298 = vunpack.c.h.b16 %v4016
  %v4299 = vunpack.c.l.b16 %v4017
  %v4300 = vunpack.c.h.b16 %v4017
  %v4301 = vunpack.c.l.b16 %v4018
  %v4302 = vunpack.c.h.b16 %v4018
  %v4303 = vunpack.c.l.b16 %v4019
  %v4304 = vunpack.c.h.b16 %v4019
  %v4305 = vunpack.c.l.b16 %v4020
  %v4306 = vunpack.c.h.b16 %v4020
  %v4307 = vunpack.c.l.b16 %v4021
  %v4308 = vunpack.c.h.b16 %v4021
  %v4309 = vunpack.c.l.b16 %v4022
  %v4310 = vunpack.c.h.b16 %v4022
  %v4311 = vunpack.c.l.b16 %v4023
  %v4312 = vunpack.c.h.b16 %v4023
  %v4313 = vunpack.c.l.b16 %v4024
  %v4314 = vunpack.c.h.b16 %v4024
  %v4315 = vunpack.c.l.b16 %v4025
  %v4316 = vunpack.c.h.b16 %v4025
  %v4317 = vunpack.c.l.b16 %v4026
  %v4318 = vunpack.c.h.b16 %v4026
  %v4319 = vunpack.c.l.b16 %v4027
  %v4320 = vunpack.c.h.b16 %v4027
  %v4321 = vunpack.c.l.b16 %v4028
  %v4322 = vunpack.c.h.b16 %v4028
  %v4323 = vunpack.c.l.b16 %v4029
  %v4324 = vunpack.c.h.b16 %v4029
  %v4325 = vunpack.c.l.b16 %v4030
  %v4326 = vunpack.c.h.b16 %v4030
  %v4327 = vunpack.c.l.b16 %v4031
  %v4328 = vunpack.c.h.b16 %v4031
  %v4329 = vunpack.c.l.b16 %v4032
  %v4330 = vunpack.c.h.b16 %v4032
  %v4331 = vunpack.c.l.b16 %v4033
  %v4332 = vunpack.c.h.b16 %v4033
  %v4333 = vunpack.c.l.b16 %v4034
  %v4334 = vunpack.c.h.b16 %v4034
  %v4335 = vunpack.c.l.b16 %v4035
  %v4336 = vunpack.c.h.b16 %v4035
  %v4337 = vunpack.c.l.b16 %v4036
  %v4338 = vunpack.c.h.b16 %v4036
  %v4339 = vunpack.c.l.b16 %v4037
  %v4340 = vunpack.c.h.b16 %v4037
  %v4341 = vunpack.c.l.b16 %v4038
  %v4342 = vunpack.c.h.b16 %v4038
  %v4343 = vunpack.c.l.b16 %v4039
  %v4344 = vunpack.c.h.b16 %v4039
  %v4345 = vunpack.c.l.b16 %v4040
  %v4346 = vunpack.c.h.b16 %v4040
  %v4347 = vunpack.c.l.b16 %v4041
  %v4348 = vunpack.c.h.b16 %v4041
  %v4349 = vunpack.c.l.b16 %v4042
  %v4350 = vunpack.c.h.b16 %v4042
  %v4351 = vunpack.c.l.b16 %v4043
  %v4352 = vunpack.c.h.b16 %v4043
  %v4353 = vunpack.c.l.b16 %v4044
  %v4354 = vunpack.c.h.b16 %v4044
  %v4355 = vunpack.c.l.b16 %v4045
  %v4356 = vunpack.c.h.b16 %v4045
  %v4357 = vunpack.c.l.b16 %v4046
  %v4358 = vunpack.c.h.b16 %v4046
  %v4359 = vunpack.c.l.b16 %v4047
  %v4360 = vunpack.c.h.b16 %v4047
  %v4361 = vunpack.c.l.b16 %v4048
  %v4362 = vunpack.c.h.b16 %v4048
  %v4363 = vunpack.c.l.b16 %v4049
  %v4364 = vunpack.c.h.b16 %v4049
  %v4365 = vunpack.c.l.b16 %v4050
  %v4366 = vunpack.c.h.b16 %v4050
  %v4367 = vunpack.c.l.b16 %v4051
  %v4368 = vunpack.c.h.b16 %v4051
  %v4369 = vunpack.c.l.b16 %v4052
  %v4370 = vunpack.c.h.b16 %v4052
  %v4371 = vunpack.c.l.b16 %v4053
  %v4372 = vunpack.c.h.b16 %v4053
  %v4373 = vunpack.c.l.b16 %v4054
  %v4374 = vunpack.c.h.b16 %v4054
  %v4375 = vunpack.c.l.b16 %v4055
  %v4376 = vunpack.c.h.b16 %v4055
  %v4377 = vunpack.c.l.b16 %v4056
  %v4378 = vunpack.c.h.b16 %v4056
  %v4379 = vunpack.c.l.b16 %v4057
  %v4380 = vunpack.c.h.b16 %v4057
  %v4381 = vunpack.c.l.b16 %v4058
  %v4382 = vunpack.c.h.b16 %v4058
  %v4383 = vunpack.c.l.b16 %v4059
  %v4384 = vunpack.c.h.b16 %v4059
  %v4385 = vunpack.c.l.b16 %v4060
  %v4386 = vunpack.c.h.b16 %v4060
  %v4387 = vunpack.c.l.b16 %v4061
  %v4388 = vunpack.c.h.b16 %v4061
  %v4389 = vunpack.c.l.b16 %v4062
  %v4390 = vunpack.c.h.b16 %v4062
  %v4391 = vunpack.c.l.b16 %v4063
  %v4392 = vunpack.c.h.b16 %v4063
  %v4393 = vunpack.c.l.b16 %v4064
  %v4394 = vunpack.c.h.b16 %v4064
  %v4395 = vunpack.c.l.b16 %v4065
  %v4396 = vunpack.c.h.b16 %v4065
  %v4397 = vunpack.c.l.b16 %v4066
  %v4398 = vunpack.c.h.b16 %v4066
  %v4399 = vunpack.c.l.b16 %v4067
  %v4400 = vunpack.c.h.b16 %v4067
  %v4401 = vunpack.c.l.b16 %v4068
  %v4402 = vunpack.c.h.b16 %v4068
  %v4403 = vunpack.c.l.b16 %v4069
  %v4404 = vunpack.c.h.b16 %v4069
  %v4405 = vunpack.c.l.b16 %v4070
  %v4406 = vunpack.c.h.b16 %v4070
  %v4407 = vunpack.c.l.b16 %v4071
  %v4408 = vunpack.c.h.b16 %v4071
  %v4409 = vunpack.c.l.b16 %v4072
  %v4410 = vunpack.c.h.b16 %v4072
  %v4411 = vunpack.c.l.b16 %v4073
  %v4412 = vunpack.c.h.b16 %v4073
  %v4413 = vunpack.c.l.b16 %v4074
  %v4414 = vunpack.c.h.b16 %v4074
  %v4415 = vunpack.c.l.b16 %v4075
  %v4416 = vunpack.c.h.b16 %v4075
  %v4417 = vunpack.c.l.b16 %v4076
  %v4418 = vunpack.c.h.b16 %v4076
  %v4419 = vunpack.c.l.b16 %v4077
  %v4420 = vunpack.c.h.b16 %v4077
  %v4421 = vunpack.c.l.b16 %v4078
  %v4422 = vunpack.c.h.b16 %v4078
  %v4423 = vunpack.c.l.b16 %v4079
  %v4424 = vunpack.c.h.b16 %v4079
  %v4425 = vunpack.c.l.b16 %v4080
  %v4426 = vunpack.c.h.b16 %v4080
  %v4427 = vunpack.c.l.b16 %v4081
  %v4428 = vunpack.c.h.b16 %v4081
  %v4429 = vunpack.c.l.b16 %v4082
  %v4430 = vunpack.c.h.b16 %v4082
  %v4431 = vpack.c.b16 %v4203, %v4199
  %v4432 = vpack.c.b16 %v4204, %v4200
  %v4433 = vpack.c.b16 %v4205, %v4201
  %v4434 = vpack.c.b16 %v4206, %v4202
  %v4435 = vpack.c.b16 %v4211, %v4207
  %v4436 = vpack.c.b16 %v4212, %v4208
  %v4437 = vpack.c.b16 %v4213, %v4209
  %v4438 = vpack.c.b16 %v4214, %v4210
  %v4439 = vpack.c.b16 %v4219, %v4215
  %v4440 = vpack.c.b16 %v4220, %v4216
  %v4441 = vpack.c.b16 %v4221, %v4217
  %v4442 = vpack.c.b16 %v4222, %v4218
  %v4443 = vpack.c.b16 %v4227, %v4223
  %v4444 = vpack.c.b16 %v4228, %v4224
  %v4445 = vpack.c.b16 %v4229, %v4225
  %v4446 = vpack.c.b16 %v4230, %v4226
  %v4447 = vpack.c.b16 %v4235, %v4231
  %v4448 = vpack.c.b16 %v4236, %v4232
  %v4449 = vpack.c.b16 %v4237, %v4233
  %v4450 = vpack.c.b16 %v4238, %v4234
  %v4451 = vpack.c.b16 %v4243, %v4239
  %v4452 = vpack.c.b16 %v4244, %v4240
  %v4453 = vpack.c.b16 %v4245, %v4241
  %v4454 = vpack.c.b16 %v4246, %v4242
  %v4455 = vpack.c.b16 %v4251, %v4247
  %v4456 = vpack.c.b16 %v4252, %v4248
  %v4457 = vpack.c.b16 %v4253, %v4249
  %v4458 = vpack.c.b16 %v4254, %v4250
  %v4459 = vpack.c.b16 %v4259, %v4255
  %v4460 = vpack.c.b16 %v4260, %v4256
  %v4461 = vpack.c.b16 %v4261, %v4257
  %v4462 = vpack.c.b16 %v4262, %v4258
  %v4463 = vpack.c.b16 %v4267, %v4263
  %v4464 = vpack.c.b16 %v4268, %v4264
  %v4465 = vpack.c.b16 %v4269, %v4265
  %v4466 = vpack.c.b16 %v4270, %v4266
  %v4467 = vpack.c.b16 %v4275, %v4271
  %v4468 = vpack.c.b16 %v4276, %v4272
  %v4469 = vpack.c.b16 %v4277, %v4273
  %v4470 = vpack.c.b16 %v4278, %v4274
  %v4471 = vpack.c.b16 %v4283, %v4279
  %v4472 = vpack.c.b16 %v4284, %v4280
  %v4473 = vpack.c.b16 %v4285, %v4281
  %v4474 = vpack.c.b16 %v4286, %v4282
  %v4475 = vpack.c.b16 %v4291, %v4287
  %v4476 = vpack.c.b16 %v4292, %v4288
  %v4477 = vpack.c.b16 %v4293, %v4289
  %v4478 = vpack.c.b16 %v4294, %v4290
  %v4479 = vpack.c.b16 %v4299, %v4295
  %v4480 = vpack.c.b16 %v4300, %v4296
  %v4481 = vpack.c.b16 %v4301, %v4297
  %v4482 = vpack.c.b16 %v4302, %v4298
  %v4483 = vpack.c.b16 %v4307, %v4303
  %v4484 = vpack.c.b16 %v4308, %v4304
  %v4485 = vpack.c.b16 %v4309, %v4305
  %v4486 = vpack.c.b16 %v4310, %v4306
  %v4487 = vpack.c.b16 %v4315, %v4311
  %v4488 = vpack.c.b16 %v4316, %v4312
  %v4489 = vpack.c.b16 %v4317, %v4313
  %v4490 = vpack.c.b16 %v4318, %v4314
  %v4491 = vpack.c.b16 %v4323, %v4319
  %v4492 = vpack.c.b16 %v4324, %v4320
  %v4493 = vpack.c.b16 %v4325, %v4321
  %v4494 = vpack.c.b16 %v4326, %v4322
  %v4495 = vpack.c.b16 %v4331, %v4327
  %v4496 = vpack.c.b16 %v4332, %v4328
  %v4497 = vpack.c.b16 %v4333, %v4329
  %v4498 = vpack.c.b16 %v4334, %v4330
  %v4499 = vpack.c.b16 %v4339, %v4335
  %v4500 = vpack.c.b16 %v4340, %v4336
  %v4501 = vpack.c.b16 %v4341, %v4337
  %v4502 = vpack.c.b16 %v4342, %v4338
  %v4503 = vpack.c.b16 %v4347, %v4343
  %v4504 = vpack.c.b16 %v4348, %v4344
  %v4505 = vpack.c.b16 %v4349, %v4345
  %v4506 = vpack.c.b16 %v4350, %v4346
  %v4507 = vpack.c.b16 %v4355, %v4351
  %v4508 = vpack.c.b16 %v4356, %v4352
  %v4509 = vpack.c.b16 %v4357, %v4353
  %v4510 = vpack.c.b16 %v4358, %v4354
  %v4511 = vpack.c.b16 %v4363, %v4359
  %v4512 = vpack.c.b16 %v4364, %v4360
  %v4513 = vpack.c.b16 %v4365, %v4361
  %v4514 = vpack.c.b16 %v4366, %v4362
  %v4515 = vpack.c.b16 %v4371, %v4367
  %v4516 = vpack.c.b16 %v4372, %v4368
  %v4517 = vpack.c.b16 %v4373, %v4369
  %v4518 = vpack.c.b16 %v4374, %v4370
  %v4519 = vpack.c.b16 %v4379, %v4375
  %v4520 = vpack.c.b16 %v4380, %v4376
  %v4521 = vpack.c.b16 %v4381, %v4377
  %v4522 = vpack.c.b16 %v4382, %v4378
  %v4523 = vpack.c.b16 %v4387, %v4383
  %v4524 = vpack.c.b16 %v4388, %v4384
  %v4525 = vpack.c.b16 %v4389, %v4385
  %v4526 = vpack.c.b16 %v4390, %v4386
  %v4527 = vpack.c.b16 %v4395, %v4391
  %v4528 = vpack.c.b16 %v4396, %v4392
  %v4529 = vpack.c.b16 %v4397, %v4393
  %v4530 = vpack.c.b16 %v4398, %v4394
  %v4531 = vpack.c.b16 %v4403, %v4399
  %v4532 = vpack.c.b16 %v4404, %v4400
  %v4533 = vpack.c.b16 %v4405, %v4401
  %v4534 = vpack.c.b16 %v4406, %v4402
  %v4535 = vpack.c.b16 %v4411, %v4407
  %v4536 = vpack.c.b16 %v4412, %v4408
  %v4537 = vpack.c.b16 %v4413, %v4409
  %v4538 = vpack.c.b16 %v4414, %v4410
  %v4539 = vpack.c.b16 %v4419, %v4415
  %v4540 = vpack.c.b16 %v4420, %v4416
  %v4541 = vpack.c.b16 %v4421, %v4417
  %v4542 = vpack.c.b16 %v4422, %v4418
  %v4543 = vpack.c.b16 %v4427, %v4423
  %v4544 = vpack.c.b16 %v4428, %v4424
  %v4545 = vpack.c.b16 %v4429, %v4425
  %v4546 = vpack.c.b16 %v4430, %v4426
  %v4660 = vsel %vm111, %v4543, 0
  %v4663 = vsel %vm111, %v4544, 0
  %v4666 = vsel %vm111, %v4545, 0
  %v4669 = vsel %vm111, %v4546, 0
  %4671 = vmatprep.subr.bf16.mxu0 %v4432
  %4672 = vmatpush1.bf16.msra.mxu0 %v4431
  %4673 = vmatprep.subr.bf16.mxu0 %v4436
  %4674 = vmatpush1.bf16.msra.mxu0 %v4435
  %4675 = vmatprep.subr.bf16.mxu0 %v4440
  %4676 = vmatpush1.bf16.msra.mxu0 %v4439
  %4677 = vmatprep.subr.bf16.mxu0 %v4444
  %4678 = vmatpush1.bf16.msra.mxu0 %v4443
  %4679 = vmatprep.subr.bf16.mxu0 %v4448
  %4680 = vmatpush1.bf16.msra.mxu0 %v4447
  %4681 = vmatprep.subr.bf16.mxu0 %v4452
  %4682 = vmatpush1.bf16.msra.mxu0 %v4451
  %4683 = vmatprep.subr.bf16.mxu0 %v4456
  %4684 = vmatpush1.bf16.msra.mxu0 %v4455
  %4685 = vmatprep.subr.bf16.mxu0 %v4460
  %4686 = vmatpush1.bf16.msra.mxu0 %v4459
  %4687 = vmatprep.subr.bf16.mxu0 %v4464
  %4688 = vmatpush1.bf16.msra.mxu0 %v4463
  %4689 = vmatprep.subr.bf16.mxu0 %v4468
  %4690 = vmatpush1.bf16.msra.mxu0 %v4467
  %4691 = vmatprep.subr.bf16.mxu0 %v4472
  %4692 = vmatpush1.bf16.msra.mxu0 %v4471
  %4693 = vmatprep.subr.bf16.mxu0 %v4476
  %4694 = vmatpush1.bf16.msra.mxu0 %v4475
  %4695 = vmatprep.subr.bf16.mxu0 %v4480
  %4696 = vmatpush1.bf16.msra.mxu0 %v4479
  %4697 = vmatprep.subr.bf16.mxu0 %v4484
  %4698 = vmatpush1.bf16.msra.mxu0 %v4483
  %4699 = vmatprep.subr.bf16.mxu0 %v4488
  %4700 = vmatpush1.bf16.msra.mxu0 %v4487
  %4701 = vmatprep.subr.bf16.mxu0 %v4492
  %4702 = vmatpush1.bf16.msra.mxu0 %v4491
  %4703 = vmatprep.mubr.bf16.mxu0 %v2718
  %4704 = vmatmul.mubr.bf16.gmra.mrb[0].mxu0 %v2716
  %v4705 = vpop.f32.mrb[0].mxu0
  %v4706 = vadd.f32 0.0, %v4705
  %v4707 = vpop.f32.mrb[0].mxu0
  %v4708 = vadd.f32 0.0, %v4707
  %v4709 = vpop.f32.mrb[0].mxu0
  %v4710 = vadd.f32 0.0, %v4709
  %v4711 = vpop.f32.mrb[0].mxu0
  %v4712 = vadd.f32 0.0, %v4711
  %4713 = vmatprep.mubr.bf16.mxu0 %v2786
  %4714 = vmatmul.mubr.bf16.gmra.mrb[0].mxu0 %v2784
  %v4715 = vpop.f32.mrb[0].mxu0
  %v4716 = vadd.f32 0.0, %v4715
  %v4717 = vpop.f32.mrb[0].mxu0
  %v4718 = vadd.f32 0.0, %v4717
  %v4719 = vpop.f32.mrb[0].mxu0
  %v4720 = vadd.f32 0.0, %v4719
  %v4721 = vpop.f32.mrb[0].mxu0
  %v4722 = vadd.f32 0.0, %v4721
  %4723 = vmatprep.mubr.bf16.mxu0 %v2853
  %4724 = vmatmul.mubr.bf16.gmra.mrb[0].mxu0 %v2851
  %v4725 = vpop.f32.mrb[0].mxu0
  %v4726 = vadd.f32 0.0, %v4725
  %v4727 = vpop.f32.mrb[0].mxu0
  %v4728 = vadd.f32 0.0, %v4727
  %v4729 = vpop.f32.mrb[0].mxu0
  %v4730 = vpop.f32.mrb[0].mxu0
  %4731 = vdwg.mxu0
  %4732 = vmatprep.subr.bf16.mxu0 %v4496
  %4733 = vmatpush1.bf16.msra.mxu0 %v4495
  %4734 = vmatprep.subr.bf16.mxu0 %v4500
  %4735 = vmatpush1.bf16.msra.mxu0 %v4499
  %4736 = vmatprep.subr.bf16.mxu0 %v4504
  %4737 = vmatpush1.bf16.msra.mxu0 %v4503
  %4738 = vmatprep.subr.bf16.mxu0 %v4508
  %4739 = vmatpush1.bf16.msra.mxu0 %v4507
  %4740 = vmatprep.subr.bf16.mxu0 %v4512
  %4741 = vmatpush1.bf16.msra.mxu0 %v4511
  %4742 = vmatprep.subr.bf16.mxu0 %v4516
  %4743 = vmatpush1.bf16.msra.mxu0 %v4515
  %4744 = vmatprep.subr.bf16.mxu0 %v4520
  %4745 = vmatpush1.bf16.msra.mxu0 %v4519
  %4746 = vmatprep.subr.bf16.mxu0 %v4524
  %4747 = vmatpush1.bf16.msra.mxu0 %v4523
  %4748 = vmatprep.subr.bf16.mxu0 %v4528
  %4749 = vmatpush1.bf16.msra.mxu0 %v4527
  %4750 = vmatprep.subr.bf16.mxu0 %v4532
  %4751 = vmatpush1.bf16.msra.mxu0 %v4531
  %4752 = vmatprep.subr.bf16.mxu0 %v4536
  %4753 = vmatpush1.bf16.msra.mxu0 %v4535
  %4754 = vmatprep.subr.bf16.mxu0 %v4540
  %4755 = vmatpush1.bf16.msra.mxu0 %v4539
  %4756 = vmatprep.subr.bf16.mxu0 %v4663
  %4757 = vmatpush1.bf16.msra.mxu0 %v4660
  %4758 = vmatprep.subr.bf16.mxu0 0
  %4759 = vmatpush1.bf16.msra.mxu0 0
  %4760 = vmatprep.subr.bf16.mxu0 0
  %4761 = vmatpush1.bf16.msra.mxu0 0
  %4762 = vmatprep.subr.bf16.mxu0 0
  %4763 = vmatpush1.bf16.msra.mxu0 0
  %4764 = vmatprep.mubr.bf16.mxu0 %v3442
  %4765 = vmatmul.mubr.bf16.gmra.mrb[0].mxu0 %v2717
  %v4766 = vpop.f32.mrb[0].mxu0
  %v4767 = vadd.f32 %v4706, %v4766
  %v4768 = vpop.f32.mrb[0].mxu0
  %v4769 = vadd.f32 %v4708, %v4768
  %v4770 = vpop.f32.mrb[0].mxu0
  %v4771 = vadd.f32 %v4710, %v4770
  %v4772 = vpop.f32.mrb[0].mxu0
  %v4773 = vadd.f32 %v4712, %v4772
  %4774 = vmatprep.mubr.bf16.mxu0 %v3445
  %4775 = vmatmul.mubr.bf16.gmra.mrb[0].mxu0 %v2785
  %v4776 = vpop.f32.mrb[0].mxu0
  %v4777 = vadd.f32 %v4716, %v4776
  %v4778 = vpop.f32.mrb[0].mxu0
  %v4779 = vadd.f32 %v4718, %v4778
  %v4780 = vpop.f32.mrb[0].mxu0
  %v4781 = vadd.f32 %v4720, %v4780
  %v4782 = vpop.f32.mrb[0].mxu0
  %v4783 = vadd.f32 %v4722, %v4782
  %4784 = vmatprep.mubr.bf16.mxu0 %v3448
  %4785 = vmatmul.mubr.bf16.gmra.mrb[0].mxu0 %v2852
  %v4786 = vpop.f32.mrb[0].mxu0
  %v4787 = vadd.f32 %v4726, %v4786
  %v4788 = vpop.f32.mrb[0].mxu0
  %v4789 = vadd.f32 %v4728, %v4788
  %v4790 = vpop.f32.mrb[0].mxu0
  %v4791 = vpop.f32.mrb[0].mxu0
  %4792 = vdwg.mxu0
  %4793 = vmatprep.subr.bf16.mxu0 %v4434
  %4794 = vmatpush1.bf16.msra.mxu0 %v4433
  %4795 = vmatprep.subr.bf16.mxu0 %v4438
  %4796 = vmatpush1.bf16.msra.mxu0 %v4437
  %4797 = vmatprep.subr.bf16.mxu0 %v4442
  %4798 = vmatpush1.bf16.msra.mxu0 %v4441
  %4799 = vmatprep.subr.bf16.mxu0 %v4446
  %4800 = vmatpush1.bf16.msra.mxu0 %v4445
  %4801 = vmatprep.subr.bf16.mxu0 %v4450
  %4802 = vmatpush1.bf16.msra.mxu0 %v4449
  %4803 = vmatprep.subr.bf16.mxu0 %v4454
  %4804 = vmatpush1.bf16.msra.mxu0 %v4453
  %4805 = vmatprep.subr.bf16.mxu0 %v4458
  %4806 = vmatpush1.bf16.msra.mxu0 %v4457
  %4807 = vmatprep.subr.bf16.mxu0 %v4462
  %4808 = vmatpush1.bf16.msra.mxu0 %v4461
  %4809 = vmatprep.subr.bf16.mxu0 %v4466
  %4810 = vmatpush1.bf16.msra.mxu0 %v4465
  %4811 = vmatprep.subr.bf16.mxu0 %v4470
  %4812 = vmatpush1.bf16.msra.mxu0 %v4469
  %4813 = vmatprep.subr.bf16.mxu0 %v4474
  %4814 = vmatpush1.bf16.msra.mxu0 %v4473
  %4815 = vmatprep.subr.bf16.mxu0 %v4478
  %4816 = vmatpush1.bf16.msra.mxu0 %v4477
  %4817 = vmatprep.subr.bf16.mxu0 %v4482
  %4818 = vmatpush1.bf16.msra.mxu0 %v4481
  %4819 = vmatprep.subr.bf16.mxu0 %v4486
  %4820 = vmatpush1.bf16.msra.mxu0 %v4485
  %4821 = vmatprep.subr.bf16.mxu0 %v4490
  %4822 = vmatpush1.bf16.msra.mxu0 %v4489
  %4823 = vmatprep.subr.bf16.mxu0 %v4494
  %4824 = vmatpush1.bf16.msra.mxu0 %v4493
  %4825 = vmatprep.mubr.bf16.mxu0 %v2718
  %4826 = vmatmul.mubr.bf16.gmra.mrb[0].mxu0 %v2716
  %v4827 = vpop.f32.mrb[0].mxu0
  %v4828 = vadd.f32 0.0, %v4827
  %v4829 = vpop.f32.mrb[0].mxu0
  %v4830 = vadd.f32 0.0, %v4829
  %v4831 = vpop.f32.mrb[0].mxu0
  %v4832 = vadd.f32 0.0, %v4831
  %v4833 = vpop.f32.mrb[0].mxu0
  %v4834 = vadd.f32 0.0, %v4833
  %4835 = vmatprep.mubr.bf16.mxu0 %v2786
  %4836 = vmatmul.mubr.bf16.gmra.mrb[0].mxu0 %v2784
  %v4837 = vpop.f32.mrb[0].mxu0
  %v4838 = vadd.f32 0.0, %v4837
  %v4839 = vpop.f32.mrb[0].mxu0
  %v4840 = vadd.f32 0.0, %v4839
  %v4841 = vpop.f32.mrb[0].mxu0
  %v4842 = vadd.f32 0.0, %v4841
  %v4843 = vpop.f32.mrb[0].mxu0
  %v4844 = vadd.f32 0.0, %v4843
  %4845 = vmatprep.mubr.bf16.mxu0 %v2853
  %4846 = vmatmul.mubr.bf16.gmra.mrb[0].mxu0 %v2851
  %v4847 = vpop.f32.mrb[0].mxu0
  %v4848 = vadd.f32 0.0, %v4847
  %v4849 = vpop.f32.mrb[0].mxu0
  %v4850 = vadd.f32 0.0, %v4849
  %v4851 = vpop.f32.mrb[0].mxu0
  %v4852 = vpop.f32.mrb[0].mxu0
  %4853 = vdwg.mxu0
  %4854 = vmatprep.subr.bf16.mxu0 %v4498
  %4855 = vmatpush1.bf16.msra.mxu0 %v4497
  %4856 = vmatprep.subr.bf16.mxu0 %v4502
  %4857 = vmatpush1.bf16.msra.mxu0 %v4501
  %4858 = vmatprep.subr.bf16.mxu0 %v4506
  %4859 = vmatpush1.bf16.msra.mxu0 %v4505
  %4860 = vmatprep.subr.bf16.mxu0 %v4510
  %4861 = vmatpush1.bf16.msra.mxu0 %v4509
  %4862 = vmatprep.subr.bf16.mxu0 %v4514
  %4863 = vmatpush1.bf16.msra.mxu0 %v4513
  %4864 = vmatprep.subr.bf16.mxu0 %v4518
  %4865 = vmatpush1.bf16.msra.mxu0 %v4517
  %4866 = vmatprep.subr.bf16.mxu0 %v4522
  %4867 = vmatpush1.bf16.msra.mxu0 %v4521
  %4868 = vmatprep.subr.bf16.mxu0 %v4526
  %4869 = vmatpush1.bf16.msra.mxu0 %v4525
  %4870 = vmatprep.subr.bf16.mxu0 %v4530
  %4871 = vmatpush1.bf16.msra.mxu0 %v4529
  %4872 = vmatprep.subr.bf16.mxu0 %v4534
  %4873 = vmatpush1.bf16.msra.mxu0 %v4533
  %4874 = vmatprep.subr.bf16.mxu0 %v4538
  %4875 = vmatpush1.bf16.msra.mxu0 %v4537
  %4876 = vmatprep.subr.bf16.mxu0 %v4542
  %4877 = vmatpush1.bf16.msra.mxu0 %v4541
  %4878 = vmatprep.subr.bf16.mxu0 %v4669
  %4879 = vmatpush1.bf16.msra.mxu0 %v4666
  %4880 = vmatprep.subr.bf16.mxu0 0
  %4881 = vmatpush1.bf16.msra.mxu0 0
  %4882 = vmatprep.subr.bf16.mxu0 0
  %4883 = vmatpush1.bf16.msra.mxu0 0
  %4884 = vmatprep.subr.bf16.mxu0 0
  %4885 = vmatpush1.bf16.msra.mxu0 0
  %4886 = vmatprep.mubr.bf16.mxu0 %v3442
  %4887 = vmatmul.mubr.bf16.gmra.mrb[0].mxu0 %v2717
  %v4888 = vpop.f32.mrb[0].mxu0
  %v4889 = vadd.f32 %v4828, %v4888
  %v4890 = vpop.f32.mrb[0].mxu0
  %v4891 = vadd.f32 %v4830, %v4890
  %v4892 = vpop.f32.mrb[0].mxu0
  %v4893 = vadd.f32 %v4832, %v4892
  %v4894 = vpop.f32.mrb[0].mxu0
  %v4895 = vadd.f32 %v4834, %v4894
  %4896 = vmatprep.mubr.bf16.mxu0 %v3445
  %4897 = vmatmul.mubr.bf16.gmra.mrb[0].mxu0 %v2785
  %v4898 = vpop.f32.mrb[0].mxu0
  %v4899 = vadd.f32 %v4838, %v4898
  %v4900 = vpop.f32.mrb[0].mxu0
  %v4901 = vadd.f32 %v4840, %v4900
  %v4902 = vpop.f32.mrb[0].mxu0
  %v4903 = vadd.f32 %v4842, %v4902
  %v4904 = vpop.f32.mrb[0].mxu0
  %v4905 = vadd.f32 %v4844, %v4904
  %4906 = vmatprep.mubr.bf16.mxu0 %v3448
  %4907 = vmatmul.mubr.bf16.gmra.mrb[0].mxu0 %v2852
  %v4908 = vpop.f32.mrb[0].mxu0
  %v4909 = vadd.f32 %v4848, %v4908
  %v4910 = vpop.f32.mrb[0].mxu0
  %v4911 = vadd.f32 %v4850, %v4910
  %v4912 = vpop.f32.mrb[0].mxu0
  %v4913 = vpop.f32.mrb[0].mxu0
  %4914 = vdwg.mxu0
  %v4935 = vcombine.low %v4767, %v4769
  %v4936 = vcombine.high %v4767, %v4769
  %v4937 = vcombine.low %v4889, %v4891
  %v4938 = vcombine.high %v4889, %v4891
  %v4940 = vunpack.c.l.s4 1966171168
  %v4941 = vunpack.c.0.s8 %v4940
  %v4942 = vlaneseq
  %v4943 = vshrl.u32 %v4942, 7
  %v4944 = vsub.s32 %v4941, %v4943
  %v4945 = vrot.slane %v4935, %v4944
  %v4947 = vunpack.c.l.s4 1966171168
  %v4948 = vunpack.c.0.s8 %v4947
  %v4949 = vlaneseq
  %v4950 = vshrl.u32 %v4949, 7
  %v4951 = vsub.s32 %v4948, %v4950
  %v4952 = vrot.slane %v4936, %v4951
  %v4954 = vunpack.c.l.s4 1966171168
  %v4955 = vunpack.c.0.s8 %v4954
  %v4956 = vlaneseq
  %v4957 = vshrl.u32 %v4956, 7
  %v4958 = vsub.s32 %v4955, %v4957
  %v4959 = vrot.slane %v4937, %v4958
  %v4961 = vunpack.c.l.s4 1966171168
  %v4962 = vunpack.c.0.s8 %v4961
  %v4963 = vlaneseq
  %v4964 = vshrl.u32 %v4963, 7
  %v4965 = vsub.s32 %v4962, %v4964
  %v4966 = vrot.slane %v4938, %v4965
  %v4967 = vcombine.low %v4945, %v4959
  %v4968 = vcombine.low %v4952, %v4966
  %v4970 = vunpack.c.l.s4 1966171168
  %v4971 = vunpack.c.0.s8 %v4970
  %v4972 = vlaneseq
  %v4973 = vshrl.u32 %v4972, 7
  %v4974 = vsub.s32 %v4971, %v4973
  %v4975 = vrot.slane %v4967, %v4974
  %v4977 = vunpack.c.l.s4 1966171168
  %v4978 = vunpack.c.0.s8 %v4977
  %v4979 = vlaneseq
  %v4980 = vshrl.u32 %v4979, 7
  %v4981 = vsub.s32 %v4978, %v4980
  %v4982 = vrot.slane %v4968, %v4981
  %v4983 = vcombine.high %v4975, %v4975
  %v4984 = vcombine.high %v4982, %v4982
  %v4985 = vcombine.low %v4771, %v4773
  %v4986 = vcombine.high %v4771, %v4773
  %v4987 = vcombine.low %v4893, %v4895
  %v4988 = vcombine.high %v4893, %v4895
  %v4990 = vunpack.c.l.s4 1966171168
  %v4991 = vunpack.c.0.s8 %v4990
  %v4992 = vlaneseq
  %v4993 = vshrl.u32 %v4992, 7
  %v4994 = vsub.s32 %v4991, %v4993
  %v4995 = vrot.slane %v4985, %v4994
  %v4997 = vunpack.c.l.s4 1966171168
  %v4998 = vunpack.c.0.s8 %v4997
  %v4999 = vlaneseq
  %v5000 = vshrl.u32 %v4999, 7
  %v5001 = vsub.s32 %v4998, %v5000
  %v5002 = vrot.slane %v4986, %v5001
  %v5004 = vunpack.c.l.s4 1966171168
  %v5005 = vunpack.c.0.s8 %v5004
  %v5006 = vlaneseq
  %v5007 = vshrl.u32 %v5006, 7
  %v5008 = vsub.s32 %v5005, %v5007
  %v5009 = vrot.slane %v4987, %v5008
  %v5011 = vunpack.c.l.s4 1966171168
  %v5012 = vunpack.c.0.s8 %v5011
  %v5013 = vlaneseq
  %v5014 = vshrl.u32 %v5013, 7
  %v5015 = vsub.s32 %v5012, %v5014
  %v5016 = vrot.slane %v4988, %v5015
  %v5017 = vcombine.low %v4995, %v5009
  %v5018 = vcombine.low %v5002, %v5016
  %v5020 = vunpack.c.l.s4 1966171168
  %v5021 = vunpack.c.0.s8 %v5020
  %v5022 = vlaneseq
  %v5023 = vshrl.u32 %v5022, 7
  %v5024 = vsub.s32 %v5021, %v5023
  %v5025 = vrot.slane %v5017, %v5024
  %v5027 = vunpack.c.l.s4 1966171168
  %v5028 = vunpack.c.0.s8 %v5027
  %v5029 = vlaneseq
  %v5030 = vshrl.u32 %v5029, 7
  %v5031 = vsub.s32 %v5028, %v5030
  %v5032 = vrot.slane %v5018, %v5031
  %v5033 = vcombine.high %v5025, %v5025
  %v5034 = vcombine.high %v5032, %v5032
  %v5035 = vcombine.low %v4777, %v4779
  %v5036 = vcombine.low %v4899, %v4901
  %v5038 = vunpack.c.l.s4 1966171168
  %v5039 = vunpack.c.0.s8 %v5038
  %v5040 = vlaneseq
  %v5041 = vshrl.u32 %v5040, 7
  %v5042 = vsub.s32 %v5039, %v5041
  %v5043 = vrot.slane %v5035, %v5042
  %v5045 = vunpack.c.l.s4 1966171168
  %v5046 = vunpack.c.0.s8 %v5045
  %v5047 = vlaneseq
  %v5048 = vshrl.u32 %v5047, 7
  %v5049 = vsub.s32 %v5046, %v5048
  %v5050 = vrot.slane %v5036, %v5049
  %v5051 = vcombine.low %v5043, %v5050
  %v5053 = vunpack.c.l.s4 1966171168
  %v5054 = vunpack.c.0.s8 %v5053
  %v5055 = vlaneseq
  %v5056 = vshrl.u32 %v5055, 7
  %v5057 = vsub.s32 %v5054, %v5056
  %v5058 = vrot.slane %v5051, %v5057
  %v5059 = vcombine.low %v4781, %v4783
  %v5060 = vcombine.high %v4781, %v4783
  %v5061 = vcombine.low %v4903, %v4905
  %v5062 = vcombine.high %v4903, %v4905
  %v5064 = vunpack.c.l.s4 1966171168
  %v5065 = vunpack.c.0.s8 %v5064
  %v5066 = vlaneseq
  %v5067 = vshrl.u32 %v5066, 7
  %v5068 = vsub.s32 %v5065, %v5067
  %v5069 = vrot.slane %v5059, %v5068
  %v5071 = vunpack.c.l.s4 1966171168
  %v5072 = vunpack.c.0.s8 %v5071
  %v5073 = vlaneseq
  %v5074 = vshrl.u32 %v5073, 7
  %v5075 = vsub.s32 %v5072, %v5074
  %v5076 = vrot.slane %v5060, %v5075
  %v5078 = vunpack.c.l.s4 1966171168
  %v5079 = vunpack.c.0.s8 %v5078
  %v5080 = vlaneseq
  %v5081 = vshrl.u32 %v5080, 7
  %v5082 = vsub.s32 %v5079, %v5081
  %v5083 = vrot.slane %v5061, %v5082
  %v5085 = vunpack.c.l.s4 1966171168
  %v5086 = vunpack.c.0.s8 %v5085
  %v5087 = vlaneseq
  %v5088 = vshrl.u32 %v5087, 7
  %v5089 = vsub.s32 %v5086, %v5088
  %v5090 = vrot.slane %v5062, %v5089
  %v5091 = vcombine.high %v5069, %v5083
  %v5092 = vcombine.high %v5076, %v5090
  %v5094 = vunpack.c.l.s4 1966171168
  %v5095 = vunpack.c.0.s8 %v5094
  %v5096 = vlaneseq
  %v5097 = vshrl.u32 %v5096, 7
  %v5098 = vsub.s32 %v5095, %v5097
  %v5099 = vrot.slane %v5091, %v5098
  %v5101 = vunpack.c.l.s4 1966171168
  %v5102 = vunpack.c.0.s8 %v5101
  %v5103 = vlaneseq
  %v5104 = vshrl.u32 %v5103, 7
  %v5105 = vsub.s32 %v5102, %v5104
  %v5106 = vrot.slane %v5092, %v5105
  %v5107 = vcombine.high %v5099, %v5099
  %v5108 = vcombine.high %v5106, %v5106
  %v5109 = vcombine.low %v4787, %v4789
  %v5110 = vcombine.high %v4787, %v4789
  %v5111 = vcombine.low %v4909, %v4911
  %v5112 = vcombine.high %v4909, %v4911
  %v5114 = vunpack.c.l.s4 1966171168
  %v5115 = vunpack.c.0.s8 %v5114
  %v5116 = vlaneseq
  %v5117 = vshrl.u32 %v5116, 7
  %v5118 = vsub.s32 %v5115, %v5117
  %v5119 = vrot.slane %v5109, %v5118
  %v5121 = vunpack.c.l.s4 1966171168
  %v5122 = vunpack.c.0.s8 %v5121
  %v5123 = vlaneseq
  %v5124 = vshrl.u32 %v5123, 7
  %v5125 = vsub.s32 %v5122, %v5124
  %v5126 = vrot.slane %v5110, %v5125
  %v5128 = vunpack.c.l.s4 1966171168
  %v5129 = vunpack.c.0.s8 %v5128
  %v5130 = vlaneseq
  %v5131 = vshrl.u32 %v5130, 7
  %v5132 = vsub.s32 %v5129, %v5131
  %v5133 = vrot.slane %v5111, %v5132
  %v5135 = vunpack.c.l.s4 1966171168
  %v5136 = vunpack.c.0.s8 %v5135
  %v5137 = vlaneseq
  %v5138 = vshrl.u32 %v5137, 7
  %v5139 = vsub.s32 %v5136, %v5138
  %v5140 = vrot.slane %v5112, %v5139
  %v5141 = vcombine.high %v5119, %v5133
  %v5142 = vcombine.high %v5126, %v5140
  %v5144 = vunpack.c.l.s4 1966171168
  %v5145 = vunpack.c.0.s8 %v5144
  %v5146 = vlaneseq
  %v5147 = vshrl.u32 %v5146, 7
  %v5148 = vsub.s32 %v5145, %v5147
  %v5149 = vrot.slane %v5141, %v5148
  %v5151 = vunpack.c.l.s4 1966171168
  %v5152 = vunpack.c.0.s8 %v5151
  %v5153 = vlaneseq
  %v5154 = vshrl.u32 %v5153, 7
  %v5155 = vsub.s32 %v5152, %v5154
  %v5156 = vrot.slane %v5142, %v5155
  %v5157 = vcombine.high %v5149, %v5149
  %v5158 = vcombine.high %v5156, %v5156
  %v5175 = vadd.f32 %v3766, %v4983
  %v5176 = vadd.f32 %v3774, %v4982
  %v5177 = vadd.f32 %v3773, %v4984
  %v5178 = vadd.f32 %v3775, %v5025
  %v5179 = vadd.f32 %v3816, %v5033
  %v5180 = vadd.f32 %v3824, %v5032
  %v5181 = vadd.f32 %v3823, %v5034
  %v5182 = vadd.f32 %v3825, %v5058
  %v5183 = vadd.f32 %v3850, %v5099
  %v5184 = vadd.f32 %v3891, %v5107
  %v5185 = vadd.f32 %v3899, %v5106
  %v5186 = vadd.f32 %v3898, %v5108
  %v5187 = vadd.f32 %v3900, %v5149
  %v5188 = vadd.f32 %v3941, %v5157
  %v5189 = vadd.f32 %v3949, %v5156
  %v5190 = vadd.f32 %v3948, %v5158
  %s5191 = scalar_lea.vmem %s3, 1856
  %v5192 = vld [vmem:[%s5191] sm:$0xff]
  %v5193 = vld [vmem:[%s5191 + $0x8] sm:$0xff]
  %v5194 = vld [vmem:[%s5191 + $0x10] sm:$0xff]
  %v5195 = vld [vmem:[%s5191 + $0x18] sm:$0xff]
  %v5196 = vld [vmem:[%s5191 + $0x20] sm:$0xff]
  %v5197 = vld [vmem:[%s5191 + $0x28] sm:$0xff]
  %v5198 = vld [vmem:[%s5191 + $0x30] sm:$0xff]
  %v5199 = vld [vmem:[%s5191 + $0x38] sm:$0xff]
  %v5200 = vld [vmem:[%s5191 + $0x40] sm:$0xff]
  %v5201 = vld [vmem:[%s5191 + $0x48] sm:$0xff]
  %v5202 = vld [vmem:[%s5191 + $0x50] sm:$0xff]
  %v5203 = vld [vmem:[%s5191 + $0x58] sm:$0xff]
  %v5204 = vld [vmem:[%s5191 + $0x60] sm:$0xff]
  %v5205 = vld [vmem:[%s5191 + $0x68] sm:$0xff]
  %v5206 = vld [vmem:[%s5191 + $0x70] sm:$0xff]
  %v5207 = vld [vmem:[%s5191 + $0x78] sm:$0xff]
  %v5208 = vld [vmem:[%s5191 + $0x80] sm:$0xff]
  %v5209 = vld [vmem:[%s5191 + $0x88] sm:$0xff]
  %v5210 = vld [vmem:[%s5191 + $0x90] sm:$0xff]
  %v5211 = vld [vmem:[%s5191 + $0x98] sm:$0xff]
  %v5212 = vld [vmem:[%s5191 + $0xa0] sm:$0xff]
  %v5213 = vld [vmem:[%s5191 + $0xa8] sm:$0xff]
  %v5214 = vld [vmem:[%s5191 + $0xb0] sm:$0xff]
  %v5215 = vld [vmem:[%s5191 + $0xb8] sm:$0xff]
  %v5216 = vld [vmem:[%s5191 + $0xc0] sm:$0xff]
  %v5217 = vld [vmem:[%s5191 + $0xc8] sm:$0xff]
  %v5218 = vld [vmem:[%s5191 + $0xd0] sm:$0xff]
  %v5219 = vld [vmem:[%s5191 + $0xd8] sm:$0xff]
  %v5220 = vld [vmem:[%s5191 + $0xe0] sm:$0xff]
  %v5221 = vld [vmem:[%s5191 + $0xe8] sm:$0xff]
  %v5222 = vld [vmem:[%s5191 + $0xf0] sm:$0xff]
  %v5223 = vld [vmem:[%s5191 + $0xf8] sm:$0xff]
  %v5224 = vld [vmem:[%s5191 + $0x100] sm:$0xff]
  %v5225 = vld [vmem:[%s5191 + $0x108] sm:$0xff]
  %v5226 = vld [vmem:[%s5191 + $0x110] sm:$0xff]
  %v5227 = vld [vmem:[%s5191 + $0x118] sm:$0xff]
  %v5228 = vld [vmem:[%s5191 + $0x120] sm:$0xff]
  %v5229 = vld [vmem:[%s5191 + $0x128] sm:$0xff]
  %v5230 = vld [vmem:[%s5191 + $0x130] sm:$0xff]
  %v5231 = vld [vmem:[%s5191 + $0x138] sm:$0xff]
  %v5232 = vld [vmem:[%s5191 + $0x140] sm:$0xff]
  %v5233 = vld [vmem:[%s5191 + $0x148] sm:$0xff]
  %v5234 = vld [vmem:[%s5191 + $0x150] sm:$0xff]
  %v5235 = vld [vmem:[%s5191 + $0x158] sm:$0xff]
  %v5236 = vld [vmem:[%s5191 + $0x160] sm:$0xff]
  %v5237 = vld [vmem:[%s5191 + $0x168] sm:$0xff]
  %v5238 = vld [vmem:[%s5191 + $0x170] sm:$0xff]
  %v5239 = vld [vmem:[%s5191 + $0x178] sm:$0xff]
  %v5240 = vld [vmem:[%s5191 + $0x180] sm:$0xff]
  %v5241 = vld [vmem:[%s5191 + $0x188] sm:$0xff]
  %v5242 = vld [vmem:[%s5191 + $0x190] sm:$0xff]
  %v5243 = vld [vmem:[%s5191 + $0x198] sm:$0xff]
  %v5244 = vld [vmem:[%s5191 + $0x1a0] sm:$0xff]
  %v5245 = vld [vmem:[%s5191 + $0x1a8] sm:$0xff]
  %v5246 = vld [vmem:[%s5191 + $0x1b0] sm:$0xff]
  %v5247 = vld [vmem:[%s5191 + $0x1b8] sm:$0xff]
  %v5248 = vld [vmem:[%s5191 + $0x1c0] sm:$0xff]
  %v5249 = vld [vmem:[%s5191 + $0x1c8] sm:$0xff]
  %v5250 = vld [vmem:[%s5191 + $0x1d0] sm:$0xff]
  %v5251 = vld [vmem:[%s5191 + $0x1d8] sm:$0xff]
  %v5252 = vld [vmem:[%s5191 + $0x1e0] sm:$0xff]
  %v5253 = vld [vmem:[%s5191 + $0x1e8] sm:$0xff]
  %v5254 = vld [vmem:[%s5191 + $0x1f0] sm:$0xff]
  %v5255 = vld [vmem:[%s5191 + $0x1f8] sm:$0xff]
  %v5256 = vld [vmem:[%s5191 + $0x200] sm:$0xff]
  %v5257 = vld [vmem:[%s5191 + $0x208] sm:$0xff]
  %v5258 = vld [vmem:[%s5191 + $0x210] sm:$0xff]
  %v5259 = vld [vmem:[%s5191 + $0x218] sm:$0xff]
  %v5260 = vld [vmem:[%s5191 + $0x220] sm:$0xff]
  %v5261 = vld [vmem:[%s5191 + $0x228] sm:$0xff]
  %v5262 = vld [vmem:[%s5191 + $0x230] sm:$0xff]
  %v5263 = vld [vmem:[%s5191 + $0x238] sm:$0xff]
  %v5264 = vld [vmem:[%s5191 + $0x240] sm:$0xff]
  %v5265 = vld [vmem:[%s5191 + $0x248] sm:$0xff]
  %v5266 = vld [vmem:[%s5191 + $0x250] sm:$0xff]
  %v5267 = vld [vmem:[%s5191 + $0x258] sm:$0xff]
  %v5268 = vld [vmem:[%s5191 + $0x260] sm:$0xff]
  %v5269 = vld [vmem:[%s5191 + $0x268] sm:$0xff]
  %v5270 = vld [vmem:[%s5191 + $0x270] sm:$0xff]
  %v5271 = vld [vmem:[%s5191 + $0x278] sm:$0xff]
  %v5272 = vld [vmem:[%s5191 + $0x280] sm:$0xff]
  %v5273 = vld [vmem:[%s5191 + $0x288] sm:$0xff]
  %v5274 = vld [vmem:[%s5191 + $0x290] sm:$0xff]
  %v5275 = vld [vmem:[%s5191 + $0x298] sm:$0xff]
  %v5276 = vld [vmem:[%s5191 + $0x2a0] sm:$0xff]
  %v5277 = vld [vmem:[%s5191 + $0x2a8] sm:$0xff]
  %v5278 = vld [vmem:[%s5191 + $0x2b0] sm:$0xff]
  %v5279 = vld [vmem:[%s5191 + $0x2b8] sm:$0xff]
  %v5280 = vld [vmem:[%s5191 + $0x2c0] sm:$0xff]
  %v5281 = vld [vmem:[%s5191 + $0x2c8] sm:$0xff]
  %v5282 = vld [vmem:[%s5191 + $0x2d0] sm:$0xff]
  %v5283 = vld [vmem:[%s5191 + $0x2d8] sm:$0xff]
  %v5284 = vld [vmem:[%s5191 + $0x2e0] sm:$0xff]
  %v5285 = vld [vmem:[%s5191 + $0x2e8] sm:$0xff]
  %v5286 = vld [vmem:[%s5191 + $0x2f0] sm:$0xff]
  %v5287 = vld [vmem:[%s5191 + $0x2f8] sm:$0xff]
  %v5288 = vld [vmem:[%s5191 + $0x300] sm:$0xff]
  %v5289 = vld [vmem:[%s5191 + $0x308] sm:$0xff]
  %v5290 = vld [vmem:[%s5191 + $0x310] sm:$0xff]
  %v5291 = vld [vmem:[%s5191 + $0x318] sm:$0xff]
  %v5292 = vld [vmem:[%s5191 + $0x320] sm:$0xff]
  %v5293 = vld [vmem:[%s5191 + $0x328] sm:$0xff]
  %v5294 = vld [vmem:[%s5191 + $0x330] sm:$0xff]
  %v5295 = vld [vmem:[%s5191 + $0x338] sm:$0xff]
  %v5296 = vld [vmem:[%s5191 + $0x340] sm:$0xff]
  %v5297 = vld [vmem:[%s5191 + $0x348] sm:$0xff]
  %v5298 = vld [vmem:[%s5191 + $0x350] sm:$0xff]
  %v5299 = vld [vmem:[%s5191 + $0x358] sm:$0xff]
  %v5300 = vld [vmem:[%s5191 + $0x360] sm:$0xff]
  %v5301 = vld [vmem:[%s5191 + $0x368] sm:$0xff]
  %v5302 = vld [vmem:[%s5191 + $0x370] sm:$0xff]
  %v5303 = vld [vmem:[%s5191 + $0x378] sm:$0xff]
  %v5304 = vld [vmem:[%s5191 + $0x380] sm:$0xff]
  %v5305 = vld [vmem:[%s5191 + $0x388] sm:$0xff]
  %v5306 = vld [vmem:[%s5191 + $0x390] sm:$0x33]
  %v5307 = vld [vmem:[%s5191 + $0x398] sm:$0x33]
  %v5424 = vunpack.c.l.b16 %v5192
  %v5425 = vunpack.c.h.b16 %v5192
  %v5426 = vunpack.c.l.b16 %v5193
  %v5427 = vunpack.c.h.b16 %v5193
  %v5428 = vunpack.c.l.b16 %v5194
  %v5429 = vunpack.c.h.b16 %v5194
  %v5430 = vunpack.c.l.b16 %v5195
  %v5431 = vunpack.c.h.b16 %v5195
  %v5432 = vunpack.c.l.b16 %v5196
  %v5433 = vunpack.c.h.b16 %v5196
  %v5434 = vunpack.c.l.b16 %v5197
  %v5435 = vunpack.c.h.b16 %v5197
  %v5436 = vunpack.c.l.b16 %v5198
  %v5437 = vunpack.c.h.b16 %v5198
  %v5438 = vunpack.c.l.b16 %v5199
  %v5439 = vunpack.c.h.b16 %v5199
  %v5440 = vunpack.c.l.b16 %v5200
  %v5441 = vunpack.c.h.b16 %v5200
  %v5442 = vunpack.c.l.b16 %v5201
  %v5443 = vunpack.c.h.b16 %v5201
  %v5444 = vunpack.c.l.b16 %v5202
  %v5445 = vunpack.c.h.b16 %v5202
  %v5446 = vunpack.c.l.b16 %v5203
  %v5447 = vunpack.c.h.b16 %v5203
  %v5448 = vunpack.c.l.b16 %v5204
  %v5449 = vunpack.c.h.b16 %v5204
  %v5450 = vunpack.c.l.b16 %v5205
  %v5451 = vunpack.c.h.b16 %v5205
  %v5452 = vunpack.c.l.b16 %v5206
  %v5453 = vunpack.c.h.b16 %v5206
  %v5454 = vunpack.c.l.b16 %v5207
  %v5455 = vunpack.c.h.b16 %v5207
  %v5456 = vunpack.c.l.b16 %v5208
  %v5457 = vunpack.c.h.b16 %v5208
  %v5458 = vunpack.c.l.b16 %v5209
  %v5459 = vunpack.c.h.b16 %v5209
  %v5460 = vunpack.c.l.b16 %v5210
  %v5461 = vunpack.c.h.b16 %v5210
  %v5462 = vunpack.c.l.b16 %v5211
  %v5463 = vunpack.c.h.b16 %v5211
  %v5464 = vunpack.c.l.b16 %v5212
  %v5465 = vunpack.c.h.b16 %v5212
  %v5466 = vunpack.c.l.b16 %v5213
  %v5467 = vunpack.c.h.b16 %v5213
  %v5468 = vunpack.c.l.b16 %v5214
  %v5469 = vunpack.c.h.b16 %v5214
  %v5470 = vunpack.c.l.b16 %v5215
  %v5471 = vunpack.c.h.b16 %v5215
  %v5472 = vunpack.c.l.b16 %v5216
  %v5473 = vunpack.c.h.b16 %v5216
  %v5474 = vunpack.c.l.b16 %v5217
  %v5475 = vunpack.c.h.b16 %v5217
  %v5476 = vunpack.c.l.b16 %v5218
  %v5477 = vunpack.c.h.b16 %v5218
  %v5478 = vunpack.c.l.b16 %v5219
  %v5479 = vunpack.c.h.b16 %v5219
  %v5480 = vunpack.c.l.b16 %v5220
  %v5481 = vunpack.c.h.b16 %v5220
  %v5482 = vunpack.c.l.b16 %v5221
  %v5483 = vunpack.c.h.b16 %v5221
  %v5484 = vunpack.c.l.b16 %v5222
  %v5485 = vunpack.c.h.b16 %v5222
  %v5486 = vunpack.c.l.b16 %v5223
  %v5487 = vunpack.c.h.b16 %v5223
  %v5488 = vunpack.c.l.b16 %v5224
  %v5489 = vunpack.c.h.b16 %v5224
  %v5490 = vunpack.c.l.b16 %v5225
  %v5491 = vunpack.c.h.b16 %v5225
  %v5492 = vunpack.c.l.b16 %v5226
  %v5493 = vunpack.c.h.b16 %v5226
  %v5494 = vunpack.c.l.b16 %v5227
  %v5495 = vunpack.c.h.b16 %v5227
  %v5496 = vunpack.c.l.b16 %v5228
  %v5497 = vunpack.c.h.b16 %v5228
  %v5498 = vunpack.c.l.b16 %v5229
  %v5499 = vunpack.c.h.b16 %v5229
  %v5500 = vunpack.c.l.b16 %v5230
  %v5501 = vunpack.c.h.b16 %v5230
  %v5502 = vunpack.c.l.b16 %v5231
  %v5503 = vunpack.c.h.b16 %v5231
  %v5504 = vunpack.c.l.b16 %v5232
  %v5505 = vunpack.c.h.b16 %v5232
  %v5506 = vunpack.c.l.b16 %v5233
  %v5507 = vunpack.c.h.b16 %v5233
  %v5508 = vunpack.c.l.b16 %v5234
  %v5509 = vunpack.c.h.b16 %v5234
  %v5510 = vunpack.c.l.b16 %v5235
  %v5511 = vunpack.c.h.b16 %v5235
  %v5512 = vunpack.c.l.b16 %v5236
  %v5513 = vunpack.c.h.b16 %v5236
  %v5514 = vunpack.c.l.b16 %v5237
  %v5515 = vunpack.c.h.b16 %v5237
  %v5516 = vunpack.c.l.b16 %v5238
  %v5517 = vunpack.c.h.b16 %v5238
  %v5518 = vunpack.c.l.b16 %v5239
  %v5519 = vunpack.c.h.b16 %v5239
  %v5520 = vunpack.c.l.b16 %v5240
  %v5521 = vunpack.c.h.b16 %v5240
  %v5522 = vunpack.c.l.b16 %v5241
  %v5523 = vunpack.c.h.b16 %v5241
  %v5524 = vunpack.c.l.b16 %v5242
  %v5525 = vunpack.c.h.b16 %v5242
  %v5526 = vunpack.c.l.b16 %v5243
  %v5527 = vunpack.c.h.b16 %v5243
  %v5528 = vunpack.c.l.b16 %v5244
  %v5529 = vunpack.c.h.b16 %v5244
  %v5530 = vunpack.c.l.b16 %v5245
  %v5531 = vunpack.c.h.b16 %v5245
  %v5532 = vunpack.c.l.b16 %v5246
  %v5533 = vunpack.c.h.b16 %v5246
  %v5534 = vunpack.c.l.b16 %v5247
  %v5535 = vunpack.c.h.b16 %v5247
  %v5536 = vunpack.c.l.b16 %v5248
  %v5537 = vunpack.c.h.b16 %v5248
  %v5538 = vunpack.c.l.b16 %v5249
  %v5539 = vunpack.c.h.b16 %v5249
  %v5540 = vunpack.c.l.b16 %v5250
  %v5541 = vunpack.c.h.b16 %v5250
  %v5542 = vunpack.c.l.b16 %v5251
  %v5543 = vunpack.c.h.b16 %v5251
  %v5544 = vunpack.c.l.b16 %v5252
  %v5545 = vunpack.c.h.b16 %v5252
  %v5546 = vunpack.c.l.b16 %v5253
  %v5547 = vunpack.c.h.b16 %v5253
  %v5548 = vunpack.c.l.b16 %v5254
  %v5549 = vunpack.c.h.b16 %v5254
  %v5550 = vunpack.c.l.b16 %v5255
  %v5551 = vunpack.c.h.b16 %v5255
  %v5552 = vunpack.c.l.b16 %v5256
  %v5553 = vunpack.c.h.b16 %v5256
  %v5554 = vunpack.c.l.b16 %v5257
  %v5555 = vunpack.c.h.b16 %v5257
  %v5556 = vunpack.c.l.b16 %v5258
  %v5557 = vunpack.c.h.b16 %v5258
  %v5558 = vunpack.c.l.b16 %v5259
  %v5559 = vunpack.c.h.b16 %v5259
  %v5560 = vunpack.c.l.b16 %v5260
  %v5561 = vunpack.c.h.b16 %v5260
  %v5562 = vunpack.c.l.b16 %v5261
  %v5563 = vunpack.c.h.b16 %v5261
  %v5564 = vunpack.c.l.b16 %v5262
  %v5565 = vunpack.c.h.b16 %v5262
  %v5566 = vunpack.c.l.b16 %v5263
  %v5567 = vunpack.c.h.b16 %v5263
  %v5568 = vunpack.c.l.b16 %v5264
  %v5569 = vunpack.c.h.b16 %v5264
  %v5570 = vunpack.c.l.b16 %v5265
  %v5571 = vunpack.c.h.b16 %v5265
  %v5572 = vunpack.c.l.b16 %v5266
  %v5573 = vunpack.c.h.b16 %v5266
  %v5574 = vunpack.c.l.b16 %v5267
  %v5575 = vunpack.c.h.b16 %v5267
  %v5576 = vunpack.c.l.b16 %v5268
  %v5577 = vunpack.c.h.b16 %v5268
  %v5578 = vunpack.c.l.b16 %v5269
  %v5579 = vunpack.c.h.b16 %v5269
  %v5580 = vunpack.c.l.b16 %v5270
  %v5581 = vunpack.c.h.b16 %v5270
  %v5582 = vunpack.c.l.b16 %v5271
  %v5583 = vunpack.c.h.b16 %v5271
  %v5584 = vunpack.c.l.b16 %v5272
  %v5585 = vunpack.c.h.b16 %v5272
  %v5586 = vunpack.c.l.b16 %v5273
  %v5587 = vunpack.c.h.b16 %v5273
  %v5588 = vunpack.c.l.b16 %v5274
  %v5589 = vunpack.c.h.b16 %v5274
  %v5590 = vunpack.c.l.b16 %v5275
  %v5591 = vunpack.c.h.b16 %v5275
  %v5592 = vunpack.c.l.b16 %v5276
  %v5593 = vunpack.c.h.b16 %v5276
  %v5594 = vunpack.c.l.b16 %v5277
  %v5595 = vunpack.c.h.b16 %v5277
  %v5596 = vunpack.c.l.b16 %v5278
  %v5597 = vunpack.c.h.b16 %v5278
  %v5598 = vunpack.c.l.b16 %v5279
  %v5599 = vunpack.c.h.b16 %v5279
  %v5600 = vunpack.c.l.b16 %v5280
  %v5601 = vunpack.c.h.b16 %v5280
  %v5602 = vunpack.c.l.b16 %v5281
  %v5603 = vunpack.c.h.b16 %v5281
  %v5604 = vunpack.c.l.b16 %v5282
  %v5605 = vunpack.c.h.b16 %v5282
  %v5606 = vunpack.c.l.b16 %v5283
  %v5607 = vunpack.c.h.b16 %v5283
  %v5608 = vunpack.c.l.b16 %v5284
  %v5609 = vunpack.c.h.b16 %v5284
  %v5610 = vunpack.c.l.b16 %v5285
  %v5611 = vunpack.c.h.b16 %v5285
  %v5612 = vunpack.c.l.b16 %v5286
  %v5613 = vunpack.c.h.b16 %v5286
  %v5614 = vunpack.c.l.b16 %v5287
  %v5615 = vunpack.c.h.b16 %v5287
  %v5616 = vunpack.c.l.b16 %v5288
  %v5617 = vunpack.c.h.b16 %v5288
  %v5618 = vunpack.c.l.b16 %v5289
  %v5619 = vunpack.c.h.b16 %v5289
  %v5620 = vunpack.c.l.b16 %v5290
  %v5621 = vunpack.c.h.b16 %v5290
  %v5622 = vunpack.c.l.b16 %v5291
  %v5623 = vunpack.c.h.b16 %v5291
  %v5624 = vunpack.c.l.b16 %v5292
  %v5625 = vunpack.c.h.b16 %v5292
  %v5626 = vunpack.c.l.b16 %v5293
  %v5627 = vunpack.c.h.b16 %v5293
  %v5628 = vunpack.c.l.b16 %v5294
  %v5629 = vunpack.c.h.b16 %v5294
  %v5630 = vunpack.c.l.b16 %v5295
  %v5631 = vunpack.c.h.b16 %v5295
  %v5632 = vunpack.c.l.b16 %v5296
  %v5633 = vunpack.c.h.b16 %v5296
  %v5634 = vunpack.c.l.b16 %v5297
  %v5635 = vunpack.c.h.b16 %v5297
  %v5636 = vunpack.c.l.b16 %v5298
  %v5637 = vunpack.c.h.b16 %v5298
  %v5638 = vunpack.c.l.b16 %v5299
  %v5639 = vunpack.c.h.b16 %v5299
  %v5640 = vunpack.c.l.b16 %v5300
  %v5641 = vunpack.c.h.b16 %v5300
  %v5642 = vunpack.c.l.b16 %v5301
  %v5643 = vunpack.c.h.b16 %v5301
  %v5644 = vunpack.c.l.b16 %v5302
  %v5645 = vunpack.c.h.b16 %v5302
  %v5646 = vunpack.c.l.b16 %v5303
  %v5647 = vunpack.c.h.b16 %v5303
  %v5648 = vunpack.c.l.b16 %v5304
  %v5649 = vunpack.c.h.b16 %v5304
  %v5650 = vunpack.c.l.b16 %v5305
  %v5651 = vunpack.c.h.b16 %v5305
  %v5652 = vunpack.c.l.b16 %v5306
  %v5653 = vunpack.c.h.b16 %v5306
  %v5654 = vunpack.c.l.b16 %v5307
  %v5655 = vunpack.c.h.b16 %v5307
  %v5656 = vpack.c.b16 %v5428, %v5424
  %v5657 = vpack.c.b16 %v5429, %v5425
  %v5658 = vpack.c.b16 %v5430, %v5426
  %v5659 = vpack.c.b16 %v5431, %v5427
  %v5660 = vpack.c.b16 %v5436, %v5432
  %v5661 = vpack.c.b16 %v5437, %v5433
  %v5662 = vpack.c.b16 %v5438, %v5434
  %v5663 = vpack.c.b16 %v5439, %v5435
  %v5664 = vpack.c.b16 %v5444, %v5440
  %v5665 = vpack.c.b16 %v5445, %v5441
  %v5666 = vpack.c.b16 %v5446, %v5442
  %v5667 = vpack.c.b16 %v5447, %v5443
  %v5668 = vpack.c.b16 %v5452, %v5448
  %v5669 = vpack.c.b16 %v5453, %v5449
  %v5670 = vpack.c.b16 %v5454, %v5450
  %v5671 = vpack.c.b16 %v5455, %v5451
  %v5672 = vpack.c.b16 %v5460, %v5456
  %v5673 = vpack.c.b16 %v5461, %v5457
  %v5674 = vpack.c.b16 %v5462, %v5458
  %v5675 = vpack.c.b16 %v5463, %v5459
  %v5676 = vpack.c.b16 %v5468, %v5464
  %v5677 = vpack.c.b16 %v5469, %v5465
  %v5678 = vpack.c.b16 %v5470, %v5466
  %v5679 = vpack.c.b16 %v5471, %v5467
  %v5680 = vpack.c.b16 %v5476, %v5472
  %v5681 = vpack.c.b16 %v5477, %v5473
  %v5682 = vpack.c.b16 %v5478, %v5474
  %v5683 = vpack.c.b16 %v5479, %v5475
  %v5684 = vpack.c.b16 %v5484, %v5480
  %v5685 = vpack.c.b16 %v5485, %v5481
  %v5686 = vpack.c.b16 %v5486, %v5482
  %v5687 = vpack.c.b16 %v5487, %v5483
  %v5688 = vpack.c.b16 %v5492, %v5488
  %v5689 = vpack.c.b16 %v5493, %v5489
  %v5690 = vpack.c.b16 %v5494, %v5490
  %v5691 = vpack.c.b16 %v5495, %v5491
  %v5692 = vpack.c.b16 %v5500, %v5496
  %v5693 = vpack.c.b16 %v5501, %v5497
  %v5694 = vpack.c.b16 %v5502, %v5498
  %v5695 = vpack.c.b16 %v5503, %v5499
  %v5696 = vpack.c.b16 %v5508, %v5504
  %v5697 = vpack.c.b16 %v5509, %v5505
  %v5698 = vpack.c.b16 %v5510, %v5506
  %v5699 = vpack.c.b16 %v5511, %v5507
  %v5700 = vpack.c.b16 %v5516, %v5512
  %v5701 = vpack.c.b16 %v5517, %v5513
  %v5702 = vpack.c.b16 %v5518, %v5514
  %v5703 = vpack.c.b16 %v5519, %v5515
  %v5704 = vpack.c.b16 %v5524, %v5520
  %v5705 = vpack.c.b16 %v5525, %v5521
  %v5706 = vpack.c.b16 %v5526, %v5522
  %v5707 = vpack.c.b16 %v5527, %v5523
  %v5708 = vpack.c.b16 %v5532, %v5528
  %v5709 = vpack.c.b16 %v5533, %v5529
  %v5710 = vpack.c.b16 %v5534, %v5530
  %v5711 = vpack.c.b16 %v5535, %v5531
  %v5712 = vpack.c.b16 %v5540, %v5536
  %v5713 = vpack.c.b16 %v5541, %v5537
  %v5714 = vpack.c.b16 %v5542, %v5538
  %v5715 = vpack.c.b16 %v5543, %v5539
  %v5716 = vpack.c.b16 %v5548, %v5544
  %v5717 = vpack.c.b16 %v5549, %v5545
  %v5718 = vpack.c.b16 %v5550, %v5546
  %v5719 = vpack.c.b16 %v5551, %v5547
  %v5720 = vpack.c.b16 %v5556, %v5552
  %v5721 = vpack.c.b16 %v5557, %v5553
  %v5722 = vpack.c.b16 %v5558, %v5554
  %v5723 = vpack.c.b16 %v5559, %v5555
  %v5724 = vpack.c.b16 %v5564, %v5560
  %v5725 = vpack.c.b16 %v5565, %v5561
  %v5726 = vpack.c.b16 %v5566, %v5562
  %v5727 = vpack.c.b16 %v5567, %v5563
  %v5728 = vpack.c.b16 %v5572, %v5568
  %v5729 = vpack.c.b16 %v5573, %v5569
  %v5730 = vpack.c.b16 %v5574, %v5570
  %v5731 = vpack.c.b16 %v5575, %v5571
  %v5732 = vpack.c.b16 %v5580, %v5576
  %v5733 = vpack.c.b16 %v5581, %v5577
  %v5734 = vpack.c.b16 %v5582, %v5578
  %v5735 = vpack.c.b16 %v5583, %v5579
  %v5736 = vpack.c.b16 %v5588, %v5584
  %v5737 = vpack.c.b16 %v5589, %v5585
  %v5738 = vpack.c.b16 %v5590, %v5586
  %v5739 = vpack.c.b16 %v5591, %v5587
  %v5740 = vpack.c.b16 %v5596, %v5592
  %v5741 = vpack.c.b16 %v5597, %v5593
  %v5742 = vpack.c.b16 %v5598, %v5594
  %v5743 = vpack.c.b16 %v5599, %v5595
  %v5744 = vpack.c.b16 %v5604, %v5600
  %v5745 = vpack.c.b16 %v5605, %v5601
  %v5746 = vpack.c.b16 %v5606, %v5602
  %v5747 = vpack.c.b16 %v5607, %v5603
  %v5748 = vpack.c.b16 %v5612, %v5608
  %v5749 = vpack.c.b16 %v5613, %v5609
  %v5750 = vpack.c.b16 %v5614, %v5610
  %v5751 = vpack.c.b16 %v5615, %v5611
  %v5752 = vpack.c.b16 %v5620, %v5616
  %v5753 = vpack.c.b16 %v5621, %v5617
  %v5754 = vpack.c.b16 %v5622, %v5618
  %v5755 = vpack.c.b16 %v5623, %v5619
  %v5756 = vpack.c.b16 %v5628, %v5624
  %v5757 = vpack.c.b16 %v5629, %v5625
  %v5758 = vpack.c.b16 %v5630, %v5626
  %v5759 = vpack.c.b16 %v5631, %v5627
  %v5760 = vpack.c.b16 %v5636, %v5632
  %v5761 = vpack.c.b16 %v5637, %v5633
  %v5762 = vpack.c.b16 %v5638, %v5634
  %v5763 = vpack.c.b16 %v5639, %v5635
  %v5764 = vpack.c.b16 %v5644, %v5640
  %v5765 = vpack.c.b16 %v5645, %v5641
  %v5766 = vpack.c.b16 %v5646, %v5642
  %v5767 = vpack.c.b16 %v5647, %v5643
  %v5768 = vpack.c.b16 %v5652, %v5648
  %v5769 = vpack.c.b16 %v5653, %v5649
  %v5770 = vpack.c.b16 %v5654, %v5650
  %v5771 = vpack.c.b16 %v5655, %v5651
  %v5885 = vsel %vm111, %v5768, 0
  %v5888 = vsel %vm111, %v5769, 0
  %v5891 = vsel %vm111, %v5770, 0
  %v5894 = vsel %vm111, %v5771, 0
  %5896 = vmatprep.subr.bf16.mxu0 %v5657
  %5897 = vmatpush1.bf16.msra.mxu0 %v5656
  %5898 = vmatprep.subr.bf16.mxu0 %v5661
  %5899 = vmatpush1.bf16.msra.mxu0 %v5660
  %5900 = vmatprep.subr.bf16.mxu0 %v5665
  %5901 = vmatpush1.bf16.msra.mxu0 %v5664
  %5902 = vmatprep.subr.bf16.mxu0 %v5669
  %5903 = vmatpush1.bf16.msra.mxu0 %v5668
  %5904 = vmatprep.subr.bf16.mxu0 %v5673
  %5905 = vmatpush1.bf16.msra.mxu0 %v5672
  %5906 = vmatprep.subr.bf16.mxu0 %v5677
  %5907 = vmatpush1.bf16.msra.mxu0 %v5676
  %5908 = vmatprep.subr.bf16.mxu0 %v5681
  %5909 = vmatpush1.bf16.msra.mxu0 %v5680
  %5910 = vmatprep.subr.bf16.mxu0 %v5685
  %5911 = vmatpush1.bf16.msra.mxu0 %v5684
  %5912 = vmatprep.subr.bf16.mxu0 %v5689
  %5913 = vmatpush1.bf16.msra.mxu0 %v5688
  %5914 = vmatprep.subr.bf16.mxu0 %v5693
  %5915 = vmatpush1.bf16.msra.mxu0 %v5692
  %5916 = vmatprep.subr.bf16.mxu0 %v5697
  %5917 = vmatpush1.bf16.msra.mxu0 %v5696
  %5918 = vmatprep.subr.bf16.mxu0 %v5701
  %5919 = vmatpush1.bf16.msra.mxu0 %v5700
  %5920 = vmatprep.subr.bf16.mxu0 %v5705
  %5921 = vmatpush1.bf16.msra.mxu0 %v5704
  %5922 = vmatprep.subr.bf16.mxu0 %v5709
  %5923 = vmatpush1.bf16.msra.mxu0 %v5708
  %5924 = vmatprep.subr.bf16.mxu0 %v5713
  %5925 = vmatpush1.bf16.msra.mxu0 %v5712
  %5926 = vmatprep.subr.bf16.mxu0 %v5717
  %5927 = vmatpush1.bf16.msra.mxu0 %v5716
  %5928 = vmatprep.mubr.bf16.mxu0 %v2718
  %5929 = vmatmul.mubr.bf16.gmra.mrb[0].mxu0 %v2716
  %v5930 = vpop.f32.mrb[0].mxu0
  %v5931 = vadd.f32 0.0, %v5930
  %v5932 = vpop.f32.mrb[0].mxu0
  %v5933 = vadd.f32 0.0, %v5932
  %v5934 = vpop.f32.mrb[0].mxu0
  %v5935 = vadd.f32 0.0, %v5934
  %v5936 = vpop.f32.mrb[0].mxu0
  %v5937 = vadd.f32 0.0, %v5936
  %5938 = vmatprep.mubr.bf16.mxu0 %v2786
  %5939 = vmatmul.mubr.bf16.gmra.mrb[0].mxu0 %v2784
  %v5940 = vpop.f32.mrb[0].mxu0
  %v5941 = vadd.f32 0.0, %v5940
  %v5942 = vpop.f32.mrb[0].mxu0
  %v5943 = vadd.f32 0.0, %v5942
  %v5944 = vpop.f32.mrb[0].mxu0
  %v5945 = vadd.f32 0.0, %v5944
  %v5946 = vpop.f32.mrb[0].mxu0
  %v5947 = vadd.f32 0.0, %v5946
  %5948 = vmatprep.mubr.bf16.mxu0 %v2853
  %5949 = vmatmul.mubr.bf16.gmra.mrb[0].mxu0 %v2851
  %v5950 = vpop.f32.mrb[0].mxu0
  %v5951 = vadd.f32 0.0, %v5950
  %v5952 = vpop.f32.mrb[0].mxu0
  %v5953 = vadd.f32 0.0, %v5952
  %v5954 = vpop.f32.mrb[0].mxu0
  %v5955 = vadd.f32 0.0, %v5954
  %v5956 = vpop.f32.mrb[0].mxu0
  %v5957 = vadd.f32 0.0, %v5956
  %5958 = vdwg.mxu0
  %5959 = vmatprep.subr.bf16.mxu0 %v5721
  %5960 = vmatpush1.bf16.msra.mxu0 %v5720
  %5961 = vmatprep.subr.bf16.mxu0 %v5725
  %5962 = vmatpush1.bf16.msra.mxu0 %v5724
  %5963 = vmatprep.subr.bf16.mxu0 %v5729
  %5964 = vmatpush1.bf16.msra.mxu0 %v5728
  %5965 = vmatprep.subr.bf16.mxu0 %v5733
  %5966 = vmatpush1.bf16.msra.mxu0 %v5732
  %5967 = vmatprep.subr.bf16.mxu0 %v5737
  %5968 = vmatpush1.bf16.msra.mxu0 %v5736
  %5969 = vmatprep.subr.bf16.mxu0 %v5741
  %5970 = vmatpush1.bf16.msra.mxu0 %v5740
  %5971 = vmatprep.subr.bf16.mxu0 %v5745
  %5972 = vmatpush1.bf16.msra.mxu0 %v5744
  %5973 = vmatprep.subr.bf16.mxu0 %v5749
  %5974 = vmatpush1.bf16.msra.mxu0 %v5748
  %5975 = vmatprep.subr.bf16.mxu0 %v5753
  %5976 = vmatpush1.bf16.msra.mxu0 %v5752
  %5977 = vmatprep.subr.bf16.mxu0 %v5757
  %5978 = vmatpush1.bf16.msra.mxu0 %v5756
  %5979 = vmatprep.subr.bf16.mxu0 %v5761
  %5980 = vmatpush1.bf16.msra.mxu0 %v5760
  %5981 = vmatprep.subr.bf16.mxu0 %v5765
  %5982 = vmatpush1.bf16.msra.mxu0 %v5764
  %5983 = vmatprep.subr.bf16.mxu0 %v5888
  %5984 = vmatpush1.bf16.msra.mxu0 %v5885
  %5985 = vmatprep.subr.bf16.mxu0 0
  %5986 = vmatpush1.bf16.msra.mxu0 0
  %5987 = vmatprep.subr.bf16.mxu0 0
  %5988 = vmatpush1.bf16.msra.mxu0 0
  %5989 = vmatprep.subr.bf16.mxu0 0
  %5990 = vmatpush1.bf16.msra.mxu0 0
  %5991 = vmatprep.mubr.bf16.mxu0 %v3442
  %5992 = vmatmul.mubr.bf16.gmra.mrb[0].mxu0 %v2717
  %v5993 = vpop.f32.mrb[0].mxu0
  %v5994 = vadd.f32 %v5931, %v5993
  %v5995 = vpop.f32.mrb[0].mxu0
  %v5996 = vadd.f32 %v5933, %v5995
  %v5997 = vpop.f32.mrb[0].mxu0
  %v5998 = vadd.f32 %v5935, %v5997
  %v5999 = vpop.f32.mrb[0].mxu0
  %v6000 = vadd.f32 %v5937, %v5999
  %6001 = vmatprep.mubr.bf16.mxu0 %v3445
  %6002 = vmatmul.mubr.bf16.gmra.mrb[0].mxu0 %v2785
  %v6003 = vpop.f32.mrb[0].mxu0
  %v6004 = vadd.f32 %v5941, %v6003
  %v6005 = vpop.f32.mrb[0].mxu0
  %v6006 = vadd.f32 %v5943, %v6005
  %v6007 = vpop.f32.mrb[0].mxu0
  %v6008 = vadd.f32 %v5945, %v6007
  %v6009 = vpop.f32.mrb[0].mxu0
  %v6010 = vadd.f32 %v5947, %v6009
  %6011 = vmatprep.mubr.bf16.mxu0 %v3448
  %6012 = vmatmul.mubr.bf16.gmra.mrb[0].mxu0 %v2852
  %v6013 = vpop.f32.mrb[0].mxu0
  %v6014 = vadd.f32 %v5951, %v6013
  %v6015 = vpop.f32.mrb[0].mxu0
  %v6016 = vadd.f32 %v5953, %v6015
  %v6017 = vpop.f32.mrb[0].mxu0
  %v6018 = vadd.f32 %v5955, %v6017
  %v6019 = vpop.f32.mrb[0].mxu0
  %v6020 = vadd.f32 %v5957, %v6019
  %6021 = vdwg.mxu0
  %6022 = vmatprep.subr.bf16.mxu0 %v5659
  %6023 = vmatpush1.bf16.msra.mxu0 %v5658
  %6024 = vmatprep.subr.bf16.mxu0 %v5663
  %6025 = vmatpush1.bf16.msra.mxu0 %v5662
  %6026 = vmatprep.subr.bf16.mxu0 %v5667
  %6027 = vmatpush1.bf16.msra.mxu0 %v5666
  %6028 = vmatprep.subr.bf16.mxu0 %v5671
  %6029 = vmatpush1.bf16.msra.mxu0 %v5670
  %6030 = vmatprep.subr.bf16.mxu0 %v5675
  %6031 = vmatpush1.bf16.msra.mxu0 %v5674
  %6032 = vmatprep.subr.bf16.mxu0 %v5679
  %6033 = vmatpush1.bf16.msra.mxu0 %v5678
  %6034 = vmatprep.subr.bf16.mxu0 %v5683
  %6035 = vmatpush1.bf16.msra.mxu0 %v5682
  %6036 = vmatprep.subr.bf16.mxu0 %v5687
  %6037 = vmatpush1.bf16.msra.mxu0 %v5686
  %6038 = vmatprep.subr.bf16.mxu0 %v5691
  %6039 = vmatpush1.bf16.msra.mxu0 %v5690
  %6040 = vmatprep.subr.bf16.mxu0 %v5695
  %6041 = vmatpush1.bf16.msra.mxu0 %v5694
  %6042 = vmatprep.subr.bf16.mxu0 %v5699
  %6043 = vmatpush1.bf16.msra.mxu0 %v5698
  %6044 = vmatprep.subr.bf16.mxu0 %v5703
  %6045 = vmatpush1.bf16.msra.mxu0 %v5702
  %6046 = vmatprep.subr.bf16.mxu0 %v5707
  %6047 = vmatpush1.bf16.msra.mxu0 %v5706
  %6048 = vmatprep.subr.bf16.mxu0 %v5711
  %6049 = vmatpush1.bf16.msra.mxu0 %v5710
  %6050 = vmatprep.subr.bf16.mxu0 %v5715
  %6051 = vmatpush1.bf16.msra.mxu0 %v5714
  %6052 = vmatprep.subr.bf16.mxu0 %v5719
  %6053 = vmatpush1.bf16.msra.mxu0 %v5718
  %6054 = vmatprep.mubr.bf16.mxu0 %v2718
  %6055 = vmatmul.mubr.bf16.gmra.mrb[0].mxu0 %v2716
  %v6056 = vpop.f32.mrb[0].mxu0
  %v6057 = vadd.f32 0.0, %v6056
  %v6058 = vpop.f32.mrb[0].mxu0
  %v6059 = vadd.f32 0.0, %v6058
  %v6060 = vpop.f32.mrb[0].mxu0
  %v6061 = vadd.f32 0.0, %v6060
  %v6062 = vpop.f32.mrb[0].mxu0
  %v6063 = vadd.f32 0.0, %v6062
  %6064 = vmatprep.mubr.bf16.mxu0 %v2786
  %6065 = vmatmul.mubr.bf16.gmra.mrb[0].mxu0 %v2784
  %v6066 = vpop.f32.mrb[0].mxu0
  %v6067 = vadd.f32 0.0, %v6066
  %v6068 = vpop.f32.mrb[0].mxu0
  %v6069 = vadd.f32 0.0, %v6068
  %v6070 = vpop.f32.mrb[0].mxu0
  %v6071 = vadd.f32 0.0, %v6070
  %v6072 = vpop.f32.mrb[0].mxu0
  %v6073 = vadd.f32 0.0, %v6072
  %6074 = vmatprep.mubr.bf16.mxu0 %v2853
  %6075 = vmatmul.mubr.bf16.gmra.mrb[0].mxu0 %v2851
  %v6076 = vpop.f32.mrb[0].mxu0
  %v6077 = vadd.f32 0.0, %v6076
  %v6078 = vpop.f32.mrb[0].mxu0
  %v6079 = vadd.f32 0.0, %v6078
  %v6080 = vpop.f32.mrb[0].mxu0
  %v6081 = vadd.f32 0.0, %v6080
  %v6082 = vpop.f32.mrb[0].mxu0
  %v6083 = vadd.f32 0.0, %v6082
  %6084 = vdwg.mxu0
  %6085 = vmatprep.subr.bf16.mxu0 %v5723
  %6086 = vmatpush1.bf16.msra.mxu0 %v5722
  %6087 = vmatprep.subr.bf16.mxu0 %v5727
  %6088 = vmatpush1.bf16.msra.mxu0 %v5726
  %6089 = vmatprep.subr.bf16.mxu0 %v5731
  %6090 = vmatpush1.bf16.msra.mxu0 %v5730
  %6091 = vmatprep.subr.bf16.mxu0 %v5735
  %6092 = vmatpush1.bf16.msra.mxu0 %v5734
  %6093 = vmatprep.subr.bf16.mxu0 %v5739
  %6094 = vmatpush1.bf16.msra.mxu0 %v5738
  %6095 = vmatprep.subr.bf16.mxu0 %v5743
  %6096 = vmatpush1.bf16.msra.mxu0 %v5742
  %6097 = vmatprep.subr.bf16.mxu0 %v5747
  %6098 = vmatpush1.bf16.msra.mxu0 %v5746
  %6099 = vmatprep.subr.bf16.mxu0 %v5751
  %6100 = vmatpush1.bf16.msra.mxu0 %v5750
  %6101 = vmatprep.subr.bf16.mxu0 %v5755
  %6102 = vmatpush1.bf16.msra.mxu0 %v5754
  %6103 = vmatprep.subr.bf16.mxu0 %v5759
  %6104 = vmatpush1.bf16.msra.mxu0 %v5758
  %6105 = vmatprep.subr.bf16.mxu0 %v5763
  %6106 = vmatpush1.bf16.msra.mxu0 %v5762
  %6107 = vmatprep.subr.bf16.mxu0 %v5767
  %6108 = vmatpush1.bf16.msra.mxu0 %v5766
  %6109 = vmatprep.subr.bf16.mxu0 %v5894
  %6110 = vmatpush1.bf16.msra.mxu0 %v5891
  %6111 = vmatprep.subr.bf16.mxu0 0
  %6112 = vmatpush1.bf16.msra.mxu0 0
  %6113 = vmatprep.subr.bf16.mxu0 0
  %6114 = vmatpush1.bf16.msra.mxu0 0
  %6115 = vmatprep.subr.bf16.mxu0 0
  %6116 = vmatpush1.bf16.msra.mxu0 0
  %6117 = vmatprep.mubr.bf16.mxu0 %v3442
  %6118 = vmatmul.mubr.bf16.gmra.mrb[0].mxu0 %v2717
  %v6119 = vpop.f32.mrb[0].mxu0
  %v6120 = vadd.f32 %v6057, %v6119
  %v6121 = vpop.f32.mrb[0].mxu0
  %v6122 = vadd.f32 %v6059, %v6121
  %v6123 = vpop.f32.mrb[0].mxu0
  %v6124 = vadd.f32 %v6061, %v6123
  %v6125 = vpop.f32.mrb[0].mxu0
  %v6126 = vadd.f32 %v6063, %v6125
  %6127 = vmatprep.mubr.bf16.mxu0 %v3445
  %6128 = vmatmul.mubr.bf16.gmra.mrb[0].mxu0 %v2785
  %v6129 = vpop.f32.mrb[0].mxu0
  %v6130 = vadd.f32 %v6067, %v6129
  %v6131 = vpop.f32.mrb[0].mxu0
  %v6132 = vadd.f32 %v6069, %v6131
  %v6133 = vpop.f32.mrb[0].mxu0
  %v6134 = vadd.f32 %v6071, %v6133
  %v6135 = vpop.f32.mrb[0].mxu0
  %v6136 = vadd.f32 %v6073, %v6135
  %6137 = vmatprep.mubr.bf16.mxu0 %v3448
  %6138 = vmatmul.mubr.bf16.gmra.mrb[0].mxu0 %v2852
  %v6139 = vpop.f32.mrb[0].mxu0
  %v6140 = vadd.f32 %v6077, %v6139
  %v6141 = vpop.f32.mrb[0].mxu0
  %v6142 = vadd.f32 %v6079, %v6141
  %v6143 = vpop.f32.mrb[0].mxu0
  %v6144 = vadd.f32 %v6081, %v6143
  %v6145 = vpop.f32.mrb[0].mxu0
  %v6146 = vadd.f32 %v6083, %v6145
  %6147 = vdwg.mxu0
  %v6172 = vcombine.high %v5994, %v5996
  %v6173 = vcombine.high %v6120, %v6122
  %v6175 = vunpack.c.l.s4 1966171168
  %v6176 = vunpack.c.0.s8 %v6175
  %v6177 = vlaneseq
  %v6178 = vshrl.u32 %v6177, 7
  %v6179 = vsub.s32 %v6176, %v6178
  %v6180 = vrot.slane %v6172, %v6179
  %v6182 = vunpack.c.l.s4 1966171168
  %v6183 = vunpack.c.0.s8 %v6182
  %v6184 = vlaneseq
  %v6185 = vshrl.u32 %v6184, 7
  %v6186 = vsub.s32 %v6183, %v6185
  %v6187 = vrot.slane %v6173, %v6186
  %v6188 = vcombine.low %v6180, %v6187
  %v6190 = vunpack.c.l.s4 1966171168
  %v6191 = vunpack.c.0.s8 %v6190
  %v6192 = vlaneseq
  %v6193 = vshrl.u32 %v6192, 7
  %v6194 = vsub.s32 %v6191, %v6193
  %v6195 = vrot.slane %v6188, %v6194
  %v6196 = vcombine.high %v6195, %v6195
  %v6197 = vcombine.low %v5998, %v6000
  %v6198 = vcombine.high %v5998, %v6000
  %v6199 = vcombine.low %v6124, %v6126
  %v6200 = vcombine.high %v6124, %v6126
  %v6202 = vunpack.c.l.s4 1966171168
  %v6203 = vunpack.c.0.s8 %v6202
  %v6204 = vlaneseq
  %v6205 = vshrl.u32 %v6204, 7
  %v6206 = vsub.s32 %v6203, %v6205
  %v6207 = vrot.slane %v6197, %v6206
  %v6209 = vunpack.c.l.s4 1966171168
  %v6210 = vunpack.c.0.s8 %v6209
  %v6211 = vlaneseq
  %v6212 = vshrl.u32 %v6211, 7
  %v6213 = vsub.s32 %v6210, %v6212
  %v6214 = vrot.slane %v6198, %v6213
  %v6216 = vunpack.c.l.s4 1966171168
  %v6217 = vunpack.c.0.s8 %v6216
  %v6218 = vlaneseq
  %v6219 = vshrl.u32 %v6218, 7
  %v6220 = vsub.s32 %v6217, %v6219
  %v6221 = vrot.slane %v6199, %v6220
  %v6223 = vunpack.c.l.s4 1966171168
  %v6224 = vunpack.c.0.s8 %v6223
  %v6225 = vlaneseq
  %v6226 = vshrl.u32 %v6225, 7
  %v6227 = vsub.s32 %v6224, %v6226
  %v6228 = vrot.slane %v6200, %v6227
  %v6229 = vcombine.low %v6207, %v6221
  %v6230 = vcombine.low %v6214, %v6228
  %v6232 = vunpack.c.l.s4 1966171168
  %v6233 = vunpack.c.0.s8 %v6232
  %v6234 = vlaneseq
  %v6235 = vshrl.u32 %v6234, 7
  %v6236 = vsub.s32 %v6233, %v6235
  %v6237 = vrot.slane %v6229, %v6236
  %v6239 = vunpack.c.l.s4 1966171168
  %v6240 = vunpack.c.0.s8 %v6239
  %v6241 = vlaneseq
  %v6242 = vshrl.u32 %v6241, 7
  %v6243 = vsub.s32 %v6240, %v6242
  %v6244 = vrot.slane %v6230, %v6243
  %v6245 = vcombine.high %v6237, %v6237
  %v6246 = vcombine.high %v6244, %v6244
  %v6247 = vcombine.low %v6004, %v6006
  %v6248 = vcombine.low %v6130, %v6132
  %v6250 = vunpack.c.l.s4 1966171168
  %v6251 = vunpack.c.0.s8 %v6250
  %v6252 = vlaneseq
  %v6253 = vshrl.u32 %v6252, 7
  %v6254 = vsub.s32 %v6251, %v6253
  %v6255 = vrot.slane %v6247, %v6254
  %v6257 = vunpack.c.l.s4 1966171168
  %v6258 = vunpack.c.0.s8 %v6257
  %v6259 = vlaneseq
  %v6260 = vshrl.u32 %v6259, 7
  %v6261 = vsub.s32 %v6258, %v6260
  %v6262 = vrot.slane %v6248, %v6261
  %v6263 = vcombine.low %v6255, %v6262
  %v6265 = vunpack.c.l.s4 1966171168
  %v6266 = vunpack.c.0.s8 %v6265
  %v6267 = vlaneseq
  %v6268 = vshrl.u32 %v6267, 7
  %v6269 = vsub.s32 %v6266, %v6268
  %v6270 = vrot.slane %v6263, %v6269
  %v6271 = vcombine.high %v6270, %v6270
  %v6272 = vcombine.low %v6008, %v6010
  %v6273 = vcombine.high %v6008, %v6010
  %v6274 = vcombine.low %v6134, %v6136
  %v6275 = vcombine.high %v6134, %v6136
  %v6277 = vunpack.c.l.s4 1966171168
  %v6278 = vunpack.c.0.s8 %v6277
  %v6279 = vlaneseq
  %v6280 = vshrl.u32 %v6279, 7
  %v6281 = vsub.s32 %v6278, %v6280
  %v6282 = vrot.slane %v6272, %v6281
  %v6284 = vunpack.c.l.s4 1966171168
  %v6285 = vunpack.c.0.s8 %v6284
  %v6286 = vlaneseq
  %v6287 = vshrl.u32 %v6286, 7
  %v6288 = vsub.s32 %v6285, %v6287
  %v6289 = vrot.slane %v6273, %v6288
  %v6291 = vunpack.c.l.s4 1966171168
  %v6292 = vunpack.c.0.s8 %v6291
  %v6293 = vlaneseq
  %v6294 = vshrl.u32 %v6293, 7
  %v6295 = vsub.s32 %v6292, %v6294
  %v6296 = vrot.slane %v6274, %v6295
  %v6298 = vunpack.c.l.s4 1966171168
  %v6299 = vunpack.c.0.s8 %v6298
  %v6300 = vlaneseq
  %v6301 = vshrl.u32 %v6300, 7
  %v6302 = vsub.s32 %v6299, %v6301
  %v6303 = vrot.slane %v6275, %v6302
  %v6304 = vcombine.high %v6282, %v6296
  %v6305 = vcombine.high %v6289, %v6303
  %v6307 = vunpack.c.l.s4 1966171168
  %v6308 = vunpack.c.0.s8 %v6307
  %v6309 = vlaneseq
  %v6310 = vshrl.u32 %v6309, 7
  %v6311 = vsub.s32 %v6308, %v6310
  %v6312 = vrot.slane %v6304, %v6311
  %v6314 = vunpack.c.l.s4 1966171168
  %v6315 = vunpack.c.0.s8 %v6314
  %v6316 = vlaneseq
  %v6317 = vshrl.u32 %v6316, 7
  %v6318 = vsub.s32 %v6315, %v6317
  %v6319 = vrot.slane %v6305, %v6318
  %v6320 = vcombine.high %v6312, %v6312
  %v6321 = vcombine.high %v6319, %v6319
  %v6322 = vcombine.low %v6014, %v6016
  %v6323 = vcombine.high %v6014, %v6016
  %v6324 = vcombine.low %v6140, %v6142
  %v6325 = vcombine.high %v6140, %v6142
  %v6327 = vunpack.c.l.s4 1966171168
  %v6328 = vunpack.c.0.s8 %v6327
  %v6329 = vlaneseq
  %v6330 = vshrl.u32 %v6329, 7
  %v6331 = vsub.s32 %v6328, %v6330
  %v6332 = vrot.slane %v6322, %v6331
  %v6334 = vunpack.c.l.s4 1966171168
  %v6335 = vunpack.c.0.s8 %v6334
  %v6336 = vlaneseq
  %v6337 = vshrl.u32 %v6336, 7
  %v6338 = vsub.s32 %v6335, %v6337
  %v6339 = vrot.slane %v6323, %v6338
  %v6341 = vunpack.c.l.s4 1966171168
  %v6342 = vunpack.c.0.s8 %v6341
  %v6343 = vlaneseq
  %v6344 = vshrl.u32 %v6343, 7
  %v6345 = vsub.s32 %v6342, %v6344
  %v6346 = vrot.slane %v6324, %v6345
  %v6348 = vunpack.c.l.s4 1966171168
  %v6349 = vunpack.c.0.s8 %v6348
  %v6350 = vlaneseq
  %v6351 = vshrl.u32 %v6350, 7
  %v6352 = vsub.s32 %v6349, %v6351
  %v6353 = vrot.slane %v6325, %v6352
  %v6354 = vcombine.high %v6332, %v6346
  %v6355 = vcombine.high %v6339, %v6353
  %v6357 = vunpack.c.l.s4 1966171168
  %v6358 = vunpack.c.0.s8 %v6357
  %v6359 = vlaneseq
  %v6360 = vshrl.u32 %v6359, 7
  %v6361 = vsub.s32 %v6358, %v6360
  %v6362 = vrot.slane %v6354, %v6361
  %v6364 = vunpack.c.l.s4 1966171168
  %v6365 = vunpack.c.0.s8 %v6364
  %v6366 = vlaneseq
  %v6367 = vshrl.u32 %v6366, 7
  %v6368 = vsub.s32 %v6365, %v6367
  %v6369 = vrot.slane %v6355, %v6368
  %v6370 = vcombine.high %v6362, %v6362
  %v6371 = vcombine.high %v6369, %v6369
  %v6372 = vcombine.low %v6018, %v6020
  %v6373 = vcombine.low %v6144, %v6146
  %v6375 = vunpack.c.l.s4 1966171168
  %v6376 = vunpack.c.0.s8 %v6375
  %v6377 = vlaneseq
  %v6378 = vshrl.u32 %v6377, 7
  %v6379 = vsub.s32 %v6376, %v6378
  %v6380 = vrot.slane %v6372, %v6379
  %v6382 = vunpack.c.l.s4 1966171168
  %v6383 = vunpack.c.0.s8 %v6382
  %v6384 = vlaneseq
  %v6385 = vshrl.u32 %v6384, 7
  %v6386 = vsub.s32 %v6383, %v6385
  %v6387 = vrot.slane %v6373, %v6386
  %v6388 = vcombine.high %v6380, %v6387
  %v6390 = vunpack.c.l.s4 1966171168
  %v6391 = vunpack.c.0.s8 %v6390
  %v6392 = vlaneseq
  %v6393 = vshrl.u32 %v6392, 7
  %v6394 = vsub.s32 %v6391, %v6393
  %v6395 = vrot.slane %v6388, %v6394
  %v6412 = vadd.f32 %v5175, %v6195
  %v6413 = vadd.f32 %v5176, %v6196
  %v6414 = vadd.f32 %v5177, %v6237
  %v6415 = vadd.f32 %v5178, %v6245
  %v6416 = vadd.f32 %v5179, %v6244
  %v6417 = vadd.f32 %v5180, %v6246
  %v6418 = vadd.f32 %v5181, %v6270
  %v6419 = vadd.f32 %v5182, %v6271
  %v6420 = vadd.f32 %v5183, %v6320
  %v6421 = vadd.f32 %v5184, %v6319
  %v6422 = vadd.f32 %v5185, %v6321
  %v6423 = vadd.f32 %v5186, %v6362
  %v6424 = vadd.f32 %v5187, %v6370
  %v6425 = vadd.f32 %v5188, %v6369
  %v6426 = vadd.f32 %v5189, %v6371
  %v6427 = vadd.f32 %v5190, %v6395
  %s6428 = scalar_lea.vmem %s3, 2784
  %v6429 = vld [vmem:[%s6428] sm:$0xff]
  %v6430 = vld [vmem:[%s6428 + $0x8] sm:$0xff]
  %v6431 = vld [vmem:[%s6428 + $0x10] sm:$0xff]
  %v6432 = vld [vmem:[%s6428 + $0x18] sm:$0xff]
  %v6433 = vld [vmem:[%s6428 + $0x20] sm:$0xff]
  %v6434 = vld [vmem:[%s6428 + $0x28] sm:$0xff]
  %v6435 = vld [vmem:[%s6428 + $0x30] sm:$0xff]
  %v6436 = vld [vmem:[%s6428 + $0x38] sm:$0xff]
  %v6437 = vld [vmem:[%s6428 + $0x40] sm:$0xff]
  %v6438 = vld [vmem:[%s6428 + $0x48] sm:$0xff]
  %v6439 = vld [vmem:[%s6428 + $0x50] sm:$0xff]
  %v6440 = vld [vmem:[%s6428 + $0x58] sm:$0xff]
  %v6441 = vld [vmem:[%s6428 + $0x60] sm:$0xff]
  %v6442 = vld [vmem:[%s6428 + $0x68] sm:$0xff]
  %v6443 = vld [vmem:[%s6428 + $0x70] sm:$0xff]
  %v6444 = vld [vmem:[%s6428 + $0x78] sm:$0xff]
  %v6445 = vld [vmem:[%s6428 + $0x80] sm:$0xff]
  %v6446 = vld [vmem:[%s6428 + $0x88] sm:$0xff]
  %v6447 = vld [vmem:[%s6428 + $0x90] sm:$0xff]
  %v6448 = vld [vmem:[%s6428 + $0x98] sm:$0xff]
  %v6449 = vld [vmem:[%s6428 + $0xa0] sm:$0xff]
  %v6450 = vld [vmem:[%s6428 + $0xa8] sm:$0xff]
  %v6451 = vld [vmem:[%s6428 + $0xb0] sm:$0xff]
  %v6452 = vld [vmem:[%s6428 + $0xb8] sm:$0xff]
  %v6453 = vld [vmem:[%s6428 + $0xc0] sm:$0xff]
  %v6454 = vld [vmem:[%s6428 + $0xc8] sm:$0xff]
  %v6455 = vld [vmem:[%s6428 + $0xd0] sm:$0xff]
  %v6456 = vld [vmem:[%s6428 + $0xd8] sm:$0xff]
  %v6457 = vld [vmem:[%s6428 + $0xe0] sm:$0xff]
  %v6458 = vld [vmem:[%s6428 + $0xe8] sm:$0xff]
  %v6459 = vld [vmem:[%s6428 + $0xf0] sm:$0xff]
  %v6460 = vld [vmem:[%s6428 + $0xf8] sm:$0xff]
  %v6461 = vld [vmem:[%s6428 + $0x100] sm:$0xff]
  %v6462 = vld [vmem:[%s6428 + $0x108] sm:$0xff]
  %v6463 = vld [vmem:[%s6428 + $0x110] sm:$0xff]
  %v6464 = vld [vmem:[%s6428 + $0x118] sm:$0xff]
  %v6465 = vld [vmem:[%s6428 + $0x120] sm:$0xff]
  %v6466 = vld [vmem:[%s6428 + $0x128] sm:$0xff]
  %v6467 = vld [vmem:[%s6428 + $0x130] sm:$0xff]
  %v6468 = vld [vmem:[%s6428 + $0x138] sm:$0xff]
  %v6469 = vld [vmem:[%s6428 + $0x140] sm:$0xff]
  %v6470 = vld [vmem:[%s6428 + $0x148] sm:$0xff]
  %v6471 = vld [vmem:[%s6428 + $0x150] sm:$0xff]
  %v6472 = vld [vmem:[%s6428 + $0x158] sm:$0xff]
  %v6473 = vld [vmem:[%s6428 + $0x160] sm:$0xff]
  %v6474 = vld [vmem:[%s6428 + $0x168] sm:$0xff]
  %v6475 = vld [vmem:[%s6428 + $0x170] sm:$0xff]
  %v6476 = vld [vmem:[%s6428 + $0x178] sm:$0xff]
  %v6477 = vld [vmem:[%s6428 + $0x180] sm:$0xff]
  %v6478 = vld [vmem:[%s6428 + $0x188] sm:$0xff]
  %v6479 = vld [vmem:[%s6428 + $0x190] sm:$0xff]
  %v6480 = vld [vmem:[%s6428 + $0x198] sm:$0xff]
  %v6481 = vld [vmem:[%s6428 + $0x1a0] sm:$0xff]
  %v6482 = vld [vmem:[%s6428 + $0x1a8] sm:$0xff]
  %v6483 = vld [vmem:[%s6428 + $0x1b0] sm:$0xff]
  %v6484 = vld [vmem:[%s6428 + $0x1b8] sm:$0xff]
  %v6485 = vld [vmem:[%s6428 + $0x1c0] sm:$0xff]
  %v6486 = vld [vmem:[%s6428 + $0x1c8] sm:$0xff]
  %v6487 = vld [vmem:[%s6428 + $0x1d0] sm:$0xff]
  %v6488 = vld [vmem:[%s6428 + $0x1d8] sm:$0xff]
  %v6489 = vld [vmem:[%s6428 + $0x1e0] sm:$0xff]
  %v6490 = vld [vmem:[%s6428 + $0x1e8] sm:$0xff]
  %v6491 = vld [vmem:[%s6428 + $0x1f0] sm:$0xff]
  %v6492 = vld [vmem:[%s6428 + $0x1f8] sm:$0xff]
  %v6493 = vld [vmem:[%s6428 + $0x200] sm:$0xff]
  %v6494 = vld [vmem:[%s6428 + $0x208] sm:$0xff]
  %v6495 = vld [vmem:[%s6428 + $0x210] sm:$0xff]
  %v6496 = vld [vmem:[%s6428 + $0x218] sm:$0xff]
  %v6497 = vld [vmem:[%s6428 + $0x220] sm:$0xff]
  %v6498 = vld [vmem:[%s6428 + $0x228] sm:$0xff]
  %v6499 = vld [vmem:[%s6428 + $0x230] sm:$0xff]
  %v6500 = vld [vmem:[%s6428 + $0x238] sm:$0xff]
  %v6501 = vld [vmem:[%s6428 + $0x240] sm:$0xff]
  %v6502 = vld [vmem:[%s6428 + $0x248] sm:$0xff]
  %v6503 = vld [vmem:[%s6428 + $0x250] sm:$0xff]
  %v6504 = vld [vmem:[%s6428 + $0x258] sm:$0xff]
  %v6505 = vld [vmem:[%s6428 + $0x260] sm:$0xff]
  %v6506 = vld [vmem:[%s6428 + $0x268] sm:$0xff]
  %v6507 = vld [vmem:[%s6428 + $0x270] sm:$0xff]
  %v6508 = vld [vmem:[%s6428 + $0x278] sm:$0xff]
  %v6509 = vld [vmem:[%s6428 + $0x280] sm:$0xff]
  %v6510 = vld [vmem:[%s6428 + $0x288] sm:$0xff]
  %v6511 = vld [vmem:[%s6428 + $0x290] sm:$0xff]
  %v6512 = vld [vmem:[%s6428 + $0x298] sm:$0xff]
  %v6513 = vld [vmem:[%s6428 + $0x2a0] sm:$0xff]
  %v6514 = vld [vmem:[%s6428 + $0x2a8] sm:$0xff]
  %v6515 = vld [vmem:[%s6428 + $0x2b0] sm:$0xff]
  %v6516 = vld [vmem:[%s6428 + $0x2b8] sm:$0xff]
  %v6517 = vld [vmem:[%s6428 + $0x2c0] sm:$0xff]
  %v6518 = vld [vmem:[%s6428 + $0x2c8] sm:$0xff]
  %v6519 = vld [vmem:[%s6428 + $0x2d0] sm:$0xff]
  %v6520 = vld [vmem:[%s6428 + $0x2d8] sm:$0xff]
  %v6521 = vld [vmem:[%s6428 + $0x2e0] sm:$0xff]
  %v6522 = vld [vmem:[%s6428 + $0x2e8] sm:$0xff]
  %v6523 = vld [vmem:[%s6428 + $0x2f0] sm:$0xff]
  %v6524 = vld [vmem:[%s6428 + $0x2f8] sm:$0xff]
  %v6525 = vld [vmem:[%s6428 + $0x300] sm:$0xff]
  %v6526 = vld [vmem:[%s6428 + $0x308] sm:$0xff]
  %v6527 = vld [vmem:[%s6428 + $0x310] sm:$0xff]
  %v6528 = vld [vmem:[%s6428 + $0x318] sm:$0xff]
  %v6529 = vld [vmem:[%s6428 + $0x320] sm:$0xff]
  %v6530 = vld [vmem:[%s6428 + $0x328] sm:$0xff]
  %v6531 = vld [vmem:[%s6428 + $0x330] sm:$0xff]
  %v6532 = vld [vmem:[%s6428 + $0x338] sm:$0xff]
  %v6533 = vld [vmem:[%s6428 + $0x340] sm:$0xff]
  %v6534 = vld [vmem:[%s6428 + $0x348] sm:$0xff]
  %v6535 = vld [vmem:[%s6428 + $0x350] sm:$0xff]
  %v6536 = vld [vmem:[%s6428 + $0x358] sm:$0xff]
  %v6537 = vld [vmem:[%s6428 + $0x360] sm:$0xff]
  %v6538 = vld [vmem:[%s6428 + $0x368] sm:$0xff]
  %v6539 = vld [vmem:[%s6428 + $0x370] sm:$0xff]
  %v6540 = vld [vmem:[%s6428 + $0x378] sm:$0xff]
  %v6541 = vld [vmem:[%s6428 + $0x380] sm:$0xff]
  %v6542 = vld [vmem:[%s6428 + $0x388] sm:$0xff]
  %v6543 = vld [vmem:[%s6428 + $0x390] sm:$0x33]
  %v6544 = vld [vmem:[%s6428 + $0x398] sm:$0x33]
  %v6661 = vunpack.c.l.b16 %v6429
  %v6662 = vunpack.c.h.b16 %v6429
  %v6663 = vunpack.c.l.b16 %v6430
  %v6664 = vunpack.c.h.b16 %v6430
  %v6665 = vunpack.c.l.b16 %v6431
  %v6666 = vunpack.c.h.b16 %v6431
  %v6667 = vunpack.c.l.b16 %v6432
  %v6668 = vunpack.c.h.b16 %v6432
  %v6669 = vunpack.c.l.b16 %v6433
  %v6670 = vunpack.c.h.b16 %v6433
  %v6671 = vunpack.c.l.b16 %v6434
  %v6672 = vunpack.c.h.b16 %v6434
  %v6673 = vunpack.c.l.b16 %v6435
  %v6674 = vunpack.c.h.b16 %v6435
  %v6675 = vunpack.c.l.b16 %v6436
  %v6676 = vunpack.c.h.b16 %v6436
  %v6677 = vunpack.c.l.b16 %v6437
  %v6678 = vunpack.c.h.b16 %v6437
  %v6679 = vunpack.c.l.b16 %v6438
  %v6680 = vunpack.c.h.b16 %v6438
  %v6681 = vunpack.c.l.b16 %v6439
  %v6682 = vunpack.c.h.b16 %v6439
  %v6683 = vunpack.c.l.b16 %v6440
  %v6684 = vunpack.c.h.b16 %v6440
  %v6685 = vunpack.c.l.b16 %v6441
  %v6686 = vunpack.c.h.b16 %v6441
  %v6687 = vunpack.c.l.b16 %v6442
  %v6688 = vunpack.c.h.b16 %v6442
  %v6689 = vunpack.c.l.b16 %v6443
  %v6690 = vunpack.c.h.b16 %v6443
  %v6691 = vunpack.c.l.b16 %v6444
  %v6692 = vunpack.c.h.b16 %v6444
  %v6693 = vunpack.c.l.b16 %v6445
  %v6694 = vunpack.c.h.b16 %v6445
  %v6695 = vunpack.c.l.b16 %v6446
  %v6696 = vunpack.c.h.b16 %v6446
  %v6697 = vunpack.c.l.b16 %v6447
  %v6698 = vunpack.c.h.b16 %v6447
  %v6699 = vunpack.c.l.b16 %v6448
  %v6700 = vunpack.c.h.b16 %v6448
  %v6701 = vunpack.c.l.b16 %v6449
  %v6702 = vunpack.c.h.b16 %v6449
  %v6703 = vunpack.c.l.b16 %v6450
  %v6704 = vunpack.c.h.b16 %v6450
  %v6705 = vunpack.c.l.b16 %v6451
  %v6706 = vunpack.c.h.b16 %v6451
  %v6707 = vunpack.c.l.b16 %v6452
  %v6708 = vunpack.c.h.b16 %v6452
  %v6709 = vunpack.c.l.b16 %v6453
  %v6710 = vunpack.c.h.b16 %v6453
  %v6711 = vunpack.c.l.b16 %v6454
  %v6712 = vunpack.c.h.b16 %v6454
  %v6713 = vunpack.c.l.b16 %v6455
  %v6714 = vunpack.c.h.b16 %v6455
  %v6715 = vunpack.c.l.b16 %v6456
  %v6716 = vunpack.c.h.b16 %v6456
  %v6717 = vunpack.c.l.b16 %v6457
  %v6718 = vunpack.c.h.b16 %v6457
  %v6719 = vunpack.c.l.b16 %v6458
  %v6720 = vunpack.c.h.b16 %v6458
  %v6721 = vunpack.c.l.b16 %v6459
  %v6722 = vunpack.c.h.b16 %v6459
  %v6723 = vunpack.c.l.b16 %v6460
  %v6724 = vunpack.c.h.b16 %v6460
  %v6725 = vunpack.c.l.b16 %v6461
  %v6726 = vunpack.c.h.b16 %v6461
  %v6727 = vunpack.c.l.b16 %v6462
  %v6728 = vunpack.c.h.b16 %v6462
  %v6729 = vunpack.c.l.b16 %v6463
  %v6730 = vunpack.c.h.b16 %v6463
  %v6731 = vunpack.c.l.b16 %v6464
  %v6732 = vunpack.c.h.b16 %v6464
  %v6733 = vunpack.c.l.b16 %v6465
  %v6734 = vunpack.c.h.b16 %v6465
  %v6735 = vunpack.c.l.b16 %v6466
  %v6736 = vunpack.c.h.b16 %v6466
  %v6737 = vunpack.c.l.b16 %v6467
  %v6738 = vunpack.c.h.b16 %v6467
  %v6739 = vunpack.c.l.b16 %v6468
  %v6740 = vunpack.c.h.b16 %v6468
  %v6741 = vunpack.c.l.b16 %v6469
  %v6742 = vunpack.c.h.b16 %v6469
  %v6743 = vunpack.c.l.b16 %v6470
  %v6744 = vunpack.c.h.b16 %v6470
  %v6745 = vunpack.c.l.b16 %v6471
  %v6746 = vunpack.c.h.b16 %v6471
  %v6747 = vunpack.c.l.b16 %v6472
  %v6748 = vunpack.c.h.b16 %v6472
  %v6749 = vunpack.c.l.b16 %v6473
  %v6750 = vunpack.c.h.b16 %v6473
  %v6751 = vunpack.c.l.b16 %v6474
  %v6752 = vunpack.c.h.b16 %v6474
  %v6753 = vunpack.c.l.b16 %v6475
  %v6754 = vunpack.c.h.b16 %v6475
  %v6755 = vunpack.c.l.b16 %v6476
  %v6756 = vunpack.c.h.b16 %v6476
  %v6757 = vunpack.c.l.b16 %v6477
  %v6758 = vunpack.c.h.b16 %v6477
  %v6759 = vunpack.c.l.b16 %v6478
  %v6760 = vunpack.c.h.b16 %v6478
  %v6761 = vunpack.c.l.b16 %v6479
  %v6762 = vunpack.c.h.b16 %v6479
  %v6763 = vunpack.c.l.b16 %v6480
  %v6764 = vunpack.c.h.b16 %v6480
  %v6765 = vunpack.c.l.b16 %v6481
  %v6766 = vunpack.c.h.b16 %v6481
  %v6767 = vunpack.c.l.b16 %v6482
  %v6768 = vunpack.c.h.b16 %v6482
  %v6769 = vunpack.c.l.b16 %v6483
  %v6770 = vunpack.c.h.b16 %v6483
  %v6771 = vunpack.c.l.b16 %v6484
  %v6772 = vunpack.c.h.b16 %v6484
  %v6773 = vunpack.c.l.b16 %v6485
  %v6774 = vunpack.c.h.b16 %v6485
  %v6775 = vunpack.c.l.b16 %v6486
  %v6776 = vunpack.c.h.b16 %v6486
  %v6777 = vunpack.c.l.b16 %v6487
  %v6778 = vunpack.c.h.b16 %v6487
  %v6779 = vunpack.c.l.b16 %v6488
  %v6780 = vunpack.c.h.b16 %v6488
  %v6781 = vunpack.c.l.b16 %v6489
  %v6782 = vunpack.c.h.b16 %v6489
  %v6783 = vunpack.c.l.b16 %v6490
  %v6784 = vunpack.c.h.b16 %v6490
  %v6785 = vunpack.c.l.b16 %v6491
  %v6786 = vunpack.c.h.b16 %v6491
  %v6787 = vunpack.c.l.b16 %v6492
  %v6788 = vunpack.c.h.b16 %v6492
  %v6789 = vunpack.c.l.b16 %v6493
  %v6790 = vunpack.c.h.b16 %v6493
  %v6791 = vunpack.c.l.b16 %v6494
  %v6792 = vunpack.c.h.b16 %v6494
  %v6793 = vunpack.c.l.b16 %v6495
  %v6794 = vunpack.c.h.b16 %v6495
  %v6795 = vunpack.c.l.b16 %v6496
  %v6796 = vunpack.c.h.b16 %v6496
  %v6797 = vunpack.c.l.b16 %v6497
  %v6798 = vunpack.c.h.b16 %v6497
  %v6799 = vunpack.c.l.b16 %v6498
  %v6800 = vunpack.c.h.b16 %v6498
  %v6801 = vunpack.c.l.b16 %v6499
  %v6802 = vunpack.c.h.b16 %v6499
  %v6803 = vunpack.c.l.b16 %v6500
  %v6804 = vunpack.c.h.b16 %v6500
  %v6805 = vunpack.c.l.b16 %v6501
  %v6806 = vunpack.c.h.b16 %v6501
  %v6807 = vunpack.c.l.b16 %v6502
  %v6808 = vunpack.c.h.b16 %v6502
  %v6809 = vunpack.c.l.b16 %v6503
  %v6810 = vunpack.c.h.b16 %v6503
  %v6811 = vunpack.c.l.b16 %v6504
  %v6812 = vunpack.c.h.b16 %v6504
  %v6813 = vunpack.c.l.b16 %v6505
  %v6814 = vunpack.c.h.b16 %v6505
  %v6815 = vunpack.c.l.b16 %v6506
  %v6816 = vunpack.c.h.b16 %v6506
  %v6817 = vunpack.c.l.b16 %v6507
  %v6818 = vunpack.c.h.b16 %v6507
  %v6819 = vunpack.c.l.b16 %v6508
  %v6820 = vunpack.c.h.b16 %v6508
  %v6821 = vunpack.c.l.b16 %v6509
  %v6822 = vunpack.c.h.b16 %v6509
  %v6823 = vunpack.c.l.b16 %v6510
  %v6824 = vunpack.c.h.b16 %v6510
  %v6825 = vunpack.c.l.b16 %v6511
  %v6826 = vunpack.c.h.b16 %v6511
  %v6827 = vunpack.c.l.b16 %v6512
  %v6828 = vunpack.c.h.b16 %v6512
  %v6829 = vunpack.c.l.b16 %v6513
  %v6830 = vunpack.c.h.b16 %v6513
  %v6831 = vunpack.c.l.b16 %v6514
  %v6832 = vunpack.c.h.b16 %v6514
  %v6833 = vunpack.c.l.b16 %v6515
  %v6834 = vunpack.c.h.b16 %v6515
  %v6835 = vunpack.c.l.b16 %v6516
  %v6836 = vunpack.c.h.b16 %v6516
  %v6837 = vunpack.c.l.b16 %v6517
  %v6838 = vunpack.c.h.b16 %v6517
  %v6839 = vunpack.c.l.b16 %v6518
  %v6840 = vunpack.c.h.b16 %v6518
  %v6841 = vunpack.c.l.b16 %v6519
  %v6842 = vunpack.c.h.b16 %v6519
  %v6843 = vunpack.c.l.b16 %v6520
  %v6844 = vunpack.c.h.b16 %v6520
  %v6845 = vunpack.c.l.b16 %v6521
  %v6846 = vunpack.c.h.b16 %v6521
  %v6847 = vunpack.c.l.b16 %v6522
  %v6848 = vunpack.c.h.b16 %v6522
  %v6849 = vunpack.c.l.b16 %v6523
  %v6850 = vunpack.c.h.b16 %v6523
  %v6851 = vunpack.c.l.b16 %v6524
  %v6852 = vunpack.c.h.b16 %v6524
  %v6853 = vunpack.c.l.b16 %v6525
  %v6854 = vunpack.c.h.b16 %v6525
  %v6855 = vunpack.c.l.b16 %v6526
  %v6856 = vunpack.c.h.b16 %v6526
  %v6857 = vunpack.c.l.b16 %v6527
  %v6858 = vunpack.c.h.b16 %v6527
  %v6859 = vunpack.c.l.b16 %v6528
  %v6860 = vunpack.c.h.b16 %v6528
  %v6861 = vunpack.c.l.b16 %v6529
  %v6862 = vunpack.c.h.b16 %v6529
  %v6863 = vunpack.c.l.b16 %v6530
  %v6864 = vunpack.c.h.b16 %v6530
  %v6865 = vunpack.c.l.b16 %v6531
  %v6866 = vunpack.c.h.b16 %v6531
  %v6867 = vunpack.c.l.b16 %v6532
  %v6868 = vunpack.c.h.b16 %v6532
  %v6869 = vunpack.c.l.b16 %v6533
  %v6870 = vunpack.c.h.b16 %v6533
  %v6871 = vunpack.c.l.b16 %v6534
  %v6872 = vunpack.c.h.b16 %v6534
  %v6873 = vunpack.c.l.b16 %v6535
  %v6874 = vunpack.c.h.b16 %v6535
  %v6875 = vunpack.c.l.b16 %v6536
  %v6876 = vunpack.c.h.b16 %v6536
  %v6877 = vunpack.c.l.b16 %v6537
  %v6878 = vunpack.c.h.b16 %v6537
  %v6879 = vunpack.c.l.b16 %v6538
  %v6880 = vunpack.c.h.b16 %v6538
  %v6881 = vunpack.c.l.b16 %v6539
  %v6882 = vunpack.c.h.b16 %v6539
  %v6883 = vunpack.c.l.b16 %v6540
  %v6884 = vunpack.c.h.b16 %v6540
  %v6885 = vunpack.c.l.b16 %v6541
  %v6886 = vunpack.c.h.b16 %v6541
  %v6887 = vunpack.c.l.b16 %v6542
  %v6888 = vunpack.c.h.b16 %v6542
  %v6889 = vunpack.c.l.b16 %v6543
  %v6890 = vunpack.c.h.b16 %v6543
  %v6891 = vunpack.c.l.b16 %v6544
  %v6892 = vunpack.c.h.b16 %v6544
  %v6893 = vpack.c.b16 %v6665, %v6661
  %v6894 = vpack.c.b16 %v6666, %v6662
  %v6895 = vpack.c.b16 %v6667, %v6663
  %v6896 = vpack.c.b16 %v6668, %v6664
  %v6897 = vpack.c.b16 %v6673, %v6669
  %v6898 = vpack.c.b16 %v6674, %v6670
  %v6899 = vpack.c.b16 %v6675, %v6671
  %v6900 = vpack.c.b16 %v6676, %v6672
  %v6901 = vpack.c.b16 %v6681, %v6677
  %v6902 = vpack.c.b16 %v6682, %v6678
  %v6903 = vpack.c.b16 %v6683, %v6679
  %v6904 = vpack.c.b16 %v6684, %v6680
  %v6905 = vpack.c.b16 %v6689, %v6685
  %v6906 = vpack.c.b16 %v6690, %v6686
  %v6907 = vpack.c.b16 %v6691, %v6687
  %v6908 = vpack.c.b16 %v6692, %v6688
  %v6909 = vpack.c.b16 %v6697, %v6693
  %v6910 = vpack.c.b16 %v6698, %v6694
  %v6911 = vpack.c.b16 %v6699, %v6695
  %v6912 = vpack.c.b16 %v6700, %v6696
  %v6913 = vpack.c.b16 %v6705, %v6701
  %v6914 = vpack.c.b16 %v6706, %v6702
  %v6915 = vpack.c.b16 %v6707, %v6703
  %v6916 = vpack.c.b16 %v6708, %v6704
  %v6917 = vpack.c.b16 %v6713, %v6709
  %v6918 = vpack.c.b16 %v6714, %v6710
  %v6919 = vpack.c.b16 %v6715, %v6711
  %v6920 = vpack.c.b16 %v6716, %v6712
  %v6921 = vpack.c.b16 %v6721, %v6717
  %v6922 = vpack.c.b16 %v6722, %v6718
  %v6923 = vpack.c.b16 %v6723, %v6719
  %v6924 = vpack.c.b16 %v6724, %v6720
  %v6925 = vpack.c.b16 %v6729, %v6725
  %v6926 = vpack.c.b16 %v6730, %v6726
  %v6927 = vpack.c.b16 %v6731, %v6727
  %v6928 = vpack.c.b16 %v6732, %v6728
  %v6929 = vpack.c.b16 %v6737, %v6733
  %v6930 = vpack.c.b16 %v6738, %v6734
  %v6931 = vpack.c.b16 %v6739, %v6735
  %v6932 = vpack.c.b16 %v6740, %v6736
  %v6933 = vpack.c.b16 %v6745, %v6741
  %v6934 = vpack.c.b16 %v6746, %v6742
  %v6935 = vpack.c.b16 %v6747, %v6743
  %v6936 = vpack.c.b16 %v6748, %v6744
  %v6937 = vpack.c.b16 %v6753, %v6749
  %v6938 = vpack.c.b16 %v6754, %v6750
  %v6939 = vpack.c.b16 %v6755, %v6751
  %v6940 = vpack.c.b16 %v6756, %v6752
  %v6941 = vpack.c.b16 %v6761, %v6757
  %v6942 = vpack.c.b16 %v6762, %v6758
  %v6943 = vpack.c.b16 %v6763, %v6759
  %v6944 = vpack.c.b16 %v6764, %v6760
  %v6945 = vpack.c.b16 %v6769, %v6765
  %v6946 = vpack.c.b16 %v6770, %v6766
  %v6947 = vpack.c.b16 %v6771, %v6767
  %v6948 = vpack.c.b16 %v6772, %v6768
  %v6949 = vpack.c.b16 %v6777, %v6773
  %v6950 = vpack.c.b16 %v6778, %v6774
  %v6951 = vpack.c.b16 %v6779, %v6775
  %v6952 = vpack.c.b16 %v6780, %v6776
  %v6953 = vpack.c.b16 %v6785, %v6781
  %v6954 = vpack.c.b16 %v6786, %v6782
  %v6955 = vpack.c.b16 %v6787, %v6783
  %v6956 = vpack.c.b16 %v6788, %v6784
  %v6957 = vpack.c.b16 %v6793, %v6789
  %v6958 = vpack.c.b16 %v6794, %v6790
  %v6959 = vpack.c.b16 %v6795, %v6791
  %v6960 = vpack.c.b16 %v6796, %v6792
  %v6961 = vpack.c.b16 %v6801, %v6797
  %v6962 = vpack.c.b16 %v6802, %v6798
  %v6963 = vpack.c.b16 %v6803, %v6799
  %v6964 = vpack.c.b16 %v6804, %v6800
  %v6965 = vpack.c.b16 %v6809, %v6805
  %v6966 = vpack.c.b16 %v6810, %v6806
  %v6967 = vpack.c.b16 %v6811, %v6807
  %v6968 = vpack.c.b16 %v6812, %v6808
  %v6969 = vpack.c.b16 %v6817, %v6813
  %v6970 = vpack.c.b16 %v6818, %v6814
  %v6971 = vpack.c.b16 %v6819, %v6815
  %v6972 = vpack.c.b16 %v6820, %v6816
  %v6973 = vpack.c.b16 %v6825, %v6821
  %v6974 = vpack.c.b16 %v6826, %v6822
  %v6975 = vpack.c.b16 %v6827, %v6823
  %v6976 = vpack.c.b16 %v6828, %v6824
  %v6977 = vpack.c.b16 %v6833, %v6829
  %v6978 = vpack.c.b16 %v6834, %v6830
  %v6979 = vpack.c.b16 %v6835, %v6831
  %v6980 = vpack.c.b16 %v6836, %v6832
  %v6981 = vpack.c.b16 %v6841, %v6837
  %v6982 = vpack.c.b16 %v6842, %v6838
  %v6983 = vpack.c.b16 %v6843, %v6839
  %v6984 = vpack.c.b16 %v6844, %v6840
  %v6985 = vpack.c.b16 %v6849, %v6845
  %v6986 = vpack.c.b16 %v6850, %v6846
  %v6987 = vpack.c.b16 %v6851, %v6847
  %v6988 = vpack.c.b16 %v6852, %v6848
  %v6989 = vpack.c.b16 %v6857, %v6853
  %v6990 = vpack.c.b16 %v6858, %v6854
  %v6991 = vpack.c.b16 %v6859, %v6855
  %v6992 = vpack.c.b16 %v6860, %v6856
  %v6993 = vpack.c.b16 %v6865, %v6861
  %v6994 = vpack.c.b16 %v6866, %v6862
  %v6995 = vpack.c.b16 %v6867, %v6863
  %v6996 = vpack.c.b16 %v6868, %v6864
  %v6997 = vpack.c.b16 %v6873, %v6869
  %v6998 = vpack.c.b16 %v6874, %v6870
  %v6999 = vpack.c.b16 %v6875, %v6871
  %v7000 = vpack.c.b16 %v6876, %v6872
  %v7001 = vpack.c.b16 %v6881, %v6877
  %v7002 = vpack.c.b16 %v6882, %v6878
  %v7003 = vpack.c.b16 %v6883, %v6879
  %v7004 = vpack.c.b16 %v6884, %v6880
  %v7005 = vpack.c.b16 %v6889, %v6885
  %v7006 = vpack.c.b16 %v6890, %v6886
  %v7007 = vpack.c.b16 %v6891, %v6887
  %v7008 = vpack.c.b16 %v6892, %v6888
  %v7122 = vsel %vm111, %v7005, 0
  %v7125 = vsel %vm111, %v7006, 0
  %v7128 = vsel %vm111, %v7007, 0
  %v7131 = vsel %vm111, %v7008, 0
  %7133 = vmatprep.subr.bf16.mxu0 %v6894
  %7134 = vmatpush1.bf16.msra.mxu0 %v6893
  %7135 = vmatprep.subr.bf16.mxu0 %v6898
  %7136 = vmatpush1.bf16.msra.mxu0 %v6897
  %7137 = vmatprep.subr.bf16.mxu0 %v6902
  %7138 = vmatpush1.bf16.msra.mxu0 %v6901
  %7139 = vmatprep.subr.bf16.mxu0 %v6906
  %7140 = vmatpush1.bf16.msra.mxu0 %v6905
  %7141 = vmatprep.subr.bf16.mxu0 %v6910
  %7142 = vmatpush1.bf16.msra.mxu0 %v6909
  %7143 = vmatprep.subr.bf16.mxu0 %v6914
  %7144 = vmatpush1.bf16.msra.mxu0 %v6913
  %7145 = vmatprep.subr.bf16.mxu0 %v6918
  %7146 = vmatpush1.bf16.msra.mxu0 %v6917
  %7147 = vmatprep.subr.bf16.mxu0 %v6922
  %7148 = vmatpush1.bf16.msra.mxu0 %v6921
  %7149 = vmatprep.subr.bf16.mxu0 %v6926
  %7150 = vmatpush1.bf16.msra.mxu0 %v6925
  %7151 = vmatprep.subr.bf16.mxu0 %v6930
  %7152 = vmatpush1.bf16.msra.mxu0 %v6929
  %7153 = vmatprep.subr.bf16.mxu0 %v6934
  %7154 = vmatpush1.bf16.msra.mxu0 %v6933
  %7155 = vmatprep.subr.bf16.mxu0 %v6938
  %7156 = vmatpush1.bf16.msra.mxu0 %v6937
  %7157 = vmatprep.subr.bf16.mxu0 %v6942
  %7158 = vmatpush1.bf16.msra.mxu0 %v6941
  %7159 = vmatprep.subr.bf16.mxu0 %v6946
  %7160 = vmatpush1.bf16.msra.mxu0 %v6945
  %7161 = vmatprep.subr.bf16.mxu0 %v6950
  %7162 = vmatpush1.bf16.msra.mxu0 %v6949
  %7163 = vmatprep.subr.bf16.mxu0 %v6954
  %7164 = vmatpush1.bf16.msra.mxu0 %v6953
  %7165 = vmatprep.mubr.bf16.mxu0 %v2718
  %7166 = vmatmul.mubr.bf16.gmra.mrb[0].mxu0 %v2716
  %v7167 = vpop.f32.mrb[0].mxu0
  %v7168 = vadd.f32 0.0, %v7167
  %v7169 = vpop.f32.mrb[0].mxu0
  %v7170 = vadd.f32 0.0, %v7169
  %v7171 = vpop.f32.mrb[0].mxu0
  %v7172 = vadd.f32 0.0, %v7171
  %v7173 = vpop.f32.mrb[0].mxu0
  %v7174 = vadd.f32 0.0, %v7173
  %7175 = vmatprep.mubr.bf16.mxu0 %v2786
  %7176 = vmatmul.mubr.bf16.gmra.mrb[0].mxu0 %v2784
  %v7177 = vpop.f32.mrb[0].mxu0
  %v7178 = vadd.f32 0.0, %v7177
  %v7179 = vpop.f32.mrb[0].mxu0
  %v7180 = vadd.f32 0.0, %v7179
  %v7181 = vpop.f32.mrb[0].mxu0
  %v7182 = vadd.f32 0.0, %v7181
  %v7183 = vpop.f32.mrb[0].mxu0
  %v7184 = vadd.f32 0.0, %v7183
  %7185 = vmatprep.mubr.bf16.mxu0 %v2853
  %7186 = vmatmul.mubr.bf16.gmra.mrb[0].mxu0 %v2851
  %v7187 = vpop.f32.mrb[0].mxu0
  %v7188 = vadd.f32 0.0, %v7187
  %v7189 = vpop.f32.mrb[0].mxu0
  %v7190 = vadd.f32 0.0, %v7189
  %v7191 = vpop.f32.mrb[0].mxu0
  %v7192 = vadd.f32 0.0, %v7191
  %v7193 = vpop.f32.mrb[0].mxu0
  %v7194 = vadd.f32 0.0, %v7193
  %7195 = vdwg.mxu0
  %7196 = vmatprep.subr.bf16.mxu0 %v6958
  %7197 = vmatpush1.bf16.msra.mxu0 %v6957
  %7198 = vmatprep.subr.bf16.mxu0 %v6962
  %7199 = vmatpush1.bf16.msra.mxu0 %v6961
  %7200 = vmatprep.subr.bf16.mxu0 %v6966
  %7201 = vmatpush1.bf16.msra.mxu0 %v6965
  %7202 = vmatprep.subr.bf16.mxu0 %v6970
  %7203 = vmatpush1.bf16.msra.mxu0 %v6969
  %7204 = vmatprep.subr.bf16.mxu0 %v6974
  %7205 = vmatpush1.bf16.msra.mxu0 %v6973
  %7206 = vmatprep.subr.bf16.mxu0 %v6978
  %7207 = vmatpush1.bf16.msra.mxu0 %v6977
  %7208 = vmatprep.subr.bf16.mxu0 %v6982
  %7209 = vmatpush1.bf16.msra.mxu0 %v6981
  %7210 = vmatprep.subr.bf16.mxu0 %v6986
  %7211 = vmatpush1.bf16.msra.mxu0 %v6985
  %7212 = vmatprep.subr.bf16.mxu0 %v6990
  %7213 = vmatpush1.bf16.msra.mxu0 %v6989
  %7214 = vmatprep.subr.bf16.mxu0 %v6994
  %7215 = vmatpush1.bf16.msra.mxu0 %v6993
  %7216 = vmatprep.subr.bf16.mxu0 %v6998
  %7217 = vmatpush1.bf16.msra.mxu0 %v6997
  %7218 = vmatprep.subr.bf16.mxu0 %v7002
  %7219 = vmatpush1.bf16.msra.mxu0 %v7001
  %7220 = vmatprep.subr.bf16.mxu0 %v7125
  %7221 = vmatpush1.bf16.msra.mxu0 %v7122
  %7222 = vmatprep.subr.bf16.mxu0 0
  %7223 = vmatpush1.bf16.msra.mxu0 0
  %7224 = vmatprep.subr.bf16.mxu0 0
  %7225 = vmatpush1.bf16.msra.mxu0 0
  %7226 = vmatprep.subr.bf16.mxu0 0
  %7227 = vmatpush1.bf16.msra.mxu0 0
  %7228 = vmatprep.mubr.bf16.mxu0 %v3442
  %7229 = vmatmul.mubr.bf16.gmra.mrb[0].mxu0 %v2717
  %v7230 = vpop.f32.mrb[0].mxu0
  %v7231 = vadd.f32 %v7168, %v7230
  %v7232 = vpop.f32.mrb[0].mxu0
  %v7233 = vadd.f32 %v7170, %v7232
  %v7234 = vpop.f32.mrb[0].mxu0
  %v7235 = vadd.f32 %v7172, %v7234
  %v7236 = vpop.f32.mrb[0].mxu0
  %v7237 = vadd.f32 %v7174, %v7236
  %7238 = vmatprep.mubr.bf16.mxu0 %v3445
  %7239 = vmatmul.mubr.bf16.gmra.mrb[0].mxu0 %v2785
  %v7240 = vpop.f32.mrb[0].mxu0
  %v7241 = vadd.f32 %v7178, %v7240
  %v7242 = vpop.f32.mrb[0].mxu0
  %v7243 = vadd.f32 %v7180, %v7242
  %v7244 = vpop.f32.mrb[0].mxu0
  %v7245 = vadd.f32 %v7182, %v7244
  %v7246 = vpop.f32.mrb[0].mxu0
  %v7247 = vadd.f32 %v7184, %v7246
  %7248 = vmatprep.mubr.bf16.mxu0 %v3448
  %7249 = vmatmul.mubr.bf16.gmra.mrb[0].mxu0 %v2852
  %v7250 = vpop.f32.mrb[0].mxu0
  %v7251 = vadd.f32 %v7188, %v7250
  %v7252 = vpop.f32.mrb[0].mxu0
  %v7253 = vadd.f32 %v7190, %v7252
  %v7254 = vpop.f32.mrb[0].mxu0
  %v7255 = vadd.f32 %v7192, %v7254
  %v7256 = vpop.f32.mrb[0].mxu0
  %v7257 = vadd.f32 %v7194, %v7256
  %7258 = vdwg.mxu0
  %7259 = vmatprep.subr.bf16.mxu0 %v6896
  %7260 = vmatpush1.bf16.msra.mxu0 %v6895
  %7261 = vmatprep.subr.bf16.mxu0 %v6900
  %7262 = vmatpush1.bf16.msra.mxu0 %v6899
  %7263 = vmatprep.subr.bf16.mxu0 %v6904
  %7264 = vmatpush1.bf16.msra.mxu0 %v6903
  %7265 = vmatprep.subr.bf16.mxu0 %v6908
  %7266 = vmatpush1.bf16.msra.mxu0 %v6907
  %7267 = vmatprep.subr.bf16.mxu0 %v6912
  %7268 = vmatpush1.bf16.msra.mxu0 %v6911
  %7269 = vmatprep.subr.bf16.mxu0 %v6916
  %7270 = vmatpush1.bf16.msra.mxu0 %v6915
  %7271 = vmatprep.subr.bf16.mxu0 %v6920
  %7272 = vmatpush1.bf16.msra.mxu0 %v6919
  %7273 = vmatprep.subr.bf16.mxu0 %v6924
  %7274 = vmatpush1.bf16.msra.mxu0 %v6923
  %7275 = vmatprep.subr.bf16.mxu0 %v6928
  %7276 = vmatpush1.bf16.msra.mxu0 %v6927
  %7277 = vmatprep.subr.bf16.mxu0 %v6932
  %7278 = vmatpush1.bf16.msra.mxu0 %v6931
  %7279 = vmatprep.subr.bf16.mxu0 %v6936
  %7280 = vmatpush1.bf16.msra.mxu0 %v6935
  %7281 = vmatprep.subr.bf16.mxu0 %v6940
  %7282 = vmatpush1.bf16.msra.mxu0 %v6939
  %7283 = vmatprep.subr.bf16.mxu0 %v6944
  %7284 = vmatpush1.bf16.msra.mxu0 %v6943
  %7285 = vmatprep.subr.bf16.mxu0 %v6948
  %7286 = vmatpush1.bf16.msra.mxu0 %v6947
  %7287 = vmatprep.subr.bf16.mxu0 %v6952
  %7288 = vmatpush1.bf16.msra.mxu0 %v6951
  %7289 = vmatprep.subr.bf16.mxu0 %v6956
  %7290 = vmatpush1.bf16.msra.mxu0 %v6955
  %7291 = vmatprep.mubr.bf16.mxu0 %v2718
  %7292 = vmatmul.mubr.bf16.gmra.mrb[0].mxu0 %v2716
  %v7293 = vpop.f32.mrb[0].mxu0
  %v7294 = vadd.f32 0.0, %v7293
  %v7295 = vpop.f32.mrb[0].mxu0
  %v7296 = vadd.f32 0.0, %v7295
  %v7297 = vpop.f32.mrb[0].mxu0
  %v7298 = vadd.f32 0.0, %v7297
  %v7299 = vpop.f32.mrb[0].mxu0
  %v7300 = vadd.f32 0.0, %v7299
  %7301 = vmatprep.mubr.bf16.mxu0 %v2786
  %7302 = vmatmul.mubr.bf16.gmra.mrb[0].mxu0 %v2784
  %v7303 = vpop.f32.mrb[0].mxu0
  %v7304 = vadd.f32 0.0, %v7303
  %v7305 = vpop.f32.mrb[0].mxu0
  %v7306 = vadd.f32 0.0, %v7305
  %v7307 = vpop.f32.mrb[0].mxu0
  %v7308 = vadd.f32 0.0, %v7307
  %v7309 = vpop.f32.mrb[0].mxu0
  %v7310 = vadd.f32 0.0, %v7309
  %7311 = vmatprep.mubr.bf16.mxu0 %v2853
  %7312 = vmatmul.mubr.bf16.gmra.mrb[0].mxu0 %v2851
  %v7313 = vpop.f32.mrb[0].mxu0
  %v7314 = vadd.f32 0.0, %v7313
  %v7315 = vpop.f32.mrb[0].mxu0
  %v7316 = vadd.f32 0.0, %v7315
  %v7317 = vpop.f32.mrb[0].mxu0
  %v7318 = vadd.f32 0.0, %v7317
  %v7319 = vpop.f32.mrb[0].mxu0
  %v7320 = vadd.f32 0.0, %v7319
  %7321 = vdwg.mxu0
  %7322 = vmatprep.subr.bf16.mxu0 %v6960
  %7323 = vmatpush1.bf16.msra.mxu0 %v6959
  %7324 = vmatprep.subr.bf16.mxu0 %v6964
  %7325 = vmatpush1.bf16.msra.mxu0 %v6963
  %7326 = vmatprep.subr.bf16.mxu0 %v6968
  %7327 = vmatpush1.bf16.msra.mxu0 %v6967
  %7328 = vmatprep.subr.bf16.mxu0 %v6972
  %7329 = vmatpush1.bf16.msra.mxu0 %v6971
  %7330 = vmatprep.subr.bf16.mxu0 %v6976
  %7331 = vmatpush1.bf16.msra.mxu0 %v6975
  %7332 = vmatprep.subr.bf16.mxu0 %v6980
  %7333 = vmatpush1.bf16.msra.mxu0 %v6979
  %7334 = vmatprep.subr.bf16.mxu0 %v6984
  %7335 = vmatpush1.bf16.msra.mxu0 %v6983
  %7336 = vmatprep.subr.bf16.mxu0 %v6988
  %7337 = vmatpush1.bf16.msra.mxu0 %v6987
  %7338 = vmatprep.subr.bf16.mxu0 %v6992
  %7339 = vmatpush1.bf16.msra.mxu0 %v6991
  %7340 = vmatprep.subr.bf16.mxu0 %v6996
  %7341 = vmatpush1.bf16.msra.mxu0 %v6995
  %7342 = vmatprep.subr.bf16.mxu0 %v7000
  %7343 = vmatpush1.bf16.msra.mxu0 %v6999
  %7344 = vmatprep.subr.bf16.mxu0 %v7004
  %7345 = vmatpush1.bf16.msra.mxu0 %v7003
  %7346 = vmatprep.subr.bf16.mxu0 %v7131
  %7347 = vmatpush1.bf16.msra.mxu0 %v7128
  %7348 = vmatprep.subr.bf16.mxu0 0
  %7349 = vmatpush1.bf16.msra.mxu0 0
  %7350 = vmatprep.subr.bf16.mxu0 0
  %7351 = vmatpush1.bf16.msra.mxu0 0
  %7352 = vmatprep.subr.bf16.mxu0 0
  %7353 = vmatpush1.bf16.msra.mxu0 0
  %7354 = vmatprep.mubr.bf16.mxu0 %v3442
  %7355 = vmatmul.mubr.bf16.gmra.mrb[0].mxu0 %v2717
  %v7356 = vpop.f32.mrb[0].mxu0
  %v7357 = vadd.f32 %v7294, %v7356
  %v7358 = vpop.f32.mrb[0].mxu0
  %v7359 = vadd.f32 %v7296, %v7358
  %v7360 = vpop.f32.mrb[0].mxu0
  %v7361 = vadd.f32 %v7298, %v7360
  %v7362 = vpop.f32.mrb[0].mxu0
  %v7363 = vadd.f32 %v7300, %v7362
  %7364 = vmatprep.mubr.bf16.mxu0 %v3445
  %7365 = vmatmul.mubr.bf16.gmra.mrb[0].mxu0 %v2785
  %v7366 = vpop.f32.mrb[0].mxu0
  %v7367 = vadd.f32 %v7304, %v7366
  %v7368 = vpop.f32.mrb[0].mxu0
  %v7369 = vadd.f32 %v7306, %v7368
  %v7370 = vpop.f32.mrb[0].mxu0
  %v7371 = vadd.f32 %v7308, %v7370
  %v7372 = vpop.f32.mrb[0].mxu0
  %v7373 = vadd.f32 %v7310, %v7372
  %7374 = vmatprep.mubr.bf16.mxu0 %v3448
  %7375 = vmatmul.mubr.bf16.gmra.mrb[0].mxu0 %v2852
  %v7376 = vpop.f32.mrb[0].mxu0
  %v7377 = vadd.f32 %v7314, %v7376
  %v7378 = vpop.f32.mrb[0].mxu0
  %v7379 = vadd.f32 %v7316, %v7378
  %v7380 = vpop.f32.mrb[0].mxu0
  %v7381 = vadd.f32 %v7318, %v7380
  %v7382 = vpop.f32.mrb[0].mxu0
  %v7383 = vadd.f32 %v7320, %v7382
  %7384 = vdwg.mxu0
  %v7409 = vcombine.high %v7231, %v7233
  %v7410 = vcombine.high %v7357, %v7359
  %v7412 = vunpack.c.l.s4 1966171168
  %v7413 = vunpack.c.0.s8 %v7412
  %v7414 = vlaneseq
  %v7415 = vshrl.u32 %v7414, 7
  %v7416 = vsub.s32 %v7413, %v7415
  %v7417 = vrot.slane %v7409, %v7416
  %v7419 = vunpack.c.l.s4 1966171168
  %v7420 = vunpack.c.0.s8 %v7419
  %v7421 = vlaneseq
  %v7422 = vshrl.u32 %v7421, 7
  %v7423 = vsub.s32 %v7420, %v7422
  %v7424 = vrot.slane %v7410, %v7423
  %v7425 = vcombine.low %v7417, %v7424
  %v7427 = vunpack.c.l.s4 1966171168
  %v7428 = vunpack.c.0.s8 %v7427
  %v7429 = vlaneseq
  %v7430 = vshrl.u32 %v7429, 7
  %v7431 = vsub.s32 %v7428, %v7430
  %v7432 = vrot.slane %v7425, %v7431
  %v7433 = vcombine.high %v7432, %v7432
  %v7434 = vcombine.low %v7235, %v7237
  %v7435 = vcombine.high %v7235, %v7237
  %v7436 = vcombine.low %v7361, %v7363
  %v7437 = vcombine.high %v7361, %v7363
  %v7439 = vunpack.c.l.s4 1966171168
  %v7440 = vunpack.c.0.s8 %v7439
  %v7441 = vlaneseq
  %v7442 = vshrl.u32 %v7441, 7
  %v7443 = vsub.s32 %v7440, %v7442
  %v7444 = vrot.slane %v7434, %v7443
  %v7446 = vunpack.c.l.s4 1966171168
  %v7447 = vunpack.c.0.s8 %v7446
  %v7448 = vlaneseq
  %v7449 = vshrl.u32 %v7448, 7
  %v7450 = vsub.s32 %v7447, %v7449
  %v7451 = vrot.slane %v7435, %v7450
  %v7453 = vunpack.c.l.s4 1966171168
  %v7454 = vunpack.c.0.s8 %v7453
  %v7455 = vlaneseq
  %v7456 = vshrl.u32 %v7455, 7
  %v7457 = vsub.s32 %v7454, %v7456
  %v7458 = vrot.slane %v7436, %v7457
  %v7460 = vunpack.c.l.s4 1966171168
  %v7461 = vunpack.c.0.s8 %v7460
  %v7462 = vlaneseq
  %v7463 = vshrl.u32 %v7462, 7
  %v7464 = vsub.s32 %v7461, %v7463
  %v7465 = vrot.slane %v7437, %v7464
  %v7466 = vcombine.low %v7444, %v7458
  %v7467 = vcombine.low %v7451, %v7465
  %v7469 = vunpack.c.l.s4 1966171168
  %v7470 = vunpack.c.0.s8 %v7469
  %v7471 = vlaneseq
  %v7472 = vshrl.u32 %v7471, 7
  %v7473 = vsub.s32 %v7470, %v7472
  %v7474 = vrot.slane %v7466, %v7473
  %v7476 = vunpack.c.l.s4 1966171168
  %v7477 = vunpack.c.0.s8 %v7476
  %v7478 = vlaneseq
  %v7479 = vshrl.u32 %v7478, 7
  %v7480 = vsub.s32 %v7477, %v7479
  %v7481 = vrot.slane %v7467, %v7480
  %v7482 = vcombine.high %v7474, %v7474
  %v7483 = vcombine.high %v7481, %v7481
  %v7484 = vcombine.low %v7241, %v7243
  %v7485 = vcombine.high %v7241, %v7243
  %v7486 = vcombine.low %v7367, %v7369
  %v7487 = vcombine.high %v7367, %v7369
  %v7489 = vunpack.c.l.s4 1966171168
  %v7490 = vunpack.c.0.s8 %v7489
  %v7491 = vlaneseq
  %v7492 = vshrl.u32 %v7491, 7
  %v7493 = vsub.s32 %v7490, %v7492
  %v7494 = vrot.slane %v7484, %v7493
  %v7496 = vunpack.c.l.s4 1966171168
  %v7497 = vunpack.c.0.s8 %v7496
  %v7498 = vlaneseq
  %v7499 = vshrl.u32 %v7498, 7
  %v7500 = vsub.s32 %v7497, %v7499
  %v7501 = vrot.slane %v7485, %v7500
  %v7503 = vunpack.c.l.s4 1966171168
  %v7504 = vunpack.c.0.s8 %v7503
  %v7505 = vlaneseq
  %v7506 = vshrl.u32 %v7505, 7
  %v7507 = vsub.s32 %v7504, %v7506
  %v7508 = vrot.slane %v7486, %v7507
  %v7510 = vunpack.c.l.s4 1966171168
  %v7511 = vunpack.c.0.s8 %v7510
  %v7512 = vlaneseq
  %v7513 = vshrl.u32 %v7512, 7
  %v7514 = vsub.s32 %v7511, %v7513
  %v7515 = vrot.slane %v7487, %v7514
  %v7516 = vcombine.low %v7494, %v7508
  %v7517 = vcombine.low %v7501, %v7515
  %v7519 = vunpack.c.l.s4 1966171168
  %v7520 = vunpack.c.0.s8 %v7519
  %v7521 = vlaneseq
  %v7522 = vshrl.u32 %v7521, 7
  %v7523 = vsub.s32 %v7520, %v7522
  %v7524 = vrot.slane %v7516, %v7523
  %v7526 = vunpack.c.l.s4 1966171168
  %v7527 = vunpack.c.0.s8 %v7526
  %v7528 = vlaneseq
  %v7529 = vshrl.u32 %v7528, 7
  %v7530 = vsub.s32 %v7527, %v7529
  %v7531 = vrot.slane %v7517, %v7530
  %v7532 = vcombine.high %v7524, %v7524
  %v7533 = vcombine.high %v7245, %v7247
  %v7534 = vcombine.high %v7371, %v7373
  %v7536 = vunpack.c.l.s4 1966171168
  %v7537 = vunpack.c.0.s8 %v7536
  %v7538 = vlaneseq
  %v7539 = vshrl.u32 %v7538, 7
  %v7540 = vsub.s32 %v7537, %v7539
  %v7541 = vrot.slane %v7533, %v7540
  %v7543 = vunpack.c.l.s4 1966171168
  %v7544 = vunpack.c.0.s8 %v7543
  %v7545 = vlaneseq
  %v7546 = vshrl.u32 %v7545, 7
  %v7547 = vsub.s32 %v7544, %v7546
  %v7548 = vrot.slane %v7534, %v7547
  %v7549 = vcombine.high %v7541, %v7548
  %v7551 = vunpack.c.l.s4 1966171168
  %v7552 = vunpack.c.0.s8 %v7551
  %v7553 = vlaneseq
  %v7554 = vshrl.u32 %v7553, 7
  %v7555 = vsub.s32 %v7552, %v7554
  %v7556 = vrot.slane %v7549, %v7555
  %v7557 = vcombine.high %v7556, %v7556
  %v7558 = vcombine.low %v7251, %v7253
  %v7559 = vcombine.high %v7251, %v7253
  %v7560 = vcombine.low %v7377, %v7379
  %v7561 = vcombine.high %v7377, %v7379
  %v7563 = vunpack.c.l.s4 1966171168
  %v7564 = vunpack.c.0.s8 %v7563
  %v7565 = vlaneseq
  %v7566 = vshrl.u32 %v7565, 7
  %v7567 = vsub.s32 %v7564, %v7566
  %v7568 = vrot.slane %v7558, %v7567
  %v7570 = vunpack.c.l.s4 1966171168
  %v7571 = vunpack.c.0.s8 %v7570
  %v7572 = vlaneseq
  %v7573 = vshrl.u32 %v7572, 7
  %v7574 = vsub.s32 %v7571, %v7573
  %v7575 = vrot.slane %v7559, %v7574
  %v7577 = vunpack.c.l.s4 1966171168
  %v7578 = vunpack.c.0.s8 %v7577
  %v7579 = vlaneseq
  %v7580 = vshrl.u32 %v7579, 7
  %v7581 = vsub.s32 %v7578, %v7580
  %v7582 = vrot.slane %v7560, %v7581
  %v7584 = vunpack.c.l.s4 1966171168
  %v7585 = vunpack.c.0.s8 %v7584
  %v7586 = vlaneseq
  %v7587 = vshrl.u32 %v7586, 7
  %v7588 = vsub.s32 %v7585, %v7587
  %v7589 = vrot.slane %v7561, %v7588
  %v7590 = vcombine.high %v7568, %v7582
  %v7591 = vcombine.high %v7575, %v7589
  %v7593 = vunpack.c.l.s4 1966171168
  %v7594 = vunpack.c.0.s8 %v7593
  %v7595 = vlaneseq
  %v7596 = vshrl.u32 %v7595, 7
  %v7597 = vsub.s32 %v7594, %v7596
  %v7598 = vrot.slane %v7590, %v7597
  %v7600 = vunpack.c.l.s4 1966171168
  %v7601 = vunpack.c.0.s8 %v7600
  %v7602 = vlaneseq
  %v7603 = vshrl.u32 %v7602, 7
  %v7604 = vsub.s32 %v7601, %v7603
  %v7605 = vrot.slane %v7591, %v7604
  %v7606 = vcombine.high %v7598, %v7598
  %v7607 = vcombine.high %v7605, %v7605
  %v7608 = vcombine.low %v7255, %v7257
  %v7609 = vcombine.low %v7381, %v7383
  %v7611 = vunpack.c.l.s4 1966171168
  %v7612 = vunpack.c.0.s8 %v7611
  %v7613 = vlaneseq
  %v7614 = vshrl.u32 %v7613, 7
  %v7615 = vsub.s32 %v7612, %v7614
  %v7616 = vrot.slane %v7608, %v7615
  %v7618 = vunpack.c.l.s4 1966171168
  %v7619 = vunpack.c.0.s8 %v7618
  %v7620 = vlaneseq
  %v7621 = vshrl.u32 %v7620, 7
  %v7622 = vsub.s32 %v7619, %v7621
  %v7623 = vrot.slane %v7609, %v7622
  %v7624 = vcombine.high %v7616, %v7623
  %v7626 = vunpack.c.l.s4 1966171168
  %v7627 = vunpack.c.0.s8 %v7626
  %v7628 = vlaneseq
  %v7629 = vshrl.u32 %v7628, 7
  %v7630 = vsub.s32 %v7627, %v7629
  %v7631 = vrot.slane %v7624, %v7630
  %v7632 = vcombine.high %v7631, %v7631
  %v7649 = vadd.f32 %v6412, %v7433
  %v7650 = vadd.f32 %v6413, %v7474
  %v7651 = vadd.f32 %v6414, %v7482
  %v7652 = vadd.f32 %v6415, %v7481
  %v7653 = vadd.f32 %v6416, %v7483
  %v7654 = vadd.f32 %v6417, %v7524
  %v7655 = vadd.f32 %v6418, %v7532
  %v7656 = vadd.f32 %v6419, %v7531
  %v7657 = vadd.f32 %v6420, %v7556
  %v7658 = vadd.f32 %v6421, %v7557
  %v7659 = vadd.f32 %v6422, %v7598
  %v7660 = vadd.f32 %v6423, %v7606
  %v7661 = vadd.f32 %v6424, %v7605
  %v7662 = vadd.f32 %v6425, %v7607
  %v7663 = vadd.f32 %v6426, %v7631
  %v7664 = vadd.f32 %v6427, %v7632
  %s7665 = scalar_lea.vmem %s3, 3712
  %v7666 = vld [vmem:[%s7665] sm:$0xff]
  %v7667 = vld [vmem:[%s7665 + $0x8] sm:$0xff]
  %v7668 = vld [vmem:[%s7665 + $0x10] sm:$0xff]
  %v7669 = vld [vmem:[%s7665 + $0x18] sm:$0xff]
  %v7670 = vld [vmem:[%s7665 + $0x20] sm:$0xff]
  %v7671 = vld [vmem:[%s7665 + $0x28] sm:$0xff]
  %v7672 = vld [vmem:[%s7665 + $0x30] sm:$0xff]
  %v7673 = vld [vmem:[%s7665 + $0x38] sm:$0xff]
  %v7674 = vld [vmem:[%s7665 + $0x40] sm:$0xff]
  %v7675 = vld [vmem:[%s7665 + $0x48] sm:$0xff]
  %v7676 = vld [vmem:[%s7665 + $0x50] sm:$0xff]
  %v7677 = vld [vmem:[%s7665 + $0x58] sm:$0xff]
  %v7678 = vld [vmem:[%s7665 + $0x60] sm:$0xff]
  %v7679 = vld [vmem:[%s7665 + $0x68] sm:$0xff]
  %v7680 = vld [vmem:[%s7665 + $0x70] sm:$0xff]
  %v7681 = vld [vmem:[%s7665 + $0x78] sm:$0xff]
  %v7682 = vld [vmem:[%s7665 + $0x80] sm:$0xff]
  %v7683 = vld [vmem:[%s7665 + $0x88] sm:$0xff]
  %v7684 = vld [vmem:[%s7665 + $0x90] sm:$0xff]
  %v7685 = vld [vmem:[%s7665 + $0x98] sm:$0xff]
  %v7686 = vld [vmem:[%s7665 + $0xa0] sm:$0xff]
  %v7687 = vld [vmem:[%s7665 + $0xa8] sm:$0xff]
  %v7688 = vld [vmem:[%s7665 + $0xb0] sm:$0xff]
  %v7689 = vld [vmem:[%s7665 + $0xb8] sm:$0xff]
  %v7690 = vld [vmem:[%s7665 + $0xc0] sm:$0xff]
  %v7691 = vld [vmem:[%s7665 + $0xc8] sm:$0xff]
  %v7692 = vld [vmem:[%s7665 + $0xd0] sm:$0xff]
  %v7693 = vld [vmem:[%s7665 + $0xd8] sm:$0xff]
  %v7694 = vld [vmem:[%s7665 + $0xe0] sm:$0xff]
  %v7695 = vld [vmem:[%s7665 + $0xe8] sm:$0xff]
  %v7696 = vld [vmem:[%s7665 + $0xf0] sm:$0xff]
  %v7697 = vld [vmem:[%s7665 + $0xf8] sm:$0xff]
  %v7698 = vld [vmem:[%s7665 + $0x100] sm:$0xff]
  %v7699 = vld [vmem:[%s7665 + $0x108] sm:$0xff]
  %v7700 = vld [vmem:[%s7665 + $0x110] sm:$0xff]
  %v7701 = vld [vmem:[%s7665 + $0x118] sm:$0xff]
  %v7702 = vld [vmem:[%s7665 + $0x120] sm:$0xff]
  %v7703 = vld [vmem:[%s7665 + $0x128] sm:$0xff]
  %v7704 = vld [vmem:[%s7665 + $0x130] sm:$0xff]
  %v7705 = vld [vmem:[%s7665 + $0x138] sm:$0xff]
  %v7706 = vld [vmem:[%s7665 + $0x140] sm:$0xff]
  %v7707 = vld [vmem:[%s7665 + $0x148] sm:$0xff]
  %v7708 = vld [vmem:[%s7665 + $0x150] sm:$0xff]
  %v7709 = vld [vmem:[%s7665 + $0x158] sm:$0xff]
  %v7710 = vld [vmem:[%s7665 + $0x160] sm:$0xff]
  %v7711 = vld [vmem:[%s7665 + $0x168] sm:$0xff]
  %v7712 = vld [vmem:[%s7665 + $0x170] sm:$0xff]
  %v7713 = vld [vmem:[%s7665 + $0x178] sm:$0xff]
  %v7714 = vld [vmem:[%s7665 + $0x180] sm:$0xff]
  %v7715 = vld [vmem:[%s7665 + $0x188] sm:$0xff]
  %v7716 = vld [vmem:[%s7665 + $0x190] sm:$0xff]
  %v7717 = vld [vmem:[%s7665 + $0x198] sm:$0xff]
  %v7718 = vld [vmem:[%s7665 + $0x1a0] sm:$0xff]
  %v7719 = vld [vmem:[%s7665 + $0x1a8] sm:$0xff]
  %v7720 = vld [vmem:[%s7665 + $0x1b0] sm:$0xff]
  %v7721 = vld [vmem:[%s7665 + $0x1b8] sm:$0xff]
  %v7722 = vld [vmem:[%s7665 + $0x1c0] sm:$0xff]
  %v7723 = vld [vmem:[%s7665 + $0x1c8] sm:$0xff]
  %v7724 = vld [vmem:[%s7665 + $0x1d0] sm:$0xff]
  %v7725 = vld [vmem:[%s7665 + $0x1d8] sm:$0xff]
  %v7726 = vld [vmem:[%s7665 + $0x1e0] sm:$0xff]
  %v7727 = vld [vmem:[%s7665 + $0x1e8] sm:$0xff]
  %v7728 = vld [vmem:[%s7665 + $0x1f0] sm:$0xff]
  %v7729 = vld [vmem:[%s7665 + $0x1f8] sm:$0xff]
  %v7730 = vld [vmem:[%s7665 + $0x200] sm:$0xff]
  %v7731 = vld [vmem:[%s7665 + $0x208] sm:$0xff]
  %v7732 = vld [vmem:[%s7665 + $0x210] sm:$0xff]
  %v7733 = vld [vmem:[%s7665 + $0x218] sm:$0xff]
  %v7734 = vld [vmem:[%s7665 + $0x220] sm:$0xff]
  %v7735 = vld [vmem:[%s7665 + $0x228] sm:$0xff]
  %v7736 = vld [vmem:[%s7665 + $0x230] sm:$0xff]
  %v7737 = vld [vmem:[%s7665 + $0x238] sm:$0xff]
  %v7738 = vld [vmem:[%s7665 + $0x240] sm:$0xff]
  %v7739 = vld [vmem:[%s7665 + $0x248] sm:$0xff]
  %v7740 = vld [vmem:[%s7665 + $0x250] sm:$0xff]
  %v7741 = vld [vmem:[%s7665 + $0x258] sm:$0xff]
  %v7742 = vld [vmem:[%s7665 + $0x260] sm:$0xff]
  %v7743 = vld [vmem:[%s7665 + $0x268] sm:$0xff]
  %v7744 = vld [vmem:[%s7665 + $0x270] sm:$0xff]
  %v7745 = vld [vmem:[%s7665 + $0x278] sm:$0xff]
  %v7746 = vld [vmem:[%s7665 + $0x280] sm:$0xff]
  %v7747 = vld [vmem:[%s7665 + $0x288] sm:$0xff]
  %v7748 = vld [vmem:[%s7665 + $0x290] sm:$0xff]
  %v7749 = vld [vmem:[%s7665 + $0x298] sm:$0xff]
  %v7750 = vld [vmem:[%s7665 + $0x2a0] sm:$0xff]
  %v7751 = vld [vmem:[%s7665 + $0x2a8] sm:$0xff]
  %v7752 = vld [vmem:[%s7665 + $0x2b0] sm:$0xff]
  %v7753 = vld [vmem:[%s7665 + $0x2b8] sm:$0xff]
  %v7754 = vld [vmem:[%s7665 + $0x2c0] sm:$0xff]
  %v7755 = vld [vmem:[%s7665 + $0x2c8] sm:$0xff]
  %v7756 = vld [vmem:[%s7665 + $0x2d0] sm:$0xff]
  %v7757 = vld [vmem:[%s7665 + $0x2d8] sm:$0xff]
  %v7758 = vld [vmem:[%s7665 + $0x2e0] sm:$0xff]
  %v7759 = vld [vmem:[%s7665 + $0x2e8] sm:$0xff]
  %v7760 = vld [vmem:[%s7665 + $0x2f0] sm:$0xff]
  %v7761 = vld [vmem:[%s7665 + $0x2f8] sm:$0xff]
  %v7762 = vld [vmem:[%s7665 + $0x300] sm:$0xff]
  %v7763 = vld [vmem:[%s7665 + $0x308] sm:$0xff]
  %v7764 = vld [vmem:[%s7665 + $0x310] sm:$0xff]
  %v7765 = vld [vmem:[%s7665 + $0x318] sm:$0xff]
  %v7766 = vld [vmem:[%s7665 + $0x320] sm:$0xff]
  %v7767 = vld [vmem:[%s7665 + $0x328] sm:$0xff]
  %v7768 = vld [vmem:[%s7665 + $0x330] sm:$0xff]
  %v7769 = vld [vmem:[%s7665 + $0x338] sm:$0xff]
  %v7770 = vld [vmem:[%s7665 + $0x340] sm:$0xff]
  %v7771 = vld [vmem:[%s7665 + $0x348] sm:$0xff]
  %v7772 = vld [vmem:[%s7665 + $0x350] sm:$0xff]
  %v7773 = vld [vmem:[%s7665 + $0x358] sm:$0xff]
  %v7774 = vld [vmem:[%s7665 + $0x360] sm:$0xff]
  %v7775 = vld [vmem:[%s7665 + $0x368] sm:$0xff]
  %v7776 = vld [vmem:[%s7665 + $0x370] sm:$0xff]
  %v7777 = vld [vmem:[%s7665 + $0x378] sm:$0xff]
  %v7778 = vld [vmem:[%s7665 + $0x380] sm:$0xff]
  %v7779 = vld [vmem:[%s7665 + $0x388] sm:$0xff]
  %v7780 = vld [vmem:[%s7665 + $0x390] sm:$0x33]
  %v7781 = vld [vmem:[%s7665 + $0x398] sm:$0x33]
  %v7898 = vunpack.c.l.b16 %v7666
  %v7899 = vunpack.c.h.b16 %v7666
  %v7900 = vunpack.c.l.b16 %v7667
  %v7901 = vunpack.c.h.b16 %v7667
  %v7902 = vunpack.c.l.b16 %v7668
  %v7903 = vunpack.c.h.b16 %v7668
  %v7904 = vunpack.c.l.b16 %v7669
  %v7905 = vunpack.c.h.b16 %v7669
  %v7906 = vunpack.c.l.b16 %v7670
  %v7907 = vunpack.c.h.b16 %v7670
  %v7908 = vunpack.c.l.b16 %v7671
  %v7909 = vunpack.c.h.b16 %v7671
  %v7910 = vunpack.c.l.b16 %v7672
  %v7911 = vunpack.c.h.b16 %v7672
  %v7912 = vunpack.c.l.b16 %v7673
  %v7913 = vunpack.c.h.b16 %v7673
  %v7914 = vunpack.c.l.b16 %v7674
  %v7915 = vunpack.c.h.b16 %v7674
  %v7916 = vunpack.c.l.b16 %v7675
  %v7917 = vunpack.c.h.b16 %v7675
  %v7918 = vunpack.c.l.b16 %v7676
  %v7919 = vunpack.c.h.b16 %v7676
  %v7920 = vunpack.c.l.b16 %v7677
  %v7921 = vunpack.c.h.b16 %v7677
  %v7922 = vunpack.c.l.b16 %v7678
  %v7923 = vunpack.c.h.b16 %v7678
  %v7924 = vunpack.c.l.b16 %v7679
  %v7925 = vunpack.c.h.b16 %v7679
  %v7926 = vunpack.c.l.b16 %v7680
  %v7927 = vunpack.c.h.b16 %v7680
  %v7928 = vunpack.c.l.b16 %v7681
  %v7929 = vunpack.c.h.b16 %v7681
  %v7930 = vunpack.c.l.b16 %v7682
  %v7931 = vunpack.c.h.b16 %v7682
  %v7932 = vunpack.c.l.b16 %v7683
  %v7933 = vunpack.c.h.b16 %v7683
  %v7934 = vunpack.c.l.b16 %v7684
  %v7935 = vunpack.c.h.b16 %v7684
  %v7936 = vunpack.c.l.b16 %v7685
  %v7937 = vunpack.c.h.b16 %v7685
  %v7938 = vunpack.c.l.b16 %v7686
  %v7939 = vunpack.c.h.b16 %v7686
  %v7940 = vunpack.c.l.b16 %v7687
  %v7941 = vunpack.c.h.b16 %v7687
  %v7942 = vunpack.c.l.b16 %v7688
  %v7943 = vunpack.c.h.b16 %v7688
  %v7944 = vunpack.c.l.b16 %v7689
  %v7945 = vunpack.c.h.b16 %v7689
  %v7946 = vunpack.c.l.b16 %v7690
  %v7947 = vunpack.c.h.b16 %v7690
  %v7948 = vunpack.c.l.b16 %v7691
  %v7949 = vunpack.c.h.b16 %v7691
  %v7950 = vunpack.c.l.b16 %v7692
  %v7951 = vunpack.c.h.b16 %v7692
  %v7952 = vunpack.c.l.b16 %v7693
  %v7953 = vunpack.c.h.b16 %v7693
  %v7954 = vunpack.c.l.b16 %v7694
  %v7955 = vunpack.c.h.b16 %v7694
  %v7956 = vunpack.c.l.b16 %v7695
  %v7957 = vunpack.c.h.b16 %v7695
  %v7958 = vunpack.c.l.b16 %v7696
  %v7959 = vunpack.c.h.b16 %v7696
  %v7960 = vunpack.c.l.b16 %v7697
  %v7961 = vunpack.c.h.b16 %v7697
  %v7962 = vunpack.c.l.b16 %v7698
  %v7963 = vunpack.c.h.b16 %v7698
  %v7964 = vunpack.c.l.b16 %v7699
  %v7965 = vunpack.c.h.b16 %v7699
  %v7966 = vunpack.c.l.b16 %v7700
  %v7967 = vunpack.c.h.b16 %v7700
  %v7968 = vunpack.c.l.b16 %v7701
  %v7969 = vunpack.c.h.b16 %v7701
  %v7970 = vunpack.c.l.b16 %v7702
  %v7971 = vunpack.c.h.b16 %v7702
  %v7972 = vunpack.c.l.b16 %v7703
  %v7973 = vunpack.c.h.b16 %v7703
  %v7974 = vunpack.c.l.b16 %v7704
  %v7975 = vunpack.c.h.b16 %v7704
  %v7976 = vunpack.c.l.b16 %v7705
  %v7977 = vunpack.c.h.b16 %v7705
  %v7978 = vunpack.c.l.b16 %v7706
  %v7979 = vunpack.c.h.b16 %v7706
  %v7980 = vunpack.c.l.b16 %v7707
  %v7981 = vunpack.c.h.b16 %v7707
  %v7982 = vunpack.c.l.b16 %v7708
  %v7983 = vunpack.c.h.b16 %v7708
  %v7984 = vunpack.c.l.b16 %v7709
  %v7985 = vunpack.c.h.b16 %v7709
  %v7986 = vunpack.c.l.b16 %v7710
  %v7987 = vunpack.c.h.b16 %v7710
  %v7988 = vunpack.c.l.b16 %v7711
  %v7989 = vunpack.c.h.b16 %v7711
  %v7990 = vunpack.c.l.b16 %v7712
  %v7991 = vunpack.c.h.b16 %v7712
  %v7992 = vunpack.c.l.b16 %v7713
  %v7993 = vunpack.c.h.b16 %v7713
  %v7994 = vunpack.c.l.b16 %v7714
  %v7995 = vunpack.c.h.b16 %v7714
  %v7996 = vunpack.c.l.b16 %v7715
  %v7997 = vunpack.c.h.b16 %v7715
  %v7998 = vunpack.c.l.b16 %v7716
  %v7999 = vunpack.c.h.b16 %v7716
  %v8000 = vunpack.c.l.b16 %v7717
  %v8001 = vunpack.c.h.b16 %v7717
  %v8002 = vunpack.c.l.b16 %v7718
  %v8003 = vunpack.c.h.b16 %v7718
  %v8004 = vunpack.c.l.b16 %v7719
  %v8005 = vunpack.c.h.b16 %v7719
  %v8006 = vunpack.c.l.b16 %v7720
  %v8007 = vunpack.c.h.b16 %v7720
  %v8008 = vunpack.c.l.b16 %v7721
  %v8009 = vunpack.c.h.b16 %v7721
  %v8010 = vunpack.c.l.b16 %v7722
  %v8011 = vunpack.c.h.b16 %v7722
  %v8012 = vunpack.c.l.b16 %v7723
  %v8013 = vunpack.c.h.b16 %v7723
  %v8014 = vunpack.c.l.b16 %v7724
  %v8015 = vunpack.c.h.b16 %v7724
  %v8016 = vunpack.c.l.b16 %v7725
  %v8017 = vunpack.c.h.b16 %v7725
  %v8018 = vunpack.c.l.b16 %v7726
  %v8019 = vunpack.c.h.b16 %v7726
  %v8020 = vunpack.c.l.b16 %v7727
  %v8021 = vunpack.c.h.b16 %v7727
  %v8022 = vunpack.c.l.b16 %v7728
  %v8023 = vunpack.c.h.b16 %v7728
  %v8024 = vunpack.c.l.b16 %v7729
  %v8025 = vunpack.c.h.b16 %v7729
  %v8026 = vunpack.c.l.b16 %v7730
  %v8027 = vunpack.c.h.b16 %v7730
  %v8028 = vunpack.c.l.b16 %v7731
  %v8029 = vunpack.c.h.b16 %v7731
  %v8030 = vunpack.c.l.b16 %v7732
  %v8031 = vunpack.c.h.b16 %v7732
  %v8032 = vunpack.c.l.b16 %v7733
  %v8033 = vunpack.c.h.b16 %v7733
  %v8034 = vunpack.c.l.b16 %v7734
  %v8035 = vunpack.c.h.b16 %v7734
  %v8036 = vunpack.c.l.b16 %v7735
  %v8037 = vunpack.c.h.b16 %v7735
  %v8038 = vunpack.c.l.b16 %v7736
  %v8039 = vunpack.c.h.b16 %v7736
  %v8040 = vunpack.c.l.b16 %v7737
  %v8041 = vunpack.c.h.b16 %v7737
  %v8042 = vunpack.c.l.b16 %v7738
  %v8043 = vunpack.c.h.b16 %v7738
  %v8044 = vunpack.c.l.b16 %v7739
  %v8045 = vunpack.c.h.b16 %v7739
  %v8046 = vunpack.c.l.b16 %v7740
  %v8047 = vunpack.c.h.b16 %v7740
  %v8048 = vunpack.c.l.b16 %v7741
  %v8049 = vunpack.c.h.b16 %v7741
  %v8050 = vunpack.c.l.b16 %v7742
  %v8051 = vunpack.c.h.b16 %v7742
  %v8052 = vunpack.c.l.b16 %v7743
  %v8053 = vunpack.c.h.b16 %v7743
  %v8054 = vunpack.c.l.b16 %v7744
  %v8055 = vunpack.c.h.b16 %v7744
  %v8056 = vunpack.c.l.b16 %v7745
  %v8057 = vunpack.c.h.b16 %v7745
  %v8058 = vunpack.c.l.b16 %v7746
  %v8059 = vunpack.c.h.b16 %v7746
  %v8060 = vunpack.c.l.b16 %v7747
  %v8061 = vunpack.c.h.b16 %v7747
  %v8062 = vunpack.c.l.b16 %v7748
  %v8063 = vunpack.c.h.b16 %v7748
  %v8064 = vunpack.c.l.b16 %v7749
  %v8065 = vunpack.c.h.b16 %v7749
  %v8066 = vunpack.c.l.b16 %v7750
  %v8067 = vunpack.c.h.b16 %v7750
  %v8068 = vunpack.c.l.b16 %v7751
  %v8069 = vunpack.c.h.b16 %v7751
  %v8070 = vunpack.c.l.b16 %v7752
  %v8071 = vunpack.c.h.b16 %v7752
  %v8072 = vunpack.c.l.b16 %v7753
  %v8073 = vunpack.c.h.b16 %v7753
  %v8074 = vunpack.c.l.b16 %v7754
  %v8075 = vunpack.c.h.b16 %v7754
  %v8076 = vunpack.c.l.b16 %v7755
  %v8077 = vunpack.c.h.b16 %v7755
  %v8078 = vunpack.c.l.b16 %v7756
  %v8079 = vunpack.c.h.b16 %v7756
  %v8080 = vunpack.c.l.b16 %v7757
  %v8081 = vunpack.c.h.b16 %v7757
  %v8082 = vunpack.c.l.b16 %v7758
  %v8083 = vunpack.c.h.b16 %v7758
  %v8084 = vunpack.c.l.b16 %v7759
  %v8085 = vunpack.c.h.b16 %v7759
  %v8086 = vunpack.c.l.b16 %v7760
  %v8087 = vunpack.c.h.b16 %v7760
  %v8088 = vunpack.c.l.b16 %v7761
  %v8089 = vunpack.c.h.b16 %v7761
  %v8090 = vunpack.c.l.b16 %v7762
  %v8091 = vunpack.c.h.b16 %v7762
  %v8092 = vunpack.c.l.b16 %v7763
  %v8093 = vunpack.c.h.b16 %v7763
  %v8094 = vunpack.c.l.b16 %v7764
  %v8095 = vunpack.c.h.b16 %v7764
  %v8096 = vunpack.c.l.b16 %v7765
  %v8097 = vunpack.c.h.b16 %v7765
  %v8098 = vunpack.c.l.b16 %v7766
  %v8099 = vunpack.c.h.b16 %v7766
  %v8100 = vunpack.c.l.b16 %v7767
  %v8101 = vunpack.c.h.b16 %v7767
  %v8102 = vunpack.c.l.b16 %v7768
  %v8103 = vunpack.c.h.b16 %v7768
  %v8104 = vunpack.c.l.b16 %v7769
  %v8105 = vunpack.c.h.b16 %v7769
  %v8106 = vunpack.c.l.b16 %v7770
  %v8107 = vunpack.c.h.b16 %v7770
  %v8108 = vunpack.c.l.b16 %v7771
  %v8109 = vunpack.c.h.b16 %v7771
  %v8110 = vunpack.c.l.b16 %v7772
  %v8111 = vunpack.c.h.b16 %v7772
  %v8112 = vunpack.c.l.b16 %v7773
  %v8113 = vunpack.c.h.b16 %v7773
  %v8114 = vunpack.c.l.b16 %v7774
  %v8115 = vunpack.c.h.b16 %v7774
  %v8116 = vunpack.c.l.b16 %v7775
  %v8117 = vunpack.c.h.b16 %v7775
  %v8118 = vunpack.c.l.b16 %v7776
  %v8119 = vunpack.c.h.b16 %v7776
  %v8120 = vunpack.c.l.b16 %v7777
  %v8121 = vunpack.c.h.b16 %v7777
  %v8122 = vunpack.c.l.b16 %v7778
  %v8123 = vunpack.c.h.b16 %v7778
  %v8124 = vunpack.c.l.b16 %v7779
  %v8125 = vunpack.c.h.b16 %v7779
  %v8126 = vunpack.c.l.b16 %v7780
  %v8127 = vunpack.c.h.b16 %v7780
  %v8128 = vunpack.c.l.b16 %v7781
  %v8129 = vunpack.c.h.b16 %v7781
  %v8130 = vpack.c.b16 %v7902, %v7898
  %v8131 = vpack.c.b16 %v7903, %v7899
  %v8132 = vpack.c.b16 %v7904, %v7900
  %v8133 = vpack.c.b16 %v7905, %v7901
  %v8134 = vpack.c.b16 %v7910, %v7906
  %v8135 = vpack.c.b16 %v7911, %v7907
  %v8136 = vpack.c.b16 %v7912, %v7908
  %v8137 = vpack.c.b16 %v7913, %v7909
  %v8138 = vpack.c.b16 %v7918, %v7914
  %v8139 = vpack.c.b16 %v7919, %v7915
  %v8140 = vpack.c.b16 %v7920, %v7916
  %v8141 = vpack.c.b16 %v7921, %v7917
  %v8142 = vpack.c.b16 %v7926, %v7922
  %v8143 = vpack.c.b16 %v7927, %v7923
  %v8144 = vpack.c.b16 %v7928, %v7924
  %v8145 = vpack.c.b16 %v7929, %v7925
  %v8146 = vpack.c.b16 %v7934, %v7930
  %v8147 = vpack.c.b16 %v7935, %v7931
  %v8148 = vpack.c.b16 %v7936, %v7932
  %v8149 = vpack.c.b16 %v7937, %v7933
  %v8150 = vpack.c.b16 %v7942, %v7938
  %v8151 = vpack.c.b16 %v7943, %v7939
  %v8152 = vpack.c.b16 %v7944, %v7940
  %v8153 = vpack.c.b16 %v7945, %v7941
  %v8154 = vpack.c.b16 %v7950, %v7946
  %v8155 = vpack.c.b16 %v7951, %v7947
  %v8156 = vpack.c.b16 %v7952, %v7948
  %v8157 = vpack.c.b16 %v7953, %v7949
  %v8158 = vpack.c.b16 %v7958, %v7954
  %v8159 = vpack.c.b16 %v7959, %v7955
  %v8160 = vpack.c.b16 %v7960, %v7956
  %v8161 = vpack.c.b16 %v7961, %v7957
  %v8162 = vpack.c.b16 %v7966, %v7962
  %v8163 = vpack.c.b16 %v7967, %v7963
  %v8164 = vpack.c.b16 %v7968, %v7964
  %v8165 = vpack.c.b16 %v7969, %v7965
  %v8166 = vpack.c.b16 %v7974, %v7970
  %v8167 = vpack.c.b16 %v7975, %v7971
  %v8168 = vpack.c.b16 %v7976, %v7972
  %v8169 = vpack.c.b16 %v7977, %v7973
  %v8170 = vpack.c.b16 %v7982, %v7978
  %v8171 = vpack.c.b16 %v7983, %v7979
  %v8172 = vpack.c.b16 %v7984, %v7980
  %v8173 = vpack.c.b16 %v7985, %v7981
  %v8174 = vpack.c.b16 %v7990, %v7986
  %v8175 = vpack.c.b16 %v7991, %v7987
  %v8176 = vpack.c.b16 %v7992, %v7988
  %v8177 = vpack.c.b16 %v7993, %v7989
  %v8178 = vpack.c.b16 %v7998, %v7994
  %v8179 = vpack.c.b16 %v7999, %v7995
  %v8180 = vpack.c.b16 %v8000, %v7996
  %v8181 = vpack.c.b16 %v8001, %v7997
  %v8182 = vpack.c.b16 %v8006, %v8002
  %v8183 = vpack.c.b16 %v8007, %v8003
  %v8184 = vpack.c.b16 %v8008, %v8004
  %v8185 = vpack.c.b16 %v8009, %v8005
  %v8186 = vpack.c.b16 %v8014, %v8010
  %v8187 = vpack.c.b16 %v8015, %v8011
  %v8188 = vpack.c.b16 %v8016, %v8012
  %v8189 = vpack.c.b16 %v8017, %v8013
  %v8190 = vpack.c.b16 %v8022, %v8018
  %v8191 = vpack.c.b16 %v8023, %v8019
  %v8192 = vpack.c.b16 %v8024, %v8020
  %v8193 = vpack.c.b16 %v8025, %v8021
  %v8194 = vpack.c.b16 %v8030, %v8026
  %v8195 = vpack.c.b16 %v8031, %v8027
  %v8196 = vpack.c.b16 %v8032, %v8028
  %v8197 = vpack.c.b16 %v8033, %v8029
  %v8198 = vpack.c.b16 %v8038, %v8034
  %v8199 = vpack.c.b16 %v8039, %v8035
  %v8200 = vpack.c.b16 %v8040, %v8036
  %v8201 = vpack.c.b16 %v8041, %v8037
  %v8202 = vpack.c.b16 %v8046, %v8042
  %v8203 = vpack.c.b16 %v8047, %v8043
  %v8204 = vpack.c.b16 %v8048, %v8044
  %v8205 = vpack.c.b16 %v8049, %v8045
  %v8206 = vpack.c.b16 %v8054, %v8050
  %v8207 = vpack.c.b16 %v8055, %v8051
  %v8208 = vpack.c.b16 %v8056, %v8052
  %v8209 = vpack.c.b16 %v8057, %v8053
  %v8210 = vpack.c.b16 %v8062, %v8058
  %v8211 = vpack.c.b16 %v8063, %v8059
  %v8212 = vpack.c.b16 %v8064, %v8060
  %v8213 = vpack.c.b16 %v8065, %v8061
  %v8214 = vpack.c.b16 %v8070, %v8066
  %v8215 = vpack.c.b16 %v8071, %v8067
  %v8216 = vpack.c.b16 %v8072, %v8068
  %v8217 = vpack.c.b16 %v8073, %v8069
  %v8218 = vpack.c.b16 %v8078, %v8074
  %v8219 = vpack.c.b16 %v8079, %v8075
  %v8220 = vpack.c.b16 %v8080, %v8076
  %v8221 = vpack.c.b16 %v8081, %v8077
  %v8222 = vpack.c.b16 %v8086, %v8082
  %v8223 = vpack.c.b16 %v8087, %v8083
  %v8224 = vpack.c.b16 %v8088, %v8084
  %v8225 = vpack.c.b16 %v8089, %v8085
  %v8226 = vpack.c.b16 %v8094, %v8090
  %v8227 = vpack.c.b16 %v8095, %v8091
  %v8228 = vpack.c.b16 %v8096, %v8092
  %v8229 = vpack.c.b16 %v8097, %v8093
  %v8230 = vpack.c.b16 %v8102, %v8098
  %v8231 = vpack.c.b16 %v8103, %v8099
  %v8232 = vpack.c.b16 %v8104, %v8100
  %v8233 = vpack.c.b16 %v8105, %v8101
  %v8234 = vpack.c.b16 %v8110, %v8106
  %v8235 = vpack.c.b16 %v8111, %v8107
  %v8236 = vpack.c.b16 %v8112, %v8108
  %v8237 = vpack.c.b16 %v8113, %v8109
  %v8238 = vpack.c.b16 %v8118, %v8114
  %v8239 = vpack.c.b16 %v8119, %v8115
  %v8240 = vpack.c.b16 %v8120, %v8116
  %v8241 = vpack.c.b16 %v8121, %v8117
  %v8242 = vpack.c.b16 %v8126, %v8122
  %v8243 = vpack.c.b16 %v8127, %v8123
  %v8244 = vpack.c.b16 %v8128, %v8124
  %v8245 = vpack.c.b16 %v8129, %v8125
  %v8359 = vsel %vm111, %v8242, 0
  %v8362 = vsel %vm111, %v8243, 0
  %v8365 = vsel %vm111, %v8244, 0
  %v8368 = vsel %vm111, %v8245, 0
  %8370 = vmatprep.subr.bf16.mxu0 %v8131
  %8371 = vmatpush1.bf16.msra.mxu0 %v8130
  %8372 = vmatprep.subr.bf16.mxu0 %v8135
  %8373 = vmatpush1.bf16.msra.mxu0 %v8134
  %8374 = vmatprep.subr.bf16.mxu0 %v8139
  %8375 = vmatpush1.bf16.msra.mxu0 %v8138
  %8376 = vmatprep.subr.bf16.mxu0 %v8143
  %8377 = vmatpush1.bf16.msra.mxu0 %v8142
  %8378 = vmatprep.subr.bf16.mxu0 %v8147
  %8379 = vmatpush1.bf16.msra.mxu0 %v8146
  %8380 = vmatprep.subr.bf16.mxu0 %v8151
  %8381 = vmatpush1.bf16.msra.mxu0 %v8150
  %8382 = vmatprep.subr.bf16.mxu0 %v8155
  %8383 = vmatpush1.bf16.msra.mxu0 %v8154
  %8384 = vmatprep.subr.bf16.mxu0 %v8159
  %8385 = vmatpush1.bf16.msra.mxu0 %v8158
  %8386 = vmatprep.subr.bf16.mxu0 %v8163
  %8387 = vmatpush1.bf16.msra.mxu0 %v8162
  %8388 = vmatprep.subr.bf16.mxu0 %v8167
  %8389 = vmatpush1.bf16.msra.mxu0 %v8166
  %8390 = vmatprep.subr.bf16.mxu0 %v8171
  %8391 = vmatpush1.bf16.msra.mxu0 %v8170
  %8392 = vmatprep.subr.bf16.mxu0 %v8175
  %8393 = vmatpush1.bf16.msra.mxu0 %v8174
  %8394 = vmatprep.subr.bf16.mxu0 %v8179
  %8395 = vmatpush1.bf16.msra.mxu0 %v8178
  %8396 = vmatprep.subr.bf16.mxu0 %v8183
  %8397 = vmatpush1.bf16.msra.mxu0 %v8182
  %8398 = vmatprep.subr.bf16.mxu0 %v8187
  %8399 = vmatpush1.bf16.msra.mxu0 %v8186
  %8400 = vmatprep.subr.bf16.mxu0 %v8191
  %8401 = vmatpush1.bf16.msra.mxu0 %v8190
  %8402 = vmatprep.mubr.bf16.mxu0 %v2718
  %8403 = vmatmul.mubr.bf16.gmra.mrb[0].mxu0 %v2716
  %v8404 = vpop.f32.mrb[0].mxu0
  %v8405 = vpop.f32.mrb[0].mxu0
  %v8406 = vpop.f32.mrb[0].mxu0
  %v8407 = vadd.f32 0.0, %v8406
  %v8408 = vpop.f32.mrb[0].mxu0
  %v8409 = vadd.f32 0.0, %v8408
  %8410 = vmatprep.mubr.bf16.mxu0 %v2786
  %8411 = vmatmul.mubr.bf16.gmra.mrb[0].mxu0 %v2784
  %v8412 = vpop.f32.mrb[0].mxu0
  %v8413 = vadd.f32 0.0, %v8412
  %v8414 = vpop.f32.mrb[0].mxu0
  %v8415 = vadd.f32 0.0, %v8414
  %v8416 = vpop.f32.mrb[0].mxu0
  %v8417 = vadd.f32 0.0, %v8416
  %v8418 = vpop.f32.mrb[0].mxu0
  %v8419 = vadd.f32 0.0, %v8418
  %8420 = vmatprep.mubr.bf16.mxu0 %v2853
  %8421 = vmatmul.mubr.bf16.gmra.mrb[0].mxu0 %v2851
  %v8422 = vpop.f32.mrb[0].mxu0
  %v8423 = vadd.f32 0.0, %v8422
  %v8424 = vpop.f32.mrb[0].mxu0
  %v8425 = vadd.f32 0.0, %v8424
  %v8426 = vpop.f32.mrb[0].mxu0
  %v8427 = vadd.f32 0.0, %v8426
  %v8428 = vpop.f32.mrb[0].mxu0
  %v8429 = vadd.f32 0.0, %v8428
  %8430 = vdwg.mxu0
  %8431 = vmatprep.subr.bf16.mxu0 %v8195
  %8432 = vmatpush1.bf16.msra.mxu0 %v8194
  %8433 = vmatprep.subr.bf16.mxu0 %v8199
  %8434 = vmatpush1.bf16.msra.mxu0 %v8198
  %8435 = vmatprep.subr.bf16.mxu0 %v8203
  %8436 = vmatpush1.bf16.msra.mxu0 %v8202
  %8437 = vmatprep.subr.bf16.mxu0 %v8207
  %8438 = vmatpush1.bf16.msra.mxu0 %v8206
  %8439 = vmatprep.subr.bf16.mxu0 %v8211
  %8440 = vmatpush1.bf16.msra.mxu0 %v8210
  %8441 = vmatprep.subr.bf16.mxu0 %v8215
  %8442 = vmatpush1.bf16.msra.mxu0 %v8214
  %8443 = vmatprep.subr.bf16.mxu0 %v8219
  %8444 = vmatpush1.bf16.msra.mxu0 %v8218
  %8445 = vmatprep.subr.bf16.mxu0 %v8223
  %8446 = vmatpush1.bf16.msra.mxu0 %v8222
  %8447 = vmatprep.subr.bf16.mxu0 %v8227
  %8448 = vmatpush1.bf16.msra.mxu0 %v8226
  %8449 = vmatprep.subr.bf16.mxu0 %v8231
  %8450 = vmatpush1.bf16.msra.mxu0 %v8230
  %8451 = vmatprep.subr.bf16.mxu0 %v8235
  %8452 = vmatpush1.bf16.msra.mxu0 %v8234
  %8453 = vmatprep.subr.bf16.mxu0 %v8239
  %8454 = vmatpush1.bf16.msra.mxu0 %v8238
  %8455 = vmatprep.subr.bf16.mxu0 %v8362
  %8456 = vmatpush1.bf16.msra.mxu0 %v8359
  %8457 = vmatprep.subr.bf16.mxu0 0
  %8458 = vmatpush1.bf16.msra.mxu0 0
  %8459 = vmatprep.subr.bf16.mxu0 0
  %8460 = vmatpush1.bf16.msra.mxu0 0
  %8461 = vmatprep.subr.bf16.mxu0 0
  %8462 = vmatpush1.bf16.msra.mxu0 0
  %8463 = vmatprep.mubr.bf16.mxu0 %v3442
  %8464 = vmatmul.mubr.bf16.gmra.mrb[0].mxu0 %v2717
  %v8465 = vpop.f32.mrb[0].mxu0
  %v8466 = vpop.f32.mrb[0].mxu0
  %v8467 = vpop.f32.mrb[0].mxu0
  %v8468 = vadd.f32 %v8407, %v8467
  %v8469 = vpop.f32.mrb[0].mxu0
  %v8470 = vadd.f32 %v8409, %v8469
  %8471 = vmatprep.mubr.bf16.mxu0 %v3445
  %8472 = vmatmul.mubr.bf16.gmra.mrb[0].mxu0 %v2785
  %v8473 = vpop.f32.mrb[0].mxu0
  %v8474 = vadd.f32 %v8413, %v8473
  %v8475 = vpop.f32.mrb[0].mxu0
  %v8476 = vadd.f32 %v8415, %v8475
  %v8477 = vpop.f32.mrb[0].mxu0
  %v8478 = vadd.f32 %v8417, %v8477
  %v8479 = vpop.f32.mrb[0].mxu0
  %v8480 = vadd.f32 %v8419, %v8479
  %8481 = vmatprep.mubr.bf16.mxu0 %v3448
  %8482 = vmatmul.mubr.bf16.gmra.mrb[0].mxu0 %v2852
  %v8483 = vpop.f32.mrb[0].mxu0
  %v8484 = vadd.f32 %v8423, %v8483
  %v8485 = vpop.f32.mrb[0].mxu0
  %v8486 = vadd.f32 %v8425, %v8485
  %v8487 = vpop.f32.mrb[0].mxu0
  %v8488 = vadd.f32 %v8427, %v8487
  %v8489 = vpop.f32.mrb[0].mxu0
  %v8490 = vadd.f32 %v8429, %v8489
  %8491 = vdwg.mxu0
  %8492 = vmatprep.subr.bf16.mxu0 %v8133
  %8493 = vmatpush1.bf16.msra.mxu0 %v8132
  %8494 = vmatprep.subr.bf16.mxu0 %v8137
  %8495 = vmatpush1.bf16.msra.mxu0 %v8136
  %8496 = vmatprep.subr.bf16.mxu0 %v8141
  %8497 = vmatpush1.bf16.msra.mxu0 %v8140
  %8498 = vmatprep.subr.bf16.mxu0 %v8145
  %8499 = vmatpush1.bf16.msra.mxu0 %v8144
  %8500 = vmatprep.subr.bf16.mxu0 %v8149
  %8501 = vmatpush1.bf16.msra.mxu0 %v8148
  %8502 = vmatprep.subr.bf16.mxu0 %v8153
  %8503 = vmatpush1.bf16.msra.mxu0 %v8152
  %8504 = vmatprep.subr.bf16.mxu0 %v8157
  %8505 = vmatpush1.bf16.msra.mxu0 %v8156
  %8506 = vmatprep.subr.bf16.mxu0 %v8161
  %8507 = vmatpush1.bf16.msra.mxu0 %v8160
  %8508 = vmatprep.subr.bf16.mxu0 %v8165
  %8509 = vmatpush1.bf16.msra.mxu0 %v8164
  %8510 = vmatprep.subr.bf16.mxu0 %v8169
  %8511 = vmatpush1.bf16.msra.mxu0 %v8168
  %8512 = vmatprep.subr.bf16.mxu0 %v8173
  %8513 = vmatpush1.bf16.msra.mxu0 %v8172
  %8514 = vmatprep.subr.bf16.mxu0 %v8177
  %8515 = vmatpush1.bf16.msra.mxu0 %v8176
  %8516 = vmatprep.subr.bf16.mxu0 %v8181
  %8517 = vmatpush1.bf16.msra.mxu0 %v8180
  %8518 = vmatprep.subr.bf16.mxu0 %v8185
  %8519 = vmatpush1.bf16.msra.mxu0 %v8184
  %8520 = vmatprep.subr.bf16.mxu0 %v8189
  %8521 = vmatpush1.bf16.msra.mxu0 %v8188
  %8522 = vmatprep.subr.bf16.mxu0 %v8193
  %8523 = vmatpush1.bf16.msra.mxu0 %v8192
  %8524 = vmatprep.mubr.bf16.mxu0 %v2718
  %8525 = vmatmul.mubr.bf16.gmra.mrb[0].mxu0 %v2716
  %v8526 = vpop.f32.mrb[0].mxu0
  %v8527 = vpop.f32.mrb[0].mxu0
  %v8528 = vpop.f32.mrb[0].mxu0
  %v8529 = vadd.f32 0.0, %v8528
  %v8530 = vpop.f32.mrb[0].mxu0
  %v8531 = vadd.f32 0.0, %v8530
  %8532 = vmatprep.mubr.bf16.mxu0 %v2786
  %8533 = vmatmul.mubr.bf16.gmra.mrb[0].mxu0 %v2784
  %v8534 = vpop.f32.mrb[0].mxu0
  %v8535 = vadd.f32 0.0, %v8534
  %v8536 = vpop.f32.mrb[0].mxu0
  %v8537 = vadd.f32 0.0, %v8536
  %v8538 = vpop.f32.mrb[0].mxu0
  %v8539 = vadd.f32 0.0, %v8538
  %v8540 = vpop.f32.mrb[0].mxu0
  %v8541 = vadd.f32 0.0, %v8540
  %8542 = vmatprep.mubr.bf16.mxu0 %v2853
  %8543 = vmatmul.mubr.bf16.gmra.mrb[0].mxu0 %v2851
  %v8544 = vpop.f32.mrb[0].mxu0
  %v8545 = vadd.f32 0.0, %v8544
  %v8546 = vpop.f32.mrb[0].mxu0
  %v8547 = vadd.f32 0.0, %v8546
  %v8548 = vpop.f32.mrb[0].mxu0
  %v8549 = vadd.f32 0.0, %v8548
  %v8550 = vpop.f32.mrb[0].mxu0
  %v8551 = vadd.f32 0.0, %v8550
  %8552 = vdwg.mxu0
  %8553 = vmatprep.subr.bf16.mxu0 %v8197
  %8554 = vmatpush1.bf16.msra.mxu0 %v8196
  %8555 = vmatprep.subr.bf16.mxu0 %v8201
  %8556 = vmatpush1.bf16.msra.mxu0 %v8200
  %8557 = vmatprep.subr.bf16.mxu0 %v8205
  %8558 = vmatpush1.bf16.msra.mxu0 %v8204
  %8559 = vmatprep.subr.bf16.mxu0 %v8209
  %8560 = vmatpush1.bf16.msra.mxu0 %v8208
  %8561 = vmatprep.subr.bf16.mxu0 %v8213
  %8562 = vmatpush1.bf16.msra.mxu0 %v8212
  %8563 = vmatprep.subr.bf16.mxu0 %v8217
  %8564 = vmatpush1.bf16.msra.mxu0 %v8216
  %8565 = vmatprep.subr.bf16.mxu0 %v8221
  %8566 = vmatpush1.bf16.msra.mxu0 %v8220
  %8567 = vmatprep.subr.bf16.mxu0 %v8225
  %8568 = vmatpush1.bf16.msra.mxu0 %v8224
  %8569 = vmatprep.subr.bf16.mxu0 %v8229
  %8570 = vmatpush1.bf16.msra.mxu0 %v8228
  %8571 = vmatprep.subr.bf16.mxu0 %v8233
  %8572 = vmatpush1.bf16.msra.mxu0 %v8232
  %8573 = vmatprep.subr.bf16.mxu0 %v8237
  %8574 = vmatpush1.bf16.msra.mxu0 %v8236
  %8575 = vmatprep.subr.bf16.mxu0 %v8241
  %8576 = vmatpush1.bf16.msra.mxu0 %v8240
  %8577 = vmatprep.subr.bf16.mxu0 %v8368
  %8578 = vmatpush1.bf16.msra.mxu0 %v8365
  %8579 = vmatprep.subr.bf16.mxu0 0
  %8580 = vmatpush1.bf16.msra.mxu0 0
  %8581 = vmatprep.subr.bf16.mxu0 0
  %8582 = vmatpush1.bf16.msra.mxu0 0
  %8583 = vmatprep.subr.bf16.mxu0 0
  %8584 = vmatpush1.bf16.msra.mxu0 0
  %8585 = vmatprep.mubr.bf16.mxu0 %v3442
  %8586 = vmatmul.mubr.bf16.gmra.mrb[0].mxu0 %v2717
  %v8587 = vpop.f32.mrb[0].mxu0
  %v8588 = vpop.f32.mrb[0].mxu0
  %v8589 = vpop.f32.mrb[0].mxu0
  %v8590 = vadd.f32 %v8529, %v8589
  %v8591 = vpop.f32.mrb[0].mxu0
  %v8592 = vadd.f32 %v8531, %v8591
  %8593 = vmatprep.mubr.bf16.mxu0 %v3445
  %8594 = vmatmul.mubr.bf16.gmra.mrb[0].mxu0 %v2785
  %v8595 = vpop.f32.mrb[0].mxu0
  %v8596 = vadd.f32 %v8535, %v8595
  %v8597 = vpop.f32.mrb[0].mxu0
  %v8598 = vadd.f32 %v8537, %v8597
  %v8599 = vpop.f32.mrb[0].mxu0
  %v8600 = vadd.f32 %v8539, %v8599
  %v8601 = vpop.f32.mrb[0].mxu0
  %v8602 = vadd.f32 %v8541, %v8601
  %8603 = vmatprep.mubr.bf16.mxu0 %v3448
  %8604 = vmatmul.mubr.bf16.gmra.mrb[0].mxu0 %v2852
  %v8605 = vpop.f32.mrb[0].mxu0
  %v8606 = vadd.f32 %v8545, %v8605
  %v8607 = vpop.f32.mrb[0].mxu0
  %v8608 = vadd.f32 %v8547, %v8607
  %v8609 = vpop.f32.mrb[0].mxu0
  %v8610 = vadd.f32 %v8549, %v8609
  %v8611 = vpop.f32.mrb[0].mxu0
  %v8612 = vadd.f32 %v8551, %v8611
  %8613 = vdwg.mxu0
  %v8634 = vcombine.low %v8468, %v8470
  %v8635 = vcombine.high %v8468, %v8470
  %v8636 = vcombine.low %v8590, %v8592
  %v8637 = vcombine.high %v8590, %v8592
  %v8639 = vunpack.c.l.s4 1966171168
  %v8640 = vunpack.c.0.s8 %v8639
  %v8641 = vlaneseq
  %v8642 = vshrl.u32 %v8641, 7
  %v8643 = vsub.s32 %v8640, %v8642
  %v8644 = vrot.slane %v8634, %v8643
  %v8646 = vunpack.c.l.s4 1966171168
  %v8647 = vunpack.c.0.s8 %v8646
  %v8648 = vlaneseq
  %v8649 = vshrl.u32 %v8648, 7
  %v8650 = vsub.s32 %v8647, %v8649
  %v8651 = vrot.slane %v8635, %v8650
  %v8653 = vunpack.c.l.s4 1966171168
  %v8654 = vunpack.c.0.s8 %v8653
  %v8655 = vlaneseq
  %v8656 = vshrl.u32 %v8655, 7
  %v8657 = vsub.s32 %v8654, %v8656
  %v8658 = vrot.slane %v8636, %v8657
  %v8660 = vunpack.c.l.s4 1966171168
  %v8661 = vunpack.c.0.s8 %v8660
  %v8662 = vlaneseq
  %v8663 = vshrl.u32 %v8662, 7
  %v8664 = vsub.s32 %v8661, %v8663
  %v8665 = vrot.slane %v8637, %v8664
  %v8666 = vcombine.low %v8644, %v8658
  %v8667 = vcombine.low %v8651, %v8665
  %v8669 = vunpack.c.l.s4 1966171168
  %v8670 = vunpack.c.0.s8 %v8669
  %v8671 = vlaneseq
  %v8672 = vshrl.u32 %v8671, 7
  %v8673 = vsub.s32 %v8670, %v8672
  %v8674 = vrot.slane %v8666, %v8673
  %v8676 = vunpack.c.l.s4 1966171168
  %v8677 = vunpack.c.0.s8 %v8676
  %v8678 = vlaneseq
  %v8679 = vshrl.u32 %v8678, 7
  %v8680 = vsub.s32 %v8677, %v8679
  %v8681 = vrot.slane %v8667, %v8680
  %v8682 = vcombine.high %v8674, %v8674
  %v8683 = vcombine.high %v8681, %v8681
  %v8684 = vcombine.low %v8474, %v8476
  %v8685 = vcombine.high %v8474, %v8476
  %v8686 = vcombine.low %v8596, %v8598
  %v8687 = vcombine.high %v8596, %v8598
  %v8689 = vunpack.c.l.s4 1966171168
  %v8690 = vunpack.c.0.s8 %v8689
  %v8691 = vlaneseq
  %v8692 = vshrl.u32 %v8691, 7
  %v8693 = vsub.s32 %v8690, %v8692
  %v8694 = vrot.slane %v8684, %v8693
  %v8696 = vunpack.c.l.s4 1966171168
  %v8697 = vunpack.c.0.s8 %v8696
  %v8698 = vlaneseq
  %v8699 = vshrl.u32 %v8698, 7
  %v8700 = vsub.s32 %v8697, %v8699
  %v8701 = vrot.slane %v8685, %v8700
  %v8703 = vunpack.c.l.s4 1966171168
  %v8704 = vunpack.c.0.s8 %v8703
  %v8705 = vlaneseq
  %v8706 = vshrl.u32 %v8705, 7
  %v8707 = vsub.s32 %v8704, %v8706
  %v8708 = vrot.slane %v8686, %v8707
  %v8710 = vunpack.c.l.s4 1966171168
  %v8711 = vunpack.c.0.s8 %v8710
  %v8712 = vlaneseq
  %v8713 = vshrl.u32 %v8712, 7
  %v8714 = vsub.s32 %v8711, %v8713
  %v8715 = vrot.slane %v8687, %v8714
  %v8716 = vcombine.low %v8694, %v8708
  %v8717 = vcombine.low %v8701, %v8715
  %v8719 = vunpack.c.l.s4 1966171168
  %v8720 = vunpack.c.0.s8 %v8719
  %v8721 = vlaneseq
  %v8722 = vshrl.u32 %v8721, 7
  %v8723 = vsub.s32 %v8720, %v8722
  %v8724 = vrot.slane %v8716, %v8723
  %v8726 = vunpack.c.l.s4 1966171168
  %v8727 = vunpack.c.0.s8 %v8726
  %v8728 = vlaneseq
  %v8729 = vshrl.u32 %v8728, 7
  %v8730 = vsub.s32 %v8727, %v8729
  %v8731 = vrot.slane %v8717, %v8730
  %v8732 = vcombine.high %v8724, %v8724
  %v8733 = vcombine.high %v8731, %v8731
  %v8734 = vcombine.high %v8478, %v8480
  %v8735 = vcombine.high %v8600, %v8602
  %v8737 = vunpack.c.l.s4 1966171168
  %v8738 = vunpack.c.0.s8 %v8737
  %v8739 = vlaneseq
  %v8740 = vshrl.u32 %v8739, 7
  %v8741 = vsub.s32 %v8738, %v8740
  %v8742 = vrot.slane %v8734, %v8741
  %v8744 = vunpack.c.l.s4 1966171168
  %v8745 = vunpack.c.0.s8 %v8744
  %v8746 = vlaneseq
  %v8747 = vshrl.u32 %v8746, 7
  %v8748 = vsub.s32 %v8745, %v8747
  %v8749 = vrot.slane %v8735, %v8748
  %v8750 = vcombine.high %v8742, %v8749
  %v8752 = vunpack.c.l.s4 1966171168
  %v8753 = vunpack.c.0.s8 %v8752
  %v8754 = vlaneseq
  %v8755 = vshrl.u32 %v8754, 7
  %v8756 = vsub.s32 %v8753, %v8755
  %v8757 = vrot.slane %v8750, %v8756
  %v8758 = vcombine.high %v8757, %v8757
  %v8759 = vcombine.low %v8484, %v8486
  %v8760 = vcombine.high %v8484, %v8486
  %v8761 = vcombine.low %v8606, %v8608
  %v8762 = vcombine.high %v8606, %v8608
  %v8764 = vunpack.c.l.s4 1966171168
  %v8765 = vunpack.c.0.s8 %v8764
  %v8766 = vlaneseq
  %v8767 = vshrl.u32 %v8766, 7
  %v8768 = vsub.s32 %v8765, %v8767
  %v8769 = vrot.slane %v8759, %v8768
  %v8771 = vunpack.c.l.s4 1966171168
  %v8772 = vunpack.c.0.s8 %v8771
  %v8773 = vlaneseq
  %v8774 = vshrl.u32 %v8773, 7
  %v8775 = vsub.s32 %v8772, %v8774
  %v8776 = vrot.slane %v8760, %v8775
  %v8778 = vunpack.c.l.s4 1966171168
  %v8779 = vunpack.c.0.s8 %v8778
  %v8780 = vlaneseq
  %v8781 = vshrl.u32 %v8780, 7
  %v8782 = vsub.s32 %v8779, %v8781
  %v8783 = vrot.slane %v8761, %v8782
  %v8785 = vunpack.c.l.s4 1966171168
  %v8786 = vunpack.c.0.s8 %v8785
  %v8787 = vlaneseq
  %v8788 = vshrl.u32 %v8787, 7
  %v8789 = vsub.s32 %v8786, %v8788
  %v8790 = vrot.slane %v8762, %v8789
  %v8791 = vcombine.high %v8769, %v8783
  %v8792 = vcombine.high %v8776, %v8790
  %v8794 = vunpack.c.l.s4 1966171168
  %v8795 = vunpack.c.0.s8 %v8794
  %v8796 = vlaneseq
  %v8797 = vshrl.u32 %v8796, 7
  %v8798 = vsub.s32 %v8795, %v8797
  %v8799 = vrot.slane %v8791, %v8798
  %v8801 = vunpack.c.l.s4 1966171168
  %v8802 = vunpack.c.0.s8 %v8801
  %v8803 = vlaneseq
  %v8804 = vshrl.u32 %v8803, 7
  %v8805 = vsub.s32 %v8802, %v8804
  %v8806 = vrot.slane %v8792, %v8805
  %v8807 = vcombine.high %v8799, %v8799
  %v8808 = vcombine.high %v8806, %v8806
  %v8809 = vcombine.low %v8488, %v8490
  %v8810 = vcombine.high %v8488, %v8490
  %v8811 = vcombine.low %v8610, %v8612
  %v8812 = vcombine.high %v8610, %v8612
  %v8814 = vunpack.c.l.s4 1966171168
  %v8815 = vunpack.c.0.s8 %v8814
  %v8816 = vlaneseq
  %v8817 = vshrl.u32 %v8816, 7
  %v8818 = vsub.s32 %v8815, %v8817
  %v8819 = vrot.slane %v8809, %v8818
  %v8821 = vunpack.c.l.s4 1966171168
  %v8822 = vunpack.c.0.s8 %v8821
  %v8823 = vlaneseq
  %v8824 = vshrl.u32 %v8823, 7
  %v8825 = vsub.s32 %v8822, %v8824
  %v8826 = vrot.slane %v8810, %v8825
  %v8828 = vunpack.c.l.s4 1966171168
  %v8829 = vunpack.c.0.s8 %v8828
  %v8830 = vlaneseq
  %v8831 = vshrl.u32 %v8830, 7
  %v8832 = vsub.s32 %v8829, %v8831
  %v8833 = vrot.slane %v8811, %v8832
  %v8835 = vunpack.c.l.s4 1966171168
  %v8836 = vunpack.c.0.s8 %v8835
  %v8837 = vlaneseq
  %v8838 = vshrl.u32 %v8837, 7
  %v8839 = vsub.s32 %v8836, %v8838
  %v8840 = vrot.slane %v8812, %v8839
  %v8841 = vcombine.high %v8819, %v8833
  %v8842 = vcombine.high %v8826, %v8840
  %v8844 = vunpack.c.l.s4 1966171168
  %v8845 = vunpack.c.0.s8 %v8844
  %v8846 = vlaneseq
  %v8847 = vshrl.u32 %v8846, 7
  %v8848 = vsub.s32 %v8845, %v8847
  %v8849 = vrot.slane %v8841, %v8848
  %v8851 = vunpack.c.l.s4 1966171168
  %v8852 = vunpack.c.0.s8 %v8851
  %v8853 = vlaneseq
  %v8854 = vshrl.u32 %v8853, 7
  %v8855 = vsub.s32 %v8852, %v8854
  %v8856 = vrot.slane %v8842, %v8855
  %v8857 = vcombine.high %v8849, %v8849
  %v8874 = vadd.f32 %v7649, %v8674
  %v8875 = vadd.f32 %v7650, %v8682
  %v8876 = vadd.f32 %v7651, %v8681
  %v8877 = vadd.f32 %v7652, %v8683
  %v8878 = vadd.f32 %v7653, %v8724
  %v8879 = vadd.f32 %v7654, %v8732
  %v8880 = vadd.f32 %v7655, %v8731
  %v8881 = vadd.f32 %v7656, %v8733
  %v8882 = vadd.f32 %v7657, %v8758
  %v8883 = vadd.f32 %v7658, %v8799
  %v8884 = vadd.f32 %v7659, %v8807
  %v8885 = vadd.f32 %v7660, %v8806
  %v8886 = vadd.f32 %v7661, %v8808
  %v8887 = vadd.f32 %v7662, %v8849
  %v8888 = vadd.f32 %v7663, %v8857
  %v8889 = vadd.f32 %v7664, %v8856
  %v8890 = vld [vmem:[%s4] sm:$0xf]
  %v8892 = vlaneseq
  %v8893 = vshrl.u32 %v8892, 7
  %v8894 = vsub.s32 0, %v8893
  %v8895 = vrot.slane %v8890, %v8894
  %v8896 = vlaneseq
  %v8897 = vshrl.u32 %v8896, 7
  %v8898 = vsub.s32 1, %v8897
  %v8899 = vrot.slane %v8890, %v8898
  %v8900 = vlaneseq
  %v8901 = vshrl.u32 %v8900, 7
  %v8902 = vsub.s32 2, %v8901
  %v8903 = vrot.slane %v8890, %v8902
  %v8904 = vlaneseq
  %v8905 = vshrl.u32 %v8904, 7
  %v8906 = vsub.s32 3, %v8905
  %v8907 = vrot.slane %v8890, %v8906
  %v8908 = vcombine.low %v8895, %v8899
  %v8909 = vcombine.high %v8895, %v8899
  %v8910 = vcombine.low %v8903, %v8907
  %v8911 = vcombine.high %v8903, %v8907
  %v8913 = vunpack.c.l.s4 1966171168
  %v8914 = vunpack.c.0.s8 %v8913
  %v8915 = vlaneseq
  %v8916 = vshrl.u32 %v8915, 7
  %v8917 = vsub.s32 %v8914, %v8916
  %v8918 = vrot.slane %v8908, %v8917
  %v8920 = vunpack.c.l.s4 1966171168
  %v8921 = vunpack.c.0.s8 %v8920
  %v8922 = vlaneseq
  %v8923 = vshrl.u32 %v8922, 7
  %v8924 = vsub.s32 %v8921, %v8923
  %v8925 = vrot.slane %v8909, %v8924
  %v8927 = vunpack.c.l.s4 1966171168
  %v8928 = vunpack.c.0.s8 %v8927
  %v8929 = vlaneseq
  %v8930 = vshrl.u32 %v8929, 7
  %v8931 = vsub.s32 %v8928, %v8930
  %v8932 = vrot.slane %v8910, %v8931
  %v8934 = vunpack.c.l.s4 1966171168
  %v8935 = vunpack.c.0.s8 %v8934
  %v8936 = vlaneseq
  %v8937 = vshrl.u32 %v8936, 7
  %v8938 = vsub.s32 %v8935, %v8937
  %v8939 = vrot.slane %v8911, %v8938
  %v8940 = vcombine.low %v8918, %v8932
  %v8941 = vcombine.low %v8925, %v8939
  %v8943 = vunpack.c.l.s4 1966171168
  %v8944 = vunpack.c.0.s8 %v8943
  %v8945 = vlaneseq
  %v8946 = vshrl.u32 %v8945, 7
  %v8947 = vsub.s32 %v8944, %v8946
  %v8948 = vrot.slane %v8940, %v8947
  %v8950 = vunpack.c.l.s4 1966171168
  %v8951 = vunpack.c.0.s8 %v8950
  %v8952 = vlaneseq
  %v8953 = vshrl.u32 %v8952, 7
  %v8954 = vsub.s32 %v8951, %v8953
  %v8955 = vrot.slane %v8941, %v8954
  %v8956 = vcombine.high %v8948, %v8948
  %v8957 = vcombine.high %v8955, %v8955
  %v8962 = vadd.f32 %v8874, %v8948
  %v8963 = vadd.f32 %v8875, %v8956
  %v8964 = vadd.f32 %v8876, %v8955
  %v8965 = vadd.f32 %v8877, %v8957
  %v8966 = vadd.f32 %v8878, %v8948
  %v8967 = vadd.f32 %v8879, %v8956
  %v8968 = vadd.f32 %v8880, %v8955
  %v8969 = vadd.f32 %v8881, %v8957
  %v8970 = vadd.f32 %v8882, %v8948
  %v8971 = vadd.f32 %v8883, %v8956
  %v8972 = vadd.f32 %v8884, %v8955
  %v8973 = vadd.f32 %v8885, %v8957
  %v8974 = vadd.f32 %v8886, %v8948
  %v8975 = vadd.f32 %v8887, %v8956
  %v8976 = vadd.f32 %v8888, %v8955
  %v8977 = vadd.f32 %v8889, %v8957
  %8994 = vrot.lane.b32.xlu0 %v8962, 78
  %v8995 = vpop.permute.xlu0 %8994
  %8996 = vrot.lane.b32.xlu0 %v8963, 78
  %v8997 = vpop.permute.xlu0 %8996
  %8998 = vrot.lane.b32.xlu0 %v8964, 78
  %v8999 = vpop.permute.xlu0 %8998
  %9000 = vrot.lane.b32.xlu0 %v8965, 78
  %v9001 = vpop.permute.xlu0 %9000
  %9002 = vrot.lane.b32.xlu0 %v8966, 78
  %v9003 = vpop.permute.xlu0 %9002
  %9004 = vrot.lane.b32.xlu0 %v8967, 78
  %v9005 = vpop.permute.xlu0 %9004
  %9006 = vrot.lane.b32.xlu0 %v8968, 78
  %v9007 = vpop.permute.xlu0 %9006
  %9008 = vrot.lane.b32.xlu0 %v8969, 78
  %v9009 = vpop.permute.xlu0 %9008
  %9010 = vrot.lane.b32.xlu0 %v8970, 78
  %v9011 = vpop.permute.xlu0 %9010
  %9012 = vrot.lane.b32.xlu0 %v8971, 78
  %v9013 = vpop.permute.xlu0 %9012
  %9014 = vrot.lane.b32.xlu0 %v8972, 78
  %v9015 = vpop.permute.xlu0 %9014
  %9016 = vrot.lane.b32.xlu0 %v8973, 78
  %v9017 = vpop.permute.xlu0 %9016
  %9018 = vrot.lane.b32.xlu0 %v8974, 78
  %v9019 = vpop.permute.xlu0 %9018
  %9020 = vrot.lane.b32.xlu0 %v8975, 78
  %v9021 = vpop.permute.xlu0 %9020
  %9022 = vrot.lane.b32.xlu0 %v8976, 78
  %v9023 = vpop.permute.xlu0 %9022
  %9024 = vrot.lane.b32.xlu0 %v8977, 78
  %v9025 = vpop.permute.xlu0 %9024
  %v9026 = vrot.slane %v8995, 1
  %v9027 = vrot.slane %v8997, 1
  %v9028 = vrot.slane %v8999, 1
  %v9029 = vrot.slane %v9001, 1
  %v9030 = vrot.slane %v9003, 1
  %v9031 = vrot.slane %v9005, 1
  %v9032 = vrot.slane %v9007, 1
  %v9033 = vrot.slane %v9009, 1
  %v9034 = vrot.slane %v9011, 1
  %v9035 = vrot.slane %v9013, 1
  %v9036 = vrot.slane %v9015, 1
  %v9037 = vrot.slane %v9017, 1
  %v9038 = vrot.slane %v9019, 1
  %v9039 = vrot.slane %v9021, 1
  %v9040 = vrot.slane %v9023, 1
  %v9041 = vrot.slane %v9025, 1
  %vm9042 = vcmask 637952
  %v9043 = vsel %vm9042, %v8995, %v9026
  %v9044 = vsel %vm9042, %v8997, %v9027
  %v9045 = vsel %vm9042, %v8999, %v9028
  %v9046 = vsel %vm9042, %v9001, %v9029
  %v9047 = vsel %vm9042, %v9003, %v9030
  %v9048 = vsel %vm9042, %v9005, %v9031
  %v9049 = vsel %vm9042, %v9007, %v9032
  %v9050 = vsel %vm9042, %v9009, %v9033
  %v9051 = vsel %vm9042, %v9011, %v9034
  %v9052 = vsel %vm9042, %v9013, %v9035
  %v9053 = vsel %vm9042, %v9015, %v9036
  %v9054 = vsel %vm9042, %v9017, %v9037
  %v9055 = vsel %vm9042, %v9019, %v9038
  %v9056 = vsel %vm9042, %v9021, %v9039
  %v9057 = vsel %vm9042, %v9023, %v9040
  %v9058 = vsel %vm9042, %v9025, %v9041
  %v9075 = vmax.f32 %v8962, %v9043
  %v9076 = vmax.f32 %v8963, %v9044
  %v9077 = vmax.f32 %v8964, %v9045
  %v9078 = vmax.f32 %v8965, %v9046
  %v9079 = vmax.f32 %v8966, %v9047
  %v9080 = vmax.f32 %v8967, %v9048
  %v9081 = vmax.f32 %v8968, %v9049
  %v9082 = vmax.f32 %v8969, %v9050
  %v9083 = vmax.f32 %v8970, %v9051
  %v9084 = vmax.f32 %v8971, %v9052
  %v9085 = vmax.f32 %v8972, %v9053
  %v9086 = vmax.f32 %v8973, %v9054
  %v9087 = vmax.f32 %v8974, %v9055
  %v9088 = vmax.f32 %v8975, %v9056
  %v9089 = vmax.f32 %v8976, %v9057
  %v9090 = vmax.f32 %v8977, %v9058
  %v9091 = vmax.f32 %v9075, %v9076
  %v9092 = vmax.f32 %v9077, %v9078
  %v9093 = vmax.f32 %v9079, %v9080
  %v9094 = vmax.f32 %v9081, %v9082
  %v9095 = vmax.f32 %v9083, %v9084
  %v9096 = vmax.f32 %v9085, %v9086
  %v9097 = vmax.f32 %v9087, %v9088
  %v9098 = vmax.f32 %v9089, %v9090
  %v9101 = vlaneseq
  %v9102 = vshrl.u32 %v9101, 7
  %v9103 = vsub.s32 0, %v9102
  %v9104 = vrot.slane %v9091, %v9103
  %v9105 = vlaneseq
  %v9106 = vshrl.u32 %v9105, 7
  %v9107 = vsub.s32 1, %v9106
  %v9108 = vrot.slane %v9091, %v9107
  %v9109 = vlaneseq
  %v9110 = vshrl.u32 %v9109, 7
  %v9111 = vsub.s32 2, %v9110
  %v9112 = vrot.slane %v9091, %v9111
  %v9113 = vlaneseq
  %v9114 = vshrl.u32 %v9113, 7
  %v9115 = vsub.s32 0, %v9114
  %v9116 = vrot.slane %v9095, %v9115
  %v9117 = vlaneseq
  %v9118 = vshrl.u32 %v9117, 7
  %v9119 = vsub.s32 1, %v9118
  %v9120 = vrot.slane %v9095, %v9119
  %v9121 = vlaneseq
  %v9122 = vshrl.u32 %v9121, 7
  %v9123 = vsub.s32 2, %v9122
  %v9124 = vrot.slane %v9095, %v9123
  %v9131 = vpack.c.bf16 %v9104, %v9104
  %v9132 = vpack.c.bf16 %v9108, %v9108
  %v9133 = vpack.c.bf16 %v9112, %v9112
  %v9134 = vpack.c.bf16 %v9116, %v9116
  %v9135 = vpack.c.bf16 %v9120, %v9120
  %v9136 = vpack.c.bf16 %v9124, %v9124
  %v9137 = vld [vmem:[%s5] sm:$0xff]
  %v9138 = vld [vmem:[%s5 + $0x8] sm:$0xff]
  %v9139 = vld [vmem:[%s5 + $0x10] sm:$0xff]
  %v9140 = vld [vmem:[%s5 + $0x18] sm:$0xff]
  %v9141 = vld [vmem:[%s5 + $0x20] sm:$0xff]
  %v9142 = vld [vmem:[%s5 + $0x28] sm:$0xff]
  %v9143 = vld [vmem:[%s5 + $0x30] sm:$0xff]
  %v9144 = vld [vmem:[%s5 + $0x38] sm:$0xff]
  %v9145 = vld [vmem:[%s5 + $0x40] sm:$0xff]
  %v9146 = vld [vmem:[%s5 + $0x48] sm:$0xff]
  %v9147 = vld [vmem:[%s5 + $0x50] sm:$0xff]
  %v9148 = vld [vmem:[%s5 + $0x58] sm:$0xff]
  %v9149 = vld [vmem:[%s5 + $0x60] sm:$0xff]
  %v9150 = vld [vmem:[%s5 + $0x68] sm:$0xff]
  %v9151 = vld [vmem:[%s5 + $0x70] sm:$0xff]
  %v9152 = vld [vmem:[%s5 + $0x78] sm:$0xff]
  %v9153 = vld [vmem:[%s5 + $0x80] sm:$0xff]
  %v9154 = vld [vmem:[%s5 + $0x88] sm:$0xff]
  %v9155 = vld [vmem:[%s5 + $0x90] sm:$0xff]
  %v9156 = vld [vmem:[%s5 + $0x98] sm:$0xff]
  %v9157 = vld [vmem:[%s5 + $0xa0] sm:$0xff]
  %v9158 = vld [vmem:[%s5 + $0xa8] sm:$0xff]
  %v9159 = vld [vmem:[%s5 + $0xb0] sm:$0xff]
  %v9160 = vld [vmem:[%s5 + $0xb8] sm:$0xff]
  %v9161 = vld [vmem:[%s5 + $0xc0] sm:$0xff]
  %v9162 = vld [vmem:[%s5 + $0xc8] sm:$0xff]
  %v9163 = vld [vmem:[%s5 + $0xd0] sm:$0xff]
  %v9164 = vld [vmem:[%s5 + $0xd8] sm:$0xff]
  %v9165 = vld [vmem:[%s5 + $0xe0] sm:$0xff]
  %v9166 = vld [vmem:[%s5 + $0xe8] sm:$0xff]
  %v9167 = vld [vmem:[%s5 + $0xf0] sm:$0xff]
  %v9168 = vld [vmem:[%s5 + $0xf8] sm:$0xff]
  %v9169 = vld [vmem:[%s5 + $0x100] sm:$0xff]
  %v9170 = vld [vmem:[%s5 + $0x108] sm:$0xff]
  %v9171 = vld [vmem:[%s5 + $0x110] sm:$0xff]
  %v9172 = vld [vmem:[%s5 + $0x118] sm:$0xff]
  %v9173 = vld [vmem:[%s5 + $0x120] sm:$0xff]
  %v9174 = vld [vmem:[%s5 + $0x128] sm:$0xff]
  %v9175 = vld [vmem:[%s5 + $0x130] sm:$0xff]
  %v9176 = vld [vmem:[%s5 + $0x138] sm:$0xff]
  %v9177 = vld [vmem:[%s5 + $0x140] sm:$0xff]
  %v9178 = vld [vmem:[%s5 + $0x148] sm:$0xff]
  %v9179 = vld [vmem:[%s5 + $0x150] sm:$0xff]
  %v9180 = vld [vmem:[%s5 + $0x158] sm:$0xff]
  %v9181 = vld [vmem:[%s5 + $0x160] sm:$0xff]
  %v9182 = vld [vmem:[%s5 + $0x168] sm:$0xff]
  %v9183 = vld [vmem:[%s5 + $0x170] sm:$0xff]
  %v9184 = vld [vmem:[%s5 + $0x178] sm:$0xff]
  %v9185 = vld [vmem:[%s5 + $0x180] sm:$0xff]
  %v9186 = vld [vmem:[%s5 + $0x188] sm:$0xff]
  %v9187 = vld [vmem:[%s5 + $0x190] sm:$0xff]
  %v9188 = vld [vmem:[%s5 + $0x198] sm:$0xff]
  %v9189 = vld [vmem:[%s5 + $0x1a0] sm:$0xff]
  %v9190 = vld [vmem:[%s5 + $0x1a8] sm:$0xff]
  %v9191 = vld [vmem:[%s5 + $0x1b0] sm:$0xff]
  %v9192 = vld [vmem:[%s5 + $0x1b8] sm:$0xff]
  %v9193 = vld [vmem:[%s5 + $0x1c0] sm:$0xff]
  %v9194 = vld [vmem:[%s5 + $0x1c8] sm:$0xff]
  %v9195 = vld [vmem:[%s5 + $0x1d0] sm:$0xff]
  %v9196 = vld [vmem:[%s5 + $0x1d8] sm:$0xff]
  %v9197 = vld [vmem:[%s5 + $0x1e0] sm:$0xff]
  %v9198 = vld [vmem:[%s5 + $0x1e8] sm:$0xff]
  %v9199 = vld [vmem:[%s5 + $0x1f0] sm:$0xff]
  %v9200 = vld [vmem:[%s5 + $0x1f8] sm:$0xff]
  %v9201 = vld [vmem:[%s5 + $0x200] sm:$0xff]
  %v9202 = vld [vmem:[%s5 + $0x208] sm:$0xff]
  %v9203 = vld [vmem:[%s5 + $0x210] sm:$0xff]
  %v9204 = vld [vmem:[%s5 + $0x218] sm:$0xff]
  %v9205 = vld [vmem:[%s5 + $0x220] sm:$0xff]
  %v9206 = vld [vmem:[%s5 + $0x228] sm:$0xff]
  %v9207 = vld [vmem:[%s5 + $0x230] sm:$0xff]
  %v9208 = vld [vmem:[%s5 + $0x238] sm:$0xff]
  %v9209 = vld [vmem:[%s5 + $0x240] sm:$0xff]
  %v9210 = vld [vmem:[%s5 + $0x248] sm:$0xff]
  %v9211 = vld [vmem:[%s5 + $0x250] sm:$0xff]
  %v9212 = vld [vmem:[%s5 + $0x258] sm:$0xff]
  %v9213 = vld [vmem:[%s5 + $0x260] sm:$0xff]
  %v9214 = vld [vmem:[%s5 + $0x268] sm:$0xff]
  %v9215 = vld [vmem:[%s5 + $0x270] sm:$0xff]
  %v9216 = vld [vmem:[%s5 + $0x278] sm:$0xff]
  %v9217 = vld [vmem:[%s5 + $0x280] sm:$0xff]
  %v9218 = vld [vmem:[%s5 + $0x288] sm:$0xff]
  %v9219 = vld [vmem:[%s5 + $0x290] sm:$0xff]
  %v9220 = vld [vmem:[%s5 + $0x298] sm:$0xff]
  %v9221 = vld [vmem:[%s5 + $0x2a0] sm:$0xff]
  %v9222 = vld [vmem:[%s5 + $0x2a8] sm:$0xff]
  %v9223 = vld [vmem:[%s5 + $0x2b0] sm:$0x77]
  %v9224 = vld [vmem:[%s5 + $0x2b8] sm:$0x77]
  %v9227 = vlaneseq
  %v9228 = vshrl.u32 %v9227, 7
  %v9229 = vsub.s32 0, %v9228
  %v9230 = vrot.slane %v9092, %v9229
  %v9231 = vlaneseq
  %v9232 = vshrl.u32 %v9231, 7
  %v9233 = vsub.s32 1, %v9232
  %v9234 = vrot.slane %v9092, %v9233
  %v9235 = vlaneseq
  %v9236 = vshrl.u32 %v9235, 7
  %v9237 = vsub.s32 2, %v9236
  %v9238 = vrot.slane %v9092, %v9237
  %v9239 = vlaneseq
  %v9240 = vshrl.u32 %v9239, 7
  %v9241 = vsub.s32 0, %v9240
  %v9242 = vrot.slane %v9096, %v9241
  %v9243 = vlaneseq
  %v9244 = vshrl.u32 %v9243, 7
  %v9245 = vsub.s32 1, %v9244
  %v9246 = vrot.slane %v9096, %v9245
  %v9247 = vlaneseq
  %v9248 = vshrl.u32 %v9247, 7
  %v9249 = vsub.s32 2, %v9248
  %v9250 = vrot.slane %v9096, %v9249
  %v9257 = vpack.c.bf16 %v9230, %v9230
  %v9258 = vpack.c.bf16 %v9234, %v9234
  %v9259 = vpack.c.bf16 %v9238, %v9238
  %v9260 = vpack.c.bf16 %v9242, %v9242
  %v9261 = vpack.c.bf16 %v9246, %v9246
  %v9262 = vpack.c.bf16 %v9250, %v9250
  %s9263 = scalar_lea.vmem %s5, 704
  %v9264 = vld [vmem:[%s9263] sm:$0xff]
  %v9265 = vld [vmem:[%s9263 + $0x8] sm:$0xff]
  %v9266 = vld [vmem:[%s9263 + $0x10] sm:$0xff]
  %v9267 = vld [vmem:[%s9263 + $0x18] sm:$0xff]
  %v9268 = vld [vmem:[%s9263 + $0x20] sm:$0xff]
  %v9269 = vld [vmem:[%s9263 + $0x28] sm:$0xff]
  %v9270 = vld [vmem:[%s9263 + $0x30] sm:$0xff]
  %v9271 = vld [vmem:[%s9263 + $0x38] sm:$0xff]
  %v9272 = vld [vmem:[%s9263 + $0x40] sm:$0xff]
  %v9273 = vld [vmem:[%s9263 + $0x48] sm:$0xff]
  %v9274 = vld [vmem:[%s9263 + $0x50] sm:$0xff]
  %v9275 = vld [vmem:[%s9263 + $0x58] sm:$0xff]
  %v9276 = vld [vmem:[%s9263 + $0x60] sm:$0xff]
  %v9277 = vld [vmem:[%s9263 + $0x68] sm:$0xff]
  %v9278 = vld [vmem:[%s9263 + $0x70] sm:$0xff]
  %v9279 = vld [vmem:[%s9263 + $0x78] sm:$0xff]
  %v9280 = vld [vmem:[%s9263 + $0x80] sm:$0xff]
  %v9281 = vld [vmem:[%s9263 + $0x88] sm:$0xff]
  %v9282 = vld [vmem:[%s9263 + $0x90] sm:$0xff]
  %v9283 = vld [vmem:[%s9263 + $0x98] sm:$0xff]
  %v9284 = vld [vmem:[%s9263 + $0xa0] sm:$0xff]
  %v9285 = vld [vmem:[%s9263 + $0xa8] sm:$0xff]
  %v9286 = vld [vmem:[%s9263 + $0xb0] sm:$0xff]
  %v9287 = vld [vmem:[%s9263 + $0xb8] sm:$0xff]
  %v9288 = vld [vmem:[%s9263 + $0xc0] sm:$0xff]
  %v9289 = vld [vmem:[%s9263 + $0xc8] sm:$0xff]
  %v9290 = vld [vmem:[%s9263 + $0xd0] sm:$0xff]
  %v9291 = vld [vmem:[%s9263 + $0xd8] sm:$0xff]
  %v9292 = vld [vmem:[%s9263 + $0xe0] sm:$0xff]
  %v9293 = vld [vmem:[%s9263 + $0xe8] sm:$0xff]
  %v9294 = vld [vmem:[%s9263 + $0xf0] sm:$0xff]
  %v9295 = vld [vmem:[%s9263 + $0xf8] sm:$0xff]
  %v9296 = vld [vmem:[%s9263 + $0x100] sm:$0xff]
  %v9297 = vld [vmem:[%s9263 + $0x108] sm:$0xff]
  %v9298 = vld [vmem:[%s9263 + $0x110] sm:$0xff]
  %v9299 = vld [vmem:[%s9263 + $0x118] sm:$0xff]
  %v9300 = vld [vmem:[%s9263 + $0x120] sm:$0xff]
  %v9301 = vld [vmem:[%s9263 + $0x128] sm:$0xff]
  %v9302 = vld [vmem:[%s9263 + $0x130] sm:$0xff]
  %v9303 = vld [vmem:[%s9263 + $0x138] sm:$0xff]
  %v9304 = vld [vmem:[%s9263 + $0x140] sm:$0xff]
  %v9305 = vld [vmem:[%s9263 + $0x148] sm:$0xff]
  %v9306 = vld [vmem:[%s9263 + $0x150] sm:$0xff]
  %v9307 = vld [vmem:[%s9263 + $0x158] sm:$0xff]
  %v9308 = vld [vmem:[%s9263 + $0x160] sm:$0xff]
  %v9309 = vld [vmem:[%s9263 + $0x168] sm:$0xff]
  %v9310 = vld [vmem:[%s9263 + $0x170] sm:$0xff]
  %v9311 = vld [vmem:[%s9263 + $0x178] sm:$0xff]
  %v9312 = vld [vmem:[%s9263 + $0x180] sm:$0xff]
  %v9313 = vld [vmem:[%s9263 + $0x188] sm:$0xff]
  %v9314 = vld [vmem:[%s9263 + $0x190] sm:$0xff]
  %v9315 = vld [vmem:[%s9263 + $0x198] sm:$0xff]
  %v9316 = vld [vmem:[%s9263 + $0x1a0] sm:$0xff]
  %v9317 = vld [vmem:[%s9263 + $0x1a8] sm:$0xff]
  %v9318 = vld [vmem:[%s9263 + $0x1b0] sm:$0xff]
  %v9319 = vld [vmem:[%s9263 + $0x1b8] sm:$0xff]
  %v9320 = vld [vmem:[%s9263 + $0x1c0] sm:$0xff]
  %v9321 = vld [vmem:[%s9263 + $0x1c8] sm:$0xff]
  %v9322 = vld [vmem:[%s9263 + $0x1d0] sm:$0xff]
  %v9323 = vld [vmem:[%s9263 + $0x1d8] sm:$0xff]
  %v9324 = vld [vmem:[%s9263 + $0x1e0] sm:$0xff]
  %v9325 = vld [vmem:[%s9263 + $0x1e8] sm:$0xff]
  %v9326 = vld [vmem:[%s9263 + $0x1f0] sm:$0xff]
  %v9327 = vld [vmem:[%s9263 + $0x1f8] sm:$0xff]
  %v9328 = vld [vmem:[%s9263 + $0x200] sm:$0xff]
  %v9329 = vld [vmem:[%s9263 + $0x208] sm:$0xff]
  %v9330 = vld [vmem:[%s9263 + $0x210] sm:$0xff]
  %v9331 = vld [vmem:[%s9263 + $0x218] sm:$0xff]
  %v9332 = vld [vmem:[%s9263 + $0x220] sm:$0xff]
  %v9333 = vld [vmem:[%s9263 + $0x228] sm:$0xff]
  %v9334 = vld [vmem:[%s9263 + $0x230] sm:$0xff]
  %v9335 = vld [vmem:[%s9263 + $0x238] sm:$0xff]
  %v9336 = vld [vmem:[%s9263 + $0x240] sm:$0xff]
  %v9337 = vld [vmem:[%s9263 + $0x248] sm:$0xff]
  %v9338 = vld [vmem:[%s9263 + $0x250] sm:$0xff]
  %v9339 = vld [vmem:[%s9263 + $0x258] sm:$0xff]
  %v9340 = vld [vmem:[%s9263 + $0x260] sm:$0xff]
  %v9341 = vld [vmem:[%s9263 + $0x268] sm:$0xff]
  %v9342 = vld [vmem:[%s9263 + $0x270] sm:$0xff]
  %v9343 = vld [vmem:[%s9263 + $0x278] sm:$0xff]
  %v9344 = vld [vmem:[%s9263 + $0x280] sm:$0xff]
  %v9345 = vld [vmem:[%s9263 + $0x288] sm:$0xff]
  %v9346 = vld [vmem:[%s9263 + $0x290] sm:$0xff]
  %v9347 = vld [vmem:[%s9263 + $0x298] sm:$0xff]
  %v9348 = vld [vmem:[%s9263 + $0x2a0] sm:$0xff]
  %v9349 = vld [vmem:[%s9263 + $0x2a8] sm:$0xff]
  %v9350 = vld [vmem:[%s9263 + $0x2b0] sm:$0x77]
  %v9351 = vld [vmem:[%s9263 + $0x2b8] sm:$0x77]
  %v9358 = vunpack.c.l.b16 %v9257
  %v9359 = vunpack.c.l.b16 %v9258
  %v9360 = vunpack.c.l.b16 %v9259
  %v9361 = vunpack.c.l.b16 %v9260
  %v9362 = vunpack.c.l.b16 %v9261
  %v9363 = vunpack.c.l.b16 %v9262
  %v9364 = vrot.slane %v9361, 7
  %vm9365 = vcmask 1041409
  %v9366 = vsel %vm9365, %v9364, %v9358
  %v9367 = vrot.slane %v9362, 7
  %v9368 = vsel %vm9365, %v9367, %v9359
  %v9369 = vrot.slane %v9363, 7
  %v9370 = vsel %vm9365, %v9369, %v9360
  %v9371 = vpack.c.b16 %v9366, %v9366
  %v9372 = vpack.c.b16 %v9368, %v9368
  %v9373 = vpack.c.b16 %v9370, %v9370
  %v9464 = vunpack.c.l.b16 %v9264
  %v9465 = vunpack.c.h.b16 %v9264
  %v9466 = vunpack.c.l.b16 %v9265
  %v9467 = vunpack.c.h.b16 %v9265
  %v9468 = vunpack.c.l.b16 %v9266
  %v9469 = vunpack.c.h.b16 %v9266
  %v9470 = vunpack.c.l.b16 %v9267
  %v9471 = vunpack.c.h.b16 %v9267
  %v9472 = vunpack.c.l.b16 %v9268
  %v9473 = vunpack.c.h.b16 %v9268
  %v9474 = vunpack.c.l.b16 %v9269
  %v9475 = vunpack.c.h.b16 %v9269
  %v9476 = vunpack.c.l.b16 %v9270
  %v9477 = vunpack.c.h.b16 %v9270
  %v9478 = vunpack.c.l.b16 %v9271
  %v9479 = vunpack.c.h.b16 %v9271
  %v9480 = vunpack.c.l.b16 %v9272
  %v9481 = vunpack.c.h.b16 %v9272
  %v9482 = vunpack.c.l.b16 %v9273
  %v9483 = vunpack.c.h.b16 %v9273
  %v9484 = vunpack.c.l.b16 %v9274
  %v9485 = vunpack.c.h.b16 %v9274
  %v9486 = vunpack.c.l.b16 %v9275
  %v9487 = vunpack.c.h.b16 %v9275
  %v9488 = vunpack.c.l.b16 %v9276
  %v9489 = vunpack.c.h.b16 %v9276
  %v9490 = vunpack.c.l.b16 %v9277
  %v9491 = vunpack.c.h.b16 %v9277
  %v9492 = vunpack.c.l.b16 %v9278
  %v9493 = vunpack.c.h.b16 %v9278
  %v9494 = vunpack.c.l.b16 %v9279
  %v9495 = vunpack.c.h.b16 %v9279
  %v9496 = vunpack.c.l.b16 %v9280
  %v9497 = vunpack.c.h.b16 %v9280
  %v9498 = vunpack.c.l.b16 %v9281
  %v9499 = vunpack.c.h.b16 %v9281
  %v9500 = vunpack.c.l.b16 %v9282
  %v9501 = vunpack.c.h.b16 %v9282
  %v9502 = vunpack.c.l.b16 %v9283
  %v9503 = vunpack.c.h.b16 %v9283
  %v9504 = vunpack.c.l.b16 %v9284
  %v9505 = vunpack.c.h.b16 %v9284
  %v9506 = vunpack.c.l.b16 %v9285
  %v9507 = vunpack.c.h.b16 %v9285
  %v9508 = vunpack.c.l.b16 %v9286
  %v9509 = vunpack.c.h.b16 %v9286
  %v9510 = vunpack.c.l.b16 %v9287
  %v9511 = vunpack.c.h.b16 %v9287
  %v9512 = vunpack.c.l.b16 %v9288
  %v9513 = vunpack.c.h.b16 %v9288
  %v9514 = vunpack.c.l.b16 %v9289
  %v9515 = vunpack.c.h.b16 %v9289
  %v9516 = vunpack.c.l.b16 %v9290
  %v9517 = vunpack.c.h.b16 %v9290
  %v9518 = vunpack.c.l.b16 %v9291
  %v9519 = vunpack.c.h.b16 %v9291
  %v9520 = vunpack.c.l.b16 %v9292
  %v9521 = vunpack.c.h.b16 %v9292
  %v9522 = vunpack.c.l.b16 %v9293
  %v9523 = vunpack.c.h.b16 %v9293
  %v9524 = vunpack.c.l.b16 %v9294
  %v9525 = vunpack.c.h.b16 %v9294
  %v9526 = vunpack.c.l.b16 %v9295
  %v9527 = vunpack.c.h.b16 %v9295
  %v9528 = vunpack.c.l.b16 %v9296
  %v9529 = vunpack.c.h.b16 %v9296
  %v9530 = vunpack.c.l.b16 %v9297
  %v9531 = vunpack.c.h.b16 %v9297
  %v9532 = vunpack.c.l.b16 %v9298
  %v9533 = vunpack.c.h.b16 %v9298
  %v9534 = vunpack.c.l.b16 %v9299
  %v9535 = vunpack.c.h.b16 %v9299
  %v9536 = vunpack.c.l.b16 %v9300
  %v9537 = vunpack.c.h.b16 %v9300
  %v9538 = vunpack.c.l.b16 %v9301
  %v9539 = vunpack.c.h.b16 %v9301
  %v9540 = vunpack.c.l.b16 %v9302
  %v9541 = vunpack.c.h.b16 %v9302
  %v9542 = vunpack.c.l.b16 %v9303
  %v9543 = vunpack.c.h.b16 %v9303
  %v9544 = vunpack.c.l.b16 %v9304
  %v9545 = vunpack.c.h.b16 %v9304
  %v9546 = vunpack.c.l.b16 %v9305
  %v9547 = vunpack.c.h.b16 %v9305
  %v9548 = vunpack.c.l.b16 %v9306
  %v9549 = vunpack.c.h.b16 %v9306
  %v9550 = vunpack.c.l.b16 %v9307
  %v9551 = vunpack.c.h.b16 %v9307
  %v9552 = vunpack.c.l.b16 %v9308
  %v9553 = vunpack.c.h.b16 %v9308
  %v9554 = vunpack.c.l.b16 %v9309
  %v9555 = vunpack.c.h.b16 %v9309
  %v9556 = vunpack.c.l.b16 %v9310
  %v9557 = vunpack.c.h.b16 %v9310
  %v9558 = vunpack.c.l.b16 %v9311
  %v9559 = vunpack.c.h.b16 %v9311
  %v9560 = vunpack.c.l.b16 %v9312
  %v9561 = vunpack.c.h.b16 %v9312
  %v9562 = vunpack.c.l.b16 %v9313
  %v9563 = vunpack.c.h.b16 %v9313
  %v9564 = vunpack.c.l.b16 %v9314
  %v9565 = vunpack.c.h.b16 %v9314
  %v9566 = vunpack.c.l.b16 %v9315
  %v9567 = vunpack.c.h.b16 %v9315
  %v9568 = vunpack.c.l.b16 %v9316
  %v9569 = vunpack.c.h.b16 %v9316
  %v9570 = vunpack.c.l.b16 %v9317
  %v9571 = vunpack.c.h.b16 %v9317
  %v9572 = vunpack.c.l.b16 %v9318
  %v9573 = vunpack.c.h.b16 %v9318
  %v9574 = vunpack.c.l.b16 %v9319
  %v9575 = vunpack.c.h.b16 %v9319
  %v9576 = vunpack.c.l.b16 %v9320
  %v9577 = vunpack.c.h.b16 %v9320
  %v9578 = vunpack.c.l.b16 %v9321
  %v9579 = vunpack.c.h.b16 %v9321
  %v9580 = vunpack.c.l.b16 %v9322
  %v9581 = vunpack.c.h.b16 %v9322
  %v9582 = vunpack.c.l.b16 %v9323
  %v9583 = vunpack.c.h.b16 %v9323
  %v9584 = vunpack.c.l.b16 %v9324
  %v9585 = vunpack.c.h.b16 %v9324
  %v9586 = vunpack.c.l.b16 %v9325
  %v9587 = vunpack.c.h.b16 %v9325
  %v9588 = vunpack.c.l.b16 %v9326
  %v9589 = vunpack.c.h.b16 %v9326
  %v9590 = vunpack.c.l.b16 %v9327
  %v9591 = vunpack.c.h.b16 %v9327
  %v9592 = vunpack.c.l.b16 %v9328
  %v9593 = vunpack.c.h.b16 %v9328
  %v9594 = vunpack.c.l.b16 %v9329
  %v9595 = vunpack.c.h.b16 %v9329
  %v9596 = vunpack.c.l.b16 %v9330
  %v9597 = vunpack.c.h.b16 %v9330
  %v9598 = vunpack.c.l.b16 %v9331
  %v9599 = vunpack.c.h.b16 %v9331
  %v9600 = vunpack.c.l.b16 %v9332
  %v9601 = vunpack.c.h.b16 %v9332
  %v9602 = vunpack.c.l.b16 %v9333
  %v9603 = vunpack.c.h.b16 %v9333
  %v9604 = vunpack.c.l.b16 %v9334
  %v9605 = vunpack.c.h.b16 %v9334
  %v9606 = vunpack.c.l.b16 %v9335
  %v9607 = vunpack.c.h.b16 %v9335
  %v9608 = vunpack.c.l.b16 %v9336
  %v9609 = vunpack.c.h.b16 %v9336
  %v9610 = vunpack.c.l.b16 %v9337
  %v9611 = vunpack.c.h.b16 %v9337
  %v9612 = vunpack.c.l.b16 %v9338
  %v9613 = vunpack.c.h.b16 %v9338
  %v9614 = vunpack.c.l.b16 %v9339
  %v9615 = vunpack.c.h.b16 %v9339
  %v9616 = vunpack.c.l.b16 %v9340
  %v9617 = vunpack.c.h.b16 %v9340
  %v9618 = vunpack.c.l.b16 %v9341
  %v9619 = vunpack.c.h.b16 %v9341
  %v9620 = vunpack.c.l.b16 %v9342
  %v9621 = vunpack.c.h.b16 %v9342
  %v9622 = vunpack.c.l.b16 %v9343
  %v9623 = vunpack.c.h.b16 %v9343
  %v9624 = vunpack.c.l.b16 %v9344
  %v9625 = vunpack.c.h.b16 %v9344
  %v9626 = vunpack.c.l.b16 %v9345
  %v9627 = vunpack.c.h.b16 %v9345
  %v9628 = vunpack.c.l.b16 %v9346
  %v9629 = vunpack.c.h.b16 %v9346
  %v9630 = vunpack.c.l.b16 %v9347
  %v9631 = vunpack.c.h.b16 %v9347
  %v9632 = vunpack.c.l.b16 %v9348
  %v9633 = vunpack.c.h.b16 %v9348
  %v9634 = vunpack.c.l.b16 %v9349
  %v9635 = vunpack.c.h.b16 %v9349
  %v9636 = vunpack.c.l.b16 %v9350
  %v9637 = vunpack.c.h.b16 %v9350
  %v9638 = vunpack.c.l.b16 %v9351
  %v9639 = vunpack.c.h.b16 %v9351
  %v9640 = vpack.c.b16 %v9468, %v9464
  %v9641 = vpack.c.b16 %v9469, %v9465
  %v9642 = vpack.c.b16 %v9470, %v9466
  %v9643 = vpack.c.b16 %v9471, %v9467
  %v9644 = vpack.c.b16 %v9476, %v9472
  %v9645 = vpack.c.b16 %v9477, %v9473
  %v9646 = vpack.c.b16 %v9478, %v9474
  %v9647 = vpack.c.b16 %v9479, %v9475
  %v9648 = vpack.c.b16 %v9484, %v9480
  %v9649 = vpack.c.b16 %v9485, %v9481
  %v9650 = vpack.c.b16 %v9486, %v9482
  %v9651 = vpack.c.b16 %v9487, %v9483
  %v9652 = vpack.c.b16 %v9492, %v9488
  %v9653 = vpack.c.b16 %v9493, %v9489
  %v9654 = vpack.c.b16 %v9494, %v9490
  %v9655 = vpack.c.b16 %v9495, %v9491
  %v9656 = vpack.c.b16 %v9500, %v9496
  %v9657 = vpack.c.b16 %v9501, %v9497
  %v9658 = vpack.c.b16 %v9502, %v9498
  %v9659 = vpack.c.b16 %v9503, %v9499
  %v9660 = vpack.c.b16 %v9508, %v9504
  %v9661 = vpack.c.b16 %v9509, %v9505
  %v9662 = vpack.c.b16 %v9510, %v9506
  %v9663 = vpack.c.b16 %v9511, %v9507
  %v9664 = vpack.c.b16 %v9516, %v9512
  %v9665 = vpack.c.b16 %v9517, %v9513
  %v9666 = vpack.c.b16 %v9518, %v9514
  %v9667 = vpack.c.b16 %v9519, %v9515
  %v9668 = vpack.c.b16 %v9524, %v9520
  %v9669 = vpack.c.b16 %v9525, %v9521
  %v9670 = vpack.c.b16 %v9526, %v9522
  %v9671 = vpack.c.b16 %v9527, %v9523
  %v9672 = vpack.c.b16 %v9532, %v9528
  %v9673 = vpack.c.b16 %v9533, %v9529
  %v9674 = vpack.c.b16 %v9534, %v9530
  %v9675 = vpack.c.b16 %v9535, %v9531
  %v9676 = vpack.c.b16 %v9540, %v9536
  %v9677 = vpack.c.b16 %v9541, %v9537
  %v9678 = vpack.c.b16 %v9542, %v9538
  %v9679 = vpack.c.b16 %v9543, %v9539
  %v9680 = vpack.c.b16 %v9548, %v9544
  %v9681 = vpack.c.b16 %v9549, %v9545
  %v9682 = vpack.c.b16 %v9550, %v9546
  %v9683 = vpack.c.b16 %v9551, %v9547
  %v9684 = vpack.c.b16 %v9556, %v9552
  %v9685 = vpack.c.b16 %v9557, %v9553
  %v9686 = vpack.c.b16 %v9558, %v9554
  %v9687 = vpack.c.b16 %v9559, %v9555
  %v9688 = vpack.c.b16 %v9564, %v9560
  %v9689 = vpack.c.b16 %v9565, %v9561
  %v9690 = vpack.c.b16 %v9566, %v9562
  %v9691 = vpack.c.b16 %v9567, %v9563
  %v9692 = vpack.c.b16 %v9572, %v9568
  %v9693 = vpack.c.b16 %v9573, %v9569
  %v9694 = vpack.c.b16 %v9574, %v9570
  %v9695 = vpack.c.b16 %v9575, %v9571
  %v9696 = vpack.c.b16 %v9580, %v9576
  %v9697 = vpack.c.b16 %v9581, %v9577
  %v9698 = vpack.c.b16 %v9582, %v9578
  %v9699 = vpack.c.b16 %v9583, %v9579
  %v9700 = vpack.c.b16 %v9588, %v9584
  %v9701 = vpack.c.b16 %v9589, %v9585
  %v9702 = vpack.c.b16 %v9590, %v9586
  %v9703 = vpack.c.b16 %v9591, %v9587
  %v9704 = vpack.c.b16 %v9596, %v9592
  %v9705 = vpack.c.b16 %v9597, %v9593
  %v9706 = vpack.c.b16 %v9598, %v9594
  %v9707 = vpack.c.b16 %v9599, %v9595
  %v9708 = vpack.c.b16 %v9604, %v9600
  %v9709 = vpack.c.b16 %v9605, %v9601
  %v9710 = vpack.c.b16 %v9606, %v9602
  %v9711 = vpack.c.b16 %v9607, %v9603
  %v9712 = vpack.c.b16 %v9612, %v9608
  %v9713 = vpack.c.b16 %v9613, %v9609
  %v9714 = vpack.c.b16 %v9614, %v9610
  %v9715 = vpack.c.b16 %v9615, %v9611
  %v9716 = vpack.c.b16 %v9620, %v9616
  %v9717 = vpack.c.b16 %v9621, %v9617
  %v9718 = vpack.c.b16 %v9622, %v9618
  %v9719 = vpack.c.b16 %v9623, %v9619
  %v9720 = vpack.c.b16 %v9628, %v9624
  %v9721 = vpack.c.b16 %v9629, %v9625
  %v9722 = vpack.c.b16 %v9630, %v9626
  %v9723 = vpack.c.b16 %v9631, %v9627
  %v9724 = vpack.c.b16 %v9636, %v9632
  %v9725 = vpack.c.b16 %v9637, %v9633
  %v9726 = vpack.c.b16 %v9638, %v9634
  %v9727 = vpack.c.b16 %v9639, %v9635
  %vm9812 = vcmask 769024
  %v9814 = vsel %vm9812, %v9373, 0
  %vm9816 = vcmask 1046528
  %v9818 = vsel %vm9816, %v9724, 0
  %v9821 = vsel %vm9816, %v9725, 0
  %v9824 = vsel %vm9816, %v9726, 0
  %v9827 = vsel %vm9816, %v9727, 0
  %9829 = vmatprep.subr.bf16.mxu0 %v9641
  %9830 = vmatpush1.bf16.msra.mxu0 %v9640
  %9831 = vmatprep.subr.bf16.mxu0 %v9645
  %9832 = vmatpush1.bf16.msra.mxu0 %v9644
  %9833 = vmatprep.subr.bf16.mxu0 %v9649
  %9834 = vmatpush1.bf16.msra.mxu0 %v9648
  %9835 = vmatprep.subr.bf16.mxu0 %v9653
  %9836 = vmatpush1.bf16.msra.mxu0 %v9652
  %9837 = vmatprep.subr.bf16.mxu0 %v9657
  %9838 = vmatpush1.bf16.msra.mxu0 %v9656
  %9839 = vmatprep.subr.bf16.mxu0 %v9661
  %9840 = vmatpush1.bf16.msra.mxu0 %v9660
  %9841 = vmatprep.subr.bf16.mxu0 %v9665
  %9842 = vmatpush1.bf16.msra.mxu0 %v9664
  %9843 = vmatprep.subr.bf16.mxu0 %v9669
  %9844 = vmatpush1.bf16.msra.mxu0 %v9668
  %9845 = vmatprep.subr.bf16.mxu0 %v9673
  %9846 = vmatpush1.bf16.msra.mxu0 %v9672
  %9847 = vmatprep.subr.bf16.mxu0 %v9677
  %9848 = vmatpush1.bf16.msra.mxu0 %v9676
  %9849 = vmatprep.subr.bf16.mxu0 %v9681
  %9850 = vmatpush1.bf16.msra.mxu0 %v9680
  %9851 = vmatprep.subr.bf16.mxu0 %v9685
  %9852 = vmatpush1.bf16.msra.mxu0 %v9684
  %9853 = vmatprep.subr.bf16.mxu0 %v9689
  %9854 = vmatpush1.bf16.msra.mxu0 %v9688
  %9855 = vmatprep.subr.bf16.mxu0 %v9693
  %9856 = vmatpush1.bf16.msra.mxu0 %v9692
  %9857 = vmatprep.subr.bf16.mxu0 %v9697
  %9858 = vmatpush1.bf16.msra.mxu0 %v9696
  %9859 = vmatprep.subr.bf16.mxu0 %v9701
  %9860 = vmatpush1.bf16.msra.mxu0 %v9700
  %9861 = vmatprep.mubr.bf16.mxu0 %v9372
  %9862 = vmatmul.mubr.bf16.gmra.mrb[0].mxu0 %v9371
  %v9863 = vpop.f32.mrb[0].mxu0
  %v9864 = vadd.f32 0.0, %v9863
  %v9865 = vpop.f32.mrb[0].mxu0
  %v9866 = vadd.f32 0.0, %v9865
  %v9867 = vpop.f32.mrb[0].mxu0
  %v9868 = vpop.f32.mrb[0].mxu0
  %9869 = vdwg.mxu0
  %9870 = vmatprep.subr.bf16.mxu0 %v9705
  %9871 = vmatpush1.bf16.msra.mxu0 %v9704
  %9872 = vmatprep.subr.bf16.mxu0 %v9709
  %9873 = vmatpush1.bf16.msra.mxu0 %v9708
  %9874 = vmatprep.subr.bf16.mxu0 %v9713
  %9875 = vmatpush1.bf16.msra.mxu0 %v9712
  %9876 = vmatprep.subr.bf16.mxu0 %v9717
  %9877 = vmatpush1.bf16.msra.mxu0 %v9716
  %9878 = vmatprep.subr.bf16.mxu0 %v9721
  %9879 = vmatpush1.bf16.msra.mxu0 %v9720
  %9880 = vmatprep.subr.bf16.mxu0 %v9821
  %9881 = vmatpush1.bf16.msra.mxu0 %v9818
  %9882 = vmatprep.subr.bf16.mxu0 0
  %9883 = vmatpush1.bf16.msra.mxu0 0
  %9884 = vmatprep.subr.bf16.mxu0 0
  %9885 = vmatpush1.bf16.msra.mxu0 0
  %9886 = vmatprep.subr.bf16.mxu0 0
  %9887 = vmatpush1.bf16.msra.mxu0 0
  %9888 = vmatprep.subr.bf16.mxu0 0
  %9889 = vmatpush1.bf16.msra.mxu0 0
  %9890 = vmatprep.subr.bf16.mxu0 0
  %9891 = vmatpush1.bf16.msra.mxu0 0
  %9892 = vmatprep.subr.bf16.mxu0 0
  %9893 = vmatpush1.bf16.msra.mxu0 0
  %9894 = vmatprep.subr.bf16.mxu0 0
  %9895 = vmatpush1.bf16.msra.mxu0 0
  %9896 = vmatprep.subr.bf16.mxu0 0
  %9897 = vmatpush1.bf16.msra.mxu0 0
  %9898 = vmatprep.subr.bf16.mxu0 0
  %9899 = vmatpush1.bf16.msra.mxu0 0
  %9900 = vmatprep.subr.bf16.mxu0 0
  %9901 = vmatpush1.bf16.msra.mxu0 0
  %9902 = vmatprep.mubr.bf16.mxu0 0
  %9903 = vmatmul.mubr.bf16.gmra.mrb[0].mxu0 %v9814
  %v9904 = vpop.f32.mrb[0].mxu0
  %v9905 = vadd.f32 %v9864, %v9904
  %v9906 = vpop.f32.mrb[0].mxu0
  %v9907 = vadd.f32 %v9866, %v9906
  %v9908 = vpop.f32.mrb[0].mxu0
  %v9909 = vpop.f32.mrb[0].mxu0
  %9910 = vdwg.mxu0
  %9911 = vmatprep.subr.bf16.mxu0 %v9643
  %9912 = vmatpush1.bf16.msra.mxu0 %v9642
  %9913 = vmatprep.subr.bf16.mxu0 %v9647
  %9914 = vmatpush1.bf16.msra.mxu0 %v9646
  %9915 = vmatprep.subr.bf16.mxu0 %v9651
  %9916 = vmatpush1.bf16.msra.mxu0 %v9650
  %9917 = vmatprep.subr.bf16.mxu0 %v9655
  %9918 = vmatpush1.bf16.msra.mxu0 %v9654
  %9919 = vmatprep.subr.bf16.mxu0 %v9659
  %9920 = vmatpush1.bf16.msra.mxu0 %v9658
  %9921 = vmatprep.subr.bf16.mxu0 %v9663
  %9922 = vmatpush1.bf16.msra.mxu0 %v9662
  %9923 = vmatprep.subr.bf16.mxu0 %v9667
  %9924 = vmatpush1.bf16.msra.mxu0 %v9666
  %9925 = vmatprep.subr.bf16.mxu0 %v9671
  %9926 = vmatpush1.bf16.msra.mxu0 %v9670
  %9927 = vmatprep.subr.bf16.mxu0 %v9675
  %9928 = vmatpush1.bf16.msra.mxu0 %v9674
  %9929 = vmatprep.subr.bf16.mxu0 %v9679
  %9930 = vmatpush1.bf16.msra.mxu0 %v9678
  %9931 = vmatprep.subr.bf16.mxu0 %v9683
  %9932 = vmatpush1.bf16.msra.mxu0 %v9682
  %9933 = vmatprep.subr.bf16.mxu0 %v9687
  %9934 = vmatpush1.bf16.msra.mxu0 %v9686
  %9935 = vmatprep.subr.bf16.mxu0 %v9691
  %9936 = vmatpush1.bf16.msra.mxu0 %v9690
  %9937 = vmatprep.subr.bf16.mxu0 %v9695
  %9938 = vmatpush1.bf16.msra.mxu0 %v9694
  %9939 = vmatprep.subr.bf16.mxu0 %v9699
  %9940 = vmatpush1.bf16.msra.mxu0 %v9698
  %9941 = vmatprep.subr.bf16.mxu0 %v9703
  %9942 = vmatpush1.bf16.msra.mxu0 %v9702
  %9943 = vmatprep.mubr.bf16.mxu0 %v9372
  %9944 = vmatmul.mubr.bf16.gmra.mrb[0].mxu0 %v9371
  %v9945 = vpop.f32.mrb[0].mxu0
  %v9946 = vadd.f32 0.0, %v9945
  %v9947 = vpop.f32.mrb[0].mxu0
  %v9948 = vadd.f32 0.0, %v9947
  %v9949 = vpop.f32.mrb[0].mxu0
  %v9950 = vpop.f32.mrb[0].mxu0
  %9951 = vdwg.mxu0
  %9952 = vmatprep.subr.bf16.mxu0 %v9707
  %9953 = vmatpush1.bf16.msra.mxu0 %v9706
  %9954 = vmatprep.subr.bf16.mxu0 %v9711
  %9955 = vmatpush1.bf16.msra.mxu0 %v9710
  %9956 = vmatprep.subr.bf16.mxu0 %v9715
  %9957 = vmatpush1.bf16.msra.mxu0 %v9714
  %9958 = vmatprep.subr.bf16.mxu0 %v9719
  %9959 = vmatpush1.bf16.msra.mxu0 %v9718
  %9960 = vmatprep.subr.bf16.mxu0 %v9723
  %9961 = vmatpush1.bf16.msra.mxu0 %v9722
  %9962 = vmatprep.subr.bf16.mxu0 %v9827
  %9963 = vmatpush1.bf16.msra.mxu0 %v9824
  %9964 = vmatprep.subr.bf16.mxu0 0
  %9965 = vmatpush1.bf16.msra.mxu0 0
  %9966 = vmatprep.subr.bf16.mxu0 0
  %9967 = vmatpush1.bf16.msra.mxu0 0
  %9968 = vmatprep.subr.bf16.mxu0 0
  %9969 = vmatpush1.bf16.msra.mxu0 0
  %9970 = vmatprep.subr.bf16.mxu0 0
  %9971 = vmatpush1.bf16.msra.mxu0 0
  %9972 = vmatprep.subr.bf16.mxu0 0
  %9973 = vmatpush1.bf16.msra.mxu0 0
  %9974 = vmatprep.subr.bf16.mxu0 0
  %9975 = vmatpush1.bf16.msra.mxu0 0
  %9976 = vmatprep.subr.bf16.mxu0 0
  %9977 = vmatpush1.bf16.msra.mxu0 0
  %9978 = vmatprep.subr.bf16.mxu0 0
  %9979 = vmatpush1.bf16.msra.mxu0 0
  %9980 = vmatprep.subr.bf16.mxu0 0
  %9981 = vmatpush1.bf16.msra.mxu0 0
  %9982 = vmatprep.subr.bf16.mxu0 0
  %9983 = vmatpush1.bf16.msra.mxu0 0
  %9984 = vmatprep.mubr.bf16.mxu0 0
  %9985 = vmatmul.mubr.bf16.gmra.mrb[0].mxu0 %v9814
  %v9986 = vpop.f32.mrb[0].mxu0
  %v9987 = vadd.f32 %v9946, %v9986
  %v9988 = vpop.f32.mrb[0].mxu0
  %v9989 = vadd.f32 %v9948, %v9988
  %v9990 = vpop.f32.mrb[0].mxu0
  %v9991 = vpop.f32.mrb[0].mxu0
  %9992 = vdwg.mxu0
  %v9999 = vunpack.c.l.b16 %v9131
  %v10000 = vunpack.c.l.b16 %v9132
  %v10001 = vunpack.c.l.b16 %v9133
  %v10002 = vunpack.c.l.b16 %v9134
  %v10003 = vunpack.c.l.b16 %v9135
  %v10004 = vunpack.c.l.b16 %v9136
  %v10005 = vrot.slane %v10002, 7
  %v10006 = vsel %vm9365, %v10005, %v9999
  %v10007 = vrot.slane %v10003, 7
  %v10008 = vsel %vm9365, %v10007, %v10000
  %v10009 = vrot.slane %v10004, 7
  %v10010 = vsel %vm9365, %v10009, %v10001
  %v10011 = vpack.c.b16 %v10006, %v10006
  %v10012 = vpack.c.b16 %v10008, %v10008
  %v10013 = vpack.c.b16 %v10010, %v10010
  %v10104 = vunpack.c.l.b16 %v9137
  %v10105 = vunpack.c.h.b16 %v9137
  %v10106 = vunpack.c.l.b16 %v9138
  %v10107 = vunpack.c.h.b16 %v9138
  %v10108 = vunpack.c.l.b16 %v9139
  %v10109 = vunpack.c.h.b16 %v9139
  %v10110 = vunpack.c.l.b16 %v9140
  %v10111 = vunpack.c.h.b16 %v9140
  %v10112 = vunpack.c.l.b16 %v9141
  %v10113 = vunpack.c.h.b16 %v9141
  %v10114 = vunpack.c.l.b16 %v9142
  %v10115 = vunpack.c.h.b16 %v9142
  %v10116 = vunpack.c.l.b16 %v9143
  %v10117 = vunpack.c.h.b16 %v9143
  %v10118 = vunpack.c.l.b16 %v9144
  %v10119 = vunpack.c.h.b16 %v9144
  %v10120 = vunpack.c.l.b16 %v9145
  %v10121 = vunpack.c.h.b16 %v9145
  %v10122 = vunpack.c.l.b16 %v9146
  %v10123 = vunpack.c.h.b16 %v9146
  %v10124 = vunpack.c.l.b16 %v9147
  %v10125 = vunpack.c.h.b16 %v9147
  %v10126 = vunpack.c.l.b16 %v9148
  %v10127 = vunpack.c.h.b16 %v9148
  %v10128 = vunpack.c.l.b16 %v9149
  %v10129 = vunpack.c.h.b16 %v9149
  %v10130 = vunpack.c.l.b16 %v9150
  %v10131 = vunpack.c.h.b16 %v9150
  %v10132 = vunpack.c.l.b16 %v9151
  %v10133 = vunpack.c.h.b16 %v9151
  %v10134 = vunpack.c.l.b16 %v9152
  %v10135 = vunpack.c.h.b16 %v9152
  %v10136 = vunpack.c.l.b16 %v9153
  %v10137 = vunpack.c.h.b16 %v9153
  %v10138 = vunpack.c.l.b16 %v9154
  %v10139 = vunpack.c.h.b16 %v9154
  %v10140 = vunpack.c.l.b16 %v9155
  %v10141 = vunpack.c.h.b16 %v9155
  %v10142 = vunpack.c.l.b16 %v9156
  %v10143 = vunpack.c.h.b16 %v9156
  %v10144 = vunpack.c.l.b16 %v9157
  %v10145 = vunpack.c.h.b16 %v9157
  %v10146 = vunpack.c.l.b16 %v9158
  %v10147 = vunpack.c.h.b16 %v9158
  %v10148 = vunpack.c.l.b16 %v9159
  %v10149 = vunpack.c.h.b16 %v9159
  %v10150 = vunpack.c.l.b16 %v9160
  %v10151 = vunpack.c.h.b16 %v9160
  %v10152 = vunpack.c.l.b16 %v9161
  %v10153 = vunpack.c.h.b16 %v9161
  %v10154 = vunpack.c.l.b16 %v9162
  %v10155 = vunpack.c.h.b16 %v9162
  %v10156 = vunpack.c.l.b16 %v9163
  %v10157 = vunpack.c.h.b16 %v9163
  %v10158 = vunpack.c.l.b16 %v9164
  %v10159 = vunpack.c.h.b16 %v9164
  %v10160 = vunpack.c.l.b16 %v9165
  %v10161 = vunpack.c.h.b16 %v9165
  %v10162 = vunpack.c.l.b16 %v9166
  %v10163 = vunpack.c.h.b16 %v9166
  %v10164 = vunpack.c.l.b16 %v9167
  %v10165 = vunpack.c.h.b16 %v9167
  %v10166 = vunpack.c.l.b16 %v9168
  %v10167 = vunpack.c.h.b16 %v9168
  %v10168 = vunpack.c.l.b16 %v9169
  %v10169 = vunpack.c.h.b16 %v9169
  %v10170 = vunpack.c.l.b16 %v9170
  %v10171 = vunpack.c.h.b16 %v9170
  %v10172 = vunpack.c.l.b16 %v9171
  %v10173 = vunpack.c.h.b16 %v9171
  %v10174 = vunpack.c.l.b16 %v9172
  %v10175 = vunpack.c.h.b16 %v9172
  %v10176 = vunpack.c.l.b16 %v9173
  %v10177 = vunpack.c.h.b16 %v9173
  %v10178 = vunpack.c.l.b16 %v9174
  %v10179 = vunpack.c.h.b16 %v9174
  %v10180 = vunpack.c.l.b16 %v9175
  %v10181 = vunpack.c.h.b16 %v9175
  %v10182 = vunpack.c.l.b16 %v9176
  %v10183 = vunpack.c.h.b16 %v9176
  %v10184 = vunpack.c.l.b16 %v9177
  %v10185 = vunpack.c.h.b16 %v9177
  %v10186 = vunpack.c.l.b16 %v9178
  %v10187 = vunpack.c.h.b16 %v9178
  %v10188 = vunpack.c.l.b16 %v9179
  %v10189 = vunpack.c.h.b16 %v9179
  %v10190 = vunpack.c.l.b16 %v9180
  %v10191 = vunpack.c.h.b16 %v9180
  %v10192 = vunpack.c.l.b16 %v9181
  %v10193 = vunpack.c.h.b16 %v9181
  %v10194 = vunpack.c.l.b16 %v9182
  %v10195 = vunpack.c.h.b16 %v9182
  %v10196 = vunpack.c.l.b16 %v9183
  %v10197 = vunpack.c.h.b16 %v9183
  %v10198 = vunpack.c.l.b16 %v9184
  %v10199 = vunpack.c.h.b16 %v9184
  %v10200 = vunpack.c.l.b16 %v9185
  %v10201 = vunpack.c.h.b16 %v9185
  %v10202 = vunpack.c.l.b16 %v9186
  %v10203 = vunpack.c.h.b16 %v9186
  %v10204 = vunpack.c.l.b16 %v9187
  %v10205 = vunpack.c.h.b16 %v9187
  %v10206 = vunpack.c.l.b16 %v9188
  %v10207 = vunpack.c.h.b16 %v9188
  %v10208 = vunpack.c.l.b16 %v9189
  %v10209 = vunpack.c.h.b16 %v9189
  %v10210 = vunpack.c.l.b16 %v9190
  %v10211 = vunpack.c.h.b16 %v9190
  %v10212 = vunpack.c.l.b16 %v9191
  %v10213 = vunpack.c.h.b16 %v9191
  %v10214 = vunpack.c.l.b16 %v9192
  %v10215 = vunpack.c.h.b16 %v9192
  %v10216 = vunpack.c.l.b16 %v9193
  %v10217 = vunpack.c.h.b16 %v9193
  %v10218 = vunpack.c.l.b16 %v9194
  %v10219 = vunpack.c.h.b16 %v9194
  %v10220 = vunpack.c.l.b16 %v9195
  %v10221 = vunpack.c.h.b16 %v9195
  %v10222 = vunpack.c.l.b16 %v9196
  %v10223 = vunpack.c.h.b16 %v9196
  %v10224 = vunpack.c.l.b16 %v9197
  %v10225 = vunpack.c.h.b16 %v9197
  %v10226 = vunpack.c.l.b16 %v9198
  %v10227 = vunpack.c.h.b16 %v9198
  %v10228 = vunpack.c.l.b16 %v9199
  %v10229 = vunpack.c.h.b16 %v9199
  %v10230 = vunpack.c.l.b16 %v9200
  %v10231 = vunpack.c.h.b16 %v9200
  %v10232 = vunpack.c.l.b16 %v9201
  %v10233 = vunpack.c.h.b16 %v9201
  %v10234 = vunpack.c.l.b16 %v9202
  %v10235 = vunpack.c.h.b16 %v9202
  %v10236 = vunpack.c.l.b16 %v9203
  %v10237 = vunpack.c.h.b16 %v9203
  %v10238 = vunpack.c.l.b16 %v9204
  %v10239 = vunpack.c.h.b16 %v9204
  %v10240 = vunpack.c.l.b16 %v9205
  %v10241 = vunpack.c.h.b16 %v9205
  %v10242 = vunpack.c.l.b16 %v9206
  %v10243 = vunpack.c.h.b16 %v9206
  %v10244 = vunpack.c.l.b16 %v9207
  %v10245 = vunpack.c.h.b16 %v9207
  %v10246 = vunpack.c.l.b16 %v9208
  %v10247 = vunpack.c.h.b16 %v9208
  %v10248 = vunpack.c.l.b16 %v9209
  %v10249 = vunpack.c.h.b16 %v9209
  %v10250 = vunpack.c.l.b16 %v9210
  %v10251 = vunpack.c.h.b16 %v9210
  %v10252 = vunpack.c.l.b16 %v9211
  %v10253 = vunpack.c.h.b16 %v9211
  %v10254 = vunpack.c.l.b16 %v9212
  %v10255 = vunpack.c.h.b16 %v9212
  %v10256 = vunpack.c.l.b16 %v9213
  %v10257 = vunpack.c.h.b16 %v9213
  %v10258 = vunpack.c.l.b16 %v9214
  %v10259 = vunpack.c.h.b16 %v9214
  %v10260 = vunpack.c.l.b16 %v9215
  %v10261 = vunpack.c.h.b16 %v9215
  %v10262 = vunpack.c.l.b16 %v9216
  %v10263 = vunpack.c.h.b16 %v9216
  %v10264 = vunpack.c.l.b16 %v9217
  %v10265 = vunpack.c.h.b16 %v9217
  %v10266 = vunpack.c.l.b16 %v9218
  %v10267 = vunpack.c.h.b16 %v9218
  %v10268 = vunpack.c.l.b16 %v9219
  %v10269 = vunpack.c.h.b16 %v9219
  %v10270 = vunpack.c.l.b16 %v9220
  %v10271 = vunpack.c.h.b16 %v9220
  %v10272 = vunpack.c.l.b16 %v9221
  %v10273 = vunpack.c.h.b16 %v9221
  %v10274 = vunpack.c.l.b16 %v9222
  %v10275 = vunpack.c.h.b16 %v9222
  %v10276 = vunpack.c.l.b16 %v9223
  %v10277 = vunpack.c.h.b16 %v9223
  %v10278 = vunpack.c.l.b16 %v9224
  %v10279 = vunpack.c.h.b16 %v9224
  %v10280 = vpack.c.b16 %v10108, %v10104
  %v10281 = vpack.c.b16 %v10109, %v10105
  %v10282 = vpack.c.b16 %v10110, %v10106
  %v10283 = vpack.c.b16 %v10111, %v10107
  %v10284 = vpack.c.b16 %v10116, %v10112
  %v10285 = vpack.c.b16 %v10117, %v10113
  %v10286 = vpack.c.b16 %v10118, %v10114
  %v10287 = vpack.c.b16 %v10119, %v10115
  %v10288 = vpack.c.b16 %v10124, %v10120
  %v10289 = vpack.c.b16 %v10125, %v10121
  %v10290 = vpack.c.b16 %v10126, %v10122
  %v10291 = vpack.c.b16 %v10127, %v10123
  %v10292 = vpack.c.b16 %v10132, %v10128
  %v10293 = vpack.c.b16 %v10133, %v10129
  %v10294 = vpack.c.b16 %v10134, %v10130
  %v10295 = vpack.c.b16 %v10135, %v10131
  %v10296 = vpack.c.b16 %v10140, %v10136
  %v10297 = vpack.c.b16 %v10141, %v10137
  %v10298 = vpack.c.b16 %v10142, %v10138
  %v10299 = vpack.c.b16 %v10143, %v10139
  %v10300 = vpack.c.b16 %v10148, %v10144
  %v10301 = vpack.c.b16 %v10149, %v10145
  %v10302 = vpack.c.b16 %v10150, %v10146
  %v10303 = vpack.c.b16 %v10151, %v10147
  %v10304 = vpack.c.b16 %v10156, %v10152
  %v10305 = vpack.c.b16 %v10157, %v10153
  %v10306 = vpack.c.b16 %v10158, %v10154
  %v10307 = vpack.c.b16 %v10159, %v10155
  %v10308 = vpack.c.b16 %v10164, %v10160
  %v10309 = vpack.c.b16 %v10165, %v10161
  %v10310 = vpack.c.b16 %v10166, %v10162
  %v10311 = vpack.c.b16 %v10167, %v10163
  %v10312 = vpack.c.b16 %v10172, %v10168
  %v10313 = vpack.c.b16 %v10173, %v10169
  %v10314 = vpack.c.b16 %v10174, %v10170
  %v10315 = vpack.c.b16 %v10175, %v10171
  %v10316 = vpack.c.b16 %v10180, %v10176
  %v10317 = vpack.c.b16 %v10181, %v10177
  %v10318 = vpack.c.b16 %v10182, %v10178
  %v10319 = vpack.c.b16 %v10183, %v10179
  %v10320 = vpack.c.b16 %v10188, %v10184
  %v10321 = vpack.c.b16 %v10189, %v10185
  %v10322 = vpack.c.b16 %v10190, %v10186
  %v10323 = vpack.c.b16 %v10191, %v10187
  %v10324 = vpack.c.b16 %v10196, %v10192
  %v10325 = vpack.c.b16 %v10197, %v10193
  %v10326 = vpack.c.b16 %v10198, %v10194
  %v10327 = vpack.c.b16 %v10199, %v10195
  %v10328 = vpack.c.b16 %v10204, %v10200
  %v10329 = vpack.c.b16 %v10205, %v10201
  %v10330 = vpack.c.b16 %v10206, %v10202
  %v10331 = vpack.c.b16 %v10207, %v10203
  %v10332 = vpack.c.b16 %v10212, %v10208
  %v10333 = vpack.c.b16 %v10213, %v10209
  %v10334 = vpack.c.b16 %v10214, %v10210
  %v10335 = vpack.c.b16 %v10215, %v10211
  %v10336 = vpack.c.b16 %v10220, %v10216
  %v10337 = vpack.c.b16 %v10221, %v10217
  %v10338 = vpack.c.b16 %v10222, %v10218
  %v10339 = vpack.c.b16 %v10223, %v10219
  %v10340 = vpack.c.b16 %v10228, %v10224
  %v10341 = vpack.c.b16 %v10229, %v10225
  %v10342 = vpack.c.b16 %v10230, %v10226
  %v10343 = vpack.c.b16 %v10231, %v10227
  %v10344 = vpack.c.b16 %v10236, %v10232
  %v10345 = vpack.c.b16 %v10237, %v10233
  %v10346 = vpack.c.b16 %v10238, %v10234
  %v10347 = vpack.c.b16 %v10239, %v10235
  %v10348 = vpack.c.b16 %v10244, %v10240
  %v10349 = vpack.c.b16 %v10245, %v10241
  %v10350 = vpack.c.b16 %v10246, %v10242
  %v10351 = vpack.c.b16 %v10247, %v10243
  %v10352 = vpack.c.b16 %v10252, %v10248
  %v10353 = vpack.c.b16 %v10253, %v10249
  %v10354 = vpack.c.b16 %v10254, %v10250
  %v10355 = vpack.c.b16 %v10255, %v10251
  %v10356 = vpack.c.b16 %v10260, %v10256
  %v10357 = vpack.c.b16 %v10261, %v10257
  %v10358 = vpack.c.b16 %v10262, %v10258
  %v10359 = vpack.c.b16 %v10263, %v10259
  %v10360 = vpack.c.b16 %v10268, %v10264
  %v10361 = vpack.c.b16 %v10269, %v10265
  %v10362 = vpack.c.b16 %v10270, %v10266
  %v10363 = vpack.c.b16 %v10271, %v10267
  %v10364 = vpack.c.b16 %v10276, %v10272
  %v10365 = vpack.c.b16 %v10277, %v10273
  %v10366 = vpack.c.b16 %v10278, %v10274
  %v10367 = vpack.c.b16 %v10279, %v10275
  %v10453 = vsel %vm9812, %v10013, 0
  %v10456 = vsel %vm9816, %v10364, 0
  %v10459 = vsel %vm9816, %v10365, 0
  %v10462 = vsel %vm9816, %v10366, 0
  %v10465 = vsel %vm9816, %v10367, 0
  %10467 = vmatprep.subr.bf16.mxu0 %v10281
  %10468 = vmatpush1.bf16.msra.mxu0 %v10280
  %10469 = vmatprep.subr.bf16.mxu0 %v10285
  %10470 = vmatpush1.bf16.msra.mxu0 %v10284
  %10471 = vmatprep.subr.bf16.mxu0 %v10289
  %10472 = vmatpush1.bf16.msra.mxu0 %v10288
  %10473 = vmatprep.subr.bf16.mxu0 %v10293
  %10474 = vmatpush1.bf16.msra.mxu0 %v10292
  %10475 = vmatprep.subr.bf16.mxu0 %v10297
  %10476 = vmatpush1.bf16.msra.mxu0 %v10296
  %10477 = vmatprep.subr.bf16.mxu0 %v10301
  %10478 = vmatpush1.bf16.msra.mxu0 %v10300
  %10479 = vmatprep.subr.bf16.mxu0 %v10305
  %10480 = vmatpush1.bf16.msra.mxu0 %v10304
  %10481 = vmatprep.subr.bf16.mxu0 %v10309
  %10482 = vmatpush1.bf16.msra.mxu0 %v10308
  %10483 = vmatprep.subr.bf16.mxu0 %v10313
  %10484 = vmatpush1.bf16.msra.mxu0 %v10312
  %10485 = vmatprep.subr.bf16.mxu0 %v10317
  %10486 = vmatpush1.bf16.msra.mxu0 %v10316
  %10487 = vmatprep.subr.bf16.mxu0 %v10321
  %10488 = vmatpush1.bf16.msra.mxu0 %v10320
  %10489 = vmatprep.subr.bf16.mxu0 %v10325
  %10490 = vmatpush1.bf16.msra.mxu0 %v10324
  %10491 = vmatprep.subr.bf16.mxu0 %v10329
  %10492 = vmatpush1.bf16.msra.mxu0 %v10328
  %10493 = vmatprep.subr.bf16.mxu0 %v10333
  %10494 = vmatpush1.bf16.msra.mxu0 %v10332
  %10495 = vmatprep.subr.bf16.mxu0 %v10337
  %10496 = vmatpush1.bf16.msra.mxu0 %v10336
  %10497 = vmatprep.subr.bf16.mxu0 %v10341
  %10498 = vmatpush1.bf16.msra.mxu0 %v10340
  %10499 = vmatprep.mubr.bf16.mxu0 %v10012
  %10500 = vmatmul.mubr.bf16.gmra.mrb[0].mxu0 %v10011
  %v10501 = vpop.f32.mrb[0].mxu0
  %v10502 = vadd.f32 %v9905, %v10501
  %v10503 = vpop.f32.mrb[0].mxu0
  %v10504 = vadd.f32 %v9907, %v10503
  %v10505 = vpop.f32.mrb[0].mxu0
  %v10506 = vpop.f32.mrb[0].mxu0
  %10507 = vdwg.mxu0
  %10508 = vmatprep.subr.bf16.mxu0 %v10345
  %10509 = vmatpush1.bf16.msra.mxu0 %v10344
  %10510 = vmatprep.subr.bf16.mxu0 %v10349
  %10511 = vmatpush1.bf16.msra.mxu0 %v10348
  %10512 = vmatprep.subr.bf16.mxu0 %v10353
  %10513 = vmatpush1.bf16.msra.mxu0 %v10352
  %10514 = vmatprep.subr.bf16.mxu0 %v10357
  %10515 = vmatpush1.bf16.msra.mxu0 %v10356
  %10516 = vmatprep.subr.bf16.mxu0 %v10361
  %10517 = vmatpush1.bf16.msra.mxu0 %v10360
  %10518 = vmatprep.subr.bf16.mxu0 %v10459
  %10519 = vmatpush1.bf16.msra.mxu0 %v10456
  %10520 = vmatprep.subr.bf16.mxu0 0
  %10521 = vmatpush1.bf16.msra.mxu0 0
  %10522 = vmatprep.subr.bf16.mxu0 0
  %10523 = vmatpush1.bf16.msra.mxu0 0
  %10524 = vmatprep.subr.bf16.mxu0 0
  %10525 = vmatpush1.bf16.msra.mxu0 0
  %10526 = vmatprep.subr.bf16.mxu0 0
  %10527 = vmatpush1.bf16.msra.mxu0 0
  %10528 = vmatprep.subr.bf16.mxu0 0
  %10529 = vmatpush1.bf16.msra.mxu0 0
  %10530 = vmatprep.subr.bf16.mxu0 0
  %10531 = vmatpush1.bf16.msra.mxu0 0
  %10532 = vmatprep.subr.bf16.mxu0 0
  %10533 = vmatpush1.bf16.msra.mxu0 0
  %10534 = vmatprep.subr.bf16.mxu0 0
  %10535 = vmatpush1.bf16.msra.mxu0 0
  %10536 = vmatprep.subr.bf16.mxu0 0
  %10537 = vmatpush1.bf16.msra.mxu0 0
  %10538 = vmatprep.subr.bf16.mxu0 0
  %10539 = vmatpush1.bf16.msra.mxu0 0
  %10540 = vmatprep.mubr.bf16.mxu0 0
  %10541 = vmatmul.mubr.bf16.gmra.mrb[0].mxu0 %v10453
  %v10542 = vpop.f32.mrb[0].mxu0
  %v10543 = vadd.f32 %v10502, %v10542
  %v10544 = vpop.f32.mrb[0].mxu0
  %v10545 = vadd.f32 %v10504, %v10544
  %v10546 = vpop.f32.mrb[0].mxu0
  %v10547 = vpop.f32.mrb[0].mxu0
  %10548 = vdwg.mxu0
  %10549 = vmatprep.subr.bf16.mxu0 %v10283
  %10550 = vmatpush1.bf16.msra.mxu0 %v10282
  %10551 = vmatprep.subr.bf16.mxu0 %v10287
  %10552 = vmatpush1.bf16.msra.mxu0 %v10286
  %10553 = vmatprep.subr.bf16.mxu0 %v10291
  %10554 = vmatpush1.bf16.msra.mxu0 %v10290
  %10555 = vmatprep.subr.bf16.mxu0 %v10295
  %10556 = vmatpush1.bf16.msra.mxu0 %v10294
  %10557 = vmatprep.subr.bf16.mxu0 %v10299
  %10558 = vmatpush1.bf16.msra.mxu0 %v10298
  %10559 = vmatprep.subr.bf16.mxu0 %v10303
  %10560 = vmatpush1.bf16.msra.mxu0 %v10302
  %10561 = vmatprep.subr.bf16.mxu0 %v10307
  %10562 = vmatpush1.bf16.msra.mxu0 %v10306
  %10563 = vmatprep.subr.bf16.mxu0 %v10311
  %10564 = vmatpush1.bf16.msra.mxu0 %v10310
  %10565 = vmatprep.subr.bf16.mxu0 %v10315
  %10566 = vmatpush1.bf16.msra.mxu0 %v10314
  %10567 = vmatprep.subr.bf16.mxu0 %v10319
  %10568 = vmatpush1.bf16.msra.mxu0 %v10318
  %10569 = vmatprep.subr.bf16.mxu0 %v10323
  %10570 = vmatpush1.bf16.msra.mxu0 %v10322
  %10571 = vmatprep.subr.bf16.mxu0 %v10327
  %10572 = vmatpush1.bf16.msra.mxu0 %v10326
  %10573 = vmatprep.subr.bf16.mxu0 %v10331
  %10574 = vmatpush1.bf16.msra.mxu0 %v10330
  %10575 = vmatprep.subr.bf16.mxu0 %v10335
  %10576 = vmatpush1.bf16.msra.mxu0 %v10334
  %10577 = vmatprep.subr.bf16.mxu0 %v10339
  %10578 = vmatpush1.bf16.msra.mxu0 %v10338
  %10579 = vmatprep.subr.bf16.mxu0 %v10343
  %10580 = vmatpush1.bf16.msra.mxu0 %v10342
  %10581 = vmatprep.mubr.bf16.mxu0 %v10012
  %10582 = vmatmul.mubr.bf16.gmra.mrb[0].mxu0 %v10011
  %v10583 = vpop.f32.mrb[0].mxu0
  %v10584 = vadd.f32 %v9987, %v10583
  %v10585 = vpop.f32.mrb[0].mxu0
  %v10586 = vadd.f32 %v9989, %v10585
  %v10587 = vpop.f32.mrb[0].mxu0
  %v10588 = vpop.f32.mrb[0].mxu0
  %10589 = vdwg.mxu0
  %10590 = vmatprep.subr.bf16.mxu0 %v10347
  %10591 = vmatpush1.bf16.msra.mxu0 %v10346
  %10592 = vmatprep.subr.bf16.mxu0 %v10351
  %10593 = vmatpush1.bf16.msra.mxu0 %v10350
  %10594 = vmatprep.subr.bf16.mxu0 %v10355
  %10595 = vmatpush1.bf16.msra.mxu0 %v10354
  %10596 = vmatprep.subr.bf16.mxu0 %v10359
  %10597 = vmatpush1.bf16.msra.mxu0 %v10358
  %10598 = vmatprep.subr.bf16.mxu0 %v10363
  %10599 = vmatpush1.bf16.msra.mxu0 %v10362
  %10600 = vmatprep.subr.bf16.mxu0 %v10465
  %10601 = vmatpush1.bf16.msra.mxu0 %v10462
  %10602 = vmatprep.subr.bf16.mxu0 0
  %10603 = vmatpush1.bf16.msra.mxu0 0
  %10604 = vmatprep.subr.bf16.mxu0 0
  %10605 = vmatpush1.bf16.msra.mxu0 0
  %10606 = vmatprep.subr.bf16.mxu0 0
  %10607 = vmatpush1.bf16.msra.mxu0 0
  %10608 = vmatprep.subr.bf16.mxu0 0
  %10609 = vmatpush1.bf16.msra.mxu0 0
  %10610 = vmatprep.subr.bf16.mxu0 0
  %10611 = vmatpush1.bf16.msra.mxu0 0
  %10612 = vmatprep.subr.bf16.mxu0 0
  %10613 = vmatpush1.bf16.msra.mxu0 0
  %10614 = vmatprep.subr.bf16.mxu0 0
  %10615 = vmatpush1.bf16.msra.mxu0 0
  %10616 = vmatprep.subr.bf16.mxu0 0
  %10617 = vmatpush1.bf16.msra.mxu0 0
  %10618 = vmatprep.subr.bf16.mxu0 0
  %10619 = vmatpush1.bf16.msra.mxu0 0
  %10620 = vmatprep.subr.bf16.mxu0 0
  %10621 = vmatpush1.bf16.msra.mxu0 0
  %10622 = vmatprep.mubr.bf16.mxu0 0
  %10623 = vmatmul.mubr.bf16.gmra.mrb[0].mxu0 %v10453
  %v10624 = vpop.f32.mrb[0].mxu0
  %v10625 = vadd.f32 %v10584, %v10624
  %v10626 = vpop.f32.mrb[0].mxu0
  %v10627 = vadd.f32 %v10586, %v10626
  %v10628 = vpop.f32.mrb[0].mxu0
  %v10629 = vpop.f32.mrb[0].mxu0
  %10630 = vdwg.mxu0
  %v10633 = vlaneseq
  %v10634 = vshrl.u32 %v10633, 7
  %v10635 = vsub.s32 0, %v10634
  %v10636 = vrot.slane %v9093, %v10635
  %v10637 = vlaneseq
  %v10638 = vshrl.u32 %v10637, 7
  %v10639 = vsub.s32 1, %v10638
  %v10640 = vrot.slane %v9093, %v10639
  %v10641 = vlaneseq
  %v10642 = vshrl.u32 %v10641, 7
  %v10643 = vsub.s32 2, %v10642
  %v10644 = vrot.slane %v9093, %v10643
  %v10645 = vlaneseq
  %v10646 = vshrl.u32 %v10645, 7
  %v10647 = vsub.s32 0, %v10646
  %v10648 = vrot.slane %v9097, %v10647
  %v10649 = vlaneseq
  %v10650 = vshrl.u32 %v10649, 7
  %v10651 = vsub.s32 1, %v10650
  %v10652 = vrot.slane %v9097, %v10651
  %v10653 = vlaneseq
  %v10654 = vshrl.u32 %v10653, 7
  %v10655 = vsub.s32 2, %v10654
  %v10656 = vrot.slane %v9097, %v10655
  %v10663 = vpack.c.bf16 %v10636, %v10636
  %v10664 = vpack.c.bf16 %v10640, %v10640
  %v10665 = vpack.c.bf16 %v10644, %v10644
  %v10666 = vpack.c.bf16 %v10648, %v10648
  %v10667 = vpack.c.bf16 %v10652, %v10652
  %v10668 = vpack.c.bf16 %v10656, %v10656
  %s10669 = scalar_lea.vmem %s5, 1408
  %v10670 = vld [vmem:[%s10669] sm:$0xff]
  %v10671 = vld [vmem:[%s10669 + $0x8] sm:$0xff]
  %v10672 = vld [vmem:[%s10669 + $0x10] sm:$0xff]
  %v10673 = vld [vmem:[%s10669 + $0x18] sm:$0xff]
  %v10674 = vld [vmem:[%s10669 + $0x20] sm:$0xff]
  %v10675 = vld [vmem:[%s10669 + $0x28] sm:$0xff]
  %v10676 = vld [vmem:[%s10669 + $0x30] sm:$0xff]
  %v10677 = vld [vmem:[%s10669 + $0x38] sm:$0xff]
  %v10678 = vld [vmem:[%s10669 + $0x40] sm:$0xff]
  %v10679 = vld [vmem:[%s10669 + $0x48] sm:$0xff]
  %v10680 = vld [vmem:[%s10669 + $0x50] sm:$0xff]
  %v10681 = vld [vmem:[%s10669 + $0x58] sm:$0xff]
  %v10682 = vld [vmem:[%s10669 + $0x60] sm:$0xff]
  %v10683 = vld [vmem:[%s10669 + $0x68] sm:$0xff]
  %v10684 = vld [vmem:[%s10669 + $0x70] sm:$0xff]
  %v10685 = vld [vmem:[%s10669 + $0x78] sm:$0xff]
  %v10686 = vld [vmem:[%s10669 + $0x80] sm:$0xff]
  %v10687 = vld [vmem:[%s10669 + $0x88] sm:$0xff]
  %v10688 = vld [vmem:[%s10669 + $0x90] sm:$0xff]
  %v10689 = vld [vmem:[%s10669 + $0x98] sm:$0xff]
  %v10690 = vld [vmem:[%s10669 + $0xa0] sm:$0xff]
  %v10691 = vld [vmem:[%s10669 + $0xa8] sm:$0xff]
  %v10692 = vld [vmem:[%s10669 + $0xb0] sm:$0xff]
  %v10693 = vld [vmem:[%s10669 + $0xb8] sm:$0xff]
  %v10694 = vld [vmem:[%s10669 + $0xc0] sm:$0xff]
  %v10695 = vld [vmem:[%s10669 + $0xc8] sm:$0xff]
  %v10696 = vld [vmem:[%s10669 + $0xd0] sm:$0xff]
  %v10697 = vld [vmem:[%s10669 + $0xd8] sm:$0xff]
  %v10698 = vld [vmem:[%s10669 + $0xe0] sm:$0xff]
  %v10699 = vld [vmem:[%s10669 + $0xe8] sm:$0xff]
  %v10700 = vld [vmem:[%s10669 + $0xf0] sm:$0xff]
  %v10701 = vld [vmem:[%s10669 + $0xf8] sm:$0xff]
  %v10702 = vld [vmem:[%s10669 + $0x100] sm:$0xff]
  %v10703 = vld [vmem:[%s10669 + $0x108] sm:$0xff]
  %v10704 = vld [vmem:[%s10669 + $0x110] sm:$0xff]
  %v10705 = vld [vmem:[%s10669 + $0x118] sm:$0xff]
  %v10706 = vld [vmem:[%s10669 + $0x120] sm:$0xff]
  %v10707 = vld [vmem:[%s10669 + $0x128] sm:$0xff]
  %v10708 = vld [vmem:[%s10669 + $0x130] sm:$0xff]
  %v10709 = vld [vmem:[%s10669 + $0x138] sm:$0xff]
  %v10710 = vld [vmem:[%s10669 + $0x140] sm:$0xff]
  %v10711 = vld [vmem:[%s10669 + $0x148] sm:$0xff]
  %v10712 = vld [vmem:[%s10669 + $0x150] sm:$0xff]
  %v10713 = vld [vmem:[%s10669 + $0x158] sm:$0xff]
  %v10714 = vld [vmem:[%s10669 + $0x160] sm:$0xff]
  %v10715 = vld [vmem:[%s10669 + $0x168] sm:$0xff]
  %v10716 = vld [vmem:[%s10669 + $0x170] sm:$0xff]
  %v10717 = vld [vmem:[%s10669 + $0x178] sm:$0xff]
  %v10718 = vld [vmem:[%s10669 + $0x180] sm:$0xff]
  %v10719 = vld [vmem:[%s10669 + $0x188] sm:$0xff]
  %v10720 = vld [vmem:[%s10669 + $0x190] sm:$0xff]
  %v10721 = vld [vmem:[%s10669 + $0x198] sm:$0xff]
  %v10722 = vld [vmem:[%s10669 + $0x1a0] sm:$0xff]
  %v10723 = vld [vmem:[%s10669 + $0x1a8] sm:$0xff]
  %v10724 = vld [vmem:[%s10669 + $0x1b0] sm:$0xff]
  %v10725 = vld [vmem:[%s10669 + $0x1b8] sm:$0xff]
  %v10726 = vld [vmem:[%s10669 + $0x1c0] sm:$0xff]
  %v10727 = vld [vmem:[%s10669 + $0x1c8] sm:$0xff]
  %v10728 = vld [vmem:[%s10669 + $0x1d0] sm:$0xff]
  %v10729 = vld [vmem:[%s10669 + $0x1d8] sm:$0xff]
  %v10730 = vld [vmem:[%s10669 + $0x1e0] sm:$0xff]
  %v10731 = vld [vmem:[%s10669 + $0x1e8] sm:$0xff]
  %v10732 = vld [vmem:[%s10669 + $0x1f0] sm:$0xff]
  %v10733 = vld [vmem:[%s10669 + $0x1f8] sm:$0xff]
  %v10734 = vld [vmem:[%s10669 + $0x200] sm:$0xff]
  %v10735 = vld [vmem:[%s10669 + $0x208] sm:$0xff]
  %v10736 = vld [vmem:[%s10669 + $0x210] sm:$0xff]
  %v10737 = vld [vmem:[%s10669 + $0x218] sm:$0xff]
  %v10738 = vld [vmem:[%s10669 + $0x220] sm:$0xff]
  %v10739 = vld [vmem:[%s10669 + $0x228] sm:$0xff]
  %v10740 = vld [vmem:[%s10669 + $0x230] sm:$0xff]
  %v10741 = vld [vmem:[%s10669 + $0x238] sm:$0xff]
  %v10742 = vld [vmem:[%s10669 + $0x240] sm:$0xff]
  %v10743 = vld [vmem:[%s10669 + $0x248] sm:$0xff]
  %v10744 = vld [vmem:[%s10669 + $0x250] sm:$0xff]
  %v10745 = vld [vmem:[%s10669 + $0x258] sm:$0xff]
  %v10746 = vld [vmem:[%s10669 + $0x260] sm:$0xff]
  %v10747 = vld [vmem:[%s10669 + $0x268] sm:$0xff]
  %v10748 = vld [vmem:[%s10669 + $0x270] sm:$0xff]
  %v10749 = vld [vmem:[%s10669 + $0x278] sm:$0xff]
  %v10750 = vld [vmem:[%s10669 + $0x280] sm:$0xff]
  %v10751 = vld [vmem:[%s10669 + $0x288] sm:$0xff]
  %v10752 = vld [vmem:[%s10669 + $0x290] sm:$0xff]
  %v10753 = vld [vmem:[%s10669 + $0x298] sm:$0xff]
  %v10754 = vld [vmem:[%s10669 + $0x2a0] sm:$0xff]
  %v10755 = vld [vmem:[%s10669 + $0x2a8] sm:$0xff]
  %v10756 = vld [vmem:[%s10669 + $0x2b0] sm:$0x77]
  %v10757 = vld [vmem:[%s10669 + $0x2b8] sm:$0x77]
  %v10764 = vunpack.c.l.b16 %v10663
  %v10765 = vunpack.c.l.b16 %v10664
  %v10766 = vunpack.c.l.b16 %v10665
  %v10767 = vunpack.c.l.b16 %v10666
  %v10768 = vunpack.c.l.b16 %v10667
  %v10769 = vunpack.c.l.b16 %v10668
  %v10770 = vrot.slane %v10767, 7
  %v10771 = vsel %vm9365, %v10770, %v10764
  %v10772 = vrot.slane %v10768, 7
  %v10773 = vsel %vm9365, %v10772, %v10765
  %v10774 = vrot.slane %v10769, 7
  %v10775 = vsel %vm9365, %v10774, %v10766
  %v10776 = vpack.c.b16 %v10771, %v10771
  %v10777 = vpack.c.b16 %v10773, %v10773
  %v10778 = vpack.c.b16 %v10775, %v10775
  %v10869 = vunpack.c.l.b16 %v10670
  %v10870 = vunpack.c.h.b16 %v10670
  %v10871 = vunpack.c.l.b16 %v10671
  %v10872 = vunpack.c.h.b16 %v10671
  %v10873 = vunpack.c.l.b16 %v10672
  %v10874 = vunpack.c.h.b16 %v10672
  %v10875 = vunpack.c.l.b16 %v10673
  %v10876 = vunpack.c.h.b16 %v10673
  %v10877 = vunpack.c.l.b16 %v10674
  %v10878 = vunpack.c.h.b16 %v10674
  %v10879 = vunpack.c.l.b16 %v10675
  %v10880 = vunpack.c.h.b16 %v10675
  %v10881 = vunpack.c.l.b16 %v10676
  %v10882 = vunpack.c.h.b16 %v10676
  %v10883 = vunpack.c.l.b16 %v10677
  %v10884 = vunpack.c.h.b16 %v10677
  %v10885 = vunpack.c.l.b16 %v10678
  %v10886 = vunpack.c.h.b16 %v10678
  %v10887 = vunpack.c.l.b16 %v10679
  %v10888 = vunpack.c.h.b16 %v10679
  %v10889 = vunpack.c.l.b16 %v10680
  %v10890 = vunpack.c.h.b16 %v10680
  %v10891 = vunpack.c.l.b16 %v10681
  %v10892 = vunpack.c.h.b16 %v10681
  %v10893 = vunpack.c.l.b16 %v10682
  %v10894 = vunpack.c.h.b16 %v10682
  %v10895 = vunpack.c.l.b16 %v10683
  %v10896 = vunpack.c.h.b16 %v10683
  %v10897 = vunpack.c.l.b16 %v10684
  %v10898 = vunpack.c.h.b16 %v10684
  %v10899 = vunpack.c.l.b16 %v10685
  %v10900 = vunpack.c.h.b16 %v10685
  %v10901 = vunpack.c.l.b16 %v10686
  %v10902 = vunpack.c.h.b16 %v10686
  %v10903 = vunpack.c.l.b16 %v10687
  %v10904 = vunpack.c.h.b16 %v10687
  %v10905 = vunpack.c.l.b16 %v10688
  %v10906 = vunpack.c.h.b16 %v10688
  %v10907 = vunpack.c.l.b16 %v10689
  %v10908 = vunpack.c.h.b16 %v10689
  %v10909 = vunpack.c.l.b16 %v10690
  %v10910 = vunpack.c.h.b16 %v10690
  %v10911 = vunpack.c.l.b16 %v10691
  %v10912 = vunpack.c.h.b16 %v10691
  %v10913 = vunpack.c.l.b16 %v10692
  %v10914 = vunpack.c.h.b16 %v10692
  %v10915 = vunpack.c.l.b16 %v10693
  %v10916 = vunpack.c.h.b16 %v10693
  %v10917 = vunpack.c.l.b16 %v10694
  %v10918 = vunpack.c.h.b16 %v10694
  %v10919 = vunpack.c.l.b16 %v10695
  %v10920 = vunpack.c.h.b16 %v10695
  %v10921 = vunpack.c.l.b16 %v10696
  %v10922 = vunpack.c.h.b16 %v10696
  %v10923 = vunpack.c.l.b16 %v10697
  %v10924 = vunpack.c.h.b16 %v10697
  %v10925 = vunpack.c.l.b16 %v10698
  %v10926 = vunpack.c.h.b16 %v10698
  %v10927 = vunpack.c.l.b16 %v10699
  %v10928 = vunpack.c.h.b16 %v10699
  %v10929 = vunpack.c.l.b16 %v10700
  %v10930 = vunpack.c.h.b16 %v10700
  %v10931 = vunpack.c.l.b16 %v10701
  %v10932 = vunpack.c.h.b16 %v10701
  %v10933 = vunpack.c.l.b16 %v10702
  %v10934 = vunpack.c.h.b16 %v10702
  %v10935 = vunpack.c.l.b16 %v10703
  %v10936 = vunpack.c.h.b16 %v10703
  %v10937 = vunpack.c.l.b16 %v10704
  %v10938 = vunpack.c.h.b16 %v10704
  %v10939 = vunpack.c.l.b16 %v10705
  %v10940 = vunpack.c.h.b16 %v10705
  %v10941 = vunpack.c.l.b16 %v10706
  %v10942 = vunpack.c.h.b16 %v10706
  %v10943 = vunpack.c.l.b16 %v10707
  %v10944 = vunpack.c.h.b16 %v10707
  %v10945 = vunpack.c.l.b16 %v10708
  %v10946 = vunpack.c.h.b16 %v10708
  %v10947 = vunpack.c.l.b16 %v10709
  %v10948 = vunpack.c.h.b16 %v10709
  %v10949 = vunpack.c.l.b16 %v10710
  %v10950 = vunpack.c.h.b16 %v10710
  %v10951 = vunpack.c.l.b16 %v10711
  %v10952 = vunpack.c.h.b16 %v10711
  %v10953 = vunpack.c.l.b16 %v10712
  %v10954 = vunpack.c.h.b16 %v10712
  %v10955 = vunpack.c.l.b16 %v10713
  %v10956 = vunpack.c.h.b16 %v10713
  %v10957 = vunpack.c.l.b16 %v10714
  %v10958 = vunpack.c.h.b16 %v10714
  %v10959 = vunpack.c.l.b16 %v10715
  %v10960 = vunpack.c.h.b16 %v10715
  %v10961 = vunpack.c.l.b16 %v10716
  %v10962 = vunpack.c.h.b16 %v10716
  %v10963 = vunpack.c.l.b16 %v10717
  %v10964 = vunpack.c.h.b16 %v10717
  %v10965 = vunpack.c.l.b16 %v10718
  %v10966 = vunpack.c.h.b16 %v10718
  %v10967 = vunpack.c.l.b16 %v10719
  %v10968 = vunpack.c.h.b16 %v10719
  %v10969 = vunpack.c.l.b16 %v10720
  %v10970 = vunpack.c.h.b16 %v10720
  %v10971 = vunpack.c.l.b16 %v10721
  %v10972 = vunpack.c.h.b16 %v10721
  %v10973 = vunpack.c.l.b16 %v10722
  %v10974 = vunpack.c.h.b16 %v10722
  %v10975 = vunpack.c.l.b16 %v10723
  %v10976 = vunpack.c.h.b16 %v10723
  %v10977 = vunpack.c.l.b16 %v10724
  %v10978 = vunpack.c.h.b16 %v10724
  %v10979 = vunpack.c.l.b16 %v10725
  %v10980 = vunpack.c.h.b16 %v10725
  %v10981 = vunpack.c.l.b16 %v10726
  %v10982 = vunpack.c.h.b16 %v10726
  %v10983 = vunpack.c.l.b16 %v10727
  %v10984 = vunpack.c.h.b16 %v10727
  %v10985 = vunpack.c.l.b16 %v10728
  %v10986 = vunpack.c.h.b16 %v10728
  %v10987 = vunpack.c.l.b16 %v10729
  %v10988 = vunpack.c.h.b16 %v10729
  %v10989 = vunpack.c.l.b16 %v10730
  %v10990 = vunpack.c.h.b16 %v10730
  %v10991 = vunpack.c.l.b16 %v10731
  %v10992 = vunpack.c.h.b16 %v10731
  %v10993 = vunpack.c.l.b16 %v10732
  %v10994 = vunpack.c.h.b16 %v10732
  %v10995 = vunpack.c.l.b16 %v10733
  %v10996 = vunpack.c.h.b16 %v10733
  %v10997 = vunpack.c.l.b16 %v10734
  %v10998 = vunpack.c.h.b16 %v10734
  %v10999 = vunpack.c.l.b16 %v10735
  %v11000 = vunpack.c.h.b16 %v10735
  %v11001 = vunpack.c.l.b16 %v10736
  %v11002 = vunpack.c.h.b16 %v10736
  %v11003 = vunpack.c.l.b16 %v10737
  %v11004 = vunpack.c.h.b16 %v10737
  %v11005 = vunpack.c.l.b16 %v10738
  %v11006 = vunpack.c.h.b16 %v10738
  %v11007 = vunpack.c.l.b16 %v10739
  %v11008 = vunpack.c.h.b16 %v10739
  %v11009 = vunpack.c.l.b16 %v10740
  %v11010 = vunpack.c.h.b16 %v10740
  %v11011 = vunpack.c.l.b16 %v10741
  %v11012 = vunpack.c.h.b16 %v10741
  %v11013 = vunpack.c.l.b16 %v10742
  %v11014 = vunpack.c.h.b16 %v10742
  %v11015 = vunpack.c.l.b16 %v10743
  %v11016 = vunpack.c.h.b16 %v10743
  %v11017 = vunpack.c.l.b16 %v10744
  %v11018 = vunpack.c.h.b16 %v10744
  %v11019 = vunpack.c.l.b16 %v10745
  %v11020 = vunpack.c.h.b16 %v10745
  %v11021 = vunpack.c.l.b16 %v10746
  %v11022 = vunpack.c.h.b16 %v10746
  %v11023 = vunpack.c.l.b16 %v10747
  %v11024 = vunpack.c.h.b16 %v10747
  %v11025 = vunpack.c.l.b16 %v10748
  %v11026 = vunpack.c.h.b16 %v10748
  %v11027 = vunpack.c.l.b16 %v10749
  %v11028 = vunpack.c.h.b16 %v10749
  %v11029 = vunpack.c.l.b16 %v10750
  %v11030 = vunpack.c.h.b16 %v10750
  %v11031 = vunpack.c.l.b16 %v10751
  %v11032 = vunpack.c.h.b16 %v10751
  %v11033 = vunpack.c.l.b16 %v10752
  %v11034 = vunpack.c.h.b16 %v10752
  %v11035 = vunpack.c.l.b16 %v10753
  %v11036 = vunpack.c.h.b16 %v10753
  %v11037 = vunpack.c.l.b16 %v10754
  %v11038 = vunpack.c.h.b16 %v10754
  %v11039 = vunpack.c.l.b16 %v10755
  %v11040 = vunpack.c.h.b16 %v10755
  %v11041 = vunpack.c.l.b16 %v10756
  %v11042 = vunpack.c.h.b16 %v10756
  %v11043 = vunpack.c.l.b16 %v10757
  %v11044 = vunpack.c.h.b16 %v10757
  %v11045 = vpack.c.b16 %v10873, %v10869
  %v11046 = vpack.c.b16 %v10874, %v10870
  %v11047 = vpack.c.b16 %v10875, %v10871
  %v11048 = vpack.c.b16 %v10876, %v10872
  %v11049 = vpack.c.b16 %v10881, %v10877
  %v11050 = vpack.c.b16 %v10882, %v10878
  %v11051 = vpack.c.b16 %v10883, %v10879
  %v11052 = vpack.c.b16 %v10884, %v10880
  %v11053 = vpack.c.b16 %v10889, %v10885
  %v11054 = vpack.c.b16 %v10890, %v10886
  %v11055 = vpack.c.b16 %v10891, %v10887
  %v11056 = vpack.c.b16 %v10892, %v10888
  %v11057 = vpack.c.b16 %v10897, %v10893
  %v11058 = vpack.c.b16 %v10898, %v10894
  %v11059 = vpack.c.b16 %v10899, %v10895
  %v11060 = vpack.c.b16 %v10900, %v10896
  %v11061 = vpack.c.b16 %v10905, %v10901
  %v11062 = vpack.c.b16 %v10906, %v10902
  %v11063 = vpack.c.b16 %v10907, %v10903
  %v11064 = vpack.c.b16 %v10908, %v10904
  %v11065 = vpack.c.b16 %v10913, %v10909
  %v11066 = vpack.c.b16 %v10914, %v10910
  %v11067 = vpack.c.b16 %v10915, %v10911
  %v11068 = vpack.c.b16 %v10916, %v10912
  %v11069 = vpack.c.b16 %v10921, %v10917
  %v11070 = vpack.c.b16 %v10922, %v10918
  %v11071 = vpack.c.b16 %v10923, %v10919
  %v11072 = vpack.c.b16 %v10924, %v10920
  %v11073 = vpack.c.b16 %v10929, %v10925
  %v11074 = vpack.c.b16 %v10930, %v10926
  %v11075 = vpack.c.b16 %v10931, %v10927
  %v11076 = vpack.c.b16 %v10932, %v10928
  %v11077 = vpack.c.b16 %v10937, %v10933
  %v11078 = vpack.c.b16 %v10938, %v10934
  %v11079 = vpack.c.b16 %v10939, %v10935
  %v11080 = vpack.c.b16 %v10940, %v10936
  %v11081 = vpack.c.b16 %v10945, %v10941
  %v11082 = vpack.c.b16 %v10946, %v10942
  %v11083 = vpack.c.b16 %v10947, %v10943
  %v11084 = vpack.c.b16 %v10948, %v10944
  %v11085 = vpack.c.b16 %v10953, %v10949
  %v11086 = vpack.c.b16 %v10954, %v10950
  %v11087 = vpack.c.b16 %v10955, %v10951
  %v11088 = vpack.c.b16 %v10956, %v10952
  %v11089 = vpack.c.b16 %v10961, %v10957
  %v11090 = vpack.c.b16 %v10962, %v10958
  %v11091 = vpack.c.b16 %v10963, %v10959
  %v11092 = vpack.c.b16 %v10964, %v10960
  %v11093 = vpack.c.b16 %v10969, %v10965
  %v11094 = vpack.c.b16 %v10970, %v10966
  %v11095 = vpack.c.b16 %v10971, %v10967
  %v11096 = vpack.c.b16 %v10972, %v10968
  %v11097 = vpack.c.b16 %v10977, %v10973
  %v11098 = vpack.c.b16 %v10978, %v10974
  %v11099 = vpack.c.b16 %v10979, %v10975
  %v11100 = vpack.c.b16 %v10980, %v10976
  %v11101 = vpack.c.b16 %v10985, %v10981
  %v11102 = vpack.c.b16 %v10986, %v10982
  %v11103 = vpack.c.b16 %v10987, %v10983
  %v11104 = vpack.c.b16 %v10988, %v10984
  %v11105 = vpack.c.b16 %v10993, %v10989
  %v11106 = vpack.c.b16 %v10994, %v10990
  %v11107 = vpack.c.b16 %v10995, %v10991
  %v11108 = vpack.c.b16 %v10996, %v10992
  %v11109 = vpack.c.b16 %v11001, %v10997
  %v11110 = vpack.c.b16 %v11002, %v10998
  %v11111 = vpack.c.b16 %v11003, %v10999
  %v11112 = vpack.c.b16 %v11004, %v11000
  %v11113 = vpack.c.b16 %v11009, %v11005
  %v11114 = vpack.c.b16 %v11010, %v11006
  %v11115 = vpack.c.b16 %v11011, %v11007
  %v11116 = vpack.c.b16 %v11012, %v11008
  %v11117 = vpack.c.b16 %v11017, %v11013
  %v11118 = vpack.c.b16 %v11018, %v11014
  %v11119 = vpack.c.b16 %v11019, %v11015
  %v11120 = vpack.c.b16 %v11020, %v11016
  %v11121 = vpack.c.b16 %v11025, %v11021
  %v11122 = vpack.c.b16 %v11026, %v11022
  %v11123 = vpack.c.b16 %v11027, %v11023
  %v11124 = vpack.c.b16 %v11028, %v11024
  %v11125 = vpack.c.b16 %v11033, %v11029
  %v11126 = vpack.c.b16 %v11034, %v11030
  %v11127 = vpack.c.b16 %v11035, %v11031
  %v11128 = vpack.c.b16 %v11036, %v11032
  %v11129 = vpack.c.b16 %v11041, %v11037
  %v11130 = vpack.c.b16 %v11042, %v11038
  %v11131 = vpack.c.b16 %v11043, %v11039
  %v11132 = vpack.c.b16 %v11044, %v11040
  %v11218 = vsel %vm9812, %v10778, 0
  %v11221 = vsel %vm9816, %v11129, 0
  %v11224 = vsel %vm9816, %v11130, 0
  %v11227 = vsel %vm9816, %v11131, 0
  %v11230 = vsel %vm9816, %v11132, 0
  %11232 = vmatprep.subr.bf16.mxu0 %v11046
  %11233 = vmatpush1.bf16.msra.mxu0 %v11045
  %11234 = vmatprep.subr.bf16.mxu0 %v11050
  %11235 = vmatpush1.bf16.msra.mxu0 %v11049
  %11236 = vmatprep.subr.bf16.mxu0 %v11054
  %11237 = vmatpush1.bf16.msra.mxu0 %v11053
  %11238 = vmatprep.subr.bf16.mxu0 %v11058
  %11239 = vmatpush1.bf16.msra.mxu0 %v11057
  %11240 = vmatprep.subr.bf16.mxu0 %v11062
  %11241 = vmatpush1.bf16.msra.mxu0 %v11061
  %11242 = vmatprep.subr.bf16.mxu0 %v11066
  %11243 = vmatpush1.bf16.msra.mxu0 %v11065
  %11244 = vmatprep.subr.bf16.mxu0 %v11070
  %11245 = vmatpush1.bf16.msra.mxu0 %v11069
  %11246 = vmatprep.subr.bf16.mxu0 %v11074
  %11247 = vmatpush1.bf16.msra.mxu0 %v11073
  %11248 = vmatprep.subr.bf16.mxu0 %v11078
  %11249 = vmatpush1.bf16.msra.mxu0 %v11077
  %11250 = vmatprep.subr.bf16.mxu0 %v11082
  %11251 = vmatpush1.bf16.msra.mxu0 %v11081
  %11252 = vmatprep.subr.bf16.mxu0 %v11086
  %11253 = vmatpush1.bf16.msra.mxu0 %v11085
  %11254 = vmatprep.subr.bf16.mxu0 %v11090
  %11255 = vmatpush1.bf16.msra.mxu0 %v11089
  %11256 = vmatprep.subr.bf16.mxu0 %v11094
  %11257 = vmatpush1.bf16.msra.mxu0 %v11093
  %11258 = vmatprep.subr.bf16.mxu0 %v11098
  %11259 = vmatpush1.bf16.msra.mxu0 %v11097
  %11260 = vmatprep.subr.bf16.mxu0 %v11102
  %11261 = vmatpush1.bf16.msra.mxu0 %v11101
  %11262 = vmatprep.subr.bf16.mxu0 %v11106
  %11263 = vmatpush1.bf16.msra.mxu0 %v11105
  %11264 = vmatprep.mubr.bf16.mxu0 %v10777
  %11265 = vmatmul.mubr.bf16.gmra.mrb[0].mxu0 %v10776
  %v11266 = vpop.f32.mrb[0].mxu0
  %v11267 = vadd.f32 0.0, %v11266
  %v11268 = vpop.f32.mrb[0].mxu0
  %v11269 = vadd.f32 0.0, %v11268
  %v11270 = vpop.f32.mrb[0].mxu0
  %v11271 = vpop.f32.mrb[0].mxu0
  %11272 = vdwg.mxu0
  %11273 = vmatprep.subr.bf16.mxu0 %v11110
  %11274 = vmatpush1.bf16.msra.mxu0 %v11109
  %11275 = vmatprep.subr.bf16.mxu0 %v11114
  %11276 = vmatpush1.bf16.msra.mxu0 %v11113
  %11277 = vmatprep.subr.bf16.mxu0 %v11118
  %11278 = vmatpush1.bf16.msra.mxu0 %v11117
  %11279 = vmatprep.subr.bf16.mxu0 %v11122
  %11280 = vmatpush1.bf16.msra.mxu0 %v11121
  %11281 = vmatprep.subr.bf16.mxu0 %v11126
  %11282 = vmatpush1.bf16.msra.mxu0 %v11125
  %11283 = vmatprep.subr.bf16.mxu0 %v11224
  %11284 = vmatpush1.bf16.msra.mxu0 %v11221
  %11285 = vmatprep.subr.bf16.mxu0 0
  %11286 = vmatpush1.bf16.msra.mxu0 0
  %11287 = vmatprep.subr.bf16.mxu0 0
  %11288 = vmatpush1.bf16.msra.mxu0 0
  %11289 = vmatprep.subr.bf16.mxu0 0
  %11290 = vmatpush1.bf16.msra.mxu0 0
  %11291 = vmatprep.subr.bf16.mxu0 0
  %11292 = vmatpush1.bf16.msra.mxu0 0
  %11293 = vmatprep.subr.bf16.mxu0 0
  %11294 = vmatpush1.bf16.msra.mxu0 0
  %11295 = vmatprep.subr.bf16.mxu0 0
  %11296 = vmatpush1.bf16.msra.mxu0 0
  %11297 = vmatprep.subr.bf16.mxu0 0
  %11298 = vmatpush1.bf16.msra.mxu0 0
  %11299 = vmatprep.subr.bf16.mxu0 0
  %11300 = vmatpush1.bf16.msra.mxu0 0
  %11301 = vmatprep.subr.bf16.mxu0 0
  %11302 = vmatpush1.bf16.msra.mxu0 0
  %11303 = vmatprep.subr.bf16.mxu0 0
  %11304 = vmatpush1.bf16.msra.mxu0 0
  %11305 = vmatprep.mubr.bf16.mxu0 0
  %11306 = vmatmul.mubr.bf16.gmra.mrb[0].mxu0 %v11218
  %v11307 = vpop.f32.mrb[0].mxu0
  %v11308 = vadd.f32 %v11267, %v11307
  %v11309 = vpop.f32.mrb[0].mxu0
  %v11310 = vadd.f32 %v11269, %v11309
  %v11311 = vpop.f32.mrb[0].mxu0
  %v11312 = vpop.f32.mrb[0].mxu0
  %11313 = vdwg.mxu0
  %11314 = vmatprep.subr.bf16.mxu0 %v11048
  %11315 = vmatpush1.bf16.msra.mxu0 %v11047
  %11316 = vmatprep.subr.bf16.mxu0 %v11052
  %11317 = vmatpush1.bf16.msra.mxu0 %v11051
  %11318 = vmatprep.subr.bf16.mxu0 %v11056
  %11319 = vmatpush1.bf16.msra.mxu0 %v11055
  %11320 = vmatprep.subr.bf16.mxu0 %v11060
  %11321 = vmatpush1.bf16.msra.mxu0 %v11059
  %11322 = vmatprep.subr.bf16.mxu0 %v11064
  %11323 = vmatpush1.bf16.msra.mxu0 %v11063
  %11324 = vmatprep.subr.bf16.mxu0 %v11068
  %11325 = vmatpush1.bf16.msra.mxu0 %v11067
  %11326 = vmatprep.subr.bf16.mxu0 %v11072
  %11327 = vmatpush1.bf16.msra.mxu0 %v11071
  %11328 = vmatprep.subr.bf16.mxu0 %v11076
  %11329 = vmatpush1.bf16.msra.mxu0 %v11075
  %11330 = vmatprep.subr.bf16.mxu0 %v11080
  %11331 = vmatpush1.bf16.msra.mxu0 %v11079
  %11332 = vmatprep.subr.bf16.mxu0 %v11084
  %11333 = vmatpush1.bf16.msra.mxu0 %v11083
  %11334 = vmatprep.subr.bf16.mxu0 %v11088
  %11335 = vmatpush1.bf16.msra.mxu0 %v11087
  %11336 = vmatprep.subr.bf16.mxu0 %v11092
  %11337 = vmatpush1.bf16.msra.mxu0 %v11091
  %11338 = vmatprep.subr.bf16.mxu0 %v11096
  %11339 = vmatpush1.bf16.msra.mxu0 %v11095
  %11340 = vmatprep.subr.bf16.mxu0 %v11100
  %11341 = vmatpush1.bf16.msra.mxu0 %v11099
  %11342 = vmatprep.subr.bf16.mxu0 %v11104
  %11343 = vmatpush1.bf16.msra.mxu0 %v11103
  %11344 = vmatprep.subr.bf16.mxu0 %v11108
  %11345 = vmatpush1.bf16.msra.mxu0 %v11107
  %11346 = vmatprep.mubr.bf16.mxu0 %v10777
  %11347 = vmatmul.mubr.bf16.gmra.mrb[0].mxu0 %v10776
  %v11348 = vpop.f32.mrb[0].mxu0
  %v11349 = vadd.f32 0.0, %v11348
  %v11350 = vpop.f32.mrb[0].mxu0
  %v11351 = vadd.f32 0.0, %v11350
  %v11352 = vpop.f32.mrb[0].mxu0
  %v11353 = vpop.f32.mrb[0].mxu0
  %11354 = vdwg.mxu0
  %11355 = vmatprep.subr.bf16.mxu0 %v11112
  %11356 = vmatpush1.bf16.msra.mxu0 %v11111
  %11357 = vmatprep.subr.bf16.mxu0 %v11116
  %11358 = vmatpush1.bf16.msra.mxu0 %v11115
  %11359 = vmatprep.subr.bf16.mxu0 %v11120
  %11360 = vmatpush1.bf16.msra.mxu0 %v11119
  %11361 = vmatprep.subr.bf16.mxu0 %v11124
  %11362 = vmatpush1.bf16.msra.mxu0 %v11123
  %11363 = vmatprep.subr.bf16.mxu0 %v11128
  %11364 = vmatpush1.bf16.msra.mxu0 %v11127
  %11365 = vmatprep.subr.bf16.mxu0 %v11230
  %11366 = vmatpush1.bf16.msra.mxu0 %v11227
  %11367 = vmatprep.subr.bf16.mxu0 0
  %11368 = vmatpush1.bf16.msra.mxu0 0
  %11369 = vmatprep.subr.bf16.mxu0 0
  %11370 = vmatpush1.bf16.msra.mxu0 0
  %11371 = vmatprep.subr.bf16.mxu0 0
  %11372 = vmatpush1.bf16.msra.mxu0 0
  %11373 = vmatprep.subr.bf16.mxu0 0
  %11374 = vmatpush1.bf16.msra.mxu0 0
  %11375 = vmatprep.subr.bf16.mxu0 0
  %11376 = vmatpush1.bf16.msra.mxu0 0
  %11377 = vmatprep.subr.bf16.mxu0 0
  %11378 = vmatpush1.bf16.msra.mxu0 0
  %11379 = vmatprep.subr.bf16.mxu0 0
  %11380 = vmatpush1.bf16.msra.mxu0 0
  %11381 = vmatprep.subr.bf16.mxu0 0
  %11382 = vmatpush1.bf16.msra.mxu0 0
  %11383 = vmatprep.subr.bf16.mxu0 0
  %11384 = vmatpush1.bf16.msra.mxu0 0
  %11385 = vmatprep.subr.bf16.mxu0 0
  %11386 = vmatpush1.bf16.msra.mxu0 0
  %11387 = vmatprep.mubr.bf16.mxu0 0
  %11388 = vmatmul.mubr.bf16.gmra.mrb[0].mxu0 %v11218
  %v11389 = vpop.f32.mrb[0].mxu0
  %v11390 = vadd.f32 %v11349, %v11389
  %v11391 = vpop.f32.mrb[0].mxu0
  %v11392 = vadd.f32 %v11351, %v11391
  %v11393 = vpop.f32.mrb[0].mxu0
  %v11394 = vpop.f32.mrb[0].mxu0
  %11395 = vdwg.mxu0
  %v11396 = vadd.f32 %v10543, %v11308
  %v11397 = vadd.f32 %v10545, %v11310
  %v11398 = vadd.f32 %v10625, %v11390
  %v11399 = vadd.f32 %v10627, %v11392
  %v11402 = vlaneseq
  %v11403 = vshrl.u32 %v11402, 7
  %v11404 = vsub.s32 0, %v11403
  %v11405 = vrot.slane %v9094, %v11404
  %v11406 = vlaneseq
  %v11407 = vshrl.u32 %v11406, 7
  %v11408 = vsub.s32 1, %v11407
  %v11409 = vrot.slane %v9094, %v11408
  %v11410 = vlaneseq
  %v11411 = vshrl.u32 %v11410, 7
  %v11412 = vsub.s32 2, %v11411
  %v11413 = vrot.slane %v9094, %v11412
  %v11414 = vlaneseq
  %v11415 = vshrl.u32 %v11414, 7
  %v11416 = vsub.s32 0, %v11415
  %v11417 = vrot.slane %v9098, %v11416
  %v11418 = vlaneseq
  %v11419 = vshrl.u32 %v11418, 7
  %v11420 = vsub.s32 1, %v11419
  %v11421 = vrot.slane %v9098, %v11420
  %v11422 = vlaneseq
  %v11423 = vshrl.u32 %v11422, 7
  %v11424 = vsub.s32 2, %v11423
  %v11425 = vrot.slane %v9098, %v11424
  %v11432 = vpack.c.bf16 %v11405, %v11405
  %v11433 = vpack.c.bf16 %v11409, %v11409
  %v11434 = vpack.c.bf16 %v11413, %v11413
  %v11435 = vpack.c.bf16 %v11417, %v11417
  %v11436 = vpack.c.bf16 %v11421, %v11421
  %v11437 = vpack.c.bf16 %v11425, %v11425
  %s11438 = scalar_lea.vmem %s5, 2112
  %v11439 = vld [vmem:[%s11438] sm:$0xff]
  %v11440 = vld [vmem:[%s11438 + $0x8] sm:$0xff]
  %v11441 = vld [vmem:[%s11438 + $0x10] sm:$0xff]
  %v11442 = vld [vmem:[%s11438 + $0x18] sm:$0xff]
  %v11443 = vld [vmem:[%s11438 + $0x20] sm:$0xff]
  %v11444 = vld [vmem:[%s11438 + $0x28] sm:$0xff]
  %v11445 = vld [vmem:[%s11438 + $0x30] sm:$0xff]
  %v11446 = vld [vmem:[%s11438 + $0x38] sm:$0xff]
  %v11447 = vld [vmem:[%s11438 + $0x40] sm:$0xff]
  %v11448 = vld [vmem:[%s11438 + $0x48] sm:$0xff]
  %v11449 = vld [vmem:[%s11438 + $0x50] sm:$0xff]
  %v11450 = vld [vmem:[%s11438 + $0x58] sm:$0xff]
  %v11451 = vld [vmem:[%s11438 + $0x60] sm:$0xff]
  %v11452 = vld [vmem:[%s11438 + $0x68] sm:$0xff]
  %v11453 = vld [vmem:[%s11438 + $0x70] sm:$0xff]
  %v11454 = vld [vmem:[%s11438 + $0x78] sm:$0xff]
  %v11455 = vld [vmem:[%s11438 + $0x80] sm:$0xff]
  %v11456 = vld [vmem:[%s11438 + $0x88] sm:$0xff]
  %v11457 = vld [vmem:[%s11438 + $0x90] sm:$0xff]
  %v11458 = vld [vmem:[%s11438 + $0x98] sm:$0xff]
  %v11459 = vld [vmem:[%s11438 + $0xa0] sm:$0xff]
  %v11460 = vld [vmem:[%s11438 + $0xa8] sm:$0xff]
  %v11461 = vld [vmem:[%s11438 + $0xb0] sm:$0xff]
  %v11462 = vld [vmem:[%s11438 + $0xb8] sm:$0xff]
  %v11463 = vld [vmem:[%s11438 + $0xc0] sm:$0xff]
  %v11464 = vld [vmem:[%s11438 + $0xc8] sm:$0xff]
  %v11465 = vld [vmem:[%s11438 + $0xd0] sm:$0xff]
  %v11466 = vld [vmem:[%s11438 + $0xd8] sm:$0xff]
  %v11467 = vld [vmem:[%s11438 + $0xe0] sm:$0xff]
  %v11468 = vld [vmem:[%s11438 + $0xe8] sm:$0xff]
  %v11469 = vld [vmem:[%s11438 + $0xf0] sm:$0xff]
  %v11470 = vld [vmem:[%s11438 + $0xf8] sm:$0xff]
  %v11471 = vld [vmem:[%s11438 + $0x100] sm:$0xff]
  %v11472 = vld [vmem:[%s11438 + $0x108] sm:$0xff]
  %v11473 = vld [vmem:[%s11438 + $0x110] sm:$0xff]
  %v11474 = vld [vmem:[%s11438 + $0x118] sm:$0xff]
  %v11475 = vld [vmem:[%s11438 + $0x120] sm:$0xff]
  %v11476 = vld [vmem:[%s11438 + $0x128] sm:$0xff]
  %v11477 = vld [vmem:[%s11438 + $0x130] sm:$0xff]
  %v11478 = vld [vmem:[%s11438 + $0x138] sm:$0xff]
  %v11479 = vld [vmem:[%s11438 + $0x140] sm:$0xff]
  %v11480 = vld [vmem:[%s11438 + $0x148] sm:$0xff]
  %v11481 = vld [vmem:[%s11438 + $0x150] sm:$0xff]
  %v11482 = vld [vmem:[%s11438 + $0x158] sm:$0xff]
  %v11483 = vld [vmem:[%s11438 + $0x160] sm:$0xff]
  %v11484 = vld [vmem:[%s11438 + $0x168] sm:$0xff]
  %v11485 = vld [vmem:[%s11438 + $0x170] sm:$0xff]
  %v11486 = vld [vmem:[%s11438 + $0x178] sm:$0xff]
  %v11487 = vld [vmem:[%s11438 + $0x180] sm:$0xff]
  %v11488 = vld [vmem:[%s11438 + $0x188] sm:$0xff]
  %v11489 = vld [vmem:[%s11438 + $0x190] sm:$0xff]
  %v11490 = vld [vmem:[%s11438 + $0x198] sm:$0xff]
  %v11491 = vld [vmem:[%s11438 + $0x1a0] sm:$0xff]
  %v11492 = vld [vmem:[%s11438 + $0x1a8] sm:$0xff]
  %v11493 = vld [vmem:[%s11438 + $0x1b0] sm:$0xff]
  %v11494 = vld [vmem:[%s11438 + $0x1b8] sm:$0xff]
  %v11495 = vld [vmem:[%s11438 + $0x1c0] sm:$0xff]
  %v11496 = vld [vmem:[%s11438 + $0x1c8] sm:$0xff]
  %v11497 = vld [vmem:[%s11438 + $0x1d0] sm:$0xff]
  %v11498 = vld [vmem:[%s11438 + $0x1d8] sm:$0xff]
  %v11499 = vld [vmem:[%s11438 + $0x1e0] sm:$0xff]
  %v11500 = vld [vmem:[%s11438 + $0x1e8] sm:$0xff]
  %v11501 = vld [vmem:[%s11438 + $0x1f0] sm:$0xff]
  %v11502 = vld [vmem:[%s11438 + $0x1f8] sm:$0xff]
  %v11503 = vld [vmem:[%s11438 + $0x200] sm:$0xff]
  %v11504 = vld [vmem:[%s11438 + $0x208] sm:$0xff]
  %v11505 = vld [vmem:[%s11438 + $0x210] sm:$0xff]
  %v11506 = vld [vmem:[%s11438 + $0x218] sm:$0xff]
  %v11507 = vld [vmem:[%s11438 + $0x220] sm:$0xff]
  %v11508 = vld [vmem:[%s11438 + $0x228] sm:$0xff]
  %v11509 = vld [vmem:[%s11438 + $0x230] sm:$0xff]
  %v11510 = vld [vmem:[%s11438 + $0x238] sm:$0xff]
  %v11511 = vld [vmem:[%s11438 + $0x240] sm:$0xff]
  %v11512 = vld [vmem:[%s11438 + $0x248] sm:$0xff]
  %v11513 = vld [vmem:[%s11438 + $0x250] sm:$0xff]
  %v11514 = vld [vmem:[%s11438 + $0x258] sm:$0xff]
  %v11515 = vld [vmem:[%s11438 + $0x260] sm:$0xff]
  %v11516 = vld [vmem:[%s11438 + $0x268] sm:$0xff]
  %v11517 = vld [vmem:[%s11438 + $0x270] sm:$0xff]
  %v11518 = vld [vmem:[%s11438 + $0x278] sm:$0xff]
  %v11519 = vld [vmem:[%s11438 + $0x280] sm:$0xff]
  %v11520 = vld [vmem:[%s11438 + $0x288] sm:$0xff]
  %v11521 = vld [vmem:[%s11438 + $0x290] sm:$0xff]
  %v11522 = vld [vmem:[%s11438 + $0x298] sm:$0xff]
  %v11523 = vld [vmem:[%s11438 + $0x2a0] sm:$0xff]
  %v11524 = vld [vmem:[%s11438 + $0x2a8] sm:$0xff]
  %v11525 = vld [vmem:[%s11438 + $0x2b0] sm:$0x77]
  %v11526 = vld [vmem:[%s11438 + $0x2b8] sm:$0x77]
  %v11533 = vunpack.c.l.b16 %v11432
  %v11534 = vunpack.c.l.b16 %v11433
  %v11535 = vunpack.c.l.b16 %v11434
  %v11536 = vunpack.c.l.b16 %v11435
  %v11537 = vunpack.c.l.b16 %v11436
  %v11538 = vunpack.c.l.b16 %v11437
  %v11539 = vrot.slane %v11536, 7
  %v11540 = vsel %vm9365, %v11539, %v11533
  %v11541 = vrot.slane %v11537, 7
  %v11542 = vsel %vm9365, %v11541, %v11534
  %v11543 = vrot.slane %v11538, 7
  %v11544 = vsel %vm9365, %v11543, %v11535
  %v11545 = vpack.c.b16 %v11540, %v11540
  %v11546 = vpack.c.b16 %v11542, %v11542
  %v11547 = vpack.c.b16 %v11544, %v11544
  %v11638 = vunpack.c.l.b16 %v11439
  %v11639 = vunpack.c.h.b16 %v11439
  %v11640 = vunpack.c.l.b16 %v11440
  %v11641 = vunpack.c.h.b16 %v11440
  %v11642 = vunpack.c.l.b16 %v11441
  %v11643 = vunpack.c.h.b16 %v11441
  %v11644 = vunpack.c.l.b16 %v11442
  %v11645 = vunpack.c.h.b16 %v11442
  %v11646 = vunpack.c.l.b16 %v11443
  %v11647 = vunpack.c.h.b16 %v11443
  %v11648 = vunpack.c.l.b16 %v11444
  %v11649 = vunpack.c.h.b16 %v11444
  %v11650 = vunpack.c.l.b16 %v11445
  %v11651 = vunpack.c.h.b16 %v11445
  %v11652 = vunpack.c.l.b16 %v11446
  %v11653 = vunpack.c.h.b16 %v11446
  %v11654 = vunpack.c.l.b16 %v11447
  %v11655 = vunpack.c.h.b16 %v11447
  %v11656 = vunpack.c.l.b16 %v11448
  %v11657 = vunpack.c.h.b16 %v11448
  %v11658 = vunpack.c.l.b16 %v11449
  %v11659 = vunpack.c.h.b16 %v11449
  %v11660 = vunpack.c.l.b16 %v11450
  %v11661 = vunpack.c.h.b16 %v11450
  %v11662 = vunpack.c.l.b16 %v11451
  %v11663 = vunpack.c.h.b16 %v11451
  %v11664 = vunpack.c.l.b16 %v11452
  %v11665 = vunpack.c.h.b16 %v11452
  %v11666 = vunpack.c.l.b16 %v11453
  %v11667 = vunpack.c.h.b16 %v11453
  %v11668 = vunpack.c.l.b16 %v11454
  %v11669 = vunpack.c.h.b16 %v11454
  %v11670 = vunpack.c.l.b16 %v11455
  %v11671 = vunpack.c.h.b16 %v11455
  %v11672 = vunpack.c.l.b16 %v11456
  %v11673 = vunpack.c.h.b16 %v11456
  %v11674 = vunpack.c.l.b16 %v11457
  %v11675 = vunpack.c.h.b16 %v11457
  %v11676 = vunpack.c.l.b16 %v11458
  %v11677 = vunpack.c.h.b16 %v11458
  %v11678 = vunpack.c.l.b16 %v11459
  %v11679 = vunpack.c.h.b16 %v11459
  %v11680 = vunpack.c.l.b16 %v11460
  %v11681 = vunpack.c.h.b16 %v11460
  %v11682 = vunpack.c.l.b16 %v11461
  %v11683 = vunpack.c.h.b16 %v11461
  %v11684 = vunpack.c.l.b16 %v11462
  %v11685 = vunpack.c.h.b16 %v11462
  %v11686 = vunpack.c.l.b16 %v11463
  %v11687 = vunpack.c.h.b16 %v11463
  %v11688 = vunpack.c.l.b16 %v11464
  %v11689 = vunpack.c.h.b16 %v11464
  %v11690 = vunpack.c.l.b16 %v11465
  %v11691 = vunpack.c.h.b16 %v11465
  %v11692 = vunpack.c.l.b16 %v11466
  %v11693 = vunpack.c.h.b16 %v11466
  %v11694 = vunpack.c.l.b16 %v11467
  %v11695 = vunpack.c.h.b16 %v11467
  %v11696 = vunpack.c.l.b16 %v11468
  %v11697 = vunpack.c.h.b16 %v11468
  %v11698 = vunpack.c.l.b16 %v11469
  %v11699 = vunpack.c.h.b16 %v11469
  %v11700 = vunpack.c.l.b16 %v11470
  %v11701 = vunpack.c.h.b16 %v11470
  %v11702 = vunpack.c.l.b16 %v11471
  %v11703 = vunpack.c.h.b16 %v11471
  %v11704 = vunpack.c.l.b16 %v11472
  %v11705 = vunpack.c.h.b16 %v11472
  %v11706 = vunpack.c.l.b16 %v11473
  %v11707 = vunpack.c.h.b16 %v11473
  %v11708 = vunpack.c.l.b16 %v11474
  %v11709 = vunpack.c.h.b16 %v11474
  %v11710 = vunpack.c.l.b16 %v11475
  %v11711 = vunpack.c.h.b16 %v11475
  %v11712 = vunpack.c.l.b16 %v11476
  %v11713 = vunpack.c.h.b16 %v11476
  %v11714 = vunpack.c.l.b16 %v11477
  %v11715 = vunpack.c.h.b16 %v11477
  %v11716 = vunpack.c.l.b16 %v11478
  %v11717 = vunpack.c.h.b16 %v11478
  %v11718 = vunpack.c.l.b16 %v11479
  %v11719 = vunpack.c.h.b16 %v11479
  %v11720 = vunpack.c.l.b16 %v11480
  %v11721 = vunpack.c.h.b16 %v11480
  %v11722 = vunpack.c.l.b16 %v11481
  %v11723 = vunpack.c.h.b16 %v11481
  %v11724 = vunpack.c.l.b16 %v11482
  %v11725 = vunpack.c.h.b16 %v11482
  %v11726 = vunpack.c.l.b16 %v11483
  %v11727 = vunpack.c.h.b16 %v11483
  %v11728 = vunpack.c.l.b16 %v11484
  %v11729 = vunpack.c.h.b16 %v11484
  %v11730 = vunpack.c.l.b16 %v11485
  %v11731 = vunpack.c.h.b16 %v11485
  %v11732 = vunpack.c.l.b16 %v11486
  %v11733 = vunpack.c.h.b16 %v11486
  %v11734 = vunpack.c.l.b16 %v11487
  %v11735 = vunpack.c.h.b16 %v11487
  %v11736 = vunpack.c.l.b16 %v11488
  %v11737 = vunpack.c.h.b16 %v11488
  %v11738 = vunpack.c.l.b16 %v11489
  %v11739 = vunpack.c.h.b16 %v11489
  %v11740 = vunpack.c.l.b16 %v11490
  %v11741 = vunpack.c.h.b16 %v11490
  %v11742 = vunpack.c.l.b16 %v11491
  %v11743 = vunpack.c.h.b16 %v11491
  %v11744 = vunpack.c.l.b16 %v11492
  %v11745 = vunpack.c.h.b16 %v11492
  %v11746 = vunpack.c.l.b16 %v11493
  %v11747 = vunpack.c.h.b16 %v11493
  %v11748 = vunpack.c.l.b16 %v11494
  %v11749 = vunpack.c.h.b16 %v11494
  %v11750 = vunpack.c.l.b16 %v11495
  %v11751 = vunpack.c.h.b16 %v11495
  %v11752 = vunpack.c.l.b16 %v11496
  %v11753 = vunpack.c.h.b16 %v11496
  %v11754 = vunpack.c.l.b16 %v11497
  %v11755 = vunpack.c.h.b16 %v11497
  %v11756 = vunpack.c.l.b16 %v11498
  %v11757 = vunpack.c.h.b16 %v11498
  %v11758 = vunpack.c.l.b16 %v11499
  %v11759 = vunpack.c.h.b16 %v11499
  %v11760 = vunpack.c.l.b16 %v11500
  %v11761 = vunpack.c.h.b16 %v11500
  %v11762 = vunpack.c.l.b16 %v11501
  %v11763 = vunpack.c.h.b16 %v11501
  %v11764 = vunpack.c.l.b16 %v11502
  %v11765 = vunpack.c.h.b16 %v11502
  %v11766 = vunpack.c.l.b16 %v11503
  %v11767 = vunpack.c.h.b16 %v11503
  %v11768 = vunpack.c.l.b16 %v11504
  %v11769 = vunpack.c.h.b16 %v11504
  %v11770 = vunpack.c.l.b16 %v11505
  %v11771 = vunpack.c.h.b16 %v11505
  %v11772 = vunpack.c.l.b16 %v11506
  %v11773 = vunpack.c.h.b16 %v11506
  %v11774 = vunpack.c.l.b16 %v11507
  %v11775 = vunpack.c.h.b16 %v11507
  %v11776 = vunpack.c.l.b16 %v11508
  %v11777 = vunpack.c.h.b16 %v11508
  %v11778 = vunpack.c.l.b16 %v11509
  %v11779 = vunpack.c.h.b16 %v11509
  %v11780 = vunpack.c.l.b16 %v11510
  %v11781 = vunpack.c.h.b16 %v11510
  %v11782 = vunpack.c.l.b16 %v11511
  %v11783 = vunpack.c.h.b16 %v11511
  %v11784 = vunpack.c.l.b16 %v11512
  %v11785 = vunpack.c.h.b16 %v11512
  %v11786 = vunpack.c.l.b16 %v11513
  %v11787 = vunpack.c.h.b16 %v11513
  %v11788 = vunpack.c.l.b16 %v11514
  %v11789 = vunpack.c.h.b16 %v11514
  %v11790 = vunpack.c.l.b16 %v11515
  %v11791 = vunpack.c.h.b16 %v11515
  %v11792 = vunpack.c.l.b16 %v11516
  %v11793 = vunpack.c.h.b16 %v11516
  %v11794 = vunpack.c.l.b16 %v11517
  %v11795 = vunpack.c.h.b16 %v11517
  %v11796 = vunpack.c.l.b16 %v11518
  %v11797 = vunpack.c.h.b16 %v11518
  %v11798 = vunpack.c.l.b16 %v11519
  %v11799 = vunpack.c.h.b16 %v11519
  %v11800 = vunpack.c.l.b16 %v11520
  %v11801 = vunpack.c.h.b16 %v11520
  %v11802 = vunpack.c.l.b16 %v11521
  %v11803 = vunpack.c.h.b16 %v11521
  %v11804 = vunpack.c.l.b16 %v11522
  %v11805 = vunpack.c.h.b16 %v11522
  %v11806 = vunpack.c.l.b16 %v11523
  %v11807 = vunpack.c.h.b16 %v11523
  %v11808 = vunpack.c.l.b16 %v11524
  %v11809 = vunpack.c.h.b16 %v11524
  %v11810 = vunpack.c.l.b16 %v11525
  %v11811 = vunpack.c.h.b16 %v11525
  %v11812 = vunpack.c.l.b16 %v11526
  %v11813 = vunpack.c.h.b16 %v11526
  %v11814 = vpack.c.b16 %v11642, %v11638
  %v11815 = vpack.c.b16 %v11643, %v11639
  %v11816 = vpack.c.b16 %v11644, %v11640
  %v11817 = vpack.c.b16 %v11645, %v11641
  %v11818 = vpack.c.b16 %v11650, %v11646
  %v11819 = vpack.c.b16 %v11651, %v11647
  %v11820 = vpack.c.b16 %v11652, %v11648
  %v11821 = vpack.c.b16 %v11653, %v11649
  %v11822 = vpack.c.b16 %v11658, %v11654
  %v11823 = vpack.c.b16 %v11659, %v11655
  %v11824 = vpack.c.b16 %v11660, %v11656
  %v11825 = vpack.c.b16 %v11661, %v11657
  %v11826 = vpack.c.b16 %v11666, %v11662
  %v11827 = vpack.c.b16 %v11667, %v11663
  %v11828 = vpack.c.b16 %v11668, %v11664
  %v11829 = vpack.c.b16 %v11669, %v11665
  %v11830 = vpack.c.b16 %v11674, %v11670
  %v11831 = vpack.c.b16 %v11675, %v11671
  %v11832 = vpack.c.b16 %v11676, %v11672
  %v11833 = vpack.c.b16 %v11677, %v11673
  %v11834 = vpack.c.b16 %v11682, %v11678
  %v11835 = vpack.c.b16 %v11683, %v11679
  %v11836 = vpack.c.b16 %v11684, %v11680
  %v11837 = vpack.c.b16 %v11685, %v11681
  %v11838 = vpack.c.b16 %v11690, %v11686
  %v11839 = vpack.c.b16 %v11691, %v11687
  %v11840 = vpack.c.b16 %v11692, %v11688
  %v11841 = vpack.c.b16 %v11693, %v11689
  %v11842 = vpack.c.b16 %v11698, %v11694
  %v11843 = vpack.c.b16 %v11699, %v11695
  %v11844 = vpack.c.b16 %v11700, %v11696
  %v11845 = vpack.c.b16 %v11701, %v11697
  %v11846 = vpack.c.b16 %v11706, %v11702
  %v11847 = vpack.c.b16 %v11707, %v11703
  %v11848 = vpack.c.b16 %v11708, %v11704
  %v11849 = vpack.c.b16 %v11709, %v11705
  %v11850 = vpack.c.b16 %v11714, %v11710
  %v11851 = vpack.c.b16 %v11715, %v11711
  %v11852 = vpack.c.b16 %v11716, %v11712
  %v11853 = vpack.c.b16 %v11717, %v11713
  %v11854 = vpack.c.b16 %v11722, %v11718
  %v11855 = vpack.c.b16 %v11723, %v11719
  %v11856 = vpack.c.b16 %v11724, %v11720
  %v11857 = vpack.c.b16 %v11725, %v11721
  %v11858 = vpack.c.b16 %v11730, %v11726
  %v11859 = vpack.c.b16 %v11731, %v11727
  %v11860 = vpack.c.b16 %v11732, %v11728
  %v11861 = vpack.c.b16 %v11733, %v11729
  %v11862 = vpack.c.b16 %v11738, %v11734
  %v11863 = vpack.c.b16 %v11739, %v11735
  %v11864 = vpack.c.b16 %v11740, %v11736
  %v11865 = vpack.c.b16 %v11741, %v11737
  %v11866 = vpack.c.b16 %v11746, %v11742
  %v11867 = vpack.c.b16 %v11747, %v11743
  %v11868 = vpack.c.b16 %v11748, %v11744
  %v11869 = vpack.c.b16 %v11749, %v11745
  %v11870 = vpack.c.b16 %v11754, %v11750
  %v11871 = vpack.c.b16 %v11755, %v11751
  %v11872 = vpack.c.b16 %v11756, %v11752
  %v11873 = vpack.c.b16 %v11757, %v11753
  %v11874 = vpack.c.b16 %v11762, %v11758
  %v11875 = vpack.c.b16 %v11763, %v11759
  %v11876 = vpack.c.b16 %v11764, %v11760
  %v11877 = vpack.c.b16 %v11765, %v11761
  %v11878 = vpack.c.b16 %v11770, %v11766
  %v11879 = vpack.c.b16 %v11771, %v11767
  %v11880 = vpack.c.b16 %v11772, %v11768
  %v11881 = vpack.c.b16 %v11773, %v11769
  %v11882 = vpack.c.b16 %v11778, %v11774
  %v11883 = vpack.c.b16 %v11779, %v11775
  %v11884 = vpack.c.b16 %v11780, %v11776
  %v11885 = vpack.c.b16 %v11781, %v11777
  %v11886 = vpack.c.b16 %v11786, %v11782
  %v11887 = vpack.c.b16 %v11787, %v11783
  %v11888 = vpack.c.b16 %v11788, %v11784
  %v11889 = vpack.c.b16 %v11789, %v11785
  %v11890 = vpack.c.b16 %v11794, %v11790
  %v11891 = vpack.c.b16 %v11795, %v11791
  %v11892 = vpack.c.b16 %v11796, %v11792
  %v11893 = vpack.c.b16 %v11797, %v11793
  %v11894 = vpack.c.b16 %v11802, %v11798
  %v11895 = vpack.c.b16 %v11803, %v11799
  %v11896 = vpack.c.b16 %v11804, %v11800
  %v11897 = vpack.c.b16 %v11805, %v11801
  %v11898 = vpack.c.b16 %v11810, %v11806
  %v11899 = vpack.c.b16 %v11811, %v11807
  %v11900 = vpack.c.b16 %v11812, %v11808
  %v11901 = vpack.c.b16 %v11813, %v11809
  %v11987 = vsel %vm9812, %v11547, 0
  %v11990 = vsel %vm9816, %v11898, 0
  %v11993 = vsel %vm9816, %v11899, 0
  %v11996 = vsel %vm9816, %v11900, 0
  %v11999 = vsel %vm9816, %v11901, 0
  %12001 = vmatprep.subr.bf16.mxu0 %v11815
  %12002 = vmatpush1.bf16.msra.mxu0 %v11814
  %12003 = vmatprep.subr.bf16.mxu0 %v11819
  %12004 = vmatpush1.bf16.msra.mxu0 %v11818
  %12005 = vmatprep.subr.bf16.mxu0 %v11823
  %12006 = vmatpush1.bf16.msra.mxu0 %v11822
  %12007 = vmatprep.subr.bf16.mxu0 %v11827
  %12008 = vmatpush1.bf16.msra.mxu0 %v11826
  %12009 = vmatprep.subr.bf16.mxu0 %v11831
  %12010 = vmatpush1.bf16.msra.mxu0 %v11830
  %12011 = vmatprep.subr.bf16.mxu0 %v11835
  %12012 = vmatpush1.bf16.msra.mxu0 %v11834
  %12013 = vmatprep.subr.bf16.mxu0 %v11839
  %12014 = vmatpush1.bf16.msra.mxu0 %v11838
  %12015 = vmatprep.subr.bf16.mxu0 %v11843
  %12016 = vmatpush1.bf16.msra.mxu0 %v11842
  %12017 = vmatprep.subr.bf16.mxu0 %v11847
  %12018 = vmatpush1.bf16.msra.mxu0 %v11846
  %12019 = vmatprep.subr.bf16.mxu0 %v11851
  %12020 = vmatpush1.bf16.msra.mxu0 %v11850
  %12021 = vmatprep.subr.bf16.mxu0 %v11855
  %12022 = vmatpush1.bf16.msra.mxu0 %v11854
  %12023 = vmatprep.subr.bf16.mxu0 %v11859
  %12024 = vmatpush1.bf16.msra.mxu0 %v11858
  %12025 = vmatprep.subr.bf16.mxu0 %v11863
  %12026 = vmatpush1.bf16.msra.mxu0 %v11862
  %12027 = vmatprep.subr.bf16.mxu0 %v11867
  %12028 = vmatpush1.bf16.msra.mxu0 %v11866
  %12029 = vmatprep.subr.bf16.mxu0 %v11871
  %12030 = vmatpush1.bf16.msra.mxu0 %v11870
  %12031 = vmatprep.subr.bf16.mxu0 %v11875
  %12032 = vmatpush1.bf16.msra.mxu0 %v11874
  %12033 = vmatprep.mubr.bf16.mxu0 %v11546
  %12034 = vmatmul.mubr.bf16.gmra.mrb[0].mxu0 %v11545
  %v12035 = vpop.f32.mrb[0].mxu0
  %v12036 = vadd.f32 0.0, %v12035
  %v12037 = vpop.f32.mrb[0].mxu0
  %v12038 = vadd.f32 0.0, %v12037
  %v12039 = vpop.f32.mrb[0].mxu0
  %v12040 = vpop.f32.mrb[0].mxu0
  %12041 = vdwg.mxu0
  %12042 = vmatprep.subr.bf16.mxu0 %v11879
  %12043 = vmatpush1.bf16.msra.mxu0 %v11878
  %12044 = vmatprep.subr.bf16.mxu0 %v11883
  %12045 = vmatpush1.bf16.msra.mxu0 %v11882
  %12046 = vmatprep.subr.bf16.mxu0 %v11887
  %12047 = vmatpush1.bf16.msra.mxu0 %v11886
  %12048 = vmatprep.subr.bf16.mxu0 %v11891
  %12049 = vmatpush1.bf16.msra.mxu0 %v11890
  %12050 = vmatprep.subr.bf16.mxu0 %v11895
  %12051 = vmatpush1.bf16.msra.mxu0 %v11894
  %12052 = vmatprep.subr.bf16.mxu0 %v11993
  %12053 = vmatpush1.bf16.msra.mxu0 %v11990
  %12054 = vmatprep.subr.bf16.mxu0 0
  %12055 = vmatpush1.bf16.msra.mxu0 0
  %12056 = vmatprep.subr.bf16.mxu0 0
  %12057 = vmatpush1.bf16.msra.mxu0 0
  %12058 = vmatprep.subr.bf16.mxu0 0
  %12059 = vmatpush1.bf16.msra.mxu0 0
  %12060 = vmatprep.subr.bf16.mxu0 0
  %12061 = vmatpush1.bf16.msra.mxu0 0
  %12062 = vmatprep.subr.bf16.mxu0 0
  %12063 = vmatpush1.bf16.msra.mxu0 0
  %12064 = vmatprep.subr.bf16.mxu0 0
  %12065 = vmatpush1.bf16.msra.mxu0 0
  %12066 = vmatprep.subr.bf16.mxu0 0
  %12067 = vmatpush1.bf16.msra.mxu0 0
  %12068 = vmatprep.subr.bf16.mxu0 0
  %12069 = vmatpush1.bf16.msra.mxu0 0
  %12070 = vmatprep.subr.bf16.mxu0 0
  %12071 = vmatpush1.bf16.msra.mxu0 0
  %12072 = vmatprep.subr.bf16.mxu0 0
  %12073 = vmatpush1.bf16.msra.mxu0 0
  %12074 = vmatprep.mubr.bf16.mxu0 0
  %12075 = vmatmul.mubr.bf16.gmra.mrb[0].mxu0 %v11987
  %v12076 = vpop.f32.mrb[0].mxu0
  %v12077 = vadd.f32 %v12036, %v12076
  %v12078 = vpop.f32.mrb[0].mxu0
  %v12079 = vadd.f32 %v12038, %v12078
  %v12080 = vpop.f32.mrb[0].mxu0
  %v12081 = vpop.f32.mrb[0].mxu0
  %12082 = vdwg.mxu0
  %12083 = vmatprep.subr.bf16.mxu0 %v11817
  %12084 = vmatpush1.bf16.msra.mxu0 %v11816
  %12085 = vmatprep.subr.bf16.mxu0 %v11821
  %12086 = vmatpush1.bf16.msra.mxu0 %v11820
  %12087 = vmatprep.subr.bf16.mxu0 %v11825
  %12088 = vmatpush1.bf16.msra.mxu0 %v11824
  %12089 = vmatprep.subr.bf16.mxu0 %v11829
  %12090 = vmatpush1.bf16.msra.mxu0 %v11828
  %12091 = vmatprep.subr.bf16.mxu0 %v11833
  %12092 = vmatpush1.bf16.msra.mxu0 %v11832
  %12093 = vmatprep.subr.bf16.mxu0 %v11837
  %12094 = vmatpush1.bf16.msra.mxu0 %v11836
  %12095 = vmatprep.subr.bf16.mxu0 %v11841
  %12096 = vmatpush1.bf16.msra.mxu0 %v11840
  %12097 = vmatprep.subr.bf16.mxu0 %v11845
  %12098 = vmatpush1.bf16.msra.mxu0 %v11844
  %12099 = vmatprep.subr.bf16.mxu0 %v11849
  %12100 = vmatpush1.bf16.msra.mxu0 %v11848
  %12101 = vmatprep.subr.bf16.mxu0 %v11853
  %12102 = vmatpush1.bf16.msra.mxu0 %v11852
  %12103 = vmatprep.subr.bf16.mxu0 %v11857
  %12104 = vmatpush1.bf16.msra.mxu0 %v11856
  %12105 = vmatprep.subr.bf16.mxu0 %v11861
  %12106 = vmatpush1.bf16.msra.mxu0 %v11860
  %12107 = vmatprep.subr.bf16.mxu0 %v11865
  %12108 = vmatpush1.bf16.msra.mxu0 %v11864
  %12109 = vmatprep.subr.bf16.mxu0 %v11869
  %12110 = vmatpush1.bf16.msra.mxu0 %v11868
  %12111 = vmatprep.subr.bf16.mxu0 %v11873
  %12112 = vmatpush1.bf16.msra.mxu0 %v11872
  %12113 = vmatprep.subr.bf16.mxu0 %v11877
  %12114 = vmatpush1.bf16.msra.mxu0 %v11876
  %12115 = vmatprep.mubr.bf16.mxu0 %v11546
  %12116 = vmatmul.mubr.bf16.gmra.mrb[0].mxu0 %v11545
  %v12117 = vpop.f32.mrb[0].mxu0
  %v12118 = vadd.f32 0.0, %v12117
  %v12119 = vpop.f32.mrb[0].mxu0
  %v12120 = vadd.f32 0.0, %v12119
  %v12121 = vpop.f32.mrb[0].mxu0
  %v12122 = vpop.f32.mrb[0].mxu0
  %12123 = vdwg.mxu0
  %12124 = vmatprep.subr.bf16.mxu0 %v11881
  %12125 = vmatpush1.bf16.msra.mxu0 %v11880
  %12126 = vmatprep.subr.bf16.mxu0 %v11885
  %12127 = vmatpush1.bf16.msra.mxu0 %v11884
  %12128 = vmatprep.subr.bf16.mxu0 %v11889
  %12129 = vmatpush1.bf16.msra.mxu0 %v11888
  %12130 = vmatprep.subr.bf16.mxu0 %v11893
  %12131 = vmatpush1.bf16.msra.mxu0 %v11892
  %12132 = vmatprep.subr.bf16.mxu0 %v11897
  %12133 = vmatpush1.bf16.msra.mxu0 %v11896
  %12134 = vmatprep.subr.bf16.mxu0 %v11999
  %12135 = vmatpush1.bf16.msra.mxu0 %v11996
  %12136 = vmatprep.subr.bf16.mxu0 0
  %12137 = vmatpush1.bf16.msra.mxu0 0
  %12138 = vmatprep.subr.bf16.mxu0 0
  %12139 = vmatpush1.bf16.msra.mxu0 0
  %12140 = vmatprep.subr.bf16.mxu0 0
  %12141 = vmatpush1.bf16.msra.mxu0 0
  %12142 = vmatprep.subr.bf16.mxu0 0
  %12143 = vmatpush1.bf16.msra.mxu0 0
  %12144 = vmatprep.subr.bf16.mxu0 0
  %12145 = vmatpush1.bf16.msra.mxu0 0
  %12146 = vmatprep.subr.bf16.mxu0 0
  %12147 = vmatpush1.bf16.msra.mxu0 0
  %12148 = vmatprep.subr.bf16.mxu0 0
  %12149 = vmatpush1.bf16.msra.mxu0 0
  %12150 = vmatprep.subr.bf16.mxu0 0
  %12151 = vmatpush1.bf16.msra.mxu0 0
  %12152 = vmatprep.subr.bf16.mxu0 0
  %12153 = vmatpush1.bf16.msra.mxu0 0
  %12154 = vmatprep.subr.bf16.mxu0 0
  %12155 = vmatpush1.bf16.msra.mxu0 0
  %12156 = vmatprep.mubr.bf16.mxu0 0
  %12157 = vmatmul.mubr.bf16.gmra.mrb[0].mxu0 %v11987
  %v12158 = vpop.f32.mrb[0].mxu0
  %v12159 = vadd.f32 %v12118, %v12158
  %v12160 = vpop.f32.mrb[0].mxu0
  %v12161 = vadd.f32 %v12120, %v12160
  %v12162 = vpop.f32.mrb[0].mxu0
  %v12163 = vpop.f32.mrb[0].mxu0
  %12164 = vdwg.mxu0
  %v12165 = vadd.f32 %v11396, %v12077
  %v12166 = vadd.f32 %v11397, %v12079
  %v12167 = vadd.f32 %v11398, %v12159
  %v12168 = vadd.f32 %v11399, %v12161
  %v12169 = vld [vmem:[%s6] sm:$0xf]
  %v12171 = vlaneseq
  %v12172 = vshrl.u32 %v12171, 7
  %v12173 = vsub.s32 0, %v12172
  %v12174 = vrot.slane %v12169, %v12173
  %v12175 = vlaneseq
  %v12176 = vshrl.u32 %v12175, 7
  %v12177 = vsub.s32 1, %v12176
  %v12178 = vrot.slane %v12169, %v12177
  %v12179 = vlaneseq
  %v12180 = vshrl.u32 %v12179, 7
  %v12181 = vsub.s32 2, %v12180
  %v12182 = vrot.slane %v12169, %v12181
  %v12183 = vlaneseq
  %v12184 = vshrl.u32 %v12183, 7
  %v12185 = vsub.s32 3, %v12184
  %v12186 = vrot.slane %v12169, %v12185
  %v12191 = vadd.f32 %v12165, %v12174
  %v12192 = vadd.f32 %v12166, %v12178
  %v12193 = vadd.f32 %v12167, %v12182
  %v12194 = vadd.f32 %v12168, %v12186
  %v12199 = vcombine.low %v12191, %v12192
  %v12200 = vcombine.low %v12193, %v12194
  %v12202 = vunpack.c.l.s4 1983009808
  %v12203 = vunpack.c.0.s8 %v12202
  %v12204 = vlaneseq
  %v12205 = vshrl.u32 %v12204, 7
  %v12206 = vsub.s32 %v12203, %v12205
  %v12207 = vrot.slane %v12199, %v12206
  %v12209 = vunpack.c.l.s4 1983009808
  %v12210 = vunpack.c.0.s8 %v12209
  %v12211 = vlaneseq
  %v12212 = vshrl.u32 %v12211, 7
  %v12213 = vsub.s32 %v12210, %v12212
  %v12214 = vrot.slane %v12200, %v12213
  %v12215 = vcombine.low %v12207, %v12214
  %12217 = vst [vmem:[%s7] sm:$0xff] %v12215
  %v12218 = vsel %vm979, %v12191, 0.0
  %v12219 = vrot.slane %v12218, 4
  %v12220 = vadd.f32 %v12218, %v12219
  %v12221 = vrot.slane %v12220, 2
  %v12222 = vadd.f32 %v12220, %v12221
  %v12223 = vrot.slane %v12222, 1
  %v12224 = vadd.f32 %v12222, %v12223
  %v12225 = vsel %vm979, %v12192, 0.0
  %v12226 = vrot.slane %v12225, 4
  %v12227 = vadd.f32 %v12225, %v12226
  %v12228 = vrot.slane %v12227, 2
  %v12229 = vadd.f32 %v12227, %v12228
  %v12230 = vrot.slane %v12229, 1
  %v12231 = vadd.f32 %v12229, %v12230
  %v12232 = vsel %vm979, %v12193, 0.0
  %v12233 = vrot.slane %v12232, 4
  %v12234 = vadd.f32 %v12232, %v12233
  %v12235 = vrot.slane %v12234, 2
  %v12236 = vadd.f32 %v12234, %v12235
  %v12237 = vrot.slane %v12236, 1
  %v12238 = vadd.f32 %v12236, %v12237
  %v12239 = vsel %vm979, %v12194, 0.0
  %v12240 = vrot.slane %v12239, 4
  %v12241 = vadd.f32 %v12239, %v12240
  %v12242 = vrot.slane %v12241, 2
  %v12243 = vadd.f32 %v12241, %v12242
  %v12244 = vrot.slane %v12243, 1
  %v12245 = vadd.f32 %v12243, %v12244
  %v12246 = vmul.f32 %v12191, %v12191
  %v12247 = vmul.f32 %v12192, %v12192
  %v12248 = vmul.f32 %v12193, %v12193
  %v12249 = vmul.f32 %v12194, %v12194
  %v12250 = vsel %vm979, %v12246, 0.0
  %v12251 = vrot.slane %v12250, 4
  %v12252 = vadd.f32 %v12250, %v12251
  %v12253 = vrot.slane %v12252, 2
  %v12254 = vadd.f32 %v12252, %v12253
  %v12255 = vrot.slane %v12254, 1
  %v12256 = vadd.f32 %v12254, %v12255
  %v12257 = vsel %vm979, %v12247, 0.0
  %v12258 = vrot.slane %v12257, 4
  %v12259 = vadd.f32 %v12257, %v12258
  %v12260 = vrot.slane %v12259, 2
  %v12261 = vadd.f32 %v12259, %v12260
  %v12262 = vrot.slane %v12261, 1
  %v12263 = vadd.f32 %v12261, %v12262
  %v12264 = vsel %vm979, %v12248, 0.0
  %v12265 = vrot.slane %v12264, 4
  %v12266 = vadd.f32 %v12264, %v12265
  %v12267 = vrot.slane %v12266, 2
  %v12268 = vadd.f32 %v12266, %v12267
  %v12269 = vrot.slane %v12268, 1
  %v12270 = vadd.f32 %v12268, %v12269
  %v12271 = vsel %vm979, %v12249, 0.0
  %v12272 = vrot.slane %v12271, 4
  %v12273 = vadd.f32 %v12271, %v12272
  %v12274 = vrot.slane %v12273, 2
  %v12275 = vadd.f32 %v12273, %v12274
  %v12276 = vrot.slane %v12275, 1
  %v12277 = vadd.f32 %v12275, %v12276
  %12278 = vst [vmem:[%s8] sm:$0xff] 0.0
  %12279 = vst [vmem:[%s8 + $0x8] sm:$0xff] 0.0
  %12280 = vst [vmem:[%s8 + $0x10] sm:$0xff] 0.0
  %12281 = vst [vmem:[%s8 + $0x18] sm:$0xff] 0.0
  %v12286 = vcombine.low %v12224, %v12231
  %v12287 = vcombine.low %v12238, %v12245
  %v12289 = vunpack.c.l.s4 1966171168
  %v12290 = vunpack.c.0.s8 %v12289
  %v12291 = vlaneseq
  %v12292 = vshrl.u32 %v12291, 7
  %v12293 = vsub.s32 %v12290, %v12292
  %v12294 = vrot.slane %v12286, %v12293
  %v12296 = vunpack.c.l.s4 1966171168
  %v12297 = vunpack.c.0.s8 %v12296
  %v12298 = vlaneseq
  %v12299 = vshrl.u32 %v12298, 7
  %v12300 = vsub.s32 %v12297, %v12299
  %v12301 = vrot.slane %v12287, %v12300
  %v12302 = vcombine.low %v12294, %v12301
  %v12304 = vunpack.c.l.s4 1966171168
  %v12305 = vunpack.c.0.s8 %v12304
  %v12306 = vlaneseq
  %v12307 = vshrl.u32 %v12306, 7
  %v12308 = vsub.s32 %v12305, %v12307
  %v12309 = vrot.slane %v12302, %v12308
  %v12311 = vlaneseq
  %vm12312 = vcmp.ge.s32.totalorder %v12311, 0
  %vm12313 = vcmp.lt.s32.totalorder %v12311, 512
  %vm12314 = vmand %vm12312, %vm12313
  %12315 = vst.msk [vmem:[%s8] ss:$8 sm:$0xf] %vm12314, %v12309
  %12316 = vst.msk [vmem:[%s8] ss:$8 sm:$0x0] %vm12314, %v12309
  %v12321 = vcombine.low %v12256, %v12263
  %v12322 = vcombine.low %v12270, %v12277
  %v12324 = vunpack.c.l.s4 1966171168
  %v12325 = vunpack.c.0.s8 %v12324
  %v12326 = vlaneseq
  %v12327 = vshrl.u32 %v12326, 7
  %v12328 = vsub.s32 %v12325, %v12327
  %v12329 = vrot.slane %v12321, %v12328
  %v12331 = vunpack.c.l.s4 1966171168
  %v12332 = vunpack.c.0.s8 %v12331
  %v12333 = vlaneseq
  %v12334 = vshrl.u32 %v12333, 7
  %v12335 = vsub.s32 %v12332, %v12334
  %v12336 = vrot.slane %v12322, %v12335
  %v12337 = vcombine.low %v12329, %v12336
  %v12339 = vunpack.c.l.s4 1966171168
  %v12340 = vunpack.c.0.s8 %v12339
  %v12341 = vlaneseq
  %v12342 = vshrl.u32 %v12341, 7
  %v12343 = vsub.s32 %v12340, %v12342
  %v12344 = vrot.slane %v12337, %v12343
  %s12346 = scalar_lea.vmem %s8, 1
  %12347 = vst.msk [vmem:[%s12346] ss:$8 sm:$0xf] %vm12314, %v12344
  %12348 = vst.msk [vmem:[%s12346] ss:$8 sm:$0x0] %vm12314, %v12344
  // Predicated region
  $region30: #{cnn2_forward.2} parent=0 // pred_check
    _
  $region31: #{cnn2_forward.2} parent=0 // pred_check_branch
    %12350 = sbr.rel (0) target = $region33
  $region32: #{cnn2_forward.2} parent=0 // pred_region
    _
  $region33: #{cnn2_forward.2} parent=0 // pred_fallthru
    _
  // Predicated region
  $region34: #{cnn2_forward.2} parent=0 // pred_check
    _
  $region35: #{cnn2_forward.2} parent=0 // pred_check_branch
    %12352 = sbr.rel (0) target = $region37
  $region36: #{cnn2_forward.2} parent=0 // pred_region
    _
  $region37: #{cnn2_forward.2} parent=0 // pred_fallthru
    _
  // Predicated region
  $region38: #{cnn2_forward.2} parent=0 // pred_check
    _
  $region39: #{cnn2_forward.2} parent=0 // pred_check_branch
    %12354 = sbr.rel (0) target = $region41
  $region40: #{cnn2_forward.2} parent=0 // pred_region
    _
  $region41: #{cnn2_forward.2} parent=0 // pred_fallthru
    _
  // Predicated region
  $region42: #{cnn2_forward.2} parent=0 // pred_check
    _
  $region43: #{cnn2_forward.2} parent=0 // pred_check_branch
    %12356 = sbr.rel (0) target = $region45
  $region44: #{cnn2_forward.2} parent=0 // pred_region
    _
  $region45: #{cnn2_forward.2} parent=0 // pred_fallthru
    _

</llo_original>
